<compile_context>
chip_gen: v6e
topology: v6e:2x2x1
jax: 0.10.0
libtpu: 0.0.40
codegen_flags: <defaults>
</compile_context>

<pallas_src>
import functools
import math

import jax
import jax.numpy as jnp
from jax.experimental import pallas as pl
from jax.experimental.pallas import tpu as pltpu


def _round_up(x, m):
    return ((x + m - 1) // m) * m


# ----------------------------------------------------------------------------
# Pallas kernels
# ----------------------------------------------------------------------------
def linear_pallas(x, w_t, b, n_valid, relu=False):
    """y = x @ w_t + b (optionally ReLU), sliced to the first n_valid columns.

    x   : (M, K)  float32
    w_t : (K, Np) bfloat16, Np a multiple of 128 (zero-padded at init)
    b   : (Np,)   float32 (zero-padded)
    """
    x = x.astype(jnp.float32)
    M, K = x.shape
    Kw, Np = w_t.shape
    assert Kw == K and Np % 128 == 0
    b2 = b.reshape(1, Np).astype(jnp.float32)

    # Tile sizes: moderate enough for v7x's 64 MiB VMEM, big enough to hide
    # per-step overhead on v5e/v6e.
    tm = min(256, M)
    tn = 256 if (Np % 256 == 0) else 128
    tn = min(tn, Np)
    if K > 1024:
        tk = next(t for t in (512, 256, 128, K) if K % t == 0)
    else:
        tk = K
    grid = (pl.cdiv(M, tm), Np // tn, K // tk)

    if tk == K:
        # Single K step: no accumulator scratch needed.
        def kernel(x_ref, w_ref, b_ref, o_ref):
            acc = jnp.dot(
                x_ref[...].astype(jnp.bfloat16),
                w_ref[...],
                preferred_element_type=jnp.float32,
            )
            acc = acc + b_ref[...]
            if relu:
                acc = jnp.maximum(acc, 0.0)
            o_ref[...] = acc

        scratch_shapes = []
    else:
        def kernel(x_ref, w_ref, b_ref, o_ref, acc_ref):
            @pl.when(pl.program_id(2) == 0)
            def _():
                acc_ref[...] = jnp.zeros_like(acc_ref)

            acc_ref[...] += jnp.dot(
                x_ref[...].astype(jnp.bfloat16),
                w_ref[...],
                preferred_element_type=jnp.float32,
            )

            @pl.when(pl.program_id(2) == pl.num_programs(2) - 1)
            def _():
                y = acc_ref[...] + b_ref[...]
                if relu:
                    y = jnp.maximum(y, 0.0)
                o_ref[...] = y

        scratch_shapes = [pltpu.VMEM((tm, tn), jnp.float32)]

    out = pl.pallas_call(
        kernel,
        out_shape=jax.ShapeDtypeStruct((M, Np), jnp.float32),
        grid=grid,
        in_specs=[
            pl.BlockSpec((tm, tk), lambda i, j, k: (i, k)),
            pl.BlockSpec((tk, tn), lambda i, j, k: (k, j)),
            pl.BlockSpec((1, tn), lambda i, j, k: (0, j)),
        ],
        out_specs=pl.BlockSpec((tm, tn), lambda i, j, k: (i, j)),
        scratch_shapes=scratch_shapes,
        compiler_params=pltpu.CompilerParams(
            dimension_semantics=("parallel", "parallel", "arbitrary")),
    )(x, w_t, b2)

    if n_valid != Np:
        out = out[:, :n_valid]
    return out


def batchnorm_relu_pallas(x, gamma, beta, eps=1e-5):
    """Training-mode BatchNorm over rows (M = N*H*W) followed by ReLU.

    Pass 1: tiled accumulation of per-channel sum / sum-of-squares over M
            (full-M biased statistics, matching torch.nn.BatchNorm2d).
    Pass 2: tiled elementwise normalize + affine + ReLU.
    """
    x = x.astype(jnp.float32)
    M, C = x.shape
    assert C % 128 == 0

    # ---- pass 1: per-channel sum / sumsq ----------------------------------
    tmb = min(512, M)
    gm = pl.cdiv(M, tmb)
    need_mask = (M % tmb) != 0

    def stats_kernel(x_ref, s_ref, ss_ref):
        mi = pl.program_id(0)

        @pl.when(mi == 0)
        def _():
            s_ref[...] = jnp.zeros_like(s_ref)
            ss_ref[...] = jnp.zeros_like(ss_ref)

        xv = x_ref[...]
        if need_mask:
            rows = jax.lax.broadcasted_iota(jnp.int32, xv.shape, 0) + mi * tmb
            xv = jnp.where(rows < M, xv, 0.0)
        s_ref[...] += jnp.sum(xv, axis=0, keepdims=True)
        ss_ref[...] += jnp.sum(xv * xv, axis=0, keepdims=True)

    s, ss = pl.pallas_call(
        stats_kernel,
        out_shape=(jax.ShapeDtypeStruct((1, C), jnp.float32),
                   jax.ShapeDtypeStruct((1, C), jnp.float32)),
        grid=(gm,),
        in_specs=[pl.BlockSpec((tmb, C), lambda m: (m, 0))],
        out_specs=(pl.BlockSpec((1, C), lambda m: (0, 0)),
                   pl.BlockSpec((1, C), lambda m: (0, 0))),
        compiler_params=pltpu.CompilerParams(
            dimension_semantics=("arbitrary",)),
    )(x)

    mean = s / M
    var = jnp.maximum(ss / M - mean * mean, 0.0)      # biased variance
    scale = gamma.reshape(1, C) * jax.lax.rsqrt(var + eps)
    shift = beta.reshape(1, C) - mean * scale

    # ---- pass 2: elementwise normalize + affine + ReLU ---------------------
    tma = min(512, M)
    tc = C if C <= 512 else 512
    grid = (pl.cdiv(M, tma), C // tc)

    def apply_kernel(x_ref, sc_ref, sh_ref, o_ref):
        o_ref[...] = jnp.maximum(x_ref[...] * sc_ref[...] + sh_ref[...], 0.0)

    return pl.pallas_call(
        apply_kernel,
        out_shape=jax.ShapeDtypeStruct((M, C), jnp.float32),
        grid=grid,
        in_specs=[
            pl.BlockSpec((tma, tc), lambda m, c: (m, c)),
            pl.BlockSpec((1, tc), lambda m, c: (0, c)),
            pl.BlockSpec((1, tc), lambda m, c: (0, c)),
        ],
        out_specs=pl.BlockSpec((tma, tc), lambda m, c: (m, c)),
        compiler_params=pltpu.CompilerParams(
            dimension_semantics=("parallel", "parallel")),
    )(x, scale, shift)


# ----------------------------------------------------------------------------
# Glue (NHWC patch extraction / parameter setup) in plain JAX
# ----------------------------------------------------------------------------
def im2col_nhwc(x, k=4, stride=2, pad=1):
    """x: (N, H, W, C) -> cols: (N*Ho*Wo, k*k*C) with (kh, kw, c) ordering."""
    N, H, W, C = x.shape
    xp = jnp.pad(x, ((0, 0), (pad, pad), (pad, pad), (0, 0)))
    Ho = (H + 2 * pad - k) // stride + 1
    Wo = (W + 2 * pad - k) // stride + 1
    patches = [
        xp[:, ki:ki + stride * Ho:stride, kj:kj + stride * Wo:stride, :]
        for ki in range(k) for kj in range(k)
    ]
    cols = jnp.concatenate(patches, axis=-1)          # (N, Ho, Wo, k*k*C)
    return cols.reshape(N * Ho * Wo, k * k * C), Ho, Wo


def init_linear_t(key, in_f, out_f):
    """Pre-transposed (in, out_padded) bf16 weight + padded f32 bias."""
    k1, k2 = jax.random.split(key)
    bound = 1.0 / math.sqrt(in_f)
    out_p = _round_up(out_f, 128)
    w = jax.random.uniform(k1, (in_f, out_f), jnp.float32, -bound, bound)
    b = jax.random.uniform(k2, (out_f,), jnp.float32, -bound, bound)
    w = jnp.pad(w, ((0, 0), (0, out_p - out_f))).astype(jnp.bfloat16)
    b = jnp.pad(b, (0, out_p - out_f)).astype(jnp.float32)
    return w, b


def init_conv_t(key, cin, cout, k=4):
    # conv weight flattened in (kh, kw, cin) order to match im2col_nhwc.
    return init_linear_t(key, cin * k * k, cout)


def init_params(key, noise_dim, num_categories, cont_dim, img_channels,
                img_size, point_cloud_dim, img_feature_dim=512):
    keys = jax.random.split(key, 7)
    p = {}
    p["fc_n_w"], p["fc_n_b"] = init_linear_t(
        keys[0], noise_dim + num_categories + cont_dim, img_feature_dim)
    p["c1_w"], p["c1_b"] = init_conv_t(keys[1], img_channels, 64)
    p["c2_w"], p["c2_b"] = init_conv_t(keys[2], 64, 128)
    p["c3_w"], p["c3_b"] = init_conv_t(keys[3], 128, 256)
    p["c4_w"], p["c4_b"] = init_conv_t(keys[4], 256, 512)
    for c, name in ((128, "bn2"), (256, "bn3"), (512, "bn4")):
        p[f"{name}_g"] = jnp.ones((c,), jnp.float32)
        p[f"{name}_b"] = jnp.zeros((c,), jnp.float32)
    flat_dim = 512 * (img_size // 16) * (img_size // 16)
    p["fc_img_w"], p["fc_img_b"] = init_linear_t(keys[5], flat_dim,
                                                 img_feature_dim)
    p["fc_c_w"], p["fc_c_b"] = init_linear_t(keys[6], img_feature_dim * 2,
                                             point_cloud_dim)
    return p


def infogan_generator_forward(params, img, noise, c_cat, c_cont,
                              point_cloud_dim):
    B = img.shape[0]

    # fc_noise_cat_cont
    combined = jnp.concatenate([noise, c_cat, c_cont], axis=1)
    transformed_noise = linear_pallas(combined, params["fc_n_w"],
                                      params["fc_n_b"], 512)

    # NHWC activations end-to-end.
    x = jnp.transpose(img, (0, 2, 3, 1))

    # conv1 + ReLU (64 output channels computed lane-padded to 128, sliced)
    cols, ho, wo = im2col_nhwc(x)
    y = linear_pallas(cols, params["c1_w"], params["c1_b"], 64, relu=True)
    x = y.reshape(B, ho, wo, 64)

    # conv2 + BN + ReLU
    cols, ho, wo = im2col_nhwc(x)
    y = linear_pallas(cols, params["c2_w"], params["c2_b"], 128)
    y = batchnorm_relu_pallas(y, params["bn2_g"], params["bn2_b"])
    x = y.reshape(B, ho, wo, 128)

    # conv3 + BN + ReLU
    cols, ho, wo = im2col_nhwc(x)
    y = linear_pallas(cols, params["c3_w"], params["c3_b"], 256)
    y = batchnorm_relu_pallas(y, params["bn3_g"], params["bn3_b"])
    x = y.reshape(B, ho, wo, 256)

    # conv4 + BN + ReLU
    cols, ho, wo = im2col_nhwc(x)
    y = linear_pallas(cols, params["c4_w"], params["c4_b"], 512)
    y = batchnorm_relu_pallas(y, params["bn4_g"], params["bn4_b"])
    x = y.reshape(B, ho, wo, 512)

    # Flatten in NCHW order (matching nn.Flatten on NCHW activations),
    # then Linear + ReLU.
    flat = jnp.transpose(x, (0, 3, 1, 2)).reshape(B, -1)
    img_features = linear_pallas(flat, params["fc_img_w"],
                                 params["fc_img_b"], 512, relu=True)

    # concat + fc_combined
    combined_features = jnp.concatenate([img_features, transformed_noise],
                                        axis=1)
    point_cloud = linear_pallas(combined_features, params["fc_c_w"],
                                params["fc_c_b"], point_cloud_dim)

    # TODO(synk): reference hard-codes .view(-1, 26317, 3); generalized here.
    return point_cloud.reshape(-1, point_cloud_dim // 3, 3)


# ----------------------------------------------------------------------------
if __name__ == "__main__":
    # Small shapes consistent with the module structure.
    batch = 2
    noise_dim = 16
    num_categories = 4
    cont_dim = 5
    img_channels = 3
    img_size = 16                 # img_size // 16 == 1
    n_points = 128
    point_cloud_dim = n_points * 3

    key = jax.random.PRNGKey(0)
    kp, ki, kn, kc, kk = jax.random.split(key, 5)

    params = init_params(kp, noise_dim, num_categories, cont_dim,
                         img_channels, img_size, point_cloud_dim)

    img = jax.random.normal(ki, (batch, img_channels, img_size, img_size),
                            jnp.float32)
    noise = jax.random.normal(kn, (batch, noise_dim), jnp.float32)
    cat_idx = jax.random.randint(kc, (batch,), 0, num_categories)
    c_cat = jax.nn.one_hot(cat_idx, num_categories, dtype=jnp.float32)
    c_cont = jax.random.normal(kk, (batch, cont_dim), jnp.float32)

    fwd = jax.jit(functools.partial(infogan_generator_forward,
                                    point_cloud_dim=point_cloud_dim))
    point_cloud = fwd(params, img, noise, c_cat, c_cont)
    point_cloud = jax.block_until_ready(point_cloud)

    assert point_cloud.shape == (batch, n_points, 3), point_cloud.shape
    assert bool(jnp.all(jnp.isfinite(point_cloud)))
    print("KERNEL_OK")
</pallas_src>

<mosaic_0001>
module attributes {stable_mosaic.version = 11 : i64} {
  func.func @kernel(%arg0: i32, %arg1: i32, %arg2: i32, %arg3: memref<128x48xf32, #tpu.memory_space<vmem>>, %arg4: memref<48x128xbf16, #tpu.memory_space<vmem>>, %arg5: memref<1x128xf32, #tpu.memory_space<vmem>>, %arg6: memref<128x128xf32, #tpu.memory_space<vmem>>) attributes {dimension_semantics = [#tpu.dimension_semantics<parallel>, #tpu.dimension_semantics<parallel>, #tpu.dimension_semantics<arbitrary>], iteration_bounds = array<i64: 1, 1, 1>, scalar_prefetch = 0 : i64, scratch_operands = 0 : i64, tpu.core_type = #tpu.core_type<tc>, window_params = [{transform_indices = @transform_0, window_bounds = array<i64: 128, 48>}, {transform_indices = @transform_1, window_bounds = array<i64: 48, 128>}, {transform_indices = @transform_2, window_bounds = array<i64: 1, 128>}, {transform_indices = @transform_3, window_bounds = array<i64: 128, 128>}]} {
    %c0 = arith.constant 0 : index
    %c0_0 = arith.constant 0 : index
    %0 = vector.load %arg3[%c0, %c0_0] : memref<128x48xf32, #tpu.memory_space<vmem>>, vector<128x48xf32>
    %1 = arith.truncf %0 : vector<128x48xf32> to vector<128x48xbf16>
    %c0_1 = arith.constant 0 : index
    %c0_2 = arith.constant 0 : index
    %2 = vector.load %arg4[%c0_1, %c0_2] : memref<48x128xbf16, #tpu.memory_space<vmem>>, vector<48x128xbf16>
    %cst = arith.constant dense<0.000000e+00> : vector<128x128xf32>
    %3 = tpu.matmul %1, %2, %cst {dimension_numbers = #tpu.dot_dimension_numbers<[1], [0], [0], [1], [0, 0, 1, 1], [], []>} : vector<128x48xbf16>, vector<48x128xbf16>, vector<128x128xf32> -> vector<128x128xf32>
    %c0_3 = arith.constant 0 : index
    %c0_4 = arith.constant 0 : index
    %4 = vector.load %arg5[%c0_3, %c0_4] : memref<1x128xf32, #tpu.memory_space<vmem>>, vector<1x128xf32>
    %5 = vector.broadcast %4 : vector<1x128xf32> to vector<128x128xf32>
    %6 = arith.addf %3, %5 : vector<128x128xf32>
    %cst_5 = arith.constant 0.000000e+00 : f32
    %7 = vector.broadcast %cst_5 : f32 to vector<128x128xf32>
    %8 = arith.maximumf %6, %7 : vector<128x128xf32>
    %c0_6 = arith.constant 0 : index
    %c0_7 = arith.constant 0 : index
    %9 = vector.load %arg6[%c0_6, %c0_7] : memref<128x128xf32, #tpu.memory_space<vmem>>, vector<128x128xf32>
    tpu.vector_store %arg6[%c0_6, %c0_7], %8 {strides = array<i32>} : memref<128x128xf32, #tpu.memory_space<vmem>>, vector<128x128xf32>,
    return
  }
  func.func @transform_0(%arg0: i32, %arg1: i32, %arg2: i32) -> (i32, i32) {
    %c0_i32 = arith.constant 0 : i32
    return %arg0, %arg2 : i32, i32
  }
  func.func @transform_1(%arg0: i32, %arg1: i32, %arg2: i32) -> (i32, i32) {
    %c0_i32 = arith.constant 0 : i32
    return %arg2, %arg1 : i32, i32
  }
  func.func @transform_2(%arg0: i32, %arg1: i32, %arg2: i32) -> (i32, i32) {
    %c0_i32 = arith.constant 0 : i32
    %c0_i32_0 = arith.constant 0 : i32
    return %c0_i32, %arg1 : i32, i32
  }
  func.func @transform_3(%arg0: i32, %arg1: i32, %arg2: i32) -> (i32, i32) {
    %c0_i32 = arith.constant 0 : i32
    return %arg0, %arg1 : i32, i32
  }
}

module attributes {stable_mosaic.version = 11 : i64} {
  func.func @kernel(%arg0: i32, %arg1: i32, %arg2: i32, %arg3: memref<32x1024xf32, #tpu.memory_space<vmem>>, %arg4: memref<1024x128xbf16, #tpu.memory_space<vmem>>, %arg5: memref<1x128xf32, #tpu.memory_space<vmem>>, %arg6: memref<32x128xf32, #tpu.memory_space<vmem>>) attributes {dimension_semantics = [#tpu.dimension_semantics<parallel>, #tpu.dimension_semantics<parallel>, #tpu.dimension_semantics<arbitrary>], iteration_bounds = array<i64: 1, 1, 1>, scalar_prefetch = 0 : i64, scratch_operands = 0 : i64, tpu.core_type = #tpu.core_type<tc>, window_params = [{transform_indices = @transform_0, window_bounds = array<i64: 32, 1024>}, {transform_indices = @transform_1, window_bounds = array<i64: 1024, 128>}, {transform_indices = @transform_2, window_bounds = array<i64: 1, 128>}, {transform_indices = @transform_3, window_bounds = array<i64: 32, 128>}]} {
    %c0 = arith.constant 0 : index
    %c0_0 = arith.constant 0 : index
    %0 = vector.load %arg3[%c0, %c0_0] : memref<32x1024xf32, #tpu.memory_space<vmem>>, vector<32x1024xf32>
    %1 = arith.truncf %0 : vector<32x1024xf32> to vector<32x1024xbf16>
    %c0_1 = arith.constant 0 : index
    %c0_2 = arith.constant 0 : index
    %2 = vector.load %arg4[%c0_1, %c0_2] : memref<1024x128xbf16, #tpu.memory_space<vmem>>, vector<1024x128xbf16>
    %cst = arith.constant dense<0.000000e+00> : vector<32x128xf32>
    %3 = tpu.matmul %1, %2, %cst {dimension_numbers = #tpu.dot_dimension_numbers<[1], [0], [0], [1], [0, 0, 1, 1], [], []>} : vector<32x1024xbf16>, vector<1024x128xbf16>, vector<32x128xf32> -> vector<32x128xf32>
    %c0_3 = arith.constant 0 : index
    %c0_4 = arith.constant 0 : index
    %4 = vector.load %arg5[%c0_3, %c0_4] : memref<1x128xf32, #tpu.memory_space<vmem>>, vector<1x128xf32>
    %5 = vector.broadcast %4 : vector<1x128xf32> to vector<32x128xf32>
    %6 = arith.addf %3, %5 : vector<32x128xf32>
    %c0_5 = arith.constant 0 : index
    %c0_6 = arith.constant 0 : index
    %7 = vector.load %arg6[%c0_5, %c0_6] : memref<32x128xf32, #tpu.memory_space<vmem>>, vector<32x128xf32>
    tpu.vector_store %arg6[%c0_5, %c0_6], %6 {strides = array<i32>} : memref<32x128xf32, #tpu.memory_space<vmem>>, vector<32x128xf32>,
    return
  }
  func.func @transform_0(%arg0: i32, %arg1: i32, %arg2: i32) -> (i32, i32) {
    %c0_i32 = arith.constant 0 : i32
    return %arg0, %arg2 : i32, i32
  }
  func.func @transform_1(%arg0: i32, %arg1: i32, %arg2: i32) -> (i32, i32) {
    %c0_i32 = arith.constant 0 : i32
    return %arg2, %arg1 : i32, i32
  }
  func.func @transform_2(%arg0: i32, %arg1: i32, %arg2: i32) -> (i32, i32) {
    %c0_i32 = arith.constant 0 : i32
    %c0_i32_0 = arith.constant 0 : i32
    return %c0_i32, %arg1 : i32, i32
  }
  func.func @transform_3(%arg0: i32, %arg1: i32, %arg2: i32) -> (i32, i32) {
    %c0_i32 = arith.constant 0 : i32
    return %arg0, %arg1 : i32, i32
  }
}

module attributes {stable_mosaic.version = 11 : i64} {
  func.func @stats_kernel(%arg0: i32, %arg1: memref<32x128xf32, #tpu.memory_space<vmem>>, %arg2: memref<1x128xf32, #tpu.memory_space<vmem>>, %arg3: memref<1x128xf32, #tpu.memory_space<vmem>>) attributes {dimension_semantics = [#tpu.dimension_semantics<arbitrary>], iteration_bounds = array<i64: 1>, scalar_prefetch = 0 : i64, scratch_operands = 0 : i64, tpu.core_type = #tpu.core_type<tc>, window_params = [{transform_indices = @transform_0, window_bounds = array<i64: 32, 128>}, {pipeline_mode = #tpu.pipeline_mode<synchronous>, transform_indices = @transform_1, window_bounds = array<i64: 1, 128>}, {pipeline_mode = #tpu.pipeline_mode<synchronous>, transform_indices = @transform_2, window_bounds = array<i64: 1, 128>}]} {
    %c0_i32 = arith.constant 0 : i32
    %0 = arith.cmpi eq, %arg0, %c0_i32 : i32
    %1 = arith.extui %0 : i1 to i32
    %c0_i32_0 = arith.constant 0 : i32
    %2 = arith.cmpi ne, %1, %c0_i32_0 : i32
    scf.if %2 {
      %cst_11 = arith.constant 0.000000e+00 : f32
      %15 = vector.broadcast %cst_11 : f32 to vector<1x128xf32>
      %c0_12 = arith.constant 0 : index
      %c0_13 = arith.constant 0 : index
      %16 = vector.load %arg2[%c0_12, %c0_13] : memref<1x128xf32, #tpu.memory_space<vmem>>, vector<1x128xf32>
      tpu.vector_store %arg2[%c0_12, %c0_13], %15 {strides = array<i32>} : memref<1x128xf32, #tpu.memory_space<vmem>>, vector<1x128xf32>,
      %cst_14 = arith.constant 0.000000e+00 : f32
      %17 = vector.broadcast %cst_14 : f32 to vector<1x128xf32>
      %c0_15 = arith.constant 0 : index
      %c0_16 = arith.constant 0 : index
      %18 = vector.load %arg3[%c0_15, %c0_16] : memref<1x128xf32, #tpu.memory_space<vmem>>, vector<1x128xf32>
      tpu.vector_store %arg3[%c0_15, %c0_16], %17 {strides = array<i32>} : memref<1x128xf32, #tpu.memory_space<vmem>>, vector<1x128xf32>,
    } else {
    }
    %c0 = arith.constant 0 : index
    %c0_1 = arith.constant 0 : index
    %3 = vector.load %arg1[%c0, %c0_1] : memref<32x128xf32, #tpu.memory_space<vmem>>, vector<32x128xf32>
    %c0_2 = arith.constant 0 : index
    %c0_3 = arith.constant 0 : index
    %4 = vector.load %arg2[%c0_2, %c0_3] : memref<1x128xf32, #tpu.memory_space<vmem>>, vector<1x128xf32>
    %cst = arith.constant dense<0.000000e+00> : vector<128xf32>
    %5 = vector.multi_reduction <add>, %3, %cst [0] : vector<32x128xf32> to vector<128xf32>
    %6 = vector.shape_cast %5 : vector<128xf32> to vector<1x128xf32>
    %7 = arith.addf %4, %6 : vector<1x128xf32>
    %c0_4 = arith.constant 0 : index
    %c0_5 = arith.constant 0 : index
    %8 = vector.load %arg2[%c0_4, %c0_5] : memref<1x128xf32, #tpu.memory_space<vmem>>, vector<1x128xf32>
    tpu.vector_store %arg2[%c0_4, %c0_5], %7 {strides = array<i32>} : memref<1x128xf32, #tpu.memory_space<vmem>>, vector<1x128xf32>,
    %c0_6 = arith.constant 0 : index
    %c0_7 = arith.constant 0 : index
    %9 = vector.load %arg3[%c0_6, %c0_7] : memref<1x128xf32, #tpu.memory_space<vmem>>, vector<1x128xf32>
    %10 = arith.mulf %3, %3 : vector<32x128xf32>
    %cst_8 = arith.constant dense<0.000000e+00> : vector<128xf32>
    %11 = vector.multi_reduction <add>, %10, %cst_8 [0] : vector<32x128xf32> to vector<128xf32>
    %12 = vector.shape_cast %11 : vector<128xf32> to vector<1x128xf32>
    %13 = arith.addf %9, %12 : vector<1x128xf32>
    %c0_9 = arith.constant 0 : index
    %c0_10 = arith.constant 0 : index
    %14 = vector.load %arg3[%c0_9, %c0_10] : memref<1x128xf32, #tpu.memory_space<vmem>>, vector<1x128xf32>
    tpu.vector_store %arg3[%c0_9, %c0_10], %13 {strides = array<i32>} : memref<1x128xf32, #tpu.memory_space<vmem>>, vector<1x128xf32>,
    return
  }
  func.func @transform_0(%arg0: i32) -> (i32, i32) {
    %c0_i32 = arith.constant 0 : i32
    %c0_i32_0 = arith.constant 0 : i32
    return %arg0, %c0_i32 : i32, i32
  }
  func.func @transform_1(%arg0: i32) -> (i32, i32) {
    %c0_i32 = arith.constant 0 : i32
    %c0_i32_0 = arith.constant 0 : i32
    %c0_i32_1 = arith.constant 0 : i32
    return %c0_i32, %c0_i32_0 : i32, i32
  }
  func.func @transform_2(%arg0: i32) -> (i32, i32) {
    %c0_i32 = arith.constant 0 : i32
    %c0_i32_0 = arith.constant 0 : i32
    %c0_i32_1 = arith.constant 0 : i32
    return %c0_i32, %c0_i32_0 : i32, i32
  }
}

module attributes {stable_mosaic.version = 11 : i64} {
  func.func @apply_kernel(%arg0: i32, %arg1: i32, %arg2: memref<32x128xf32, #tpu.memory_space<vmem>>, %arg3: memref<1x128xf32, #tpu.memory_space<vmem>>, %arg4: memref<1x128xf32, #tpu.memory_space<vmem>>, %arg5: memref<32x128xf32, #tpu.memory_space<vmem>>) attributes {dimension_semantics = [#tpu.dimension_semantics<parallel>, #tpu.dimension_semantics<parallel>], iteration_bounds = array<i64: 1, 1>, scalar_prefetch = 0 : i64, scratch_operands = 0 : i64, tpu.core_type = #tpu.core_type<tc>, window_params = [{transform_indices = @transform_0, window_bounds = array<i64: 32, 128>}, {transform_indices = @transform_1, window_bounds = array<i64: 1, 128>}, {transform_indices = @transform_2, window_bounds = array<i64: 1, 128>}, {transform_indices = @transform_3, window_bounds = array<i64: 32, 128>}]} {
    %c0 = arith.constant 0 : index
    %c0_0 = arith.constant 0 : index
    %0 = vector.load %arg2[%c0, %c0_0] : memref<32x128xf32, #tpu.memory_space<vmem>>, vector<32x128xf32>
    %c0_1 = arith.constant 0 : index
    %c0_2 = arith.constant 0 : index
    %1 = vector.load %arg3[%c0_1, %c0_2] : memref<1x128xf32, #tpu.memory_space<vmem>>, vector<1x128xf32>
    %2 = vector.broadcast %1 : vector<1x128xf32> to vector<32x128xf32>
    %3 = arith.mulf %0, %2 : vector<32x128xf32>
    %c0_3 = arith.constant 0 : index
    %c0_4 = arith.constant 0 : index
    %4 = vector.load %arg4[%c0_3, %c0_4] : memref<1x128xf32, #tpu.memory_space<vmem>>, vector<1x128xf32>
    %5 = vector.broadcast %4 : vector<1x128xf32> to vector<32x128xf32>
    %6 = arith.addf %3, %5 : vector<32x128xf32>
    %cst = arith.constant 0.000000e+00 : f32
    %7 = vector.broadcast %cst : f32 to vector<32x128xf32>
    %8 = arith.maximumf %6, %7 : vector<32x128xf32>
    %c0_5 = arith.constant 0 : index
    %c0_6 = arith.constant 0 : index
    %9 = vector.load %arg5[%c0_5, %c0_6] : memref<32x128xf32, #tpu.memory_space<vmem>>, vector<32x128xf32>
    tpu.vector_store %arg5[%c0_5, %c0_6], %8 {strides = array<i32>} : memref<32x128xf32, #tpu.memory_space<vmem>>, vector<32x128xf32>,
    return
  }
  func.func @transform_0(%arg0: i32, %arg1: i32) -> (i32, i32) {
    %c0_i32 = arith.constant 0 : i32
    return %arg0, %arg1 : i32, i32
  }
  func.func @transform_1(%arg0: i32, %arg1: i32) -> (i32, i32) {
    %c0_i32 = arith.constant 0 : i32
    %c0_i32_0 = arith.constant 0 : i32
    return %c0_i32, %arg1 : i32, i32
  }
  func.func @transform_2(%arg0: i32, %arg1: i32) -> (i32, i32) {
    %c0_i32 = arith.constant 0 : i32
    %c0_i32_0 = arith.constant 0 : i32
    return %c0_i32, %arg1 : i32, i32
  }
  func.func @transform_3(%arg0: i32, %arg1: i32) -> (i32, i32) {
    %c0_i32 = arith.constant 0 : i32
    return %arg0, %arg1 : i32, i32
  }
}

module attributes {stable_mosaic.version = 11 : i64} {
  func.func @stats_kernel(%arg0: i32, %arg1: memref<8x256xf32, #tpu.memory_space<vmem>>, %arg2: memref<1x256xf32, #tpu.memory_space<vmem>>, %arg3: memref<1x256xf32, #tpu.memory_space<vmem>>) attributes {dimension_semantics = [#tpu.dimension_semantics<arbitrary>], iteration_bounds = array<i64: 1>, scalar_prefetch = 0 : i64, scratch_operands = 0 : i64, tpu.core_type = #tpu.core_type<tc>, window_params = [{transform_indices = @transform_0, window_bounds = array<i64: 8, 256>}, {pipeline_mode = #tpu.pipeline_mode<synchronous>, transform_indices = @transform_1, window_bounds = array<i64: 1, 256>}, {pipeline_mode = #tpu.pipeline_mode<synchronous>, transform_indices = @transform_2, window_bounds = array<i64: 1, 256>}]} {
    %c0_i32 = arith.constant 0 : i32
    %0 = arith.cmpi eq, %arg0, %c0_i32 : i32
    %1 = arith.extui %0 : i1 to i32
    %c0_i32_0 = arith.constant 0 : i32
    %2 = arith.cmpi ne, %1, %c0_i32_0 : i32
    scf.if %2 {
      %cst_11 = arith.constant 0.000000e+00 : f32
      %15 = vector.broadcast %cst_11 : f32 to vector<1x256xf32>
      %c0_12 = arith.constant 0 : index
      %c0_13 = arith.constant 0 : index
      %16 = vector.load %arg2[%c0_12, %c0_13] : memref<1x256xf32, #tpu.memory_space<vmem>>, vector<1x256xf32>
      tpu.vector_store %arg2[%c0_12, %c0_13], %15 {strides = array<i32>} : memref<1x256xf32, #tpu.memory_space<vmem>>, vector<1x256xf32>,
      %cst_14 = arith.constant 0.000000e+00 : f32
      %17 = vector.broadcast %cst_14 : f32 to vector<1x256xf32>
      %c0_15 = arith.constant 0 : index
      %c0_16 = arith.constant 0 : index
      %18 = vector.load %arg3[%c0_15, %c0_16] : memref<1x256xf32, #tpu.memory_space<vmem>>, vector<1x256xf32>
      tpu.vector_store %arg3[%c0_15, %c0_16], %17 {strides = array<i32>} : memref<1x256xf32, #tpu.memory_space<vmem>>, vector<1x256xf32>,
    } else {
    }
    %c0 = arith.constant 0 : index
    %c0_1 = arith.constant 0 : index
    %3 = vector.load %arg1[%c0, %c0_1] : memref<8x256xf32, #tpu.memory_space<vmem>>, vector<8x256xf32>
    %c0_2 = arith.constant 0 : index
    %c0_3 = arith.constant 0 : index
    %4 = vector.load %arg2[%c0_2, %c0_3] : memref<1x256xf32, #tpu.memory_space<vmem>>, vector<1x256xf32>
    %cst = arith.constant dense<0.000000e+00> : vector<256xf32>
    %5 = vector.multi_reduction <add>, %3, %cst [0] : vector<8x256xf32> to vector<256xf32>
    %6 = vector.shape_cast %5 : vector<256xf32> to vector<1x256xf32>
    %7 = arith.addf %4, %6 : vector<1x256xf32>
    %c0_4 = arith.constant 0 : index
    %c0_5 = arith.constant 0 : index
    %8 = vector.load %arg2[%c0_4, %c0_5] : memref<1x256xf32, #tpu.memory_space<vmem>>, vector<1x256xf32>
    tpu.vector_store %arg2[%c0_4, %c0_5], %7 {strides = array<i32>} : memref<1x256xf32, #tpu.memory_space<vmem>>, vector<1x256xf32>,
    %c0_6 = arith.constant 0 : index
    %c0_7 = arith.constant 0 : index
    %9 = vector.load %arg3[%c0_6, %c0_7] : memref<1x256xf32, #tpu.memory_space<vmem>>, vector<1x256xf32>
    %10 = arith.mulf %3, %3 : vector<8x256xf32>
    %cst_8 = arith.constant dense<0.000000e+00> : vector<256xf32>
    %11 = vector.multi_reduction <add>, %10, %cst_8 [0] : vector<8x256xf32> to vector<256xf32>
    %12 = vector.shape_cast %11 : vector<256xf32> to vector<1x256xf32>
    %13 = arith.addf %9, %12 : vector<1x256xf32>
    %c0_9 = arith.constant 0 : index
    %c0_10 = arith.constant 0 : index
    %14 = vector.load %arg3[%c0_9, %c0_10] : memref<1x256xf32, #tpu.memory_space<vmem>>, vector<1x256xf32>
    tpu.vector_store %arg3[%c0_9, %c0_10], %13 {strides = array<i32>} : memref<1x256xf32, #tpu.memory_space<vmem>>, vector<1x256xf32>,
    return
  }
  func.func @transform_0(%arg0: i32) -> (i32, i32) {
    %c0_i32 = arith.constant 0 : i32
    %c0_i32_0 = arith.constant 0 : i32
    return %arg0, %c0_i32 : i32, i32
  }
  func.func @transform_1(%arg0: i32) -> (i32, i32) {
    %c0_i32 = arith.constant 0 : i32
    %c0_i32_0 = arith.constant 0 : i32
    %c0_i32_1 = arith.constant 0 : i32
    return %c0_i32, %c0_i32_0 : i32, i32
  }
  func.func @transform_2(%arg0: i32) -> (i32, i32) {
    %c0_i32 = arith.constant 0 : i32
    %c0_i32_0 = arith.constant 0 : i32
    %c0_i32_1 = arith.constant 0 : i32
    return %c0_i32, %c0_i32_0 : i32, i32
  }
}

module attributes {stable_mosaic.version = 11 : i64} {
  func.func @kernel(%arg0: i32, %arg1: i32, %arg2: i32, %arg3: memref<8x512xf32, #tpu.memory_space<vmem>>, %arg4: memref<512x256xbf16, #tpu.memory_space<vmem>>, %arg5: memref<1x256xf32, #tpu.memory_space<vmem>>, %arg6: memref<8x256xf32, #tpu.memory_space<vmem>>, %arg7: memref<8x256xf32, #tpu.memory_space<vmem>>) attributes {dimension_semantics = [#tpu.dimension_semantics<parallel>, #tpu.dimension_semantics<parallel>, #tpu.dimension_semantics<arbitrary>], iteration_bounds = array<i64: 1, 1, 4>, scalar_prefetch = 0 : i64, scratch_operands = 1 : i64, tpu.core_type = #tpu.core_type<tc>, window_params = [{transform_indices = @transform_0, window_bounds = array<i64: 8, 512>}, {transform_indices = @transform_1, window_bounds = array<i64: 512, 256>}, {transform_indices = @transform_2, window_bounds = array<i64: 1, 256>}, {transform_indices = @transform_3, window_bounds = array<i64: 8, 256>}]} {
    %c0_i32 = arith.constant 0 : i32
    %0 = arith.cmpi eq, %arg2, %c0_i32 : i32
    %1 = arith.extui %0 : i1 to i32
    %c0_i32_0 = arith.constant 0 : i32
    %2 = arith.cmpi ne, %1, %c0_i32_0 : i32
    scf.if %2 {
      %cst_9 = arith.constant 0.000000e+00 : f32
      %13 = vector.broadcast %cst_9 : f32 to vector<8x256xf32>
      %c0_10 = arith.constant 0 : index
      %c0_11 = arith.constant 0 : index
      %14 = vector.load %arg7[%c0_10, %c0_11] : memref<8x256xf32, #tpu.memory_space<vmem>>, vector<8x256xf32>
      tpu.vector_store %arg7[%c0_10, %c0_11], %13 {strides = array<i32>} : memref<8x256xf32, #tpu.memory_space<vmem>>, vector<8x256xf32>,
    } else {
    }
    %c0 = arith.constant 0 : index
    %c0_1 = arith.constant 0 : index
    %3 = vector.load %arg7[%c0, %c0_1] : memref<8x256xf32, #tpu.memory_space<vmem>>, vector<8x256xf32>
    %c0_2 = arith.constant 0 : index
    %c0_3 = arith.constant 0 : index
    %4 = vector.load %arg3[%c0_2, %c0_3] : memref<8x512xf32, #tpu.memory_space<vmem>>, vector<8x512xf32>
    %5 = arith.truncf %4 : vector<8x512xf32> to vector<8x512xbf16>
    %c0_4 = arith.constant 0 : index
    %c0_5 = arith.constant 0 : index
    %6 = vector.load %arg4[%c0_4, %c0_5] : memref<512x256xbf16, #tpu.memory_space<vmem>>, vector<512x256xbf16>
    %cst = arith.constant dense<0.000000e+00> : vector<8x256xf32>
    %7 = tpu.matmul %5, %6, %cst {dimension_numbers = #tpu.dot_dimension_numbers<[1], [0], [0], [1], [0, 0, 1, 1], [], []>} : vector<8x512xbf16>, vector<512x256xbf16>, vector<8x256xf32> -> vector<8x256xf32>
    %8 = arith.addf %3, %7 : vector<8x256xf32>
    %c0_6 = arith.constant 0 : index
    %c0_7 = arith.constant 0 : index
    %9 = vector.load %arg7[%c0_6, %c0_7] : memref<8x256xf32, #tpu.memory_space<vmem>>, vector<8x256xf32>
    tpu.vector_store %arg7[%c0_6, %c0_7], %8 {strides = array<i32>} : memref<8x256xf32, #tpu.memory_space<vmem>>, vector<8x256xf32>,
    %c3_i32 = arith.constant 3 : i32
    %10 = arith.cmpi eq, %arg2, %c3_i32 : i32
    %11 = arith.extui %10 : i1 to i32
    %c0_i32_8 = arith.constant 0 : i32
    %12 = arith.cmpi ne, %11, %c0_i32_8 : i32
    scf.if %12 {
      %c0_9 = arith.constant 0 : index
      %c0_10 = arith.constant 0 : index
      %13 = vector.load %arg7[%c0_9, %c0_10] : memref<8x256xf32, #tpu.memory_space<vmem>>, vector<8x256xf32>
      %c0_11 = arith.constant 0 : index
      %c0_12 = arith.constant 0 : index
      %14 = vector.load %arg5[%c0_11, %c0_12] : memref<1x256xf32, #tpu.memory_space<vmem>>, vector<1x256xf32>
      %15 = vector.broadcast %14 : vector<1x256xf32> to vector<8x256xf32>
      %16 = arith.addf %13, %15 : vector<8x256xf32>
      %c0_13 = arith.constant 0 : index
      %c0_14 = arith.constant 0 : index
      %17 = vector.load %arg6[%c0_13, %c0_14] : memref<8x256xf32, #tpu.memory_space<vmem>>, vector<8x256xf32>
      tpu.vector_store %arg6[%c0_13, %c0_14], %16 {strides = array<i32>} : memref<8x256xf32, #tpu.memory_space<vmem>>, vector<8x256xf32>,
    } else {
    }
    return
  }
  func.func @transform_0(%arg0: i32, %arg1: i32, %arg2: i32) -> (i32, i32) {
    %c0_i32 = arith.constant 0 : i32
    return %arg0, %arg2 : i32, i32
  }
  func.func @transform_1(%arg0: i32, %arg1: i32, %arg2: i32) -> (i32, i32) {
    %c0_i32 = arith.constant 0 : i32
    return %arg2, %arg1 : i32, i32
  }
  func.func @transform_2(%arg0: i32, %arg1: i32, %arg2: i32) -> (i32, i32) {
    %c0_i32 = arith.constant 0 : i32
    %c0_i32_0 = arith.constant 0 : i32
    return %c0_i32, %arg1 : i32, i32
  }
  func.func @transform_3(%arg0: i32, %arg1: i32, %arg2: i32) -> (i32, i32) {
    %c0_i32 = arith.constant 0 : i32
    return %arg0, %arg1 : i32, i32
  }
}

module attributes {stable_mosaic.version = 11 : i64} {
  func.func @apply_kernel(%arg0: i32, %arg1: i32, %arg2: memref<8x256xf32, #tpu.memory_space<vmem>>, %arg3: memref<1x256xf32, #tpu.memory_space<vmem>>, %arg4: memref<1x256xf32, #tpu.memory_space<vmem>>, %arg5: memref<8x256xf32, #tpu.memory_space<vmem>>) attributes {dimension_semantics = [#tpu.dimension_semantics<parallel>, #tpu.dimension_semantics<parallel>], iteration_bounds = array<i64: 1, 1>, scalar_prefetch = 0 : i64, scratch_operands = 0 : i64, tpu.core_type = #tpu.core_type<tc>, window_params = [{transform_indices = @transform_0, window_bounds = array<i64: 8, 256>}, {transform_indices = @transform_1, window_bounds = array<i64: 1, 256>}, {transform_indices = @transform_2, window_bounds = array<i64: 1, 256>}, {transform_indices = @transform_3, window_bounds = array<i64: 8, 256>}]} {
    %c0 = arith.constant 0 : index
    %c0_0 = arith.constant 0 : index
    %0 = vector.load %arg2[%c0, %c0_0] : memref<8x256xf32, #tpu.memory_space<vmem>>, vector<8x256xf32>
    %c0_1 = arith.constant 0 : index
    %c0_2 = arith.constant 0 : index
    %1 = vector.load %arg3[%c0_1, %c0_2] : memref<1x256xf32, #tpu.memory_space<vmem>>, vector<1x256xf32>
    %2 = vector.broadcast %1 : vector<1x256xf32> to vector<8x256xf32>
    %3 = arith.mulf %0, %2 : vector<8x256xf32>
    %c0_3 = arith.constant 0 : index
    %c0_4 = arith.constant 0 : index
    %4 = vector.load %arg4[%c0_3, %c0_4] : memref<1x256xf32, #tpu.memory_space<vmem>>, vector<1x256xf32>
    %5 = vector.broadcast %4 : vector<1x256xf32> to vector<8x256xf32>
    %6 = arith.addf %3, %5 : vector<8x256xf32>
    %cst = arith.constant 0.000000e+00 : f32
    %7 = vector.broadcast %cst : f32 to vector<8x256xf32>
    %8 = arith.maximumf %6, %7 : vector<8x256xf32>
    %c0_5 = arith.constant 0 : index
    %c0_6 = arith.constant 0 : index
    %9 = vector.load %arg5[%c0_5, %c0_6] : memref<8x256xf32, #tpu.memory_space<vmem>>, vector<8x256xf32>
    tpu.vector_store %arg5[%c0_5, %c0_6], %8 {strides = array<i32>} : memref<8x256xf32, #tpu.memory_space<vmem>>, vector<8x256xf32>,
    return
  }
  func.func @transform_0(%arg0: i32, %arg1: i32) -> (i32, i32) {
    %c0_i32 = arith.constant 0 : i32
    return %arg0, %arg1 : i32, i32
  }
  func.func @transform_1(%arg0: i32, %arg1: i32) -> (i32, i32) {
    %c0_i32 = arith.constant 0 : i32
    %c0_i32_0 = arith.constant 0 : i32
    return %c0_i32, %arg1 : i32, i32
  }
  func.func @transform_2(%arg0: i32, %arg1: i32) -> (i32, i32) {
    %c0_i32 = arith.constant 0 : i32
    %c0_i32_0 = arith.constant 0 : i32
    return %c0_i32, %arg1 : i32, i32
  }
  func.func @transform_3(%arg0: i32, %arg1: i32) -> (i32, i32) {
    %c0_i32 = arith.constant 0 : i32
    return %arg0, %arg1 : i32, i32
  }
}

module attributes {stable_mosaic.version = 11 : i64} {
  func.func @kernel(%arg0: i32, %arg1: i32, %arg2: i32, %arg3: memref<2x512xf32, #tpu.memory_space<vmem>>, %arg4: memref<512x256xbf16, #tpu.memory_space<vmem>>, %arg5: memref<1x256xf32, #tpu.memory_space<vmem>>, %arg6: memref<2x256xf32, #tpu.memory_space<vmem>>, %arg7: memref<2x256xf32, #tpu.memory_space<vmem>>) attributes {dimension_semantics = [#tpu.dimension_semantics<parallel>, #tpu.dimension_semantics<parallel>, #tpu.dimension_semantics<arbitrary>], iteration_bounds = array<i64: 1, 2, 8>, scalar_prefetch = 0 : i64, scratch_operands = 1 : i64, tpu.core_type = #tpu.core_type<tc>, window_params = [{transform_indices = @transform_0, window_bounds = array<i64: 2, 512>}, {transform_indices = @transform_1, window_bounds = array<i64: 512, 256>}, {transform_indices = @transform_2, window_bounds = array<i64: 1, 256>}, {transform_indices = @transform_3, window_bounds = array<i64: 2, 256>}]} {
    %c0_i32 = arith.constant 0 : i32
    %0 = arith.cmpi eq, %arg2, %c0_i32 : i32
    %1 = arith.extui %0 : i1 to i32
    %c0_i32_0 = arith.constant 0 : i32
    %2 = arith.cmpi ne, %1, %c0_i32_0 : i32
    scf.if %2 {
      %cst_9 = arith.constant 0.000000e+00 : f32
      %13 = vector.broadcast %cst_9 : f32 to vector<2x256xf32>
      %c0_10 = arith.constant 0 : index
      %c0_11 = arith.constant 0 : index
      %14 = vector.load %arg7[%c0_10, %c0_11] : memref<2x256xf32, #tpu.memory_space<vmem>>, vector<2x256xf32>
      tpu.vector_store %arg7[%c0_10, %c0_11], %13 {strides = array<i32>} : memref<2x256xf32, #tpu.memory_space<vmem>>, vector<2x256xf32>,
    } else {
    }
    %c0 = arith.constant 0 : index
    %c0_1 = arith.constant 0 : index
    %3 = vector.load %arg7[%c0, %c0_1] : memref<2x256xf32, #tpu.memory_space<vmem>>, vector<2x256xf32>
    %c0_2 = arith.constant 0 : index
    %c0_3 = arith.constant 0 : index
    %4 = vector.load %arg3[%c0_2, %c0_3] : memref<2x512xf32, #tpu.memory_space<vmem>>, vector<2x512xf32>
    %5 = arith.truncf %4 : vector<2x512xf32> to vector<2x512xbf16>
    %c0_4 = arith.constant 0 : index
    %c0_5 = arith.constant 0 : index
    %6 = vector.load %arg4[%c0_4, %c0_5] : memref<512x256xbf16, #tpu.memory_space<vmem>>, vector<512x256xbf16>
    %cst = arith.constant dense<0.000000e+00> : vector<2x256xf32>
    %7 = tpu.matmul %5, %6, %cst {dimension_numbers = #tpu.dot_dimension_numbers<[1], [0], [0], [1], [0, 0, 1, 1], [], []>} : vector<2x512xbf16>, vector<512x256xbf16>, vector<2x256xf32> -> vector<2x256xf32>
    %8 = arith.addf %3, %7 : vector<2x256xf32>
    %c0_6 = arith.constant 0 : index
    %c0_7 = arith.constant 0 : index
    %9 = vector.load %arg7[%c0_6, %c0_7] : memref<2x256xf32, #tpu.memory_space<vmem>>, vector<2x256xf32>
    tpu.vector_store %arg7[%c0_6, %c0_7], %8 {strides = array<i32>} : memref<2x256xf32, #tpu.memory_space<vmem>>, vector<2x256xf32>,
    %c7_i32 = arith.constant 7 : i32
    %10 = arith.cmpi eq, %arg2, %c7_i32 : i32
    %11 = arith.extui %10 : i1 to i32
    %c0_i32_8 = arith.constant 0 : i32
    %12 = arith.cmpi ne, %11, %c0_i32_8 : i32
    scf.if %12 {
      %c0_9 = arith.constant 0 : index
      %c0_10 = arith.constant 0 : index
      %13 = vector.load %arg7[%c0_9, %c0_10] : memref<2x256xf32, #tpu.memory_space<vmem>>, vector<2x256xf32>
      %c0_11 = arith.constant 0 : index
      %c0_12 = arith.constant 0 : index
      %14 = vector.load %arg5[%c0_11, %c0_12] : memref<1x256xf32, #tpu.memory_space<vmem>>, vector<1x256xf32>
      %15 = vector.broadcast %14 : vector<1x256xf32> to vector<2x256xf32>
      %16 = arith.addf %13, %15 : vector<2x256xf32>
      %c0_13 = arith.constant 0 : index
      %c0_14 = arith.constant 0 : index
      %17 = vector.load %arg6[%c0_13, %c0_14] : memref<2x256xf32, #tpu.memory_space<vmem>>, vector<2x256xf32>
      tpu.vector_store %arg6[%c0_13, %c0_14], %16 {strides = array<i32>} : memref<2x256xf32, #tpu.memory_space<vmem>>, vector<2x256xf32>,
    } else {
    }
    return
  }
  func.func @transform_0(%arg0: i32, %arg1: i32, %arg2: i32) -> (i32, i32) {
    %c0_i32 = arith.constant 0 : i32
    return %arg0, %arg2 : i32, i32
  }
  func.func @transform_1(%arg0: i32, %arg1: i32, %arg2: i32) -> (i32, i32) {
    %c0_i32 = arith.constant 0 : i32
    return %arg2, %arg1 : i32, i32
  }
  func.func @transform_2(%arg0: i32, %arg1: i32, %arg2: i32) -> (i32, i32) {
    %c0_i32 = arith.constant 0 : i32
    %c0_i32_0 = arith.constant 0 : i32
    return %c0_i32, %arg1 : i32, i32
  }
  func.func @transform_3(%arg0: i32, %arg1: i32, %arg2: i32) -> (i32, i32) {
    %c0_i32 = arith.constant 0 : i32
    return %arg0, %arg1 : i32, i32
  }
}

module attributes {stable_mosaic.version = 11 : i64} {
  func.func @apply_kernel(%arg0: i32, %arg1: i32, %arg2: memref<2x512xf32, #tpu.memory_space<vmem>>, %arg3: memref<1x512xf32, #tpu.memory_space<vmem>>, %arg4: memref<1x512xf32, #tpu.memory_space<vmem>>, %arg5: memref<2x512xf32, #tpu.memory_space<vmem>>) attributes {dimension_semantics = [#tpu.dimension_semantics<parallel>, #tpu.dimension_semantics<parallel>], iteration_bounds = array<i64: 1, 1>, scalar_prefetch = 0 : i64, scratch_operands = 0 : i64, tpu.core_type = #tpu.core_type<tc>, window_params = [{transform_indices = @transform_0, window_bounds = array<i64: 2, 512>}, {transform_indices = @transform_1, window_bounds = array<i64: 1, 512>}, {transform_indices = @transform_2, window_bounds = array<i64: 1, 512>}, {transform_indices = @transform_3, window_bounds = array<i64: 2, 512>}]} {
    %c0 = arith.constant 0 : index
    %c0_0 = arith.constant 0 : index
    %0 = vector.load %arg2[%c0, %c0_0] : memref<2x512xf32, #tpu.memory_space<vmem>>, vector<2x512xf32>
    %c0_1 = arith.constant 0 : index
    %c0_2 = arith.constant 0 : index
    %1 = vector.load %arg3[%c0_1, %c0_2] : memref<1x512xf32, #tpu.memory_space<vmem>>, vector<1x512xf32>
    %2 = vector.broadcast %1 : vector<1x512xf32> to vector<2x512xf32>
    %3 = arith.mulf %0, %2 : vector<2x512xf32>
    %c0_3 = arith.constant 0 : index
    %c0_4 = arith.constant 0 : index
    %4 = vector.load %arg4[%c0_3, %c0_4] : memref<1x512xf32, #tpu.memory_space<vmem>>, vector<1x512xf32>
    %5 = vector.broadcast %4 : vector<1x512xf32> to vector<2x512xf32>
    %6 = arith.addf %3, %5 : vector<2x512xf32>
    %cst = arith.constant 0.000000e+00 : f32
    %7 = vector.broadcast %cst : f32 to vector<2x512xf32>
    %8 = arith.maximumf %6, %7 : vector<2x512xf32>
    %c0_5 = arith.constant 0 : index
    %c0_6 = arith.constant 0 : index
    %9 = vector.load %arg5[%c0_5, %c0_6] : memref<2x512xf32, #tpu.memory_space<vmem>>, vector<2x512xf32>
    tpu.vector_store %arg5[%c0_5, %c0_6], %8 {strides = array<i32>} : memref<2x512xf32, #tpu.memory_space<vmem>>, vector<2x512xf32>,
    return
  }
  func.func @transform_0(%arg0: i32, %arg1: i32) -> (i32, i32) {
    %c0_i32 = arith.constant 0 : i32
    return %arg0, %arg1 : i32, i32
  }
  func.func @transform_1(%arg0: i32, %arg1: i32) -> (i32, i32) {
    %c0_i32 = arith.constant 0 : i32
    %c0_i32_0 = arith.constant 0 : i32
    return %c0_i32, %arg1 : i32, i32
  }
  func.func @transform_2(%arg0: i32, %arg1: i32) -> (i32, i32) {
    %c0_i32 = arith.constant 0 : i32
    %c0_i32_0 = arith.constant 0 : i32
    return %c0_i32, %arg1 : i32, i32
  }
  func.func @transform_3(%arg0: i32, %arg1: i32) -> (i32, i32) {
    %c0_i32 = arith.constant 0 : i32
    return %arg0, %arg1 : i32, i32
  }
}

module attributes {stable_mosaic.version = 11 : i64} {
  func.func @stats_kernel(%arg0: i32, %arg1: memref<2x512xf32, #tpu.memory_space<vmem>>, %arg2: memref<1x512xf32, #tpu.memory_space<vmem>>, %arg3: memref<1x512xf32, #tpu.memory_space<vmem>>) attributes {dimension_semantics = [#tpu.dimension_semantics<arbitrary>], iteration_bounds = array<i64: 1>, scalar_prefetch = 0 : i64, scratch_operands = 0 : i64, tpu.core_type = #tpu.core_type<tc>, window_params = [{transform_indices = @transform_0, window_bounds = array<i64: 2, 512>}, {pipeline_mode = #tpu.pipeline_mode<synchronous>, transform_indices = @transform_1, window_bounds = array<i64: 1, 512>}, {pipeline_mode = #tpu.pipeline_mode<synchronous>, transform_indices = @transform_2, window_bounds = array<i64: 1, 512>}]} {
    %c0_i32 = arith.constant 0 : i32
    %0 = arith.cmpi eq, %arg0, %c0_i32 : i32
    %1 = arith.extui %0 : i1 to i32
    %c0_i32_0 = arith.constant 0 : i32
    %2 = arith.cmpi ne, %1, %c0_i32_0 : i32
    scf.if %2 {
      %cst_11 = arith.constant 0.000000e+00 : f32
      %15 = vector.broadcast %cst_11 : f32 to vector<1x512xf32>
      %c0_12 = arith.constant 0 : index
      %c0_13 = arith.constant 0 : index
      %16 = vector.load %arg2[%c0_12, %c0_13] : memref<1x512xf32, #tpu.memory_space<vmem>>, vector<1x512xf32>
      tpu.vector_store %arg2[%c0_12, %c0_13], %15 {strides = array<i32>} : memref<1x512xf32, #tpu.memory_space<vmem>>, vector<1x512xf32>,
      %cst_14 = arith.constant 0.000000e+00 : f32
      %17 = vector.broadcast %cst_14 : f32 to vector<1x512xf32>
      %c0_15 = arith.constant 0 : index
      %c0_16 = arith.constant 0 : index
      %18 = vector.load %arg3[%c0_15, %c0_16] : memref<1x512xf32, #tpu.memory_space<vmem>>, vector<1x512xf32>
      tpu.vector_store %arg3[%c0_15, %c0_16], %17 {strides = array<i32>} : memref<1x512xf32, #tpu.memory_space<vmem>>, vector<1x512xf32>,
    } else {
    }
    %c0 = arith.constant 0 : index
    %c0_1 = arith.constant 0 : index
    %3 = vector.load %arg1[%c0, %c0_1] : memref<2x512xf32, #tpu.memory_space<vmem>>, vector<2x512xf32>
    %c0_2 = arith.constant 0 : index
    %c0_3 = arith.constant 0 : index
    %4 = vector.load %arg2[%c0_2, %c0_3] : memref<1x512xf32, #tpu.memory_space<vmem>>, vector<1x512xf32>
    %cst = arith.constant dense<0.000000e+00> : vector<512xf32>
    %5 = vector.multi_reduction <add>, %3, %cst [0] : vector<2x512xf32> to vector<512xf32>
    %6 = vector.shape_cast %5 : vector<512xf32> to vector<1x512xf32>
    %7 = arith.addf %4, %6 : vector<1x512xf32>
    %c0_4 = arith.constant 0 : index
    %c0_5 = arith.constant 0 : index
    %8 = vector.load %arg2[%c0_4, %c0_5] : memref<1x512xf32, #tpu.memory_space<vmem>>, vector<1x512xf32>
    tpu.vector_store %arg2[%c0_4, %c0_5], %7 {strides = array<i32>} : memref<1x512xf32, #tpu.memory_space<vmem>>, vector<1x512xf32>,
    %c0_6 = arith.constant 0 : index
    %c0_7 = arith.constant 0 : index
    %9 = vector.load %arg3[%c0_6, %c0_7] : memref<1x512xf32, #tpu.memory_space<vmem>>, vector<1x512xf32>
    %10 = arith.mulf %3, %3 : vector<2x512xf32>
    %cst_8 = arith.constant dense<0.000000e+00> : vector<512xf32>
    %11 = vector.multi_reduction <add>, %10, %cst_8 [0] : vector<2x512xf32> to vector<512xf32>
    %12 = vector.shape_cast %11 : vector<512xf32> to vector<1x512xf32>
    %13 = arith.addf %9, %12 : vector<1x512xf32>
    %c0_9 = arith.constant 0 : index
    %c0_10 = arith.constant 0 : index
    %14 = vector.load %arg3[%c0_9, %c0_10] : memref<1x512xf32, #tpu.memory_space<vmem>>, vector<1x512xf32>
    tpu.vector_store %arg3[%c0_9, %c0_10], %13 {strides = array<i32>} : memref<1x512xf32, #tpu.memory_space<vmem>>, vector<1x512xf32>,
    return
  }
  func.func @transform_0(%arg0: i32) -> (i32, i32) {
    %c0_i32 = arith.constant 0 : i32
    %c0_i32_0 = arith.constant 0 : i32
    return %arg0, %c0_i32 : i32, i32
  }
  func.func @transform_1(%arg0: i32) -> (i32, i32) {
    %c0_i32 = arith.constant 0 : i32
    %c0_i32_0 = arith.constant 0 : i32
    %c0_i32_1 = arith.constant 0 : i32
    return %c0_i32, %c0_i32_0 : i32, i32
  }
  func.func @transform_2(%arg0: i32) -> (i32, i32) {
    %c0_i32 = arith.constant 0 : i32
    %c0_i32_0 = arith.constant 0 : i32
    %c0_i32_1 = arith.constant 0 : i32
    return %c0_i32, %c0_i32_0 : i32, i32
  }
}

module attributes {stable_mosaic.version = 11 : i64} {
  func.func @kernel(%arg0: i32, %arg1: i32, %arg2: i32, %arg3: memref<2x512xf32, #tpu.memory_space<vmem>>, %arg4: memref<512x256xbf16, #tpu.memory_space<vmem>>, %arg5: memref<1x256xf32, #tpu.memory_space<vmem>>, %arg6: memref<2x256xf32, #tpu.memory_space<vmem>>) attributes {dimension_semantics = [#tpu.dimension_semantics<parallel>, #tpu.dimension_semantics<parallel>, #tpu.dimension_semantics<arbitrary>], iteration_bounds = array<i64: 1, 2, 1>, scalar_prefetch = 0 : i64, scratch_operands = 0 : i64, tpu.core_type = #tpu.core_type<tc>, window_params = [{transform_indices = @transform_0, window_bounds = array<i64: 2, 512>}, {transform_indices = @transform_1, window_bounds = array<i64: 512, 256>}, {transform_indices = @transform_2, window_bounds = array<i64: 1, 256>}, {transform_indices = @transform_3, window_bounds = array<i64: 2, 256>}]} {
    %c0 = arith.constant 0 : index
    %c0_0 = arith.constant 0 : index
    %0 = vector.load %arg3[%c0, %c0_0] : memref<2x512xf32, #tpu.memory_space<vmem>>, vector<2x512xf32>
    %1 = arith.truncf %0 : vector<2x512xf32> to vector<2x512xbf16>
    %c0_1 = arith.constant 0 : index
    %c0_2 = arith.constant 0 : index
    %2 = vector.load %arg4[%c0_1, %c0_2] : memref<512x256xbf16, #tpu.memory_space<vmem>>, vector<512x256xbf16>
    %cst = arith.constant dense<0.000000e+00> : vector<2x256xf32>
    %3 = tpu.matmul %1, %2, %cst {dimension_numbers = #tpu.dot_dimension_numbers<[1], [0], [0], [1], [0, 0, 1, 1], [], []>} : vector<2x512xbf16>, vector<512x256xbf16>, vector<2x256xf32> -> vector<2x256xf32>
    %c0_3 = arith.constant 0 : index
    %c0_4 = arith.constant 0 : index
    %4 = vector.load %arg5[%c0_3, %c0_4] : memref<1x256xf32, #tpu.memory_space<vmem>>, vector<1x256xf32>
    %5 = vector.broadcast %4 : vector<1x256xf32> to vector<2x256xf32>
    %6 = arith.addf %3, %5 : vector<2x256xf32>
    %cst_5 = arith.constant 0.000000e+00 : f32
    %7 = vector.broadcast %cst_5 : f32 to vector<2x256xf32>
    %8 = arith.maximumf %6, %7 : vector<2x256xf32>
    %c0_6 = arith.constant 0 : index
    %c0_7 = arith.constant 0 : index
    %9 = vector.load %arg6[%c0_6, %c0_7] : memref<2x256xf32, #tpu.memory_space<vmem>>, vector<2x256xf32>
    tpu.vector_store %arg6[%c0_6, %c0_7], %8 {strides = array<i32>} : memref<2x256xf32, #tpu.memory_space<vmem>>, vector<2x256xf32>,
    return
  }
  func.func @transform_0(%arg0: i32, %arg1: i32, %arg2: i32) -> (i32, i32) {
    %c0_i32 = arith.constant 0 : i32
    return %arg0, %arg2 : i32, i32
  }
  func.func @transform_1(%arg0: i32, %arg1: i32, %arg2: i32) -> (i32, i32) {
    %c0_i32 = arith.constant 0 : i32
    return %arg2, %arg1 : i32, i32
  }
  func.func @transform_2(%arg0: i32, %arg1: i32, %arg2: i32) -> (i32, i32) {
    %c0_i32 = arith.constant 0 : i32
    %c0_i32_0 = arith.constant 0 : i32
    return %c0_i32, %arg1 : i32, i32
  }
  func.func @transform_3(%arg0: i32, %arg1: i32, %arg2: i32) -> (i32, i32) {
    %c0_i32 = arith.constant 0 : i32
    return %arg0, %arg1 : i32, i32
  }
}

module attributes {stable_mosaic.version = 11 : i64} {
  func.func @kernel(%arg0: i32, %arg1: i32, %arg2: i32, %arg3: memref<2x1024xf32, #tpu.memory_space<vmem>>, %arg4: memref<1024x128xbf16, #tpu.memory_space<vmem>>, %arg5: memref<1x128xf32, #tpu.memory_space<vmem>>, %arg6: memref<2x128xf32, #tpu.memory_space<vmem>>) attributes {dimension_semantics = [#tpu.dimension_semantics<parallel>, #tpu.dimension_semantics<parallel>, #tpu.dimension_semantics<arbitrary>], iteration_bounds = array<i64: 1, 3, 1>, scalar_prefetch = 0 : i64, scratch_operands = 0 : i64, tpu.core_type = #tpu.core_type<tc>, window_params = [{transform_indices = @transform_0, window_bounds = array<i64: 2, 1024>}, {transform_indices = @transform_1, window_bounds = array<i64: 1024, 128>}, {transform_indices = @transform_2, window_bounds = array<i64: 1, 128>}, {transform_indices = @transform_3, window_bounds = array<i64: 2, 128>}]} {
    %c0 = arith.constant 0 : index
    %c0_0 = arith.constant 0 : index
    %0 = vector.load %arg3[%c0, %c0_0] : memref<2x1024xf32, #tpu.memory_space<vmem>>, vector<2x1024xf32>
    %1 = arith.truncf %0 : vector<2x1024xf32> to vector<2x1024xbf16>
    %c0_1 = arith.constant 0 : index
    %c0_2 = arith.constant 0 : index
    %2 = vector.load %arg4[%c0_1, %c0_2] : memref<1024x128xbf16, #tpu.memory_space<vmem>>, vector<1024x128xbf16>
    %cst = arith.constant dense<0.000000e+00> : vector<2x128xf32>
    %3 = tpu.matmul %1, %2, %cst {dimension_numbers = #tpu.dot_dimension_numbers<[1], [0], [0], [1], [0, 0, 1, 1], [], []>} : vector<2x1024xbf16>, vector<1024x128xbf16>, vector<2x128xf32> -> vector<2x128xf32>
    %c0_3 = arith.constant 0 : index
    %c0_4 = arith.constant 0 : index
    %4 = vector.load %arg5[%c0_3, %c0_4] : memref<1x128xf32, #tpu.memory_space<vmem>>, vector<1x128xf32>
    %5 = vector.broadcast %4 : vector<1x128xf32> to vector<2x128xf32>
    %6 = arith.addf %3, %5 : vector<2x128xf32>
    %c0_5 = arith.constant 0 : index
    %c0_6 = arith.constant 0 : index
    %7 = vector.load %arg6[%c0_5, %c0_6] : memref<2x128xf32, #tpu.memory_space<vmem>>, vector<2x128xf32>
    tpu.vector_store %arg6[%c0_5, %c0_6], %6 {strides = array<i32>} : memref<2x128xf32, #tpu.memory_space<vmem>>, vector<2x128xf32>,
    return
  }
  func.func @transform_0(%arg0: i32, %arg1: i32, %arg2: i32) -> (i32, i32) {
    %c0_i32 = arith.constant 0 : i32
    return %arg0, %arg2 : i32, i32
  }
  func.func @transform_1(%arg0: i32, %arg1: i32, %arg2: i32) -> (i32, i32) {
    %c0_i32 = arith.constant 0 : i32
    return %arg2, %arg1 : i32, i32
  }
  func.func @transform_2(%arg0: i32, %arg1: i32, %arg2: i32) -> (i32, i32) {
    %c0_i32 = arith.constant 0 : i32
    %c0_i32_0 = arith.constant 0 : i32
    return %c0_i32, %arg1 : i32, i32
  }
  func.func @transform_3(%arg0: i32, %arg1: i32, %arg2: i32) -> (i32, i32) {
    %c0_i32 = arith.constant 0 : i32
    return %arg0, %arg1 : i32, i32
  }
}

module attributes {stable_mosaic.version = 11 : i64} {
  func.func @kernel(%arg0: i32, %arg1: i32, %arg2: i32, %arg3: memref<2x25xf32, #tpu.memory_space<vmem>>, %arg4: memref<25x256xbf16, #tpu.memory_space<vmem>>, %arg5: memref<1x256xf32, #tpu.memory_space<vmem>>, %arg6: memref<2x256xf32, #tpu.memory_space<vmem>>) attributes {dimension_semantics = [#tpu.dimension_semantics<parallel>, #tpu.dimension_semantics<parallel>, #tpu.dimension_semantics<arbitrary>], iteration_bounds = array<i64: 1, 2, 1>, scalar_prefetch = 0 : i64, scratch_operands = 0 : i64, tpu.core_type = #tpu.core_type<tc>, window_params = [{transform_indices = @transform_0, window_bounds = array<i64: 2, 25>}, {transform_indices = @transform_1, window_bounds = array<i64: 25, 256>}, {transform_indices = @transform_2, window_bounds = array<i64: 1, 256>}, {transform_indices = @transform_3, window_bounds = array<i64: 2, 256>}]} {
    %c0 = arith.constant 0 : index
    %c0_0 = arith.constant 0 : index
    %0 = vector.load %arg3[%c0, %c0_0] : memref<2x25xf32, #tpu.memory_space<vmem>>, vector<2x25xf32>
    %1 = arith.truncf %0 : vector<2x25xf32> to vector<2x25xbf16>
    %c0_1 = arith.constant 0 : index
    %c0_2 = arith.constant 0 : index
    %2 = vector.load %arg4[%c0_1, %c0_2] : memref<25x256xbf16, #tpu.memory_space<vmem>>, vector<25x256xbf16>
    %cst = arith.constant dense<0.000000e+00> : vector<2x256xf32>
    %3 = tpu.matmul %1, %2, %cst {dimension_numbers = #tpu.dot_dimension_numbers<[1], [0], [0], [1], [0, 0, 1, 1], [], []>} : vector<2x25xbf16>, vector<25x256xbf16>, vector<2x256xf32> -> vector<2x256xf32>
    %c0_3 = arith.constant 0 : index
    %c0_4 = arith.constant 0 : index
    %4 = vector.load %arg5[%c0_3, %c0_4] : memref<1x256xf32, #tpu.memory_space<vmem>>, vector<1x256xf32>
    %5 = vector.broadcast %4 : vector<1x256xf32> to vector<2x256xf32>
    %6 = arith.addf %3, %5 : vector<2x256xf32>
    %c0_5 = arith.constant 0 : index
    %c0_6 = arith.constant 0 : index
    %7 = vector.load %arg6[%c0_5, %c0_6] : memref<2x256xf32, #tpu.memory_space<vmem>>, vector<2x256xf32>
    tpu.vector_store %arg6[%c0_5, %c0_6], %6 {strides = array<i32>} : memref<2x256xf32, #tpu.memory_space<vmem>>, vector<2x256xf32>,
    return
  }
  func.func @transform_0(%arg0: i32, %arg1: i32, %arg2: i32) -> (i32, i32) {
    %c0_i32 = arith.constant 0 : i32
    return %arg0, %arg2 : i32, i32
  }
  func.func @transform_1(%arg0: i32, %arg1: i32, %arg2: i32) -> (i32, i32) {
    %c0_i32 = arith.constant 0 : i32
    return %arg2, %arg1 : i32, i32
  }
  func.func @transform_2(%arg0: i32, %arg1: i32, %arg2: i32) -> (i32, i32) {
    %c0_i32 = arith.constant 0 : i32
    %c0_i32_0 = arith.constant 0 : i32
    return %c0_i32, %arg1 : i32, i32
  }
  func.func @transform_3(%arg0: i32, %arg1: i32, %arg2: i32) -> (i32, i32) {
    %c0_i32 = arith.constant 0 : i32
    return %arg0, %arg1 : i32, i32
  }
}

</mosaic_0001>

<llo_original>
// kernel: infogan_generator_forward.14
$region0: #{infogan_generator_forward.14}
  #allocation0 [shape = 'u32[]', space=smem, size = 0x4, offset = 0x4, fixed_abs, tag = 'smem constant byte address 0x4 - core index']
  #allocation1 [shape = 'u32[144,128]{1,0:T(1,128)}', space=vmem, size = 0x12000, scoped, tag = 'internal scratch']
  %s0 = inlined_call_operand.vmem [shape: f32[128,48], index: 0, kind: input, shape index: {}]
  %s1 = inlined_call_operand.vmem [shape: bf16[48,128], index: 1, kind: input, shape index: {}]
  %s2 = inlined_call_operand.vmem [shape: f32[1,128], index: 2, kind: input, shape index: {}]
  %s3 = inlined_call_operand.vmem [shape: f32[128,128], index: 3, kind: output, shape index: {}]
  %s4 = sld [smem:[#allocation0]]
  $region22: #{infogan_generator_forward.14} parent=0
    _
  %s6 = ssub.s32 1, %s4
  %s7 = scalar_select 0, %s6, %s4
  // Predicated region
  $region2: #{infogan_generator_forward.14} parent=0 // pred_check
    _
  $region3: #{infogan_generator_forward.14} parent=0 // pred_check_branch
    %9 = sbr.rel (0) target = $region5
  $region4: #{infogan_generator_forward.14} parent=0 // pred_region
    _
  $region5: #{infogan_generator_forward.14} parent=0 // pred_fallthru
    _
  // Predicated region
  $region6: #{infogan_generator_forward.14} parent=0 // pred_check
    _
  $region7: #{infogan_generator_forward.14} parent=0 // pred_check_branch
    %11 = sbr.rel (0) target = $region9
  $region8: #{infogan_generator_forward.14} parent=0 // pred_region
    _
  $region9: #{infogan_generator_forward.14} parent=0 // pred_fallthru
    _
  // Predicated region
  $region10: #{infogan_generator_forward.14} parent=0 // pred_check
    _
  $region11: #{infogan_generator_forward.14} parent=0 // pred_check_branch
    %13 = sbr.rel (0) target = $region13
  $region12: #{infogan_generator_forward.14} parent=0 // pred_region
    _
  $region13: #{infogan_generator_forward.14} parent=0 // pred_fallthru
    _
  %v15 = vld [vmem:[%s0] sm:$0xff]
  %v16 = vld [vmem:[%s0 + $0x8] sm:$0xff]
  %v17 = vld [vmem:[%s0 + $0x10] sm:$0xff]
  %v18 = vld [vmem:[%s0 + $0x18] sm:$0xff]
  %v19 = vld [vmem:[%s0 + $0x20] sm:$0xff]
  %v20 = vld [vmem:[%s0 + $0x28] sm:$0xff]
  %v21 = vld [vmem:[%s0 + $0x30] sm:$0xff]
  %v22 = vld [vmem:[%s0 + $0x38] sm:$0xff]
  %v23 = vld [vmem:[%s0 + $0x40] sm:$0xff]
  %v24 = vld [vmem:[%s0 + $0x48] sm:$0xff]
  %v25 = vld [vmem:[%s0 + $0x50] sm:$0xff]
  %v26 = vld [vmem:[%s0 + $0x58] sm:$0xff]
  %v27 = vld [vmem:[%s0 + $0x60] sm:$0xff]
  %v28 = vld [vmem:[%s0 + $0x68] sm:$0xff]
  %v29 = vld [vmem:[%s0 + $0x70] sm:$0xff]
  %v30 = vld [vmem:[%s0 + $0x78] sm:$0xff]
  %v31 = vpack.c.bf16 %v16, %v15
  %v32 = vpack.c.bf16 %v18, %v17
  %v33 = vpack.c.bf16 %v20, %v19
  %v34 = vpack.c.bf16 %v22, %v21
  %v35 = vpack.c.bf16 %v24, %v23
  %v36 = vpack.c.bf16 %v26, %v25
  %v37 = vpack.c.bf16 %v28, %v27
  %v38 = vpack.c.bf16 %v30, %v29
  %v39 = vld [vmem:[%s1] sm:$0xf]
  %v40 = vld [vmem:[%s1 + $0x4] sm:$0xf]
  %v41 = vld [vmem:[%s1 + $0x8] sm:$0xf]
  %v42 = vld [vmem:[%s1 + $0xc] sm:$0xf]
  %v43 = vld [vmem:[%s1 + $0x10] sm:$0xf]
  %v44 = vld [vmem:[%s1 + $0x14] sm:$0xf]
  %v45 = vld [vmem:[%s2] sm:$0x1]
  %v47 = vlaneseq
  %v48 = vshrl.u32 %v47, 7
  %v49 = vsub.s32 0, %v48
  %v50 = vrot.slane %v45, %v49
  %v58 = vunpack.c.l.b16 %v39
  %v59 = vunpack.c.l.b16 %v40
  %v60 = vunpack.c.l.b16 %v41
  %v61 = vunpack.c.l.b16 %v42
  %v62 = vunpack.c.l.b16 %v43
  %v63 = vunpack.c.l.b16 %v44
  %v64 = vpack.c.b16 %v59, %v58
  %v65 = vpack.c.b16 %v61, %v60
  %v66 = vpack.c.b16 %v63, %v62
  %vm70 = vcmask 392192
  %v72 = vsel %vm70, %v31, 0
  %v75 = vsel %vm70, %v32, 0
  %v78 = vsel %vm70, %v33, 0
  %v81 = vsel %vm70, %v34, 0
  %v84 = vsel %vm70, %v35, 0
  %v87 = vsel %vm70, %v36, 0
  %v90 = vsel %vm70, %v37, 0
  %v93 = vsel %vm70, %v38, 0
  %95 = vmatprep.subr.bf16.mxu0 0
  %96 = vmatpush1.bf16.msra.mxu0 0
  %97 = vmatprep.subr.bf16.mxu0 0
  %98 = vmatpush1.bf16.msra.mxu0 0
  %99 = vmatprep.subr.bf16.mxu0 0
  %100 = vmatpush1.bf16.msra.mxu0 0
  %101 = vmatprep.subr.bf16.mxu0 0
  %102 = vmatpush1.bf16.msra.mxu0 0
  %103 = vmatprep.subr.bf16.mxu0 0
  %104 = vmatpush1.bf16.msra.mxu0 0
  %105 = vmatprep.subr.bf16.mxu0 0
  %106 = vmatpush1.bf16.msra.mxu0 %v66
  %107 = vmatprep.subr.bf16.mxu0 0
  %108 = vmatpush1.bf16.msra.mxu0 %v65
  %109 = vmatprep.subr.bf16.mxu0 0
  %110 = vmatpush1.bf16.msra.mxu0 %v64
  %111 = vmatprep.subr.bf16.mxu0 0
  %112 = vmatpush2.bf16.msra.mxu0 0
  %113 = vmatprep.subr.bf16.mxu0 0
  %114 = vmatpush2.bf16.msra.mxu0 0
  %115 = vmatprep.subr.bf16.mxu0 0
  %116 = vmatpush2.bf16.msra.mxu0 0
  %117 = vmatprep.subr.bf16.mxu0 0
  %118 = vmatpush2.bf16.msra.mxu0 0
  %119 = vmatprep.subr.bf16.mxu0 0
  %120 = vmatpush2.bf16.msra.mxu0 0
  %121 = vmatprep.subr.bf16.mxu0 0
  %122 = vmatpush2.bf16.msra.mxu0 0
  %123 = vmatprep.subr.bf16.mxu0 0
  %124 = vmatpush2.bf16.msra.mxu0 0
  %125 = vmatprep.subr.bf16.mxu0 0
  %126 = vmatpush2.bf16.msra.mxu0 0
  %127 = vmatprep.mubr.bf16.mxu0 0
  %128 = vmatmul.mubr.bf16.gmra.mxu0 %v72
  %v129 = vpop.f32.mrf.mxu0
  %v130 = vadd.f32 %v50, %v129
  %v131 = vpop.f32.mrf.mxu0
  %v132 = vpop.f32.mrf.mxu0
  %v133 = vadd.f32 %v50, %v132
  %v134 = vpop.f32.mrf.mxu0
  %135 = vmatprep.mubr.bf16.mxu0 0
  %136 = vmatmul.mubr.bf16.gmra.mxu0 %v75
  %v137 = vpop.f32.mrf.mxu0
  %v138 = vadd.f32 %v50, %v137
  %v139 = vpop.f32.mrf.mxu0
  %v140 = vpop.f32.mrf.mxu0
  %v141 = vadd.f32 %v50, %v140
  %v142 = vpop.f32.mrf.mxu0
  %143 = vmatprep.mubr.bf16.mxu0 0
  %144 = vmatmul.mubr.bf16.gmra.mxu0 %v78
  %v145 = vpop.f32.mrf.mxu0
  %v146 = vadd.f32 %v50, %v145
  %v147 = vpop.f32.mrf.mxu0
  %v148 = vpop.f32.mrf.mxu0
  %v149 = vadd.f32 %v50, %v148
  %v150 = vpop.f32.mrf.mxu0
  %151 = vmatprep.mubr.bf16.mxu0 0
  %152 = vmatmul.mubr.bf16.gmra.mxu0 %v81
  %v153 = vpop.f32.mrf.mxu0
  %v154 = vadd.f32 %v50, %v153
  %v155 = vpop.f32.mrf.mxu0
  %v156 = vpop.f32.mrf.mxu0
  %v157 = vadd.f32 %v50, %v156
  %v158 = vpop.f32.mrf.mxu0
  %159 = vmatprep.mubr.bf16.mxu0 0
  %160 = vmatmul.mubr.bf16.gmra.mxu0 %v84
  %v161 = vpop.f32.mrf.mxu0
  %v162 = vadd.f32 %v50, %v161
  %v163 = vpop.f32.mrf.mxu0
  %v164 = vpop.f32.mrf.mxu0
  %v165 = vadd.f32 %v50, %v164
  %v166 = vpop.f32.mrf.mxu0
  %167 = vmatprep.mubr.bf16.mxu0 0
  %168 = vmatmul.mubr.bf16.gmra.mxu0 %v87
  %v169 = vpop.f32.mrf.mxu0
  %v170 = vadd.f32 %v50, %v169
  %v171 = vpop.f32.mrf.mxu0
  %v172 = vpop.f32.mrf.mxu0
  %v173 = vadd.f32 %v50, %v172
  %v174 = vpop.f32.mrf.mxu0
  %175 = vmatprep.mubr.bf16.mxu0 0
  %176 = vmatmul.mubr.bf16.gmra.mxu0 %v90
  %v177 = vpop.f32.mrf.mxu0
  %v178 = vadd.f32 %v50, %v177
  %v179 = vpop.f32.mrf.mxu0
  %v180 = vpop.f32.mrf.mxu0
  %v181 = vadd.f32 %v50, %v180
  %v182 = vpop.f32.mrf.mxu0
  %183 = vmatprep.mubr.bf16.mxu0 0
  %184 = vmatmul.mubr.bf16.gmra.mxu0 %v93
  %v185 = vpop.f32.mrf.mxu0
  %v186 = vadd.f32 %v50, %v185
  %v187 = vpop.f32.mrf.mxu0
  %v188 = vpop.f32.mrf.mxu0
  %v189 = vadd.f32 %v50, %v188
  %v190 = vpop.f32.mrf.mxu0
  %191 = vdwg.mxu0
  %v192 = vmax.f32 %v130, 0.0
  %v193 = vmax.f32 %v133, 0.0
  %v194 = vmax.f32 %v138, 0.0
  %v195 = vmax.f32 %v141, 0.0
  %v196 = vmax.f32 %v146, 0.0
  %v197 = vmax.f32 %v149, 0.0
  %v198 = vmax.f32 %v154, 0.0
  %v199 = vmax.f32 %v157, 0.0
  %v200 = vmax.f32 %v162, 0.0
  %v201 = vmax.f32 %v165, 0.0
  %v202 = vmax.f32 %v170, 0.0
  %v203 = vmax.f32 %v173, 0.0
  %v204 = vmax.f32 %v178, 0.0
  %v205 = vmax.f32 %v181, 0.0
  %v206 = vmax.f32 %v186, 0.0
  %v207 = vmax.f32 %v189, 0.0
  %208 = vst [vmem:[%s3] sm:$0xff] %v192
  %209 = vst [vmem:[%s3 + $0x8] sm:$0xff] %v193
  %210 = vst [vmem:[%s3 + $0x10] sm:$0xff] %v194
  %211 = vst [vmem:[%s3 + $0x18] sm:$0xff] %v195
  %212 = vst [vmem:[%s3 + $0x20] sm:$0xff] %v196
  %213 = vst [vmem:[%s3 + $0x28] sm:$0xff] %v197
  %214 = vst [vmem:[%s3 + $0x30] sm:$0xff] %v198
  %215 = vst [vmem:[%s3 + $0x38] sm:$0xff] %v199
  %216 = vst [vmem:[%s3 + $0x40] sm:$0xff] %v200
  %217 = vst [vmem:[%s3 + $0x48] sm:$0xff] %v201
  %218 = vst [vmem:[%s3 + $0x50] sm:$0xff] %v202
  %219 = vst [vmem:[%s3 + $0x58] sm:$0xff] %v203
  %220 = vst [vmem:[%s3 + $0x60] sm:$0xff] %v204
  %221 = vst [vmem:[%s3 + $0x68] sm:$0xff] %v205
  %222 = vst [vmem:[%s3 + $0x70] sm:$0xff] %v206
  %223 = vst [vmem:[%s3 + $0x78] sm:$0xff] %v207
  // Predicated region
  $region14: #{infogan_generator_forward.14} parent=0 // pred_check
    _
  $region15: #{infogan_generator_forward.14} parent=0 // pred_check_branch
    %225 = sbr.rel (0) target = $region17
  $region16: #{infogan_generator_forward.14} parent=0 // pred_region
    _
  $region17: #{infogan_generator_forward.14} parent=0 // pred_fallthru
    _
  // Predicated region
  $region18: #{infogan_generator_forward.14} parent=0 // pred_check
    _
  $region19: #{infogan_generator_forward.14} parent=0 // pred_check_branch
    %227 = sbr.rel (0) target = $region21
  $region20: #{infogan_generator_forward.14} parent=0 // pred_region
    _
  $region21: #{infogan_generator_forward.14} parent=0 // pred_fallthru
    _

// kernel: infogan_generator_forward.16
$region0: #{infogan_generator_forward.16}
  #allocation0 [shape = 'u32[]', space=smem, size = 0x4, offset = 0x4, fixed_abs, tag = 'smem constant byte address 0x4 - core index']
  #allocation1 [shape = 'u32[144,128]{1,0:T(1,128)}', space=vmem, size = 0x12000, scoped, tag = 'internal scratch']
  %s0 = inlined_call_operand.vmem [shape: f32[32,128], index: 0, kind: input, shape index: {}]
  %s1 = inlined_call_operand.vmem [shape: f32[1,128], index: 1, kind: output, shape index: {0}]
  %s2 = inlined_call_operand.vmem [shape: f32[1,128], index: 2, kind: output, shape index: {1}]
  %3 = xla_tuple %s1, %s2
  %s4 = sld [smem:[#allocation0]]
  $region26: #{infogan_generator_forward.16} parent=0
    _
  %s6 = ssub.s32 1, %s4
  %s7 = scalar_select 0, %s6, %s4
  // Predicated region
  $region2: #{infogan_generator_forward.16} parent=0 // pred_check
    _
  $region3: #{infogan_generator_forward.16} parent=0 // pred_check_branch
    %9 = sbr.rel (0) target = $region5
  $region4: #{infogan_generator_forward.16} parent=0 // pred_region
    _
  $region5: #{infogan_generator_forward.16} parent=0 // pred_fallthru
    _
  %p10 = scmp.eq.s32.totalorder 0, 0
  // Predicated region
  $region6: #{infogan_generator_forward.16} parent=0 // pred_check
    %p11 = pneg %p10
  $region7: #{infogan_generator_forward.16} parent=0 // pred_check_branch
    %13 = sbr.rel (%p11) target = $region9
  $region8: #{infogan_generator_forward.16} parent=0 // pred_region
    %14 = vst [vmem:[%s1] sm:$0x1] 0.0
    %15 = vst [vmem:[%s2] sm:$0x1] 0.0
  $region9: #{infogan_generator_forward.16} parent=0 // pred_fallthru
    _
  %v16 = vld [vmem:[%s0] sm:$0xff]
  %v17 = vld [vmem:[%s0 + $0x8] sm:$0xff]
  %v18 = vld [vmem:[%s0 + $0x10] sm:$0xff]
  %v19 = vld [vmem:[%s0 + $0x18] sm:$0xff]
  %v20 = vld [vmem:[%s1] sm:$0x1]
  %v21 = vadd.f32 %v16, %v17
  %v22 = vadd.f32 %v21, %v18
  %v23 = vadd.f32 %v22, %v19
  %v24 = vrot.slane %v23, 4
  %v25 = vadd.f32 %v23, %v24
  %v26 = vrot.slane %v25, 2
  %v27 = vadd.f32 %v25, %v26
  %v28 = vrot.slane %v27, 1
  %v29 = vadd.f32 %v27, %v28
  %v30 = vadd.f32 %v20, %v29
  %31 = vst [vmem:[%s1] sm:$0x1] %v30
  %v32 = vld [vmem:[%s2] sm:$0x1]
  %v33 = vmul.f32 %v16, %v16
  %v34 = vmul.f32 %v17, %v17
  %v35 = vmul.f32 %v18, %v18
  %v36 = vmul.f32 %v19, %v19
  %v37 = vadd.f32 %v33, %v34
  %v38 = vadd.f32 %v37, %v35
  %v39 = vadd.f32 %v38, %v36
  %v40 = vrot.slane %v39, 4
  %v41 = vadd.f32 %v39, %v40
  %v42 = vrot.slane %v41, 2
  %v43 = vadd.f32 %v41, %v42
  %v44 = vrot.slane %v43, 1
  %v45 = vadd.f32 %v43, %v44
  %v46 = vadd.f32 %v32, %v45
  %47 = vst [vmem:[%s2] sm:$0x1] %v46
  // Predicated region
  $region10: #{infogan_generator_forward.16} parent=0 // pred_check
    _
  $region11: #{infogan_generator_forward.16} parent=0 // pred_check_branch
    %49 = sbr.rel (0) target = $region13
  $region12: #{infogan_generator_forward.16} parent=0 // pred_region
    _
  $region13: #{infogan_generator_forward.16} parent=0 // pred_fallthru
    _
  // Predicated region
  $region14: #{infogan_generator_forward.16} parent=0 // pred_check
    _
  $region15: #{infogan_generator_forward.16} parent=0 // pred_check_branch
    %51 = sbr.rel (0) target = $region17
  $region16: #{infogan_generator_forward.16} parent=0 // pred_region
    _
  $region17: #{infogan_generator_forward.16} parent=0 // pred_fallthru
    _
  // Predicated region
  $region18: #{infogan_generator_forward.16} parent=0 // pred_check
    _
  $region19: #{infogan_generator_forward.16} parent=0 // pred_check_branch
    %53 = sbr.rel (0) target = $region21
  $region20: #{infogan_generator_forward.16} parent=0 // pred_region
    _
  $region21: #{infogan_generator_forward.16} parent=0 // pred_fallthru
    _
  // Predicated region
  $region22: #{infogan_generator_forward.16} parent=0 // pred_check
    _
  $region23: #{infogan_generator_forward.16} parent=0 // pred_check_branch
    %55 = sbr.rel (0) target = $region25
  $region24: #{infogan_generator_forward.16} parent=0 // pred_region
    _
  $region25: #{infogan_generator_forward.16} parent=0 // pred_fallthru
    _

// kernel: infogan_generator_forward.17
$region0: #{infogan_generator_forward.17}
  #allocation0 [shape = 'u32[]', space=smem, size = 0x4, offset = 0x4, fixed_abs, tag = 'smem constant byte address 0x4 - core index']
  #allocation1 [shape = 'u32[144,128]{1,0:T(1,128)}', space=vmem, size = 0x12000, scoped, tag = 'internal scratch']
  %s0 = inlined_call_operand.vmem [shape: f32[32,128], index: 0, kind: input, shape index: {}]
  %s1 = inlined_call_operand.vmem [shape: f32[1,128], index: 1, kind: input, shape index: {}]
  %s2 = inlined_call_operand.vmem [shape: f32[1,128], index: 2, kind: input, shape index: {}]
  %s3 = inlined_call_operand.vmem [shape: f32[32,128], index: 3, kind: output, shape index: {}]
  %s4 = sld [smem:[#allocation0]]
  $region22: #{infogan_generator_forward.17} parent=0
    _
  %s6 = ssub.s32 1, %s4
  %s7 = scalar_select 0, %s6, %s4
  // Predicated region
  $region2: #{infogan_generator_forward.17} parent=0 // pred_check
    _
  $region3: #{infogan_generator_forward.17} parent=0 // pred_check_branch
    %9 = sbr.rel (0) target = $region5
  $region4: #{infogan_generator_forward.17} parent=0 // pred_region
    _
  $region5: #{infogan_generator_forward.17} parent=0 // pred_fallthru
    _
  // Predicated region
  $region6: #{infogan_generator_forward.17} parent=0 // pred_check
    _
  $region7: #{infogan_generator_forward.17} parent=0 // pred_check_branch
    %11 = sbr.rel (0) target = $region9
  $region8: #{infogan_generator_forward.17} parent=0 // pred_region
    _
  $region9: #{infogan_generator_forward.17} parent=0 // pred_fallthru
    _
  // Predicated region
  $region10: #{infogan_generator_forward.17} parent=0 // pred_check
    _
  $region11: #{infogan_generator_forward.17} parent=0 // pred_check_branch
    %13 = sbr.rel (0) target = $region13
  $region12: #{infogan_generator_forward.17} parent=0 // pred_region
    _
  $region13: #{infogan_generator_forward.17} parent=0 // pred_fallthru
    _
  %v14 = vld [vmem:[%s0] sm:$0xff]
  %v15 = vld [vmem:[%s0 + $0x8] sm:$0xff]
  %v16 = vld [vmem:[%s0 + $0x10] sm:$0xff]
  %v17 = vld [vmem:[%s0 + $0x18] sm:$0xff]
  %v18 = vld [vmem:[%s1] sm:$0x1]
  %v20 = vlaneseq
  %v21 = vshrl.u32 %v20, 7
  %v22 = vsub.s32 0, %v21
  %v23 = vrot.slane %v18, %v22
  %v25 = vmul.f32 %v14, %v23
  %v26 = vmul.f32 %v15, %v23
  %v27 = vmul.f32 %v16, %v23
  %v28 = vmul.f32 %v17, %v23
  %v29 = vld [vmem:[%s2] sm:$0x1]
  %v31 = vlaneseq
  %v32 = vshrl.u32 %v31, 7
  %v33 = vsub.s32 0, %v32
  %v34 = vrot.slane %v29, %v33
  %v36 = vadd.f32 %v25, %v34
  %v37 = vadd.f32 %v26, %v34
  %v38 = vadd.f32 %v27, %v34
  %v39 = vadd.f32 %v28, %v34
  %v40 = vmax.f32 %v36, 0.0
  %v41 = vmax.f32 %v37, 0.0
  %v42 = vmax.f32 %v38, 0.0
  %v43 = vmax.f32 %v39, 0.0
  %44 = vst [vmem:[%s3] sm:$0xff] %v40
  %45 = vst [vmem:[%s3 + $0x8] sm:$0xff] %v41
  %46 = vst [vmem:[%s3 + $0x10] sm:$0xff] %v42
  %47 = vst [vmem:[%s3 + $0x18] sm:$0xff] %v43
  // Predicated region
  $region14: #{infogan_generator_forward.17} parent=0 // pred_check
    _
  $region15: #{infogan_generator_forward.17} parent=0 // pred_check_branch
    %49 = sbr.rel (0) target = $region17
  $region16: #{infogan_generator_forward.17} parent=0 // pred_region
    _
  $region17: #{infogan_generator_forward.17} parent=0 // pred_fallthru
    _
  // Predicated region
  $region18: #{infogan_generator_forward.17} parent=0 // pred_check
    _
  $region19: #{infogan_generator_forward.17} parent=0 // pred_check_branch
    %51 = sbr.rel (0) target = $region21
  $region20: #{infogan_generator_forward.17} parent=0 // pred_region
    _
  $region21: #{infogan_generator_forward.17} parent=0 // pred_fallthru
    _

// kernel: infogan_generator_forward.15
$region0: #{infogan_generator_forward.15}
  #allocation0 [shape = 'u32[]', space=smem, size = 0x4, offset = 0x4, fixed_abs, tag = 'smem constant byte address 0x4 - core index']
  #allocation1 [shape = 'u32[144,128]{1,0:T(1,128)}', space=vmem, size = 0x12000, scoped, tag = 'internal scratch']
  %s0 = inlined_call_operand.vmem [shape: f32[32,1024], index: 0, kind: input, shape index: {}]
  %s1 = inlined_call_operand.vmem [shape: bf16[1024,128], index: 1, kind: input, shape index: {}]
  %s2 = inlined_call_operand.vmem [shape: f32[1,128], index: 2, kind: input, shape index: {}]
  %s3 = inlined_call_operand.vmem [shape: f32[32,128], index: 3, kind: output, shape index: {}]
  %s4 = sld [smem:[#allocation0]]
  $region22: #{infogan_generator_forward.15} parent=0
    _
  %s6 = ssub.s32 1, %s4
  %s7 = scalar_select 0, %s6, %s4
  // Predicated region
  $region2: #{infogan_generator_forward.15} parent=0 // pred_check
    _
  $region3: #{infogan_generator_forward.15} parent=0 // pred_check_branch
    %9 = sbr.rel (0) target = $region5
  $region4: #{infogan_generator_forward.15} parent=0 // pred_region
    _
  $region5: #{infogan_generator_forward.15} parent=0 // pred_fallthru
    _
  // Predicated region
  $region6: #{infogan_generator_forward.15} parent=0 // pred_check
    _
  $region7: #{infogan_generator_forward.15} parent=0 // pred_check_branch
    %11 = sbr.rel (0) target = $region9
  $region8: #{infogan_generator_forward.15} parent=0 // pred_region
    _
  $region9: #{infogan_generator_forward.15} parent=0 // pred_fallthru
    _
  // Predicated region
  $region10: #{infogan_generator_forward.15} parent=0 // pred_check
    _
  $region11: #{infogan_generator_forward.15} parent=0 // pred_check_branch
    %13 = sbr.rel (0) target = $region13
  $region12: #{infogan_generator_forward.15} parent=0 // pred_region
    _
  $region13: #{infogan_generator_forward.15} parent=0 // pred_fallthru
    _
  %v15 = vld [vmem:[%s0] sm:$0xff]
  %v16 = vld [vmem:[%s0 + $0x8] sm:$0xff]
  %v17 = vld [vmem:[%s0 + $0x10] sm:$0xff]
  %v18 = vld [vmem:[%s0 + $0x18] sm:$0xff]
  %v19 = vld [vmem:[%s0 + $0x20] sm:$0xff]
  %v20 = vld [vmem:[%s0 + $0x28] sm:$0xff]
  %v21 = vld [vmem:[%s0 + $0x30] sm:$0xff]
  %v22 = vld [vmem:[%s0 + $0x38] sm:$0xff]
  %v23 = vld [vmem:[%s0 + $0x40] sm:$0xff]
  %v24 = vld [vmem:[%s0 + $0x48] sm:$0xff]
  %v25 = vld [vmem:[%s0 + $0x50] sm:$0xff]
  %v26 = vld [vmem:[%s0 + $0x58] sm:$0xff]
  %v27 = vld [vmem:[%s0 + $0x60] sm:$0xff]
  %v28 = vld [vmem:[%s0 + $0x68] sm:$0xff]
  %v29 = vld [vmem:[%s0 + $0x70] sm:$0xff]
  %v30 = vld [vmem:[%s0 + $0x78] sm:$0xff]
  %v31 = vld [vmem:[%s0 + $0x80] sm:$0xff]
  %v32 = vld [vmem:[%s0 + $0x88] sm:$0xff]
  %v33 = vld [vmem:[%s0 + $0x90] sm:$0xff]
  %v34 = vld [vmem:[%s0 + $0x98] sm:$0xff]
  %v35 = vld [vmem:[%s0 + $0xa0] sm:$0xff]
  %v36 = vld [vmem:[%s0 + $0xa8] sm:$0xff]
  %v37 = vld [vmem:[%s0 + $0xb0] sm:$0xff]
  %v38 = vld [vmem:[%s0 + $0xb8] sm:$0xff]
  %v39 = vld [vmem:[%s0 + $0xc0] sm:$0xff]
  %v40 = vld [vmem:[%s0 + $0xc8] sm:$0xff]
  %v41 = vld [vmem:[%s0 + $0xd0] sm:$0xff]
  %v42 = vld [vmem:[%s0 + $0xd8] sm:$0xff]
  %v43 = vld [vmem:[%s0 + $0xe0] sm:$0xff]
  %v44 = vld [vmem:[%s0 + $0xe8] sm:$0xff]
  %v45 = vld [vmem:[%s0 + $0xf0] sm:$0xff]
  %v46 = vld [vmem:[%s0 + $0xf8] sm:$0xff]
  %v47 = vpack.c.bf16 %v23, %v15
  %v48 = vpack.c.bf16 %v24, %v16
  %v49 = vpack.c.bf16 %v25, %v17
  %v50 = vpack.c.bf16 %v26, %v18
  %v51 = vpack.c.bf16 %v27, %v19
  %v52 = vpack.c.bf16 %v28, %v20
  %v53 = vpack.c.bf16 %v29, %v21
  %v54 = vpack.c.bf16 %v30, %v22
  %v55 = vpack.c.bf16 %v39, %v31
  %v56 = vpack.c.bf16 %v40, %v32
  %v57 = vpack.c.bf16 %v41, %v33
  %v58 = vpack.c.bf16 %v42, %v34
  %v59 = vpack.c.bf16 %v43, %v35
  %v60 = vpack.c.bf16 %v44, %v36
  %v61 = vpack.c.bf16 %v45, %v37
  %v62 = vpack.c.bf16 %v46, %v38
  %v63 = vld [vmem:[%s1] sm:$0xf]
  %v64 = vld [vmem:[%s1 + $0x4] sm:$0xf]
  %v65 = vld [vmem:[%s1 + $0x8] sm:$0xf]
  %v66 = vld [vmem:[%s1 + $0xc] sm:$0xf]
  %v67 = vld [vmem:[%s1 + $0x10] sm:$0xf]
  %v68 = vld [vmem:[%s1 + $0x14] sm:$0xf]
  %v69 = vld [vmem:[%s1 + $0x18] sm:$0xf]
  %v70 = vld [vmem:[%s1 + $0x1c] sm:$0xf]
  %v71 = vld [vmem:[%s1 + $0x20] sm:$0xf]
  %v72 = vld [vmem:[%s1 + $0x24] sm:$0xf]
  %v73 = vld [vmem:[%s1 + $0x28] sm:$0xf]
  %v74 = vld [vmem:[%s1 + $0x2c] sm:$0xf]
  %v75 = vld [vmem:[%s1 + $0x30] sm:$0xf]
  %v76 = vld [vmem:[%s1 + $0x34] sm:$0xf]
  %v77 = vld [vmem:[%s1 + $0x38] sm:$0xf]
  %v78 = vld [vmem:[%s1 + $0x3c] sm:$0xf]
  %v79 = vld [vmem:[%s1 + $0x40] sm:$0xf]
  %v80 = vld [vmem:[%s1 + $0x44] sm:$0xf]
  %v81 = vld [vmem:[%s1 + $0x48] sm:$0xf]
  %v82 = vld [vmem:[%s1 + $0x4c] sm:$0xf]
  %v83 = vld [vmem:[%s1 + $0x50] sm:$0xf]
  %v84 = vld [vmem:[%s1 + $0x54] sm:$0xf]
  %v85 = vld [vmem:[%s1 + $0x58] sm:$0xf]
  %v86 = vld [vmem:[%s1 + $0x5c] sm:$0xf]
  %v87 = vld [vmem:[%s1 + $0x60] sm:$0xf]
  %v88 = vld [vmem:[%s1 + $0x64] sm:$0xf]
  %v89 = vld [vmem:[%s1 + $0x68] sm:$0xf]
  %v90 = vld [vmem:[%s1 + $0x6c] sm:$0xf]
  %v91 = vld [vmem:[%s1 + $0x70] sm:$0xf]
  %v92 = vld [vmem:[%s1 + $0x74] sm:$0xf]
  %v93 = vld [vmem:[%s1 + $0x78] sm:$0xf]
  %v94 = vld [vmem:[%s1 + $0x7c] sm:$0xf]
  %v95 = vld [vmem:[%s1 + $0x80] sm:$0xf]
  %v96 = vld [vmem:[%s1 + $0x84] sm:$0xf]
  %v97 = vld [vmem:[%s1 + $0x88] sm:$0xf]
  %v98 = vld [vmem:[%s1 + $0x8c] sm:$0xf]
  %v99 = vld [vmem:[%s1 + $0x90] sm:$0xf]
  %v100 = vld [vmem:[%s1 + $0x94] sm:$0xf]
  %v101 = vld [vmem:[%s1 + $0x98] sm:$0xf]
  %v102 = vld [vmem:[%s1 + $0x9c] sm:$0xf]
  %v103 = vld [vmem:[%s1 + $0xa0] sm:$0xf]
  %v104 = vld [vmem:[%s1 + $0xa4] sm:$0xf]
  %v105 = vld [vmem:[%s1 + $0xa8] sm:$0xf]
  %v106 = vld [vmem:[%s1 + $0xac] sm:$0xf]
  %v107 = vld [vmem:[%s1 + $0xb0] sm:$0xf]
  %v108 = vld [vmem:[%s1 + $0xb4] sm:$0xf]
  %v109 = vld [vmem:[%s1 + $0xb8] sm:$0xf]
  %v110 = vld [vmem:[%s1 + $0xbc] sm:$0xf]
  %v111 = vld [vmem:[%s1 + $0xc0] sm:$0xf]
  %v112 = vld [vmem:[%s1 + $0xc4] sm:$0xf]
  %v113 = vld [vmem:[%s1 + $0xc8] sm:$0xf]
  %v114 = vld [vmem:[%s1 + $0xcc] sm:$0xf]
  %v115 = vld [vmem:[%s1 + $0xd0] sm:$0xf]
  %v116 = vld [vmem:[%s1 + $0xd4] sm:$0xf]
  %v117 = vld [vmem:[%s1 + $0xd8] sm:$0xf]
  %v118 = vld [vmem:[%s1 + $0xdc] sm:$0xf]
  %v119 = vld [vmem:[%s1 + $0xe0] sm:$0xf]
  %v120 = vld [vmem:[%s1 + $0xe4] sm:$0xf]
  %v121 = vld [vmem:[%s1 + $0xe8] sm:$0xf]
  %v122 = vld [vmem:[%s1 + $0xec] sm:$0xf]
  %v123 = vld [vmem:[%s1 + $0xf0] sm:$0xf]
  %v124 = vld [vmem:[%s1 + $0xf4] sm:$0xf]
  %v125 = vld [vmem:[%s1 + $0xf8] sm:$0xf]
  %v126 = vld [vmem:[%s1 + $0xfc] sm:$0xf]
  %v127 = vld [vmem:[%s1 + $0x100] sm:$0xf]
  %v128 = vld [vmem:[%s1 + $0x104] sm:$0xf]
  %v129 = vld [vmem:[%s1 + $0x108] sm:$0xf]
  %v130 = vld [vmem:[%s1 + $0x10c] sm:$0xf]
  %v131 = vld [vmem:[%s1 + $0x110] sm:$0xf]
  %v132 = vld [vmem:[%s1 + $0x114] sm:$0xf]
  %v133 = vld [vmem:[%s1 + $0x118] sm:$0xf]
  %v134 = vld [vmem:[%s1 + $0x11c] sm:$0xf]
  %v135 = vld [vmem:[%s1 + $0x120] sm:$0xf]
  %v136 = vld [vmem:[%s1 + $0x124] sm:$0xf]
  %v137 = vld [vmem:[%s1 + $0x128] sm:$0xf]
  %v138 = vld [vmem:[%s1 + $0x12c] sm:$0xf]
  %v139 = vld [vmem:[%s1 + $0x130] sm:$0xf]
  %v140 = vld [vmem:[%s1 + $0x134] sm:$0xf]
  %v141 = vld [vmem:[%s1 + $0x138] sm:$0xf]
  %v142 = vld [vmem:[%s1 + $0x13c] sm:$0xf]
  %v143 = vld [vmem:[%s1 + $0x140] sm:$0xf]
  %v144 = vld [vmem:[%s1 + $0x144] sm:$0xf]
  %v145 = vld [vmem:[%s1 + $0x148] sm:$0xf]
  %v146 = vld [vmem:[%s1 + $0x14c] sm:$0xf]
  %v147 = vld [vmem:[%s1 + $0x150] sm:$0xf]
  %v148 = vld [vmem:[%s1 + $0x154] sm:$0xf]
  %v149 = vld [vmem:[%s1 + $0x158] sm:$0xf]
  %v150 = vld [vmem:[%s1 + $0x15c] sm:$0xf]
  %v151 = vld [vmem:[%s1 + $0x160] sm:$0xf]
  %v152 = vld [vmem:[%s1 + $0x164] sm:$0xf]
  %v153 = vld [vmem:[%s1 + $0x168] sm:$0xf]
  %v154 = vld [vmem:[%s1 + $0x16c] sm:$0xf]
  %v155 = vld [vmem:[%s1 + $0x170] sm:$0xf]
  %v156 = vld [vmem:[%s1 + $0x174] sm:$0xf]
  %v157 = vld [vmem:[%s1 + $0x178] sm:$0xf]
  %v158 = vld [vmem:[%s1 + $0x17c] sm:$0xf]
  %v159 = vld [vmem:[%s1 + $0x180] sm:$0xf]
  %v160 = vld [vmem:[%s1 + $0x184] sm:$0xf]
  %v161 = vld [vmem:[%s1 + $0x188] sm:$0xf]
  %v162 = vld [vmem:[%s1 + $0x18c] sm:$0xf]
  %v163 = vld [vmem:[%s1 + $0x190] sm:$0xf]
  %v164 = vld [vmem:[%s1 + $0x194] sm:$0xf]
  %v165 = vld [vmem:[%s1 + $0x198] sm:$0xf]
  %v166 = vld [vmem:[%s1 + $0x19c] sm:$0xf]
  %v167 = vld [vmem:[%s1 + $0x1a0] sm:$0xf]
  %v168 = vld [vmem:[%s1 + $0x1a4] sm:$0xf]
  %v169 = vld [vmem:[%s1 + $0x1a8] sm:$0xf]
  %v170 = vld [vmem:[%s1 + $0x1ac] sm:$0xf]
  %v171 = vld [vmem:[%s1 + $0x1b0] sm:$0xf]
  %v172 = vld [vmem:[%s1 + $0x1b4] sm:$0xf]
  %v173 = vld [vmem:[%s1 + $0x1b8] sm:$0xf]
  %v174 = vld [vmem:[%s1 + $0x1bc] sm:$0xf]
  %v175 = vld [vmem:[%s1 + $0x1c0] sm:$0xf]
  %v176 = vld [vmem:[%s1 + $0x1c4] sm:$0xf]
  %v177 = vld [vmem:[%s1 + $0x1c8] sm:$0xf]
  %v178 = vld [vmem:[%s1 + $0x1cc] sm:$0xf]
  %v179 = vld [vmem:[%s1 + $0x1d0] sm:$0xf]
  %v180 = vld [vmem:[%s1 + $0x1d4] sm:$0xf]
  %v181 = vld [vmem:[%s1 + $0x1d8] sm:$0xf]
  %v182 = vld [vmem:[%s1 + $0x1dc] sm:$0xf]
  %v183 = vld [vmem:[%s1 + $0x1e0] sm:$0xf]
  %v184 = vld [vmem:[%s1 + $0x1e4] sm:$0xf]
  %v185 = vld [vmem:[%s1 + $0x1e8] sm:$0xf]
  %v186 = vld [vmem:[%s1 + $0x1ec] sm:$0xf]
  %v187 = vld [vmem:[%s1 + $0x1f0] sm:$0xf]
  %v188 = vld [vmem:[%s1 + $0x1f4] sm:$0xf]
  %v189 = vld [vmem:[%s1 + $0x1f8] sm:$0xf]
  %v190 = vld [vmem:[%s1 + $0x1fc] sm:$0xf]
  %v191 = vld [vmem:[%s2] sm:$0x1]
  %v193 = vlaneseq
  %v194 = vshrl.u32 %v193, 7
  %v195 = vsub.s32 0, %v194
  %v196 = vrot.slane %v191, %v195
  %v326 = vunpack.c.l.b16 %v63
  %v327 = vunpack.c.l.b16 %v64
  %v328 = vunpack.c.l.b16 %v65
  %v329 = vunpack.c.l.b16 %v66
  %v330 = vunpack.c.l.b16 %v67
  %v331 = vunpack.c.l.b16 %v68
  %v332 = vunpack.c.l.b16 %v69
  %v333 = vunpack.c.l.b16 %v70
  %v334 = vunpack.c.l.b16 %v71
  %v335 = vunpack.c.l.b16 %v72
  %v336 = vunpack.c.l.b16 %v73
  %v337 = vunpack.c.l.b16 %v74
  %v338 = vunpack.c.l.b16 %v75
  %v339 = vunpack.c.l.b16 %v76
  %v340 = vunpack.c.l.b16 %v77
  %v341 = vunpack.c.l.b16 %v78
  %v342 = vunpack.c.l.b16 %v79
  %v343 = vunpack.c.l.b16 %v80
  %v344 = vunpack.c.l.b16 %v81
  %v345 = vunpack.c.l.b16 %v82
  %v346 = vunpack.c.l.b16 %v83
  %v347 = vunpack.c.l.b16 %v84
  %v348 = vunpack.c.l.b16 %v85
  %v349 = vunpack.c.l.b16 %v86
  %v350 = vunpack.c.l.b16 %v87
  %v351 = vunpack.c.l.b16 %v88
  %v352 = vunpack.c.l.b16 %v89
  %v353 = vunpack.c.l.b16 %v90
  %v354 = vunpack.c.l.b16 %v91
  %v355 = vunpack.c.l.b16 %v92
  %v356 = vunpack.c.l.b16 %v93
  %v357 = vunpack.c.l.b16 %v94
  %v358 = vunpack.c.l.b16 %v95
  %v359 = vunpack.c.l.b16 %v96
  %v360 = vunpack.c.l.b16 %v97
  %v361 = vunpack.c.l.b16 %v98
  %v362 = vunpack.c.l.b16 %v99
  %v363 = vunpack.c.l.b16 %v100
  %v364 = vunpack.c.l.b16 %v101
  %v365 = vunpack.c.l.b16 %v102
  %v366 = vunpack.c.l.b16 %v103
  %v367 = vunpack.c.l.b16 %v104
  %v368 = vunpack.c.l.b16 %v105
  %v369 = vunpack.c.l.b16 %v106
  %v370 = vunpack.c.l.b16 %v107
  %v371 = vunpack.c.l.b16 %v108
  %v372 = vunpack.c.l.b16 %v109
  %v373 = vunpack.c.l.b16 %v110
  %v374 = vunpack.c.l.b16 %v111
  %v375 = vunpack.c.l.b16 %v112
  %v376 = vunpack.c.l.b16 %v113
  %v377 = vunpack.c.l.b16 %v114
  %v378 = vunpack.c.l.b16 %v115
  %v379 = vunpack.c.l.b16 %v116
  %v380 = vunpack.c.l.b16 %v117
  %v381 = vunpack.c.l.b16 %v118
  %v382 = vunpack.c.l.b16 %v119
  %v383 = vunpack.c.l.b16 %v120
  %v384 = vunpack.c.l.b16 %v121
  %v385 = vunpack.c.l.b16 %v122
  %v386 = vunpack.c.l.b16 %v123
  %v387 = vunpack.c.l.b16 %v124
  %v388 = vunpack.c.l.b16 %v125
  %v389 = vunpack.c.l.b16 %v126
  %v390 = vunpack.c.l.b16 %v127
  %v391 = vunpack.c.l.b16 %v128
  %v392 = vunpack.c.l.b16 %v129
  %v393 = vunpack.c.l.b16 %v130
  %v394 = vunpack.c.l.b16 %v131
  %v395 = vunpack.c.l.b16 %v132
  %v396 = vunpack.c.l.b16 %v133
  %v397 = vunpack.c.l.b16 %v134
  %v398 = vunpack.c.l.b16 %v135
  %v399 = vunpack.c.l.b16 %v136
  %v400 = vunpack.c.l.b16 %v137
  %v401 = vunpack.c.l.b16 %v138
  %v402 = vunpack.c.l.b16 %v139
  %v403 = vunpack.c.l.b16 %v140
  %v404 = vunpack.c.l.b16 %v141
  %v405 = vunpack.c.l.b16 %v142
  %v406 = vunpack.c.l.b16 %v143
  %v407 = vunpack.c.l.b16 %v144
  %v408 = vunpack.c.l.b16 %v145
  %v409 = vunpack.c.l.b16 %v146
  %v410 = vunpack.c.l.b16 %v147
  %v411 = vunpack.c.l.b16 %v148
  %v412 = vunpack.c.l.b16 %v149
  %v413 = vunpack.c.l.b16 %v150
  %v414 = vunpack.c.l.b16 %v151
  %v415 = vunpack.c.l.b16 %v152
  %v416 = vunpack.c.l.b16 %v153
  %v417 = vunpack.c.l.b16 %v154
  %v418 = vunpack.c.l.b16 %v155
  %v419 = vunpack.c.l.b16 %v156
  %v420 = vunpack.c.l.b16 %v157
  %v421 = vunpack.c.l.b16 %v158
  %v422 = vunpack.c.l.b16 %v159
  %v423 = vunpack.c.l.b16 %v160
  %v424 = vunpack.c.l.b16 %v161
  %v425 = vunpack.c.l.b16 %v162
  %v426 = vunpack.c.l.b16 %v163
  %v427 = vunpack.c.l.b16 %v164
  %v428 = vunpack.c.l.b16 %v165
  %v429 = vunpack.c.l.b16 %v166
  %v430 = vunpack.c.l.b16 %v167
  %v431 = vunpack.c.l.b16 %v168
  %v432 = vunpack.c.l.b16 %v169
  %v433 = vunpack.c.l.b16 %v170
  %v434 = vunpack.c.l.b16 %v171
  %v435 = vunpack.c.l.b16 %v172
  %v436 = vunpack.c.l.b16 %v173
  %v437 = vunpack.c.l.b16 %v174
  %v438 = vunpack.c.l.b16 %v175
  %v439 = vunpack.c.l.b16 %v176
  %v440 = vunpack.c.l.b16 %v177
  %v441 = vunpack.c.l.b16 %v178
  %v442 = vunpack.c.l.b16 %v179
  %v443 = vunpack.c.l.b16 %v180
  %v444 = vunpack.c.l.b16 %v181
  %v445 = vunpack.c.l.b16 %v182
  %v446 = vunpack.c.l.b16 %v183
  %v447 = vunpack.c.l.b16 %v184
  %v448 = vunpack.c.l.b16 %v185
  %v449 = vunpack.c.l.b16 %v186
  %v450 = vunpack.c.l.b16 %v187
  %v451 = vunpack.c.l.b16 %v188
  %v452 = vunpack.c.l.b16 %v189
  %v453 = vunpack.c.l.b16 %v190
  %v454 = vpack.c.b16 %v327, %v326
  %v455 = vpack.c.b16 %v329, %v328
  %v456 = vpack.c.b16 %v331, %v330
  %v457 = vpack.c.b16 %v333, %v332
  %v458 = vpack.c.b16 %v335, %v334
  %v459 = vpack.c.b16 %v337, %v336
  %v460 = vpack.c.b16 %v339, %v338
  %v461 = vpack.c.b16 %v341, %v340
  %v462 = vpack.c.b16 %v343, %v342
  %v463 = vpack.c.b16 %v345, %v344
  %v464 = vpack.c.b16 %v347, %v346
  %v465 = vpack.c.b16 %v349, %v348
  %v466 = vpack.c.b16 %v351, %v350
  %v467 = vpack.c.b16 %v353, %v352
  %v468 = vpack.c.b16 %v355, %v354
  %v469 = vpack.c.b16 %v357, %v356
  %v470 = vpack.c.b16 %v359, %v358
  %v471 = vpack.c.b16 %v361, %v360
  %v472 = vpack.c.b16 %v363, %v362
  %v473 = vpack.c.b16 %v365, %v364
  %v474 = vpack.c.b16 %v367, %v366
  %v475 = vpack.c.b16 %v369, %v368
  %v476 = vpack.c.b16 %v371, %v370
  %v477 = vpack.c.b16 %v373, %v372
  %v478 = vpack.c.b16 %v375, %v374
  %v479 = vpack.c.b16 %v377, %v376
  %v480 = vpack.c.b16 %v379, %v378
  %v481 = vpack.c.b16 %v381, %v380
  %v482 = vpack.c.b16 %v383, %v382
  %v483 = vpack.c.b16 %v385, %v384
  %v484 = vpack.c.b16 %v387, %v386
  %v485 = vpack.c.b16 %v389, %v388
  %v486 = vpack.c.b16 %v391, %v390
  %v487 = vpack.c.b16 %v393, %v392
  %v488 = vpack.c.b16 %v395, %v394
  %v489 = vpack.c.b16 %v397, %v396
  %v490 = vpack.c.b16 %v399, %v398
  %v491 = vpack.c.b16 %v401, %v400
  %v492 = vpack.c.b16 %v403, %v402
  %v493 = vpack.c.b16 %v405, %v404
  %v494 = vpack.c.b16 %v407, %v406
  %v495 = vpack.c.b16 %v409, %v408
  %v496 = vpack.c.b16 %v411, %v410
  %v497 = vpack.c.b16 %v413, %v412
  %v498 = vpack.c.b16 %v415, %v414
  %v499 = vpack.c.b16 %v417, %v416
  %v500 = vpack.c.b16 %v419, %v418
  %v501 = vpack.c.b16 %v421, %v420
  %v502 = vpack.c.b16 %v423, %v422
  %v503 = vpack.c.b16 %v425, %v424
  %v504 = vpack.c.b16 %v427, %v426
  %v505 = vpack.c.b16 %v429, %v428
  %v506 = vpack.c.b16 %v431, %v430
  %v507 = vpack.c.b16 %v433, %v432
  %v508 = vpack.c.b16 %v435, %v434
  %v509 = vpack.c.b16 %v437, %v436
  %v510 = vpack.c.b16 %v439, %v438
  %v511 = vpack.c.b16 %v441, %v440
  %v512 = vpack.c.b16 %v443, %v442
  %v513 = vpack.c.b16 %v445, %v444
  %v514 = vpack.c.b16 %v447, %v446
  %v515 = vpack.c.b16 %v449, %v448
  %v516 = vpack.c.b16 %v451, %v450
  %v517 = vpack.c.b16 %v453, %v452
  %582 = vmatprep.subr.bf16.mxu0 0
  %583 = vmatpush1.bf16.msra.mxu0 %v461
  %584 = vmatprep.subr.bf16.mxu0 0
  %585 = vmatpush1.bf16.msra.mxu0 %v460
  %586 = vmatprep.subr.bf16.mxu0 0
  %587 = vmatpush1.bf16.msra.mxu0 %v459
  %588 = vmatprep.subr.bf16.mxu0 0
  %589 = vmatpush1.bf16.msra.mxu0 %v458
  %590 = vmatprep.subr.bf16.mxu0 0
  %591 = vmatpush1.bf16.msra.mxu0 %v457
  %592 = vmatprep.subr.bf16.mxu0 0
  %593 = vmatpush1.bf16.msra.mxu0 %v456
  %594 = vmatprep.subr.bf16.mxu0 0
  %595 = vmatpush1.bf16.msra.mxu0 %v455
  %596 = vmatprep.subr.bf16.mxu0 0
  %597 = vmatpush1.bf16.msra.mxu0 %v454
  %598 = vmatprep.subr.bf16.mxu0 0
  %599 = vmatpush2.bf16.msra.mxu0 %v469
  %600 = vmatprep.subr.bf16.mxu0 0
  %601 = vmatpush2.bf16.msra.mxu0 %v468
  %602 = vmatprep.subr.bf16.mxu0 0
  %603 = vmatpush2.bf16.msra.mxu0 %v467
  %604 = vmatprep.subr.bf16.mxu0 0
  %605 = vmatpush2.bf16.msra.mxu0 %v466
  %606 = vmatprep.subr.bf16.mxu0 0
  %607 = vmatpush2.bf16.msra.mxu0 %v465
  %608 = vmatprep.subr.bf16.mxu0 0
  %609 = vmatpush2.bf16.msra.mxu0 %v464
  %610 = vmatprep.subr.bf16.mxu0 0
  %611 = vmatpush2.bf16.msra.mxu0 %v463
  %612 = vmatprep.subr.bf16.mxu0 0
  %613 = vmatpush2.bf16.msra.mxu0 %v462
  %614 = vmatprep.mubr.bf16.mxu0 %v48
  %615 = vmatmul.mubr.bf16.gmra.mxu0 %v47
  %v616 = vpop.f32.mrf.mxu0
  %v617 = vadd.f32 %v196, %v616
  %v618 = vpop.f32.mrf.mxu0
  %v619 = vpop.f32.mrf.mxu0
  %v620 = vadd.f32 %v196, %v619
  %v621 = vpop.f32.mrf.mxu0
  %622 = vmatprep.mubr.bf16.mxu0 %v56
  %623 = vmatmul.mubr.bf16.gmra.mxu0 %v55
  %v624 = vpop.f32.mrf.mxu0
  %v625 = vadd.f32 %v196, %v624
  %v626 = vpop.f32.mrf.mxu0
  %v627 = vpop.f32.mrf.mxu0
  %v628 = vadd.f32 %v196, %v627
  %v629 = vpop.f32.mrf.mxu0
  %630 = vdwg.mxu0
  %631 = vmatprep.subr.bf16.mxu0 0
  %632 = vmatpush1.bf16.msra.mxu0 %v477
  %633 = vmatprep.subr.bf16.mxu0 0
  %634 = vmatpush1.bf16.msra.mxu0 %v476
  %635 = vmatprep.subr.bf16.mxu0 0
  %636 = vmatpush1.bf16.msra.mxu0 %v475
  %637 = vmatprep.subr.bf16.mxu0 0
  %638 = vmatpush1.bf16.msra.mxu0 %v474
  %639 = vmatprep.subr.bf16.mxu0 0
  %640 = vmatpush1.bf16.msra.mxu0 %v473
  %641 = vmatprep.subr.bf16.mxu0 0
  %642 = vmatpush1.bf16.msra.mxu0 %v472
  %643 = vmatprep.subr.bf16.mxu0 0
  %644 = vmatpush1.bf16.msra.mxu0 %v471
  %645 = vmatprep.subr.bf16.mxu0 0
  %646 = vmatpush1.bf16.msra.mxu0 %v470
  %647 = vmatprep.subr.bf16.mxu0 0
  %648 = vmatpush2.bf16.msra.mxu0 %v485
  %649 = vmatprep.subr.bf16.mxu0 0
  %650 = vmatpush2.bf16.msra.mxu0 %v484
  %651 = vmatprep.subr.bf16.mxu0 0
  %652 = vmatpush2.bf16.msra.mxu0 %v483
  %653 = vmatprep.subr.bf16.mxu0 0
  %654 = vmatpush2.bf16.msra.mxu0 %v482
  %655 = vmatprep.subr.bf16.mxu0 0
  %656 = vmatpush2.bf16.msra.mxu0 %v481
  %657 = vmatprep.subr.bf16.mxu0 0
  %658 = vmatpush2.bf16.msra.mxu0 %v480
  %659 = vmatprep.subr.bf16.mxu0 0
  %660 = vmatpush2.bf16.msra.mxu0 %v479
  %661 = vmatprep.subr.bf16.mxu0 0
  %662 = vmatpush2.bf16.msra.mxu0 %v478
  %663 = vmatprep.mubr.bf16.mxu0 %v50
  %664 = vmatmul.mubr.bf16.gmra.mxu0 %v49
  %v665 = vpop.f32.mrf.mxu0
  %v666 = vadd.f32 %v617, %v665
  %v667 = vpop.f32.mrf.mxu0
  %v668 = vpop.f32.mrf.mxu0
  %v669 = vadd.f32 %v620, %v668
  %v670 = vpop.f32.mrf.mxu0
  %671 = vmatprep.mubr.bf16.mxu0 %v58
  %672 = vmatmul.mubr.bf16.gmra.mxu0 %v57
  %v673 = vpop.f32.mrf.mxu0
  %v674 = vadd.f32 %v625, %v673
  %v675 = vpop.f32.mrf.mxu0
  %v676 = vpop.f32.mrf.mxu0
  %v677 = vadd.f32 %v628, %v676
  %v678 = vpop.f32.mrf.mxu0
  %679 = vdwg.mxu0
  %680 = vmatprep.subr.bf16.mxu0 0
  %681 = vmatpush1.bf16.msra.mxu0 %v493
  %682 = vmatprep.subr.bf16.mxu0 0
  %683 = vmatpush1.bf16.msra.mxu0 %v492
  %684 = vmatprep.subr.bf16.mxu0 0
  %685 = vmatpush1.bf16.msra.mxu0 %v491
  %686 = vmatprep.subr.bf16.mxu0 0
  %687 = vmatpush1.bf16.msra.mxu0 %v490
  %688 = vmatprep.subr.bf16.mxu0 0
  %689 = vmatpush1.bf16.msra.mxu0 %v489
  %690 = vmatprep.subr.bf16.mxu0 0
  %691 = vmatpush1.bf16.msra.mxu0 %v488
  %692 = vmatprep.subr.bf16.mxu0 0
  %693 = vmatpush1.bf16.msra.mxu0 %v487
  %694 = vmatprep.subr.bf16.mxu0 0
  %695 = vmatpush1.bf16.msra.mxu0 %v486
  %696 = vmatprep.subr.bf16.mxu0 0
  %697 = vmatpush2.bf16.msra.mxu0 %v501
  %698 = vmatprep.subr.bf16.mxu0 0
  %699 = vmatpush2.bf16.msra.mxu0 %v500
  %700 = vmatprep.subr.bf16.mxu0 0
  %701 = vmatpush2.bf16.msra.mxu0 %v499
  %702 = vmatprep.subr.bf16.mxu0 0
  %703 = vmatpush2.bf16.msra.mxu0 %v498
  %704 = vmatprep.subr.bf16.mxu0 0
  %705 = vmatpush2.bf16.msra.mxu0 %v497
  %706 = vmatprep.subr.bf16.mxu0 0
  %707 = vmatpush2.bf16.msra.mxu0 %v496
  %708 = vmatprep.subr.bf16.mxu0 0
  %709 = vmatpush2.bf16.msra.mxu0 %v495
  %710 = vmatprep.subr.bf16.mxu0 0
  %711 = vmatpush2.bf16.msra.mxu0 %v494
  %712 = vmatprep.mubr.bf16.mxu0 %v52
  %713 = vmatmul.mubr.bf16.gmra.mxu0 %v51
  %v714 = vpop.f32.mrf.mxu0
  %v715 = vadd.f32 %v666, %v714
  %v716 = vpop.f32.mrf.mxu0
  %v717 = vpop.f32.mrf.mxu0
  %v718 = vadd.f32 %v669, %v717
  %v719 = vpop.f32.mrf.mxu0
  %720 = vmatprep.mubr.bf16.mxu0 %v60
  %721 = vmatmul.mubr.bf16.gmra.mxu0 %v59
  %v722 = vpop.f32.mrf.mxu0
  %v723 = vadd.f32 %v674, %v722
  %v724 = vpop.f32.mrf.mxu0
  %v725 = vpop.f32.mrf.mxu0
  %v726 = vadd.f32 %v677, %v725
  %v727 = vpop.f32.mrf.mxu0
  %728 = vdwg.mxu0
  %729 = vmatprep.subr.bf16.mxu0 0
  %730 = vmatpush1.bf16.msra.mxu0 %v509
  %731 = vmatprep.subr.bf16.mxu0 0
  %732 = vmatpush1.bf16.msra.mxu0 %v508
  %733 = vmatprep.subr.bf16.mxu0 0
  %734 = vmatpush1.bf16.msra.mxu0 %v507
  %735 = vmatprep.subr.bf16.mxu0 0
  %736 = vmatpush1.bf16.msra.mxu0 %v506
  %737 = vmatprep.subr.bf16.mxu0 0
  %738 = vmatpush1.bf16.msra.mxu0 %v505
  %739 = vmatprep.subr.bf16.mxu0 0
  %740 = vmatpush1.bf16.msra.mxu0 %v504
  %741 = vmatprep.subr.bf16.mxu0 0
  %742 = vmatpush1.bf16.msra.mxu0 %v503
  %743 = vmatprep.subr.bf16.mxu0 0
  %744 = vmatpush1.bf16.msra.mxu0 %v502
  %745 = vmatprep.subr.bf16.mxu0 0
  %746 = vmatpush2.bf16.msra.mxu0 %v517
  %747 = vmatprep.subr.bf16.mxu0 0
  %748 = vmatpush2.bf16.msra.mxu0 %v516
  %749 = vmatprep.subr.bf16.mxu0 0
  %750 = vmatpush2.bf16.msra.mxu0 %v515
  %751 = vmatprep.subr.bf16.mxu0 0
  %752 = vmatpush2.bf16.msra.mxu0 %v514
  %753 = vmatprep.subr.bf16.mxu0 0
  %754 = vmatpush2.bf16.msra.mxu0 %v513
  %755 = vmatprep.subr.bf16.mxu0 0
  %756 = vmatpush2.bf16.msra.mxu0 %v512
  %757 = vmatprep.subr.bf16.mxu0 0
  %758 = vmatpush2.bf16.msra.mxu0 %v511
  %759 = vmatprep.subr.bf16.mxu0 0
  %760 = vmatpush2.bf16.msra.mxu0 %v510
  %761 = vmatprep.mubr.bf16.mxu0 %v54
  %762 = vmatmul.mubr.bf16.gmra.mxu0 %v53
  %v763 = vpop.f32.mrf.mxu0
  %v764 = vadd.f32 %v715, %v763
  %v765 = vpop.f32.mrf.mxu0
  %v766 = vpop.f32.mrf.mxu0
  %v767 = vadd.f32 %v718, %v766
  %v768 = vpop.f32.mrf.mxu0
  %769 = vmatprep.mubr.bf16.mxu0 %v62
  %770 = vmatmul.mubr.bf16.gmra.mxu0 %v61
  %v771 = vpop.f32.mrf.mxu0
  %v772 = vadd.f32 %v723, %v771
  %v773 = vpop.f32.mrf.mxu0
  %v774 = vpop.f32.mrf.mxu0
  %v775 = vadd.f32 %v726, %v774
  %v776 = vpop.f32.mrf.mxu0
  %777 = vdwg.mxu0
  %778 = vst [vmem:[%s3] sm:$0xff] %v764
  %779 = vst [vmem:[%s3 + $0x8] sm:$0xff] %v767
  %780 = vst [vmem:[%s3 + $0x10] sm:$0xff] %v772
  %781 = vst [vmem:[%s3 + $0x18] sm:$0xff] %v775
  // Predicated region
  $region14: #{infogan_generator_forward.15} parent=0 // pred_check
    _
  $region15: #{infogan_generator_forward.15} parent=0 // pred_check_branch
    %783 = sbr.rel (0) target = $region17
  $region16: #{infogan_generator_forward.15} parent=0 // pred_region
    _
  $region17: #{infogan_generator_forward.15} parent=0 // pred_fallthru
    _
  // Predicated region
  $region18: #{infogan_generator_forward.15} parent=0 // pred_check
    _
  $region19: #{infogan_generator_forward.15} parent=0 // pred_check_branch
    %785 = sbr.rel (0) target = $region21
  $region20: #{infogan_generator_forward.15} parent=0 // pred_region
    _
  $region21: #{infogan_generator_forward.15} parent=0 // pred_fallthru
    _

// kernel: infogan_generator_forward.19
$region0: #{infogan_generator_forward.19}
  #allocation0 [shape = 'u32[]', space=smem, size = 0x4, offset = 0x4, fixed_abs, tag = 'smem constant byte address 0x4 - core index']
  #allocation1 [shape = 'u32[144,128]{1,0:T(1,128)}', space=vmem, size = 0x12000, scoped, tag = 'internal scratch']
  %s0 = inlined_call_operand.vmem [shape: f32[8,256], index: 0, kind: input, shape index: {}]
  %s1 = inlined_call_operand.vmem [shape: f32[1,256], index: 1, kind: output, shape index: {0}]
  %s2 = inlined_call_operand.vmem [shape: f32[1,256], index: 2, kind: output, shape index: {1}]
  %3 = xla_tuple %s1, %s2
  %s4 = sld [smem:[#allocation0]]
  $region26: #{infogan_generator_forward.19} parent=0
    _
  %s6 = ssub.s32 1, %s4
  %s7 = scalar_select 0, %s6, %s4
  // Predicated region
  $region2: #{infogan_generator_forward.19} parent=0 // pred_check
    _
  $region3: #{infogan_generator_forward.19} parent=0 // pred_check_branch
    %9 = sbr.rel (0) target = $region5
  $region4: #{infogan_generator_forward.19} parent=0 // pred_region
    _
  $region5: #{infogan_generator_forward.19} parent=0 // pred_fallthru
    _
  %p10 = scmp.eq.s32.totalorder 0, 0
  // Predicated region
  $region6: #{infogan_generator_forward.19} parent=0 // pred_check
    %p11 = pneg %p10
  $region7: #{infogan_generator_forward.19} parent=0 // pred_check_branch
    %13 = sbr.rel (%p11) target = $region9
  $region8: #{infogan_generator_forward.19} parent=0 // pred_region
    %v14 = vlaneseq
    %vm15 = vcmp.ge.s32.totalorder %v14, 0
    %vm16 = vcmp.lt.s32.totalorder %v14, 256
    %vm17 = vmand %vm15, %vm16
    %18 = vst.msk [vmem:[%s1] sm:$0x3] %vm17, 0.0
    %19 = vst.msk [vmem:[%s2] sm:$0x3] %vm17, 0.0
  $region9: #{infogan_generator_forward.19} parent=0 // pred_fallthru
    _
  %v20 = vld [vmem:[%s0] sm:$0xff]
  %v21 = vld [vmem:[%s0 + $0x8] sm:$0xff]
  %v22 = vld [vmem:[%s1] sm:$0x3]
  %v23 = vrot.slane %v20, 4
  %v24 = vadd.f32 %v20, %v23
  %v25 = vrot.slane %v24, 2
  %v26 = vadd.f32 %v24, %v25
  %v27 = vrot.slane %v26, 1
  %v28 = vadd.f32 %v26, %v27
  %v29 = vrot.slane %v21, 4
  %v30 = vadd.f32 %v21, %v29
  %v31 = vrot.slane %v30, 2
  %v32 = vadd.f32 %v30, %v31
  %v33 = vrot.slane %v32, 1
  %v34 = vadd.f32 %v32, %v33
  %v37 = vcombine.low %v28, %v34
  %v39 = vunpack.c.l.s4 1966171168
  %v40 = vunpack.c.0.s8 %v39
  %v41 = vlaneseq
  %v42 = vshrl.u32 %v41, 7
  %v43 = vsub.s32 %v40, %v42
  %v44 = vrot.slane %v37, %v43
  %v46 = vunpack.c.l.s4 1966171168
  %v47 = vunpack.c.0.s8 %v46
  %v48 = vlaneseq
  %v49 = vshrl.u32 %v48, 7
  %v50 = vsub.s32 %v47, %v49
  %v51 = vrot.slane %v44, %v50
  %v53 = vadd.f32 %v22, %v51
  %v54 = vlaneseq
  %vm55 = vcmp.ge.s32.totalorder %v54, 0
  %vm56 = vcmp.lt.s32.totalorder %v54, 256
  %vm57 = vmand %vm55, %vm56
  %58 = vst.msk [vmem:[%s1] sm:$0x3] %vm57, %v53
  %v59 = vld [vmem:[%s2] sm:$0x3]
  %v60 = vmul.f32 %v20, %v20
  %v61 = vmul.f32 %v21, %v21
  %v62 = vrot.slane %v60, 4
  %v63 = vadd.f32 %v60, %v62
  %v64 = vrot.slane %v63, 2
  %v65 = vadd.f32 %v63, %v64
  %v66 = vrot.slane %v65, 1
  %v67 = vadd.f32 %v65, %v66
  %v68 = vrot.slane %v61, 4
  %v69 = vadd.f32 %v61, %v68
  %v70 = vrot.slane %v69, 2
  %v71 = vadd.f32 %v69, %v70
  %v72 = vrot.slane %v71, 1
  %v73 = vadd.f32 %v71, %v72
  %v76 = vcombine.low %v67, %v73
  %v78 = vunpack.c.l.s4 1966171168
  %v79 = vunpack.c.0.s8 %v78
  %v80 = vlaneseq
  %v81 = vshrl.u32 %v80, 7
  %v82 = vsub.s32 %v79, %v81
  %v83 = vrot.slane %v76, %v82
  %v85 = vunpack.c.l.s4 1966171168
  %v86 = vunpack.c.0.s8 %v85
  %v87 = vlaneseq
  %v88 = vshrl.u32 %v87, 7
  %v89 = vsub.s32 %v86, %v88
  %v90 = vrot.slane %v83, %v89
  %v92 = vadd.f32 %v59, %v90
  %93 = vst.msk [vmem:[%s2] sm:$0x3] %vm57, %v92
  // Predicated region
  $region10: #{infogan_generator_forward.19} parent=0 // pred_check
    _
  $region11: #{infogan_generator_forward.19} parent=0 // pred_check_branch
    %95 = sbr.rel (0) target = $region13
  $region12: #{infogan_generator_forward.19} parent=0 // pred_region
    _
  $region13: #{infogan_generator_forward.19} parent=0 // pred_fallthru
    _
  // Predicated region
  $region14: #{infogan_generator_forward.19} parent=0 // pred_check
    _
  $region15: #{infogan_generator_forward.19} parent=0 // pred_check_branch
    %97 = sbr.rel (0) target = $region17
  $region16: #{infogan_generator_forward.19} parent=0 // pred_region
    _
  $region17: #{infogan_generator_forward.19} parent=0 // pred_fallthru
    _
  // Predicated region
  $region18: #{infogan_generator_forward.19} parent=0 // pred_check
    _
  $region19: #{infogan_generator_forward.19} parent=0 // pred_check_branch
    %99 = sbr.rel (0) target = $region21
  $region20: #{infogan_generator_forward.19} parent=0 // pred_region
    _
  $region21: #{infogan_generator_forward.19} parent=0 // pred_fallthru
    _
  // Predicated region
  $region22: #{infogan_generator_forward.19} parent=0 // pred_check
    _
  $region23: #{infogan_generator_forward.19} parent=0 // pred_check_branch
    %101 = sbr.rel (0) target = $region25
  $region24: #{infogan_generator_forward.19} parent=0 // pred_region
    _
  $region25: #{infogan_generator_forward.19} parent=0 // pred_fallthru
    _

// kernel: infogan_generator_forward.20
$region0: #{infogan_generator_forward.20}
  #allocation0 [shape = 'u32[]', space=smem, size = 0x4, offset = 0x4, fixed_abs, tag = 'smem constant byte address 0x4 - core index']
  #allocation1 [shape = 'u32[144,128]{1,0:T(1,128)}', space=vmem, size = 0x12000, scoped, tag = 'internal scratch']
  %s0 = inlined_call_operand.vmem [shape: f32[8,256], index: 0, kind: input, shape index: {}]
  %s1 = inlined_call_operand.vmem [shape: f32[1,256], index: 1, kind: input, shape index: {}]
  %s2 = inlined_call_operand.vmem [shape: f32[1,256], index: 2, kind: input, shape index: {}]
  %s3 = inlined_call_operand.vmem [shape: f32[8,256], index: 3, kind: output, shape index: {}]
  %s4 = sld [smem:[#allocation0]]
  $region22: #{infogan_generator_forward.20} parent=0
    _
  %s6 = ssub.s32 1, %s4
  %s7 = scalar_select 0, %s6, %s4
  // Predicated region
  $region2: #{infogan_generator_forward.20} parent=0 // pred_check
    _
  $region3: #{infogan_generator_forward.20} parent=0 // pred_check_branch
    %9 = sbr.rel (0) target = $region5
  $region4: #{infogan_generator_forward.20} parent=0 // pred_region
    _
  $region5: #{infogan_generator_forward.20} parent=0 // pred_fallthru
    _
  // Predicated region
  $region6: #{infogan_generator_forward.20} parent=0 // pred_check
    _
  $region7: #{infogan_generator_forward.20} parent=0 // pred_check_branch
    %11 = sbr.rel (0) target = $region9
  $region8: #{infogan_generator_forward.20} parent=0 // pred_region
    _
  $region9: #{infogan_generator_forward.20} parent=0 // pred_fallthru
    _
  // Predicated region
  $region10: #{infogan_generator_forward.20} parent=0 // pred_check
    _
  $region11: #{infogan_generator_forward.20} parent=0 // pred_check_branch
    %13 = sbr.rel (0) target = $region13
  $region12: #{infogan_generator_forward.20} parent=0 // pred_region
    _
  $region13: #{infogan_generator_forward.20} parent=0 // pred_fallthru
    _
  %v14 = vld [vmem:[%s0] sm:$0xff]
  %v15 = vld [vmem:[%s0 + $0x8] sm:$0xff]
  %v16 = vld [vmem:[%s1] sm:$0x3]
  %v18 = vlaneseq
  %v19 = vshrl.u32 %v18, 7
  %v20 = vsub.s32 0, %v19
  %v21 = vrot.slane %v16, %v20
  %v22 = vlaneseq
  %v23 = vshrl.u32 %v22, 7
  %v24 = vsub.s32 1, %v23
  %v25 = vrot.slane %v16, %v24
  %v28 = vmul.f32 %v14, %v21
  %v29 = vmul.f32 %v15, %v25
  %v30 = vld [vmem:[%s2] sm:$0x3]
  %v32 = vlaneseq
  %v33 = vshrl.u32 %v32, 7
  %v34 = vsub.s32 0, %v33
  %v35 = vrot.slane %v30, %v34
  %v36 = vlaneseq
  %v37 = vshrl.u32 %v36, 7
  %v38 = vsub.s32 1, %v37
  %v39 = vrot.slane %v30, %v38
  %v42 = vadd.f32 %v28, %v35
  %v43 = vadd.f32 %v29, %v39
  %v44 = vmax.f32 %v42, 0.0
  %v45 = vmax.f32 %v43, 0.0
  %46 = vst [vmem:[%s3] sm:$0xff] %v44
  %47 = vst [vmem:[%s3 + $0x8] sm:$0xff] %v45
  // Predicated region
  $region14: #{infogan_generator_forward.20} parent=0 // pred_check
    _
  $region15: #{infogan_generator_forward.20} parent=0 // pred_check_branch
    %49 = sbr.rel (0) target = $region17
  $region16: #{infogan_generator_forward.20} parent=0 // pred_region
    _
  $region17: #{infogan_generator_forward.20} parent=0 // pred_fallthru
    _
  // Predicated region
  $region18: #{infogan_generator_forward.20} parent=0 // pred_check
    _
  $region19: #{infogan_generator_forward.20} parent=0 // pred_check_branch
    %51 = sbr.rel (0) target = $region21
  $region20: #{infogan_generator_forward.20} parent=0 // pred_region
    _
  $region21: #{infogan_generator_forward.20} parent=0 // pred_fallthru
    _

// kernel: infogan_generator_forward.18
$region0: #{infogan_generator_forward.18}
  #allocation0 [shape = 'u32[]', space=smem, size = 0x4, offset = 0x4, fixed_abs, tag = 'smem constant byte address 0x4 - core index']
  #allocation1 [shape = 'u32[144,128]{1,0:T(1,128)}', space=vmem, size = 0x12000, scoped, tag = 'internal scratch']
  #allocation2 [shape = 'f32[8,256]{1,0:T(8,128)}', space=vmem, size = 0x2000, scoped, tag = 'scratch operand']
  %s0 = inlined_call_operand.vmem [shape: f32[8,2048], index: 0, kind: input, shape index: {}]
  %s1 = inlined_call_operand.vmem [shape: bf16[2048,256], index: 1, kind: input, shape index: {}]
  %s2 = inlined_call_operand.vmem [shape: f32[1,256], index: 2, kind: input, shape index: {}]
  %s3 = inlined_call_operand.vmem [shape: f32[8,256], index: 3, kind: output, shape index: {}]
  %s4 = sld [smem:[#allocation0]]
  $region53: #{infogan_generator_forward.18} parent=0
    _
  %s6 = ssub.s32 1, %s4
  %s7 = scalar_select 0, %s6, %s4
  loop: start=0, step=1, limit=6
  $region2: #{infogan_generator_forward.18} parent=0 // loop_pre_header
    _
  $region3: #{infogan_generator_forward.18} parent=0 // loop_header
    %s9 = sphi 0, %s13
    %p10 = scmp.ge.s32.totalorder %s9, 6
    %s16 = sphi 0, %s35
    %s17 = sphi 0, %s31
    %s18 = sphi 0, %s27
    %s19 = sphi 0, %s16
    %s20 = sphi 0, %s17
    %s21 = sphi 0, %s18
    %s22 = sphi 0, %s19
    %s23 = sphi 0, %s20
    %s24 = sphi 0, %s21
    %s40 = sphi 0, %s42
    %s43 = sphi 0, %s40
    %s44 = sphi 0, %s43
    %s60 = sphi 0, %s44
    %s68 = sphi 0, %s70
    %s71 = sphi 0, %s68
    %s72 = sphi 0, %s71
    %s88 = sphi 0, %s72
    %s94 = sphi 0, %s96
    %s97 = sphi 0, %s94
    %s98 = sphi 0, %s97
    %s114 = sphi 0, %s98
    %s122 = sphi 0, %s124
    %s125 = sphi 0, %s122
    %s126 = sphi 0, %s125
    %s142 = sphi 0, %s126
  $region4: #{infogan_generator_forward.18} parent=0 // loop_header_branch
    %12 = sbr.rel (%p10) target = $region8
  $region5: #{infogan_generator_forward.18} parent=0 // loop_body
    %s14 = ssub.s32 %s9, 1
    %s15 = ssub.s32 %s9, 2
    %s25 = sadd.s32 1, %s18
    %p26 = scmp.ge.s32.totalorder %s25, 4
    %s27 = scalar_select %p26, 0, %s25
    %s28 = sadd.s32 1, %s17
    %s29 = scalar_select %p26, %s28, %s17
    %p30 = scmp.ge.s32.totalorder %s29, 1
    %s31 = scalar_select %p30, 0, %s29
    %s32 = sadd.s32 1, %s16
    %s33 = scalar_select %p30, %s32, %s16
    %p34 = scmp.ge.s32.totalorder %s33, 1
    %s35 = scalar_select %p34, 0, %s33
    %s36 = ssub.s32 %s16, %s35
    %s37 = ssub.s32 %s18, %s27
    %s38 = sor.u32 %s36, %s37
    %p39 = scmp.eq.s32.totalorder %s38, 0
    %s41 = sadd.s32 %s40, 1
    %s42 = scalar_select %p39, %s40, %s41
    %p45 = pneg %p39
    %p46 = scmp.eq.s32.totalorder %s9, 3
    %p47 = por %p45, %p46
    %p48 = scmp.ne.s32.totalorder %s40, %s43
    %p49 = scmp.eq.s32.totalorder %s9, 0
    %p50 = por %p48, %p49
    %p51 = scmp.ne.s32.totalorder %s40, %s43
    %p52 = scmp.eq.s32.totalorder %s14, 3
    %p53 = por %p51, %p52
    %p54 = scmp.ne.s32.totalorder %s43, %s44
    %p55 = scmp.eq.s32.totalorder %s14, 0
    %p56 = por %p54, %p55
    %p57 = scmp.ne.s32.totalorder %s43, %s44
    %p58 = scmp.eq.s32.totalorder %s15, 3
    %p59 = por %p57, %p58
    %p61 = scmp.ne.s32.totalorder %s44, %s60
    %p62 = scmp.eq.s32.totalorder %s15, 0
    %p63 = por %p61, %p62
    %s64 = ssub.s32 %s18, %s27
    %s65 = ssub.s32 %s17, %s31
    %s66 = sor.u32 %s64, %s65
    %p67 = scmp.eq.s32.totalorder %s66, 0
    %s69 = sadd.s32 %s68, 1
    %s70 = scalar_select %p67, %s68, %s69
    %p73 = pneg %p67
    %p74 = scmp.eq.s32.totalorder %s9, 3
    %p75 = por %p73, %p74
    %p76 = scmp.ne.s32.totalorder %s68, %s71
    %p77 = scmp.eq.s32.totalorder %s9, 0
    %p78 = por %p76, %p77
    %p79 = scmp.ne.s32.totalorder %s68, %s71
    %p80 = scmp.eq.s32.totalorder %s14, 3
    %p81 = por %p79, %p80
    %p82 = scmp.ne.s32.totalorder %s71, %s72
    %p83 = scmp.eq.s32.totalorder %s14, 0
    %p84 = por %p82, %p83
    %p85 = scmp.ne.s32.totalorder %s71, %s72
    %p86 = scmp.eq.s32.totalorder %s15, 3
    %p87 = por %p85, %p86
    %p89 = scmp.ne.s32.totalorder %s72, %s88
    %p90 = scmp.eq.s32.totalorder %s15, 0
    %p91 = por %p89, %p90
    %s92 = ssub.s32 %s17, %s31
    %p93 = scmp.eq.s32.totalorder %s92, 0
    %s95 = sadd.s32 %s94, 1
    %s96 = scalar_select %p93, %s94, %s95
    %p99 = pneg %p93
    %p100 = scmp.eq.s32.totalorder %s9, 3
    %p101 = por %p99, %p100
    %p102 = scmp.ne.s32.totalorder %s94, %s97
    %p103 = scmp.eq.s32.totalorder %s9, 0
    %p104 = por %p102, %p103
    %p105 = scmp.ne.s32.totalorder %s94, %s97
    %p106 = scmp.eq.s32.totalorder %s14, 3
    %p107 = por %p105, %p106
    %p108 = scmp.ne.s32.totalorder %s97, %s98
    %p109 = scmp.eq.s32.totalorder %s14, 0
    %p110 = por %p108, %p109
    %p111 = scmp.ne.s32.totalorder %s97, %s98
    %p112 = scmp.eq.s32.totalorder %s15, 3
    %p113 = por %p111, %p112
    %p115 = scmp.ne.s32.totalorder %s98, %s114
    %p116 = scmp.eq.s32.totalorder %s15, 0
    %p117 = por %p115, %p116
    %s118 = ssub.s32 %s16, %s35
    %s119 = ssub.s32 %s17, %s31
    %s120 = sor.u32 %s118, %s119
    %p121 = scmp.eq.s32.totalorder %s120, 0
    %s123 = sadd.s32 %s122, 1
    %s124 = scalar_select %p121, %s122, %s123
    %p127 = pneg %p121
    %p128 = scmp.eq.s32.totalorder %s9, 3
    %p129 = por %p127, %p128
    %p130 = scmp.ne.s32.totalorder %s122, %s125
    %p131 = scmp.eq.s32.totalorder %s9, 0
    %p132 = por %p130, %p131
    %p133 = scmp.ne.s32.totalorder %s122, %s125
    %p134 = scmp.eq.s32.totalorder %s14, 3
    %p135 = por %p133, %p134
    %p136 = scmp.ne.s32.totalorder %s125, %s126
    %p137 = scmp.eq.s32.totalorder %s14, 0
    %p138 = por %p136, %p137
    %p139 = scmp.ne.s32.totalorder %s125, %s126
    %p140 = scmp.eq.s32.totalorder %s15, 3
    %p141 = por %p139, %p140
    %p143 = scmp.ne.s32.totalorder %s126, %s142
    %p144 = scmp.eq.s32.totalorder %s15, 0
    %p145 = por %p143, %p144
    %p146 = scmp.le.s32.totalorder 1, %s9
    %p147 = scmp.lt.s32.totalorder %s9, 5
    %p148 = pnand %p146, %p147
    %p149 = pneg %p148
    // Predicated region
    $region9: #{infogan_generator_forward.18} parent=5 // pred_check
      _
    $region10: #{infogan_generator_forward.18} parent=5 // pred_check_branch
      %151 = sbr.rel (%p148) target = $region12
    $region11: #{infogan_generator_forward.18} parent=5 // pred_region
      %s152 = ssub.s32 %s9, 1
      // Predicated region
      $region13: #{infogan_generator_forward.18} parent=11 // pred_check
        %p153 = pneg %p110
      $region14: #{infogan_generator_forward.18} parent=11 // pred_check_branch
        %155 = sbr.rel (%p153) target = $region16
      $region15: #{infogan_generator_forward.18} parent=11 // pred_region
        %s156 = smul.u32 2, %s20
        %p157 = scmp.lt.s32.totalorder %s156, 1
        %s158 = scalar_select %p157, %s156, 1
        %s159 = scalar_lea.vmem %s2, %s158
        %s160 = smul.u32 2, %s20
      $region16: #{infogan_generator_forward.18} parent=11 // pred_fallthru
        _
    $region12: #{infogan_generator_forward.18} parent=5 // pred_fallthru
      _
    %p161 = scmp.lt.s32.totalorder %s9, 4
    // Predicated region
    $region17: #{infogan_generator_forward.18} parent=5 // pred_check
      %p162 = pneg %p161
    $region18: #{infogan_generator_forward.18} parent=5 // pred_check_branch
      %164 = sbr.rel (%p162) target = $region20
    $region19: #{infogan_generator_forward.18} parent=5 // pred_region
      // Predicated region
      $region21: #{infogan_generator_forward.18} parent=19 // pred_check
        %p165 = pneg %p50
      $region22: #{infogan_generator_forward.18} parent=19 // pred_check_branch
        %167 = sbr.rel (%p165) target = $region24
      $region23: #{infogan_generator_forward.18} parent=19 // pred_region
        %s168 = smul.u32 4, %s18
        %p169 = scmp.lt.s32.totalorder %s16, 0
        %s170 = scalar_select %p169, %s16, 0
        %p171 = scmp.lt.s32.totalorder %s168, 15
        %s172 = scalar_select %p171, %s168, 15
        %s173 = smul.addr %s170, 16
        %s174 = sadd.s32 %s172, %s173
        %s175 = smul.addr %s174, 8
        %s176 = scalar_lea.vmem %s0, %s175
        %s177 = smul.u32 4, %s18
      $region24: #{infogan_generator_forward.18} parent=19 // pred_fallthru
        _
      // Predicated region
      $region25: #{infogan_generator_forward.18} parent=19 // pred_check
        %p178 = pneg %p78
      $region26: #{infogan_generator_forward.18} parent=19 // pred_check_branch
        %180 = sbr.rel (%p178) target = $region28
      $region27: #{infogan_generator_forward.18} parent=19 // pred_region
        %s181 = smul.u32 64, %s18
        %s182 = smul.u32 2, %s17
        %p183 = scmp.lt.s32.totalorder %s181, 255
        %s184 = scalar_select %p183, %s181, 255
        %p185 = scmp.lt.s32.totalorder %s182, 1
        %s186 = scalar_select %p185, %s182, 1
        %s187 = smul.addr %s184, 2
        %s188 = sadd.s32 %s186, %s187
        %s189 = smul.addr %s188, 4
        %s190 = scalar_lea.vmem %s1, %s189
        %s191 = smul.u32 64, %s18
        %s192 = smul.u32 2, %s17
      $region28: #{infogan_generator_forward.18} parent=19 // pred_fallthru
        _
    $region20: #{infogan_generator_forward.18} parent=5 // pred_fallthru
      _
    %p193 = scmp.le.s32.totalorder 1, %s9
    %p194 = scmp.lt.s32.totalorder %s9, 5
    %p195 = pnand %p193, %p194
    %p196 = pneg %p195
    // Predicated region
    $region29: #{infogan_generator_forward.18} parent=5 // pred_check
      _
    $region30: #{infogan_generator_forward.18} parent=5 // pred_check_branch
      %198 = sbr.rel (%p195) target = $region32
    $region31: #{infogan_generator_forward.18} parent=5 // pred_region
      %s199 = ssub.s32 %s9, 1
      %s200 = smul.u32 4, %s21
      %p201 = scmp.lt.s32.totalorder %s19, 0
      %s202 = scalar_select %p201, %s19, 0
      %p203 = scmp.lt.s32.totalorder %s200, 15
      %s204 = scalar_select %p203, %s200, 15
      %s205 = smul.addr %s202, 16
      %s206 = sadd.s32 %s204, %s205
      %s207 = smul.addr %s206, 8
      %s208 = scalar_lea.vmem %s0, %s207
      %p209 = pneg %p56
      %p210 = pneg %p53
      %s211 = smul.u32 64, %s21
      %s212 = smul.u32 2, %s20
      %p213 = scmp.lt.s32.totalorder %s211, 255
      %s214 = scalar_select %p213, %s211, 255
      %p215 = scmp.lt.s32.totalorder %s212, 1
      %s216 = scalar_select %p215, %s212, 1
      %s217 = smul.addr %s214, 2
      %s218 = sadd.s32 %s216, %s217
      %s219 = smul.addr %s218, 4
      %s220 = scalar_lea.vmem %s1, %s219
      %p221 = pneg %p84
      %p222 = pneg %p81
      %s223 = smul.u32 2, %s20
      %p224 = scmp.lt.s32.totalorder %s223, 1
      %s225 = scalar_select %p224, %s223, 1
      %s226 = scalar_lea.vmem %s2, %s225
      %p227 = pneg %p110
      %p228 = pneg %p107
      %p229 = pneg %p138
      %p230 = pneg %p135
      %s231 = smul.u32 2, %s20
      %p232 = scmp.lt.s32.totalorder %s19, 0
      %s233 = scalar_select %p232, %s19, 0
      %p234 = scmp.lt.s32.totalorder %s231, 1
      %s235 = scalar_select %p234, %s231, 1
      %s236 = smul.addr %s233, 2
      %s237 = sadd.s32 %s235, %s236
      %s238 = smul.addr %s237, 8
      %s239 = scalar_lea.vmem %s3, %s238
      %s240 = smul.u32 4, %s21
      %p241 = scmp.lt.s32.totalorder %s19, 0
      %s242 = scalar_select %p241, %s19, 0
      %p243 = scmp.lt.s32.totalorder %s240, 15
      %s244 = scalar_select %p243, %s240, 15
      %s245 = smul.addr %s242, 16
      %s246 = sadd.s32 %s244, %s245
      %s247 = smul.addr %s246, 8
      %s248 = scalar_lea.vmem %s0, %s247
      %s249 = smul.u32 4, %s21
      %s250 = smul.u32 64, %s21
      %s251 = smul.u32 2, %s20
      %p252 = scmp.lt.s32.totalorder %s250, 255
      %s253 = scalar_select %p252, %s250, 255
      %p254 = scmp.lt.s32.totalorder %s251, 1
      %s255 = scalar_select %p254, %s251, 1
      %s256 = smul.addr %s253, 2
      %s257 = sadd.s32 %s255, %s256
      %s258 = smul.addr %s257, 4
      %s259 = scalar_lea.vmem %s1, %s258
      %s260 = smul.u32 64, %s21
      %s261 = smul.u32 2, %s20
      %s262 = smul.u32 2, %s20
      %p263 = scmp.lt.s32.totalorder %s262, 1
      %s264 = scalar_select %p263, %s262, 1
      %s265 = scalar_lea.vmem %s2, %s264
      %s266 = smul.u32 2, %s20
      %s267 = smul.u32 2, %s20
      %p268 = scmp.lt.s32.totalorder %s19, 0
      %s269 = scalar_select %p268, %s19, 0
      %p270 = scmp.lt.s32.totalorder %s267, 1
      %s271 = scalar_select %p270, %s267, 1
      %s272 = smul.addr %s269, 2
      %s273 = sadd.s32 %s271, %s272
      %s274 = smul.addr %s273, 8
      %s275 = scalar_lea.vmem %s3, %s274
      %s276 = smul.u32 2, %s20
      %p277 = scmp.eq.s32.totalorder %s21, 0
      // Predicated region
      $region33: #{infogan_generator_forward.18} parent=31 // pred_check
        %p278 = pneg %p277
      $region34: #{infogan_generator_forward.18} parent=31 // pred_check_branch
        %280 = sbr.rel (%p278) target = $region36
      $region35: #{infogan_generator_forward.18} parent=31 // pred_region
        %281 = vst [vmem:[#allocation2] sm:$0xff] 0.0
        %282 = vst [vmem:[#allocation2 + $0x8] sm:$0xff] 0.0
      $region36: #{infogan_generator_forward.18} parent=31 // pred_fallthru
        _
      %v283 = vld [vmem:[#allocation2] sm:$0xff]
      %v284 = vld [vmem:[#allocation2 + $0x8] sm:$0xff]
      %v285 = vld [vmem:[%s248] sm:$0xff]
      %v286 = vld [vmem:[%s248 + $0x8] sm:$0xff]
      %v287 = vld [vmem:[%s248 + $0x10] sm:$0xff]
      %v288 = vld [vmem:[%s248 + $0x18] sm:$0xff]
      %v289 = vpack.c.bf16 %v285, %v285
      %v290 = vpack.c.bf16 %v286, %v286
      %v291 = vpack.c.bf16 %v287, %v287
      %v292 = vpack.c.bf16 %v288, %v288
      %v293 = vld [vmem:[%s259] sm:$0xff]
      %v294 = vld [vmem:[%s259 + $0x8] sm:$0xff]
      %v295 = vld [vmem:[%s259 + $0x10] sm:$0xff]
      %v296 = vld [vmem:[%s259 + $0x18] sm:$0xff]
      %v297 = vld [vmem:[%s259 + $0x20] sm:$0xff]
      %v298 = vld [vmem:[%s259 + $0x28] sm:$0xff]
      %v299 = vld [vmem:[%s259 + $0x30] sm:$0xff]
      %v300 = vld [vmem:[%s259 + $0x38] sm:$0xff]
      %v301 = vld [vmem:[%s259 + $0x40] sm:$0xff]
      %v302 = vld [vmem:[%s259 + $0x48] sm:$0xff]
      %v303 = vld [vmem:[%s259 + $0x50] sm:$0xff]
      %v304 = vld [vmem:[%s259 + $0x58] sm:$0xff]
      %v305 = vld [vmem:[%s259 + $0x60] sm:$0xff]
      %v306 = vld [vmem:[%s259 + $0x68] sm:$0xff]
      %v307 = vld [vmem:[%s259 + $0x70] sm:$0xff]
      %v308 = vld [vmem:[%s259 + $0x78] sm:$0xff]
      %v309 = vld [vmem:[%s259 + $0x80] sm:$0xff]
      %v310 = vld [vmem:[%s259 + $0x88] sm:$0xff]
      %v311 = vld [vmem:[%s259 + $0x90] sm:$0xff]
      %v312 = vld [vmem:[%s259 + $0x98] sm:$0xff]
      %v313 = vld [vmem:[%s259 + $0xa0] sm:$0xff]
      %v314 = vld [vmem:[%s259 + $0xa8] sm:$0xff]
      %v315 = vld [vmem:[%s259 + $0xb0] sm:$0xff]
      %v316 = vld [vmem:[%s259 + $0xb8] sm:$0xff]
      %v317 = vld [vmem:[%s259 + $0xc0] sm:$0xff]
      %v318 = vld [vmem:[%s259 + $0xc8] sm:$0xff]
      %v319 = vld [vmem:[%s259 + $0xd0] sm:$0xff]
      %v320 = vld [vmem:[%s259 + $0xd8] sm:$0xff]
      %v321 = vld [vmem:[%s259 + $0xe0] sm:$0xff]
      %v322 = vld [vmem:[%s259 + $0xe8] sm:$0xff]
      %v323 = vld [vmem:[%s259 + $0xf0] sm:$0xff]
      %v324 = vld [vmem:[%s259 + $0xf8] sm:$0xff]
      %v325 = vld [vmem:[%s259 + $0x100] sm:$0xff]
      %v326 = vld [vmem:[%s259 + $0x108] sm:$0xff]
      %v327 = vld [vmem:[%s259 + $0x110] sm:$0xff]
      %v328 = vld [vmem:[%s259 + $0x118] sm:$0xff]
      %v329 = vld [vmem:[%s259 + $0x120] sm:$0xff]
      %v330 = vld [vmem:[%s259 + $0x128] sm:$0xff]
      %v331 = vld [vmem:[%s259 + $0x130] sm:$0xff]
      %v332 = vld [vmem:[%s259 + $0x138] sm:$0xff]
      %v333 = vld [vmem:[%s259 + $0x140] sm:$0xff]
      %v334 = vld [vmem:[%s259 + $0x148] sm:$0xff]
      %v335 = vld [vmem:[%s259 + $0x150] sm:$0xff]
      %v336 = vld [vmem:[%s259 + $0x158] sm:$0xff]
      %v337 = vld [vmem:[%s259 + $0x160] sm:$0xff]
      %v338 = vld [vmem:[%s259 + $0x168] sm:$0xff]
      %v339 = vld [vmem:[%s259 + $0x170] sm:$0xff]
      %v340 = vld [vmem:[%s259 + $0x178] sm:$0xff]
      %v341 = vld [vmem:[%s259 + $0x180] sm:$0xff]
      %v342 = vld [vmem:[%s259 + $0x188] sm:$0xff]
      %v343 = vld [vmem:[%s259 + $0x190] sm:$0xff]
      %v344 = vld [vmem:[%s259 + $0x198] sm:$0xff]
      %v345 = vld [vmem:[%s259 + $0x1a0] sm:$0xff]
      %v346 = vld [vmem:[%s259 + $0x1a8] sm:$0xff]
      %v347 = vld [vmem:[%s259 + $0x1b0] sm:$0xff]
      %v348 = vld [vmem:[%s259 + $0x1b8] sm:$0xff]
      %v349 = vld [vmem:[%s259 + $0x1c0] sm:$0xff]
      %v350 = vld [vmem:[%s259 + $0x1c8] sm:$0xff]
      %v351 = vld [vmem:[%s259 + $0x1d0] sm:$0xff]
      %v352 = vld [vmem:[%s259 + $0x1d8] sm:$0xff]
      %v353 = vld [vmem:[%s259 + $0x1e0] sm:$0xff]
      %v354 = vld [vmem:[%s259 + $0x1e8] sm:$0xff]
      %v355 = vld [vmem:[%s259 + $0x1f0] sm:$0xff]
      %v356 = vld [vmem:[%s259 + $0x1f8] sm:$0xff]
      %v421 = vunpack.c.l.b16 %v293
      %v422 = vunpack.c.h.b16 %v293
      %v423 = vunpack.c.l.b16 %v294
      %v424 = vunpack.c.h.b16 %v294
      %v425 = vunpack.c.l.b16 %v295
      %v426 = vunpack.c.h.b16 %v295
      %v427 = vunpack.c.l.b16 %v296
      %v428 = vunpack.c.h.b16 %v296
      %v429 = vunpack.c.l.b16 %v297
      %v430 = vunpack.c.h.b16 %v297
      %v431 = vunpack.c.l.b16 %v298
      %v432 = vunpack.c.h.b16 %v298
      %v433 = vunpack.c.l.b16 %v299
      %v434 = vunpack.c.h.b16 %v299
      %v435 = vunpack.c.l.b16 %v300
      %v436 = vunpack.c.h.b16 %v300
      %v437 = vunpack.c.l.b16 %v301
      %v438 = vunpack.c.h.b16 %v301
      %v439 = vunpack.c.l.b16 %v302
      %v440 = vunpack.c.h.b16 %v302
      %v441 = vunpack.c.l.b16 %v303
      %v442 = vunpack.c.h.b16 %v303
      %v443 = vunpack.c.l.b16 %v304
      %v444 = vunpack.c.h.b16 %v304
      %v445 = vunpack.c.l.b16 %v305
      %v446 = vunpack.c.h.b16 %v305
      %v447 = vunpack.c.l.b16 %v306
      %v448 = vunpack.c.h.b16 %v306
      %v449 = vunpack.c.l.b16 %v307
      %v450 = vunpack.c.h.b16 %v307
      %v451 = vunpack.c.l.b16 %v308
      %v452 = vunpack.c.h.b16 %v308
      %v453 = vunpack.c.l.b16 %v309
      %v454 = vunpack.c.h.b16 %v309
      %v455 = vunpack.c.l.b16 %v310
      %v456 = vunpack.c.h.b16 %v310
      %v457 = vunpack.c.l.b16 %v311
      %v458 = vunpack.c.h.b16 %v311
      %v459 = vunpack.c.l.b16 %v312
      %v460 = vunpack.c.h.b16 %v312
      %v461 = vunpack.c.l.b16 %v313
      %v462 = vunpack.c.h.b16 %v313
      %v463 = vunpack.c.l.b16 %v314
      %v464 = vunpack.c.h.b16 %v314
      %v465 = vunpack.c.l.b16 %v315
      %v466 = vunpack.c.h.b16 %v315
      %v467 = vunpack.c.l.b16 %v316
      %v468 = vunpack.c.h.b16 %v316
      %v469 = vunpack.c.l.b16 %v317
      %v470 = vunpack.c.h.b16 %v317
      %v471 = vunpack.c.l.b16 %v318
      %v472 = vunpack.c.h.b16 %v318
      %v473 = vunpack.c.l.b16 %v319
      %v474 = vunpack.c.h.b16 %v319
      %v475 = vunpack.c.l.b16 %v320
      %v476 = vunpack.c.h.b16 %v320
      %v477 = vunpack.c.l.b16 %v321
      %v478 = vunpack.c.h.b16 %v321
      %v479 = vunpack.c.l.b16 %v322
      %v480 = vunpack.c.h.b16 %v322
      %v481 = vunpack.c.l.b16 %v323
      %v482 = vunpack.c.h.b16 %v323
      %v483 = vunpack.c.l.b16 %v324
      %v484 = vunpack.c.h.b16 %v324
      %v485 = vunpack.c.l.b16 %v325
      %v486 = vunpack.c.h.b16 %v325
      %v487 = vunpack.c.l.b16 %v326
      %v488 = vunpack.c.h.b16 %v326
      %v489 = vunpack.c.l.b16 %v327
      %v490 = vunpack.c.h.b16 %v327
      %v491 = vunpack.c.l.b16 %v328
      %v492 = vunpack.c.h.b16 %v328
      %v493 = vunpack.c.l.b16 %v329
      %v494 = vunpack.c.h.b16 %v329
      %v495 = vunpack.c.l.b16 %v330
      %v496 = vunpack.c.h.b16 %v330
      %v497 = vunpack.c.l.b16 %v331
      %v498 = vunpack.c.h.b16 %v331
      %v499 = vunpack.c.l.b16 %v332
      %v500 = vunpack.c.h.b16 %v332
      %v501 = vunpack.c.l.b16 %v333
      %v502 = vunpack.c.h.b16 %v333
      %v503 = vunpack.c.l.b16 %v334
      %v504 = vunpack.c.h.b16 %v334
      %v505 = vunpack.c.l.b16 %v335
      %v506 = vunpack.c.h.b16 %v335
      %v507 = vunpack.c.l.b16 %v336
      %v508 = vunpack.c.h.b16 %v336
      %v509 = vunpack.c.l.b16 %v337
      %v510 = vunpack.c.h.b16 %v337
      %v511 = vunpack.c.l.b16 %v338
      %v512 = vunpack.c.h.b16 %v338
      %v513 = vunpack.c.l.b16 %v339
      %v514 = vunpack.c.h.b16 %v339
      %v515 = vunpack.c.l.b16 %v340
      %v516 = vunpack.c.h.b16 %v340
      %v517 = vunpack.c.l.b16 %v341
      %v518 = vunpack.c.h.b16 %v341
      %v519 = vunpack.c.l.b16 %v342
      %v520 = vunpack.c.h.b16 %v342
      %v521 = vunpack.c.l.b16 %v343
      %v522 = vunpack.c.h.b16 %v343
      %v523 = vunpack.c.l.b16 %v344
      %v524 = vunpack.c.h.b16 %v344
      %v525 = vunpack.c.l.b16 %v345
      %v526 = vunpack.c.h.b16 %v345
      %v527 = vunpack.c.l.b16 %v346
      %v528 = vunpack.c.h.b16 %v346
      %v529 = vunpack.c.l.b16 %v347
      %v530 = vunpack.c.h.b16 %v347
      %v531 = vunpack.c.l.b16 %v348
      %v532 = vunpack.c.h.b16 %v348
      %v533 = vunpack.c.l.b16 %v349
      %v534 = vunpack.c.h.b16 %v349
      %v535 = vunpack.c.l.b16 %v350
      %v536 = vunpack.c.h.b16 %v350
      %v537 = vunpack.c.l.b16 %v351
      %v538 = vunpack.c.h.b16 %v351
      %v539 = vunpack.c.l.b16 %v352
      %v540 = vunpack.c.h.b16 %v352
      %v541 = vunpack.c.l.b16 %v353
      %v542 = vunpack.c.h.b16 %v353
      %v543 = vunpack.c.l.b16 %v354
      %v544 = vunpack.c.h.b16 %v354
      %v545 = vunpack.c.l.b16 %v355
      %v546 = vunpack.c.h.b16 %v355
      %v547 = vunpack.c.l.b16 %v356
      %v548 = vunpack.c.h.b16 %v356
      %v549 = vpack.c.b16 %v423, %v421
      %v550 = vpack.c.b16 %v424, %v422
      %v551 = vpack.c.b16 %v427, %v425
      %v552 = vpack.c.b16 %v428, %v426
      %v553 = vpack.c.b16 %v431, %v429
      %v554 = vpack.c.b16 %v432, %v430
      %v555 = vpack.c.b16 %v435, %v433
      %v556 = vpack.c.b16 %v436, %v434
      %v557 = vpack.c.b16 %v439, %v437
      %v558 = vpack.c.b16 %v440, %v438
      %v559 = vpack.c.b16 %v443, %v441
      %v560 = vpack.c.b16 %v444, %v442
      %v561 = vpack.c.b16 %v447, %v445
      %v562 = vpack.c.b16 %v448, %v446
      %v563 = vpack.c.b16 %v451, %v449
      %v564 = vpack.c.b16 %v452, %v450
      %v565 = vpack.c.b16 %v455, %v453
      %v566 = vpack.c.b16 %v456, %v454
      %v567 = vpack.c.b16 %v459, %v457
      %v568 = vpack.c.b16 %v460, %v458
      %v569 = vpack.c.b16 %v463, %v461
      %v570 = vpack.c.b16 %v464, %v462
      %v571 = vpack.c.b16 %v467, %v465
      %v572 = vpack.c.b16 %v468, %v466
      %v573 = vpack.c.b16 %v471, %v469
      %v574 = vpack.c.b16 %v472, %v470
      %v575 = vpack.c.b16 %v475, %v473
      %v576 = vpack.c.b16 %v476, %v474
      %v577 = vpack.c.b16 %v479, %v477
      %v578 = vpack.c.b16 %v480, %v478
      %v579 = vpack.c.b16 %v483, %v481
      %v580 = vpack.c.b16 %v484, %v482
      %v581 = vpack.c.b16 %v487, %v485
      %v582 = vpack.c.b16 %v488, %v486
      %v583 = vpack.c.b16 %v491, %v489
      %v584 = vpack.c.b16 %v492, %v490
      %v585 = vpack.c.b16 %v495, %v493
      %v586 = vpack.c.b16 %v496, %v494
      %v587 = vpack.c.b16 %v499, %v497
      %v588 = vpack.c.b16 %v500, %v498
      %v589 = vpack.c.b16 %v503, %v501
      %v590 = vpack.c.b16 %v504, %v502
      %v591 = vpack.c.b16 %v507, %v505
      %v592 = vpack.c.b16 %v508, %v506
      %v593 = vpack.c.b16 %v511, %v509
      %v594 = vpack.c.b16 %v512, %v510
      %v595 = vpack.c.b16 %v515, %v513
      %v596 = vpack.c.b16 %v516, %v514
      %v597 = vpack.c.b16 %v519, %v517
      %v598 = vpack.c.b16 %v520, %v518
      %v599 = vpack.c.b16 %v523, %v521
      %v600 = vpack.c.b16 %v524, %v522
      %v601 = vpack.c.b16 %v527, %v525
      %v602 = vpack.c.b16 %v528, %v526
      %v603 = vpack.c.b16 %v531, %v529
      %v604 = vpack.c.b16 %v532, %v530
      %v605 = vpack.c.b16 %v535, %v533
      %v606 = vpack.c.b16 %v536, %v534
      %v607 = vpack.c.b16 %v539, %v537
      %v608 = vpack.c.b16 %v540, %v538
      %v609 = vpack.c.b16 %v543, %v541
      %v610 = vpack.c.b16 %v544, %v542
      %v611 = vpack.c.b16 %v547, %v545
      %v612 = vpack.c.b16 %v548, %v546
      %677 = vmatprep.subr.bf16.mxu0 %v564
      %678 = vmatpush1.bf16.msra.mxu0 %v563
      %679 = vmatprep.subr.bf16.mxu0 %v562
      %680 = vmatpush1.bf16.msra.mxu0 %v561
      %681 = vmatprep.subr.bf16.mxu0 %v560
      %682 = vmatpush1.bf16.msra.mxu0 %v559
      %683 = vmatprep.subr.bf16.mxu0 %v558
      %684 = vmatpush1.bf16.msra.mxu0 %v557
      %685 = vmatprep.subr.bf16.mxu0 %v556
      %686 = vmatpush1.bf16.msra.mxu0 %v555
      %687 = vmatprep.subr.bf16.mxu0 %v554
      %688 = vmatpush1.bf16.msra.mxu0 %v553
      %689 = vmatprep.subr.bf16.mxu0 %v552
      %690 = vmatpush1.bf16.msra.mxu0 %v551
      %691 = vmatprep.subr.bf16.mxu0 %v550
      %692 = vmatpush1.bf16.msra.mxu0 %v549
      %693 = vmatprep.subr.bf16.mxu0 %v580
      %694 = vmatpush2.bf16.msra.mxu0 %v579
      %695 = vmatprep.subr.bf16.mxu0 %v578
      %696 = vmatpush2.bf16.msra.mxu0 %v577
      %697 = vmatprep.subr.bf16.mxu0 %v576
      %698 = vmatpush2.bf16.msra.mxu0 %v575
      %699 = vmatprep.subr.bf16.mxu0 %v574
      %700 = vmatpush2.bf16.msra.mxu0 %v573
      %701 = vmatprep.subr.bf16.mxu0 %v572
      %702 = vmatpush2.bf16.msra.mxu0 %v571
      %703 = vmatprep.subr.bf16.mxu0 %v570
      %704 = vmatpush2.bf16.msra.mxu0 %v569
      %705 = vmatprep.subr.bf16.mxu0 %v568
      %706 = vmatpush2.bf16.msra.mxu0 %v567
      %707 = vmatprep.subr.bf16.mxu0 %v566
      %708 = vmatpush2.bf16.msra.mxu0 %v565
      %709 = vmatprep.mubr.bf16.mxu0 %v290
      %710 = vmatmul.mubr.bf16.gmra.mxu0 %v289
      %v711 = vpop.f32.mrf.mxu0
      %v712 = vadd.f32 0.0, %v711
      %v713 = vpop.f32.mrf.mxu0
      %v714 = vadd.f32 0.0, %v713
      %v715 = vpop.f32.mrf.mxu0
      %v716 = vpop.f32.mrf.mxu0
      %717 = vdwg.mxu0
      %718 = vmatprep.subr.bf16.mxu0 %v596
      %719 = vmatpush1.bf16.msra.mxu0 %v595
      %720 = vmatprep.subr.bf16.mxu0 %v594
      %721 = vmatpush1.bf16.msra.mxu0 %v593
      %722 = vmatprep.subr.bf16.mxu0 %v592
      %723 = vmatpush1.bf16.msra.mxu0 %v591
      %724 = vmatprep.subr.bf16.mxu0 %v590
      %725 = vmatpush1.bf16.msra.mxu0 %v589
      %726 = vmatprep.subr.bf16.mxu0 %v588
      %727 = vmatpush1.bf16.msra.mxu0 %v587
      %728 = vmatprep.subr.bf16.mxu0 %v586
      %729 = vmatpush1.bf16.msra.mxu0 %v585
      %730 = vmatprep.subr.bf16.mxu0 %v584
      %731 = vmatpush1.bf16.msra.mxu0 %v583
      %732 = vmatprep.subr.bf16.mxu0 %v582
      %733 = vmatpush1.bf16.msra.mxu0 %v581
      %734 = vmatprep.subr.bf16.mxu0 %v612
      %735 = vmatpush2.bf16.msra.mxu0 %v611
      %736 = vmatprep.subr.bf16.mxu0 %v610
      %737 = vmatpush2.bf16.msra.mxu0 %v609
      %738 = vmatprep.subr.bf16.mxu0 %v608
      %739 = vmatpush2.bf16.msra.mxu0 %v607
      %740 = vmatprep.subr.bf16.mxu0 %v606
      %741 = vmatpush2.bf16.msra.mxu0 %v605
      %742 = vmatprep.subr.bf16.mxu0 %v604
      %743 = vmatpush2.bf16.msra.mxu0 %v603
      %744 = vmatprep.subr.bf16.mxu0 %v602
      %745 = vmatpush2.bf16.msra.mxu0 %v601
      %746 = vmatprep.subr.bf16.mxu0 %v600
      %747 = vmatpush2.bf16.msra.mxu0 %v599
      %748 = vmatprep.subr.bf16.mxu0 %v598
      %749 = vmatpush2.bf16.msra.mxu0 %v597
      %750 = vmatprep.mubr.bf16.mxu0 %v292
      %751 = vmatmul.mubr.bf16.gmra.mxu0 %v291
      %v752 = vpop.f32.mrf.mxu0
      %v753 = vadd.f32 %v712, %v752
      %v754 = vpop.f32.mrf.mxu0
      %v755 = vadd.f32 %v714, %v754
      %v756 = vpop.f32.mrf.mxu0
      %v757 = vpop.f32.mrf.mxu0
      %758 = vdwg.mxu0
      %v759 = vadd.f32 %v283, %v753
      %v760 = vadd.f32 %v284, %v755
      %761 = vst [vmem:[#allocation2] sm:$0xff] %v759
      %762 = vst [vmem:[#allocation2 + $0x8] sm:$0xff] %v760
      %p763 = scmp.eq.s32.totalorder %s21, 3
      // Predicated region
      $region37: #{infogan_generator_forward.18} parent=31 // pred_check
        %p764 = pneg %p763
      $region38: #{infogan_generator_forward.18} parent=31 // pred_check_branch
        %766 = sbr.rel (%p764) target = $region40
      $region39: #{infogan_generator_forward.18} parent=31 // pred_region
        %v767 = vld [vmem:[#allocation2] sm:$0xff]
        %v768 = vld [vmem:[#allocation2 + $0x8] sm:$0xff]
        %v769 = vld [vmem:[%s265] sm:$0x3]
        %v771 = vlaneseq
        %v772 = vshrl.u32 %v771, 7
        %v773 = vsub.s32 0, %v772
        %v774 = vrot.slane %v769, %v773
        %v775 = vlaneseq
        %v776 = vshrl.u32 %v775, 7
        %v777 = vsub.s32 1, %v776
        %v778 = vrot.slane %v769, %v777
        %v781 = vadd.f32 %v767, %v774
        %v782 = vadd.f32 %v768, %v778
        %783 = vst [vmem:[%s275] sm:$0xff] %v781
        %784 = vst [vmem:[%s275 + $0x8] sm:$0xff] %v782
      $region40: #{infogan_generator_forward.18} parent=31 // pred_fallthru
        _
      %s785 = smul.u32 2, %s20
      %p786 = scmp.lt.s32.totalorder %s19, 0
      %s787 = scalar_select %p786, %s19, 0
      %p788 = scmp.lt.s32.totalorder %s785, 1
      %s789 = scalar_select %p788, %s785, 1
      %s790 = smul.addr %s787, 2
      %s791 = sadd.s32 %s789, %s790
      %s792 = smul.addr %s791, 8
      %s793 = scalar_lea.vmem %s3, %s792
      // Predicated region
      $region41: #{infogan_generator_forward.18} parent=31 // pred_check
        %p794 = pneg %p135
      $region42: #{infogan_generator_forward.18} parent=31 // pred_check_branch
        %796 = sbr.rel (%p794) target = $region44
      $region43: #{infogan_generator_forward.18} parent=31 // pred_region
        %s797 = smul.u32 2, %s20
      $region44: #{infogan_generator_forward.18} parent=31 // pred_fallthru
        _
      // Predicated region
      $region45: #{infogan_generator_forward.18} parent=31 // pred_check
        %p798 = pneg %p135
      $region46: #{infogan_generator_forward.18} parent=31 // pred_check_branch
        %800 = sbr.rel (%p798) target = $region48
      $region47: #{infogan_generator_forward.18} parent=31 // pred_region
        %s801 = smul.u32 2, %s20
        %p802 = scmp.lt.s32.totalorder %s19, 0
        %s803 = scalar_select %p802, %s19, 0
        %p804 = scmp.lt.s32.totalorder %s801, 1
        %s805 = scalar_select %p804, %s801, 1
        %s806 = smul.addr %s803, 2
        %s807 = sadd.s32 %s805, %s806
        %s808 = smul.addr %s807, 8
        %s809 = scalar_lea.vmem %s3, %s808
      $region48: #{infogan_generator_forward.18} parent=31 // pred_fallthru
        _
    $region32: #{infogan_generator_forward.18} parent=5 // pred_fallthru
      _
    %p810 = scmp.le.s32.totalorder 2, %s9
    // Predicated region
    $region49: #{infogan_generator_forward.18} parent=5 // pred_check
      %p811 = pneg %p810
    $region50: #{infogan_generator_forward.18} parent=5 // pred_check_branch
      %813 = sbr.rel (%p811) target = $region52
    $region51: #{infogan_generator_forward.18} parent=5 // pred_region
      %s814 = ssub.s32 %s9, 2
    $region52: #{infogan_generator_forward.18} parent=5 // pred_fallthru
      _
  $region6: #{infogan_generator_forward.18} parent=0 // loop_footer
    %s13 = sadd.s32 1, %s9
  $region7: #{infogan_generator_forward.18} parent=0 // loop_footer_branch
    %8 = sbr.rel target = $region3
  $region8: #{infogan_generator_forward.18} parent=0 // loop_exit
    _

// kernel: infogan_generator_forward.23
$region0: #{infogan_generator_forward.23}
  #allocation0 [shape = 'u32[]', space=smem, size = 0x4, offset = 0x4, fixed_abs, tag = 'smem constant byte address 0x4 - core index']
  #allocation1 [shape = 'u32[144,128]{1,0:T(1,128)}', space=vmem, size = 0x12000, scoped, tag = 'internal scratch']
  %s0 = inlined_call_operand.vmem [shape: f32[2,512], index: 0, kind: input, shape index: {}]
  %s1 = inlined_call_operand.vmem [shape: f32[1,512], index: 1, kind: input, shape index: {}]
  %s2 = inlined_call_operand.vmem [shape: f32[1,512], index: 2, kind: input, shape index: {}]
  %s3 = inlined_call_operand.vmem [shape: f32[2,512], index: 3, kind: output, shape index: {}]
  %s4 = sld [smem:[#allocation0]]
  $region22: #{infogan_generator_forward.23} parent=0
    _
  %s6 = ssub.s32 1, %s4
  %s7 = scalar_select 0, %s6, %s4
  // Predicated region
  $region2: #{infogan_generator_forward.23} parent=0 // pred_check
    _
  $region3: #{infogan_generator_forward.23} parent=0 // pred_check_branch
    %9 = sbr.rel (0) target = $region5
  $region4: #{infogan_generator_forward.23} parent=0 // pred_region
    _
  $region5: #{infogan_generator_forward.23} parent=0 // pred_fallthru
    _
  // Predicated region
  $region6: #{infogan_generator_forward.23} parent=0 // pred_check
    _
  $region7: #{infogan_generator_forward.23} parent=0 // pred_check_branch
    %11 = sbr.rel (0) target = $region9
  $region8: #{infogan_generator_forward.23} parent=0 // pred_region
    _
  $region9: #{infogan_generator_forward.23} parent=0 // pred_fallthru
    _
  // Predicated region
  $region10: #{infogan_generator_forward.23} parent=0 // pred_check
    _
  $region11: #{infogan_generator_forward.23} parent=0 // pred_check_branch
    %13 = sbr.rel (0) target = $region13
  $region12: #{infogan_generator_forward.23} parent=0 // pred_region
    _
  $region13: #{infogan_generator_forward.23} parent=0 // pred_fallthru
    _
  %v14 = vld [vmem:[%s0] sm:$0xff]
  %v15 = vld [vmem:[%s1] sm:$0xf]
  %v17 = vlaneseq
  %v18 = vshrl.u32 %v17, 7
  %v19 = vsub.s32 0, %v18
  %v20 = vrot.slane %v15, %v19
  %v21 = vlaneseq
  %v22 = vshrl.u32 %v21, 7
  %v23 = vsub.s32 1, %v22
  %v24 = vrot.slane %v15, %v23
  %v25 = vlaneseq
  %v26 = vshrl.u32 %v25, 7
  %v27 = vsub.s32 2, %v26
  %v28 = vrot.slane %v15, %v27
  %v29 = vlaneseq
  %v30 = vshrl.u32 %v29, 7
  %v31 = vsub.s32 3, %v30
  %v32 = vrot.slane %v15, %v31
  %v33 = vcombine.low %v20, %v24
  %v34 = vcombine.low %v28, %v32
  %v36 = vunpack.c.l.s4 1983009808
  %v37 = vunpack.c.0.s8 %v36
  %v38 = vlaneseq
  %v39 = vshrl.u32 %v38, 7
  %v40 = vsub.s32 %v37, %v39
  %v41 = vrot.slane %v33, %v40
  %v43 = vunpack.c.l.s4 1983009808
  %v44 = vunpack.c.0.s8 %v43
  %v45 = vlaneseq
  %v46 = vshrl.u32 %v45, 7
  %v47 = vsub.s32 %v44, %v46
  %v48 = vrot.slane %v34, %v47
  %v49 = vcombine.low %v41, %v48
  %v51 = vmul.f32 %v14, %v49
  %v52 = vld [vmem:[%s2] sm:$0xf]
  %v54 = vlaneseq
  %v55 = vshrl.u32 %v54, 7
  %v56 = vsub.s32 0, %v55
  %v57 = vrot.slane %v52, %v56
  %v58 = vlaneseq
  %v59 = vshrl.u32 %v58, 7
  %v60 = vsub.s32 1, %v59
  %v61 = vrot.slane %v52, %v60
  %v62 = vlaneseq
  %v63 = vshrl.u32 %v62, 7
  %v64 = vsub.s32 2, %v63
  %v65 = vrot.slane %v52, %v64
  %v66 = vlaneseq
  %v67 = vshrl.u32 %v66, 7
  %v68 = vsub.s32 3, %v67
  %v69 = vrot.slane %v52, %v68
  %v70 = vcombine.low %v57, %v61
  %v71 = vcombine.low %v65, %v69
  %v73 = vunpack.c.l.s4 1983009808
  %v74 = vunpack.c.0.s8 %v73
  %v75 = vlaneseq
  %v76 = vshrl.u32 %v75, 7
  %v77 = vsub.s32 %v74, %v76
  %v78 = vrot.slane %v70, %v77
  %v80 = vunpack.c.l.s4 1983009808
  %v81 = vunpack.c.0.s8 %v80
  %v82 = vlaneseq
  %v83 = vshrl.u32 %v82, 7
  %v84 = vsub.s32 %v81, %v83
  %v85 = vrot.slane %v71, %v84
  %v86 = vcombine.low %v78, %v85
  %v88 = vadd.f32 %v51, %v86
  %v89 = vmax.f32 %v88, 0.0
  %90 = vst [vmem:[%s3] sm:$0xff] %v89
  // Predicated region
  $region14: #{infogan_generator_forward.23} parent=0 // pred_check
    _
  $region15: #{infogan_generator_forward.23} parent=0 // pred_check_branch
    %92 = sbr.rel (0) target = $region17
  $region16: #{infogan_generator_forward.23} parent=0 // pred_region
    _
  $region17: #{infogan_generator_forward.23} parent=0 // pred_fallthru
    _
  // Predicated region
  $region18: #{infogan_generator_forward.23} parent=0 // pred_check
    _
  $region19: #{infogan_generator_forward.23} parent=0 // pred_check_branch
    %94 = sbr.rel (0) target = $region21
  $region20: #{infogan_generator_forward.23} parent=0 // pred_region
    _
  $region21: #{infogan_generator_forward.23} parent=0 // pred_fallthru
    _

// kernel: infogan_generator_forward.22
$region0: #{infogan_generator_forward.22}
  #allocation0 [shape = 'u32[]', space=smem, size = 0x4, offset = 0x4, fixed_abs, tag = 'smem constant byte address 0x4 - core index']
  #allocation1 [shape = 'u32[144,128]{1,0:T(1,128)}', space=vmem, size = 0x12000, scoped, tag = 'internal scratch']
  %s0 = inlined_call_operand.vmem [shape: f32[2,512], index: 0, kind: input, shape index: {}]
  %s1 = inlined_call_operand.vmem [shape: f32[1,512], index: 1, kind: output, shape index: {0}]
  %s2 = inlined_call_operand.vmem [shape: f32[1,512], index: 2, kind: output, shape index: {1}]
  %3 = xla_tuple %s1, %s2
  %s4 = sld [smem:[#allocation0]]
  $region26: #{infogan_generator_forward.22} parent=0
    _
  %s6 = ssub.s32 1, %s4
  %s7 = scalar_select 0, %s6, %s4
  // Predicated region
  $region2: #{infogan_generator_forward.22} parent=0 // pred_check
    _
  $region3: #{infogan_generator_forward.22} parent=0 // pred_check_branch
    %9 = sbr.rel (0) target = $region5
  $region4: #{infogan_generator_forward.22} parent=0 // pred_region
    _
  $region5: #{infogan_generator_forward.22} parent=0 // pred_fallthru
    _
  %p10 = scmp.eq.s32.totalorder 0, 0
  // Predicated region
  $region6: #{infogan_generator_forward.22} parent=0 // pred_check
    %p11 = pneg %p10
  $region7: #{infogan_generator_forward.22} parent=0 // pred_check_branch
    %13 = sbr.rel (%p11) target = $region9
  $region8: #{infogan_generator_forward.22} parent=0 // pred_region
    %v14 = vlaneseq
    %vm15 = vcmp.ge.s32.totalorder %v14, 0
    %vm16 = vcmp.lt.s32.totalorder %v14, 512
    %vm17 = vmand %vm15, %vm16
    %18 = vst.msk [vmem:[%s1] sm:$0xf] %vm17, 0.0
    %19 = vst.msk [vmem:[%s2] sm:$0xf] %vm17, 0.0
  $region9: #{infogan_generator_forward.22} parent=0 // pred_fallthru
    _
  %v20 = vld [vmem:[%s0] sm:$0xff]
  %v21 = vld [vmem:[%s1] sm:$0xf]
  %v23 = vcombine.high %v20, %v20
  %v25 = vunpack.c.l.s4 1983009808
  %v26 = vunpack.c.0.s8 %v25
  %v27 = vlaneseq
  %v28 = vshrl.u32 %v27, 7
  %v29 = vsub.s32 %v26, %v28
  %v30 = vrot.slane %v20, %v29
  %v32 = vunpack.c.l.s4 1983009808
  %v33 = vunpack.c.0.s8 %v32
  %v34 = vlaneseq
  %v35 = vshrl.u32 %v34, 7
  %v36 = vsub.s32 %v33, %v35
  %v37 = vrot.slane %v23, %v36
  %v38 = vcombine.high %v30, %v30
  %v39 = vcombine.high %v37, %v37
  %vm44 = vcmask 1041408
  %v45 = vsel %vm44, %v30, 0.0
  %v46 = vrot.slane %v45, 4
  %v47 = vadd.f32 %v45, %v46
  %v48 = vrot.slane %v47, 2
  %v49 = vadd.f32 %v47, %v48
  %v50 = vrot.slane %v49, 1
  %v51 = vadd.f32 %v49, %v50
  %v52 = vsel %vm44, %v38, 0.0
  %v53 = vrot.slane %v52, 4
  %v54 = vadd.f32 %v52, %v53
  %v55 = vrot.slane %v54, 2
  %v56 = vadd.f32 %v54, %v55
  %v57 = vrot.slane %v56, 1
  %v58 = vadd.f32 %v56, %v57
  %v59 = vsel %vm44, %v37, 0.0
  %v60 = vrot.slane %v59, 4
  %v61 = vadd.f32 %v59, %v60
  %v62 = vrot.slane %v61, 2
  %v63 = vadd.f32 %v61, %v62
  %v64 = vrot.slane %v63, 1
  %v65 = vadd.f32 %v63, %v64
  %v66 = vsel %vm44, %v39, 0.0
  %v67 = vrot.slane %v66, 4
  %v68 = vadd.f32 %v66, %v67
  %v69 = vrot.slane %v68, 2
  %v70 = vadd.f32 %v68, %v69
  %v71 = vrot.slane %v70, 1
  %v72 = vadd.f32 %v70, %v71
  %v77 = vcombine.low %v51, %v58
  %v78 = vcombine.low %v65, %v72
  %v80 = vunpack.c.l.s4 1966171168
  %v81 = vunpack.c.0.s8 %v80
  %v82 = vlaneseq
  %v83 = vshrl.u32 %v82, 7
  %v84 = vsub.s32 %v81, %v83
  %v85 = vrot.slane %v77, %v84
  %v87 = vunpack.c.l.s4 1966171168
  %v88 = vunpack.c.0.s8 %v87
  %v89 = vlaneseq
  %v90 = vshrl.u32 %v89, 7
  %v91 = vsub.s32 %v88, %v90
  %v92 = vrot.slane %v78, %v91
  %v93 = vcombine.low %v85, %v92
  %v95 = vunpack.c.l.s4 1966171168
  %v96 = vunpack.c.0.s8 %v95
  %v97 = vlaneseq
  %v98 = vshrl.u32 %v97, 7
  %v99 = vsub.s32 %v96, %v98
  %v100 = vrot.slane %v93, %v99
  %v102 = vadd.f32 %v21, %v100
  %v103 = vlaneseq
  %vm104 = vcmp.ge.s32.totalorder %v103, 0
  %vm105 = vcmp.lt.s32.totalorder %v103, 512
  %vm106 = vmand %vm104, %vm105
  %107 = vst.msk [vmem:[%s1] sm:$0xf] %vm106, %v102
  %v108 = vld [vmem:[%s2] sm:$0xf]
  %v109 = vmul.f32 %v20, %v20
  %v111 = vcombine.high %v109, %v109
  %v113 = vunpack.c.l.s4 1983009808
  %v114 = vunpack.c.0.s8 %v113
  %v115 = vlaneseq
  %v116 = vshrl.u32 %v115, 7
  %v117 = vsub.s32 %v114, %v116
  %v118 = vrot.slane %v109, %v117
  %v120 = vunpack.c.l.s4 1983009808
  %v121 = vunpack.c.0.s8 %v120
  %v122 = vlaneseq
  %v123 = vshrl.u32 %v122, 7
  %v124 = vsub.s32 %v121, %v123
  %v125 = vrot.slane %v111, %v124
  %v126 = vcombine.high %v118, %v118
  %v127 = vcombine.high %v125, %v125
  %v132 = vsel %vm44, %v118, 0.0
  %v133 = vrot.slane %v132, 4
  %v134 = vadd.f32 %v132, %v133
  %v135 = vrot.slane %v134, 2
  %v136 = vadd.f32 %v134, %v135
  %v137 = vrot.slane %v136, 1
  %v138 = vadd.f32 %v136, %v137
  %v139 = vsel %vm44, %v126, 0.0
  %v140 = vrot.slane %v139, 4
  %v141 = vadd.f32 %v139, %v140
  %v142 = vrot.slane %v141, 2
  %v143 = vadd.f32 %v141, %v142
  %v144 = vrot.slane %v143, 1
  %v145 = vadd.f32 %v143, %v144
  %v146 = vsel %vm44, %v125, 0.0
  %v147 = vrot.slane %v146, 4
  %v148 = vadd.f32 %v146, %v147
  %v149 = vrot.slane %v148, 2
  %v150 = vadd.f32 %v148, %v149
  %v151 = vrot.slane %v150, 1
  %v152 = vadd.f32 %v150, %v151
  %v153 = vsel %vm44, %v127, 0.0
  %v154 = vrot.slane %v153, 4
  %v155 = vadd.f32 %v153, %v154
  %v156 = vrot.slane %v155, 2
  %v157 = vadd.f32 %v155, %v156
  %v158 = vrot.slane %v157, 1
  %v159 = vadd.f32 %v157, %v158
  %v164 = vcombine.low %v138, %v145
  %v165 = vcombine.low %v152, %v159
  %v167 = vunpack.c.l.s4 1966171168
  %v168 = vunpack.c.0.s8 %v167
  %v169 = vlaneseq
  %v170 = vshrl.u32 %v169, 7
  %v171 = vsub.s32 %v168, %v170
  %v172 = vrot.slane %v164, %v171
  %v174 = vunpack.c.l.s4 1966171168
  %v175 = vunpack.c.0.s8 %v174
  %v176 = vlaneseq
  %v177 = vshrl.u32 %v176, 7
  %v178 = vsub.s32 %v175, %v177
  %v179 = vrot.slane %v165, %v178
  %v180 = vcombine.low %v172, %v179
  %v182 = vunpack.c.l.s4 1966171168
  %v183 = vunpack.c.0.s8 %v182
  %v184 = vlaneseq
  %v185 = vshrl.u32 %v184, 7
  %v186 = vsub.s32 %v183, %v185
  %v187 = vrot.slane %v180, %v186
  %v189 = vadd.f32 %v108, %v187
  %190 = vst.msk [vmem:[%s2] sm:$0xf] %vm106, %v189
  // Predicated region
  $region10: #{infogan_generator_forward.22} parent=0 // pred_check
    _
  $region11: #{infogan_generator_forward.22} parent=0 // pred_check_branch
    %192 = sbr.rel (0) target = $region13
  $region12: #{infogan_generator_forward.22} parent=0 // pred_region
    _
  $region13: #{infogan_generator_forward.22} parent=0 // pred_fallthru
    _
  // Predicated region
  $region14: #{infogan_generator_forward.22} parent=0 // pred_check
    _
  $region15: #{infogan_generator_forward.22} parent=0 // pred_check_branch
    %194 = sbr.rel (0) target = $region17
  $region16: #{infogan_generator_forward.22} parent=0 // pred_region
    _
  $region17: #{infogan_generator_forward.22} parent=0 // pred_fallthru
    _
  // Predicated region
  $region18: #{infogan_generator_forward.22} parent=0 // pred_check
    _
  $region19: #{infogan_generator_forward.22} parent=0 // pred_check_branch
    %196 = sbr.rel (0) target = $region21
  $region20: #{infogan_generator_forward.22} parent=0 // pred_region
    _
  $region21: #{infogan_generator_forward.22} parent=0 // pred_fallthru
    _
  // Predicated region
  $region22: #{infogan_generator_forward.22} parent=0 // pred_check
    _
  $region23: #{infogan_generator_forward.22} parent=0 // pred_check_branch
    %198 = sbr.rel (0) target = $region25
  $region24: #{infogan_generator_forward.22} parent=0 // pred_region
    _
  $region25: #{infogan_generator_forward.22} parent=0 // pred_fallthru
    _

// kernel: infogan_generator_forward.21
$region0: #{infogan_generator_forward.21}
  #allocation0 [shape = 'u32[]', space=smem, size = 0x4, offset = 0x4, fixed_abs, tag = 'smem constant byte address 0x4 - core index']
  #allocation1 [shape = 'u32[144,128]{1,0:T(1,128)}', space=vmem, size = 0x12000, scoped, tag = 'internal scratch']
  #allocation2 [shape = 'f32[2,256]{1,0:T(2,128)}', space=vmem, size = 0x800, scoped, tag = 'scratch operand']
  %s0 = inlined_call_operand.vmem [shape: f32[2,4096], index: 0, kind: input, shape index: {}]
  %s1 = inlined_call_operand.vmem [shape: bf16[4096,512], index: 1, kind: input, shape index: {}]
  %s2 = inlined_call_operand.vmem [shape: f32[1,512], index: 2, kind: input, shape index: {}]
  %s3 = inlined_call_operand.vmem [shape: f32[2,512], index: 3, kind: output, shape index: {}]
  %s4 = sld [smem:[#allocation0]]
  $region91: #{infogan_generator_forward.21} parent=0
    _
  %s6 = ssub.s32 1, %s4
  %s7 = scalar_select 0, %s6, %s4
  $region1: #{infogan_generator_forward.21} parent=0
    #allocation3 [shape = 'u8[524288]{0}', space=vmem, size = 0x80000, scoped, tag = 'input window, operand 1']
    loop: start=0, step=1, limit=18
    $region2: #{infogan_generator_forward.21} parent=1 // loop_pre_header
      _
    $region3: #{infogan_generator_forward.21} parent=1 // loop_header
      %s9 = sphi 0, %s13
      %p10 = scmp.ge.s32.totalorder %s9, 18
      %s16 = sphi 0, %s35
      %s17 = sphi 0, %s31
      %s18 = sphi 0, %s27
      %s19 = sphi 0, %s16
      %s20 = sphi 0, %s17
      %s21 = sphi 0, %s18
      %s22 = sphi 0, %s19
      %s23 = sphi 0, %s20
      %s24 = sphi 0, %s21
      %s40 = sphi 0, %s42
      %s43 = sphi 0, %s40
      %s44 = sphi 0, %s43
      %s60 = sphi 0, %s44
      %s68 = sphi 0, %s70
      %s71 = sphi 0, %s68
      %s72 = sphi 0, %s71
      %s88 = sphi 0, %s72
      %s94 = sphi 0, %s96
      %s97 = sphi 0, %s94
      %s98 = sphi 0, %s97
      %s114 = sphi 0, %s98
      %s122 = sphi 0, %s124
      %s125 = sphi 0, %s122
      %s126 = sphi 0, %s125
      %s142 = sphi 0, %s126
    $region4: #{infogan_generator_forward.21} parent=1 // loop_header_branch
      %12 = sbr.rel (%p10) target = $region8
    $region5: #{infogan_generator_forward.21} parent=1 // loop_body
      %s14 = ssub.s32 %s9, 1
      %s15 = ssub.s32 %s9, 2
      %s25 = sadd.s32 1, %s18
      %p26 = scmp.ge.s32.totalorder %s25, 8
      %s27 = scalar_select %p26, 0, %s25
      %s28 = sadd.s32 1, %s17
      %s29 = scalar_select %p26, %s28, %s17
      %p30 = scmp.ge.s32.totalorder %s29, 2
      %s31 = scalar_select %p30, 0, %s29
      %s32 = sadd.s32 1, %s16
      %s33 = scalar_select %p30, %s32, %s16
      %p34 = scmp.ge.s32.totalorder %s33, 1
      %s35 = scalar_select %p34, 0, %s33
      %s36 = ssub.s32 %s16, %s35
      %s37 = ssub.s32 %s18, %s27
      %s38 = sor.u32 %s36, %s37
      %p39 = scmp.eq.s32.totalorder %s38, 0
      %s41 = sadd.s32 %s40, 1
      %s42 = scalar_select %p39, %s40, %s41
      %p45 = pneg %p39
      %p46 = scmp.eq.s32.totalorder %s9, 15
      %p47 = por %p45, %p46
      %p48 = scmp.ne.s32.totalorder %s40, %s43
      %p49 = scmp.eq.s32.totalorder %s9, 0
      %p50 = por %p48, %p49
      %p51 = scmp.ne.s32.totalorder %s40, %s43
      %p52 = scmp.eq.s32.totalorder %s14, 15
      %p53 = por %p51, %p52
      %p54 = scmp.ne.s32.totalorder %s43, %s44
      %p55 = scmp.eq.s32.totalorder %s14, 0
      %p56 = por %p54, %p55
      %p57 = scmp.ne.s32.totalorder %s43, %s44
      %p58 = scmp.eq.s32.totalorder %s15, 15
      %p59 = por %p57, %p58
      %p61 = scmp.ne.s32.totalorder %s44, %s60
      %p62 = scmp.eq.s32.totalorder %s15, 0
      %p63 = por %p61, %p62
      %s64 = ssub.s32 %s18, %s27
      %s65 = ssub.s32 %s17, %s31
      %s66 = sor.u32 %s64, %s65
      %p67 = scmp.eq.s32.totalorder %s66, 0
      %s69 = sadd.s32 %s68, 1
      %s70 = scalar_select %p67, %s68, %s69
      %p73 = pneg %p67
      %p74 = scmp.eq.s32.totalorder %s9, 15
      %p75 = por %p73, %p74
      %p76 = scmp.ne.s32.totalorder %s68, %s71
      %p77 = scmp.eq.s32.totalorder %s9, 0
      %p78 = por %p76, %p77
      %p79 = scmp.ne.s32.totalorder %s68, %s71
      %p80 = scmp.eq.s32.totalorder %s14, 15
      %p81 = por %p79, %p80
      %p82 = scmp.ne.s32.totalorder %s71, %s72
      %p83 = scmp.eq.s32.totalorder %s14, 0
      %p84 = por %p82, %p83
      %p85 = scmp.ne.s32.totalorder %s71, %s72
      %p86 = scmp.eq.s32.totalorder %s15, 15
      %p87 = por %p85, %p86
      %p89 = scmp.ne.s32.totalorder %s72, %s88
      %p90 = scmp.eq.s32.totalorder %s15, 0
      %p91 = por %p89, %p90
      %s92 = ssub.s32 %s17, %s31
      %p93 = scmp.eq.s32.totalorder %s92, 0
      %s95 = sadd.s32 %s94, 1
      %s96 = scalar_select %p93, %s94, %s95
      %p99 = pneg %p93
      %p100 = scmp.eq.s32.totalorder %s9, 15
      %p101 = por %p99, %p100
      %p102 = scmp.ne.s32.totalorder %s94, %s97
      %p103 = scmp.eq.s32.totalorder %s9, 0
      %p104 = por %p102, %p103
      %p105 = scmp.ne.s32.totalorder %s94, %s97
      %p106 = scmp.eq.s32.totalorder %s14, 15
      %p107 = por %p105, %p106
      %p108 = scmp.ne.s32.totalorder %s97, %s98
      %p109 = scmp.eq.s32.totalorder %s14, 0
      %p110 = por %p108, %p109
      %p111 = scmp.ne.s32.totalorder %s97, %s98
      %p112 = scmp.eq.s32.totalorder %s15, 15
      %p113 = por %p111, %p112
      %p115 = scmp.ne.s32.totalorder %s98, %s114
      %p116 = scmp.eq.s32.totalorder %s15, 0
      %p117 = por %p115, %p116
      %s118 = ssub.s32 %s16, %s35
      %s119 = ssub.s32 %s17, %s31
      %s120 = sor.u32 %s118, %s119
      %p121 = scmp.eq.s32.totalorder %s120, 0
      %s123 = sadd.s32 %s122, 1
      %s124 = scalar_select %p121, %s122, %s123
      %p127 = pneg %p121
      %p128 = scmp.eq.s32.totalorder %s9, 15
      %p129 = por %p127, %p128
      %p130 = scmp.ne.s32.totalorder %s122, %s125
      %p131 = scmp.eq.s32.totalorder %s9, 0
      %p132 = por %p130, %p131
      %p133 = scmp.ne.s32.totalorder %s122, %s125
      %p134 = scmp.eq.s32.totalorder %s14, 15
      %p135 = por %p133, %p134
      %p136 = scmp.ne.s32.totalorder %s125, %s126
      %p137 = scmp.eq.s32.totalorder %s14, 0
      %p138 = por %p136, %p137
      %p139 = scmp.ne.s32.totalorder %s125, %s126
      %p140 = scmp.eq.s32.totalorder %s15, 15
      %p141 = por %p139, %p140
      %p143 = scmp.ne.s32.totalorder %s126, %s142
      %p144 = scmp.eq.s32.totalorder %s15, 0
      %p145 = por %p143, %p144
      %p146 = scmp.le.s32.totalorder 1, %s9
      %p147 = scmp.lt.s32.totalorder %s9, 17
      %p148 = pnand %p146, %p147
      %p149 = pneg %p148
      // Predicated region
      $region9: #{infogan_generator_forward.21} parent=5 // pred_check
        _
      $region10: #{infogan_generator_forward.21} parent=5 // pred_check_branch
        %151 = sbr.rel (%p148) target = $region12
      $region11: #{infogan_generator_forward.21} parent=5 // pred_region
        %s152 = ssub.s32 %s9, 1
      $region12: #{infogan_generator_forward.21} parent=5 // pred_fallthru
        _
      %p153 = scmp.lt.s32.totalorder %s9, 16
      // Predicated region
      $region13: #{infogan_generator_forward.21} parent=5 // pred_check
        %p154 = pneg %p153
      $region14: #{infogan_generator_forward.21} parent=5 // pred_check_branch
        %156 = sbr.rel (%p154) target = $region16
      $region15: #{infogan_generator_forward.21} parent=5 // pred_region
        // Predicated region
        $region17: #{infogan_generator_forward.21} parent=15 // pred_check
          %p157 = pneg %p50
        $region18: #{infogan_generator_forward.21} parent=15 // pred_check_branch
          %159 = sbr.rel (%p157) target = $region20
        $region19: #{infogan_generator_forward.21} parent=15 // pred_region
          %s160 = smul.u32 4, %s18
          %p161 = scmp.lt.s32.totalorder %s16, 0
          %s162 = scalar_select %p161, %s16, 0
          %p163 = scmp.lt.s32.totalorder %s160, 31
          %s164 = scalar_select %p163, %s160, 31
          %s165 = smul.addr %s162, 32
          %s166 = sadd.s32 %s164, %s165
          %s167 = smul.addr %s166, 2
          %s168 = scalar_lea.vmem %s0, %s167
          %s169 = smul.u32 4, %s18
        $region20: #{infogan_generator_forward.21} parent=15 // pred_fallthru
          _
        // Predicated region
        $region21: #{infogan_generator_forward.21} parent=15 // pred_check
          %p170 = pneg %p78
        $region22: #{infogan_generator_forward.21} parent=15 // pred_check_branch
          %172 = sbr.rel (%p170) target = $region24
        $region23: #{infogan_generator_forward.21} parent=15 // pred_region
          %s173 = sand.u32 %s68, 1
          %s174 = sand.u32 %s68, 1
          %s175 = smul.addr %s174, 512
          %s176 = scalar_lea.vmem [#allocation3], %s175
          %s177 = smul.u32 64, %s18
          %s178 = smul.u32 2, %s17
          %s179 = smul.addr %s177, 4
          %s180 = sadd.s32 %s178, %s179
          %s181 = smul.addr %s180, 4
          %s182 = scalar_lea.vmem %s1, %s181
          // Predicated region
          $region25: #{infogan_generator_forward.21} parent=23 // pred_check
            _
          $region26: #{infogan_generator_forward.21} parent=23 // pred_check_branch
            %184 = sbr.rel (0) target = $region28
          $region27: #{infogan_generator_forward.21} parent=23 // pred_region
            // Predicated region
            $region29: #{infogan_generator_forward.21} parent=27 // pred_check
              _
            $region30: #{infogan_generator_forward.21} parent=27 // pred_check_branch
              %186 = sbr.rel (0) target = $region32
            $region31: #{infogan_generator_forward.21} parent=27 // pred_region
              // Predicated region
              $region44: #{infogan_generator_forward.21} parent=31 // pred_check
                _
              $region45: #{infogan_generator_forward.21} parent=31 // pred_check_branch
                %328 = sbr.rel (0) target = $region47
              $region46: #{infogan_generator_forward.21} parent=31 // pred_region
                loop: start=0, step=1, limit=1
                $region48: #{infogan_generator_forward.21} parent=46 // loop_pre_header
                  _
                $region49: #{infogan_generator_forward.21} parent=46 // loop_header
                  %s330 = sphi 0, %s334
                  %p331 = scmp.ge.s32.totalorder %s330, 1
                  %s335 = sphi %s182, %s182
                  %s336 = sphi %s176, %s176
                $region50: #{infogan_generator_forward.21} parent=46 // loop_header_branch
                  %333 = sbr.rel (%p331) target = $region54
                $region51: #{infogan_generator_forward.21} parent=46 // loop_body
                  %v337 = vld [vmem:[%s335] sm:$0xff]
                  %338 = vst [vmem:[%s336] sm:$0xff] %v337
                  %v339 = vld [vmem:[%s335 + $0x10] sm:$0xff]
                  %340 = vst [vmem:[%s336 + $0x8] sm:$0xff] %v339
                  %v341 = vld [vmem:[%s335 + $0x20] sm:$0xff]
                  %342 = vst [vmem:[%s336 + $0x10] sm:$0xff] %v341
                  %v343 = vld [vmem:[%s335 + $0x30] sm:$0xff]
                  %344 = vst [vmem:[%s336 + $0x18] sm:$0xff] %v343
                  %v345 = vld [vmem:[%s335 + $0x40] sm:$0xff]
                  %346 = vst [vmem:[%s336 + $0x20] sm:$0xff] %v345
                  %v347 = vld [vmem:[%s335 + $0x50] sm:$0xff]
                  %348 = vst [vmem:[%s336 + $0x28] sm:$0xff] %v347
                  %v349 = vld [vmem:[%s335 + $0x60] sm:$0xff]
                  %350 = vst [vmem:[%s336 + $0x30] sm:$0xff] %v349
                  %v351 = vld [vmem:[%s335 + $0x70] sm:$0xff]
                  %352 = vst [vmem:[%s336 + $0x38] sm:$0xff] %v351
                  %v353 = vld [vmem:[%s335 + $0x80] sm:$0xff]
                  %354 = vst [vmem:[%s336 + $0x40] sm:$0xff] %v353
                  %v355 = vld [vmem:[%s335 + $0x90] sm:$0xff]
                  %356 = vst [vmem:[%s336 + $0x48] sm:$0xff] %v355
                  %v357 = vld [vmem:[%s335 + $0xa0] sm:$0xff]
                  %358 = vst [vmem:[%s336 + $0x50] sm:$0xff] %v357
                  %v359 = vld [vmem:[%s335 + $0xb0] sm:$0xff]
                  %360 = vst [vmem:[%s336 + $0x58] sm:$0xff] %v359
                  %v361 = vld [vmem:[%s335 + $0xc0] sm:$0xff]
                  %362 = vst [vmem:[%s336 + $0x60] sm:$0xff] %v361
                  %v363 = vld [vmem:[%s335 + $0xd0] sm:$0xff]
                  %364 = vst [vmem:[%s336 + $0x68] sm:$0xff] %v363
                  %v365 = vld [vmem:[%s335 + $0xe0] sm:$0xff]
                  %366 = vst [vmem:[%s336 + $0x70] sm:$0xff] %v365
                  %v367 = vld [vmem:[%s335 + $0xf0] sm:$0xff]
                  %368 = vst [vmem:[%s336 + $0x78] sm:$0xff] %v367
                  %v369 = vld [vmem:[%s335 + $0x100] sm:$0xff]
                  %370 = vst [vmem:[%s336 + $0x80] sm:$0xff] %v369
                  %v371 = vld [vmem:[%s335 + $0x110] sm:$0xff]
                  %372 = vst [vmem:[%s336 + $0x88] sm:$0xff] %v371
                  %v373 = vld [vmem:[%s335 + $0x120] sm:$0xff]
                  %374 = vst [vmem:[%s336 + $0x90] sm:$0xff] %v373
                  %v375 = vld [vmem:[%s335 + $0x130] sm:$0xff]
                  %376 = vst [vmem:[%s336 + $0x98] sm:$0xff] %v375
                  %v377 = vld [vmem:[%s335 + $0x140] sm:$0xff]
                  %378 = vst [vmem:[%s336 + $0xa0] sm:$0xff] %v377
                  %v379 = vld [vmem:[%s335 + $0x150] sm:$0xff]
                  %380 = vst [vmem:[%s336 + $0xa8] sm:$0xff] %v379
                  %v381 = vld [vmem:[%s335 + $0x160] sm:$0xff]
                  %382 = vst [vmem:[%s336 + $0xb0] sm:$0xff] %v381
                  %v383 = vld [vmem:[%s335 + $0x170] sm:$0xff]
                  %384 = vst [vmem:[%s336 + $0xb8] sm:$0xff] %v383
                  %v385 = vld [vmem:[%s335 + $0x180] sm:$0xff]
                  %386 = vst [vmem:[%s336 + $0xc0] sm:$0xff] %v385
                  %v387 = vld [vmem:[%s335 + $0x190] sm:$0xff]
                  %388 = vst [vmem:[%s336 + $0xc8] sm:$0xff] %v387
                  %v389 = vld [vmem:[%s335 + $0x1a0] sm:$0xff]
                  %390 = vst [vmem:[%s336 + $0xd0] sm:$0xff] %v389
                  %v391 = vld [vmem:[%s335 + $0x1b0] sm:$0xff]
                  %392 = vst [vmem:[%s336 + $0xd8] sm:$0xff] %v391
                  %v393 = vld [vmem:[%s335 + $0x1c0] sm:$0xff]
                  %394 = vst [vmem:[%s336 + $0xe0] sm:$0xff] %v393
                  %v395 = vld [vmem:[%s335 + $0x1d0] sm:$0xff]
                  %396 = vst [vmem:[%s336 + $0xe8] sm:$0xff] %v395
                  %v397 = vld [vmem:[%s335 + $0x1e0] sm:$0xff]
                  %398 = vst [vmem:[%s336 + $0xf0] sm:$0xff] %v397
                  %v399 = vld [vmem:[%s335 + $0x1f0] sm:$0xff]
                  %400 = vst [vmem:[%s336 + $0xf8] sm:$0xff] %v399
                  %v401 = vld [vmem:[%s335 + $0x200] sm:$0xff]
                  %402 = vst [vmem:[%s336 + $0x100] sm:$0xff] %v401
                  %v403 = vld [vmem:[%s335 + $0x210] sm:$0xff]
                  %404 = vst [vmem:[%s336 + $0x108] sm:$0xff] %v403
                  %v405 = vld [vmem:[%s335 + $0x220] sm:$0xff]
                  %406 = vst [vmem:[%s336 + $0x110] sm:$0xff] %v405
                  %v407 = vld [vmem:[%s335 + $0x230] sm:$0xff]
                  %408 = vst [vmem:[%s336 + $0x118] sm:$0xff] %v407
                  %v409 = vld [vmem:[%s335 + $0x240] sm:$0xff]
                  %410 = vst [vmem:[%s336 + $0x120] sm:$0xff] %v409
                  %v411 = vld [vmem:[%s335 + $0x250] sm:$0xff]
                  %412 = vst [vmem:[%s336 + $0x128] sm:$0xff] %v411
                  %v413 = vld [vmem:[%s335 + $0x260] sm:$0xff]
                  %414 = vst [vmem:[%s336 + $0x130] sm:$0xff] %v413
                  %v415 = vld [vmem:[%s335 + $0x270] sm:$0xff]
                  %416 = vst [vmem:[%s336 + $0x138] sm:$0xff] %v415
                  %v417 = vld [vmem:[%s335 + $0x280] sm:$0xff]
                  %418 = vst [vmem:[%s336 + $0x140] sm:$0xff] %v417
                  %v419 = vld [vmem:[%s335 + $0x290] sm:$0xff]
                  %420 = vst [vmem:[%s336 + $0x148] sm:$0xff] %v419
                  %v421 = vld [vmem:[%s335 + $0x2a0] sm:$0xff]
                  %422 = vst [vmem:[%s336 + $0x150] sm:$0xff] %v421
                  %v423 = vld [vmem:[%s335 + $0x2b0] sm:$0xff]
                  %424 = vst [vmem:[%s336 + $0x158] sm:$0xff] %v423
                  %v425 = vld [vmem:[%s335 + $0x2c0] sm:$0xff]
                  %426 = vst [vmem:[%s336 + $0x160] sm:$0xff] %v425
                  %v427 = vld [vmem:[%s335 + $0x2d0] sm:$0xff]
                  %428 = vst [vmem:[%s336 + $0x168] sm:$0xff] %v427
                  %v429 = vld [vmem:[%s335 + $0x2e0] sm:$0xff]
                  %430 = vst [vmem:[%s336 + $0x170] sm:$0xff] %v429
                  %v431 = vld [vmem:[%s335 + $0x2f0] sm:$0xff]
                  %432 = vst [vmem:[%s336 + $0x178] sm:$0xff] %v431
                  %v433 = vld [vmem:[%s335 + $0x300] sm:$0xff]
                  %434 = vst [vmem:[%s336 + $0x180] sm:$0xff] %v433
                  %v435 = vld [vmem:[%s335 + $0x310] sm:$0xff]
                  %436 = vst [vmem:[%s336 + $0x188] sm:$0xff] %v435
                  %v437 = vld [vmem:[%s335 + $0x320] sm:$0xff]
                  %438 = vst [vmem:[%s336 + $0x190] sm:$0xff] %v437
                  %v439 = vld [vmem:[%s335 + $0x330] sm:$0xff]
                  %440 = vst [vmem:[%s336 + $0x198] sm:$0xff] %v439
                  %v441 = vld [vmem:[%s335 + $0x340] sm:$0xff]
                  %442 = vst [vmem:[%s336 + $0x1a0] sm:$0xff] %v441
                  %v443 = vld [vmem:[%s335 + $0x350] sm:$0xff]
                  %444 = vst [vmem:[%s336 + $0x1a8] sm:$0xff] %v443
                  %v445 = vld [vmem:[%s335 + $0x360] sm:$0xff]
                  %446 = vst [vmem:[%s336 + $0x1b0] sm:$0xff] %v445
                  %v447 = vld [vmem:[%s335 + $0x370] sm:$0xff]
                  %448 = vst [vmem:[%s336 + $0x1b8] sm:$0xff] %v447
                  %v449 = vld [vmem:[%s335 + $0x380] sm:$0xff]
                  %450 = vst [vmem:[%s336 + $0x1c0] sm:$0xff] %v449
                  %v451 = vld [vmem:[%s335 + $0x390] sm:$0xff]
                  %452 = vst [vmem:[%s336 + $0x1c8] sm:$0xff] %v451
                  %v453 = vld [vmem:[%s335 + $0x3a0] sm:$0xff]
                  %454 = vst [vmem:[%s336 + $0x1d0] sm:$0xff] %v453
                  %v455 = vld [vmem:[%s335 + $0x3b0] sm:$0xff]
                  %456 = vst [vmem:[%s336 + $0x1d8] sm:$0xff] %v455
                  %v457 = vld [vmem:[%s335 + $0x3c0] sm:$0xff]
                  %458 = vst [vmem:[%s336 + $0x1e0] sm:$0xff] %v457
                  %v459 = vld [vmem:[%s335 + $0x3d0] sm:$0xff]
                  %460 = vst [vmem:[%s336 + $0x1e8] sm:$0xff] %v459
                  %v461 = vld [vmem:[%s335 + $0x3e0] sm:$0xff]
                  %462 = vst [vmem:[%s336 + $0x1f0] sm:$0xff] %v461
                  %v463 = vld [vmem:[%s335 + $0x3f0] sm:$0xff]
                  %464 = vst [vmem:[%s336 + $0x1f8] sm:$0xff] %v463
                $region52: #{infogan_generator_forward.21} parent=46 // loop_footer
                  %s334 = sadd.s32 1, %s330
                $region53: #{infogan_generator_forward.21} parent=46 // loop_footer_branch
                  %329 = sbr.rel target = $region49
                $region54: #{infogan_generator_forward.21} parent=46 // loop_exit
                  _
              $region47: #{infogan_generator_forward.21} parent=31 // pred_fallthru
                _
              // Predicated region
              $region55: #{infogan_generator_forward.21} parent=31 // pred_check
                _
              $region56: #{infogan_generator_forward.21} parent=31 // pred_check_branch
                %466 = sbr.rel target = $region58
              $region57: #{infogan_generator_forward.21} parent=31 // pred_region
                _
              $region58: #{infogan_generator_forward.21} parent=31 // pred_fallthru
                _
            $region32: #{infogan_generator_forward.21} parent=27 // pred_fallthru
              _
            // Predicated region
            $region33: #{infogan_generator_forward.21} parent=27 // pred_check
              _
            $region34: #{infogan_generator_forward.21} parent=27 // pred_check_branch
              %188 = sbr.rel target = $region36
            $region35: #{infogan_generator_forward.21} parent=27 // pred_region
              %s190 = ssub.s32 256, 1
              loop: start=0, step=1, limit=1
              $region37: #{infogan_generator_forward.21} parent=35 // loop_pre_header
                _
              $region38: #{infogan_generator_forward.21} parent=35 // loop_header
                %s192 = sphi 0, %s196
                %p193 = scmp.ge.s32.totalorder %s192, 1
                %s197 = sphi %s182, %s182
                %s198 = sphi %s176, %s176
              $region39: #{infogan_generator_forward.21} parent=35 // loop_header_branch
                %195 = sbr.rel (%p193) target = $region43
              $region40: #{infogan_generator_forward.21} parent=35 // loop_body
                %v199 = vld [vmem:[%s197] sm:%s190]
                %200 = vst [vmem:[%s198] sm:%s190] %v199
                %v201 = vld [vmem:[%s197 + $0x10] sm:%s190]
                %202 = vst [vmem:[%s198 + $0x8] sm:%s190] %v201
                %v203 = vld [vmem:[%s197 + $0x20] sm:%s190]
                %204 = vst [vmem:[%s198 + $0x10] sm:%s190] %v203
                %v205 = vld [vmem:[%s197 + $0x30] sm:%s190]
                %206 = vst [vmem:[%s198 + $0x18] sm:%s190] %v205
                %v207 = vld [vmem:[%s197 + $0x40] sm:%s190]
                %208 = vst [vmem:[%s198 + $0x20] sm:%s190] %v207
                %v209 = vld [vmem:[%s197 + $0x50] sm:%s190]
                %210 = vst [vmem:[%s198 + $0x28] sm:%s190] %v209
                %v211 = vld [vmem:[%s197 + $0x60] sm:%s190]
                %212 = vst [vmem:[%s198 + $0x30] sm:%s190] %v211
                %v213 = vld [vmem:[%s197 + $0x70] sm:%s190]
                %214 = vst [vmem:[%s198 + $0x38] sm:%s190] %v213
                %v215 = vld [vmem:[%s197 + $0x80] sm:%s190]
                %216 = vst [vmem:[%s198 + $0x40] sm:%s190] %v215
                %v217 = vld [vmem:[%s197 + $0x90] sm:%s190]
                %218 = vst [vmem:[%s198 + $0x48] sm:%s190] %v217
                %v219 = vld [vmem:[%s197 + $0xa0] sm:%s190]
                %220 = vst [vmem:[%s198 + $0x50] sm:%s190] %v219
                %v221 = vld [vmem:[%s197 + $0xb0] sm:%s190]
                %222 = vst [vmem:[%s198 + $0x58] sm:%s190] %v221
                %v223 = vld [vmem:[%s197 + $0xc0] sm:%s190]
                %224 = vst [vmem:[%s198 + $0x60] sm:%s190] %v223
                %v225 = vld [vmem:[%s197 + $0xd0] sm:%s190]
                %226 = vst [vmem:[%s198 + $0x68] sm:%s190] %v225
                %v227 = vld [vmem:[%s197 + $0xe0] sm:%s190]
                %228 = vst [vmem:[%s198 + $0x70] sm:%s190] %v227
                %v229 = vld [vmem:[%s197 + $0xf0] sm:%s190]
                %230 = vst [vmem:[%s198 + $0x78] sm:%s190] %v229
                %v231 = vld [vmem:[%s197 + $0x100] sm:%s190]
                %232 = vst [vmem:[%s198 + $0x80] sm:%s190] %v231
                %v233 = vld [vmem:[%s197 + $0x110] sm:%s190]
                %234 = vst [vmem:[%s198 + $0x88] sm:%s190] %v233
                %v235 = vld [vmem:[%s197 + $0x120] sm:%s190]
                %236 = vst [vmem:[%s198 + $0x90] sm:%s190] %v235
                %v237 = vld [vmem:[%s197 + $0x130] sm:%s190]
                %238 = vst [vmem:[%s198 + $0x98] sm:%s190] %v237
                %v239 = vld [vmem:[%s197 + $0x140] sm:%s190]
                %240 = vst [vmem:[%s198 + $0xa0] sm:%s190] %v239
                %v241 = vld [vmem:[%s197 + $0x150] sm:%s190]
                %242 = vst [vmem:[%s198 + $0xa8] sm:%s190] %v241
                %v243 = vld [vmem:[%s197 + $0x160] sm:%s190]
                %244 = vst [vmem:[%s198 + $0xb0] sm:%s190] %v243
                %v245 = vld [vmem:[%s197 + $0x170] sm:%s190]
                %246 = vst [vmem:[%s198 + $0xb8] sm:%s190] %v245
                %v247 = vld [vmem:[%s197 + $0x180] sm:%s190]
                %248 = vst [vmem:[%s198 + $0xc0] sm:%s190] %v247
                %v249 = vld [vmem:[%s197 + $0x190] sm:%s190]
                %250 = vst [vmem:[%s198 + $0xc8] sm:%s190] %v249
                %v251 = vld [vmem:[%s197 + $0x1a0] sm:%s190]
                %252 = vst [vmem:[%s198 + $0xd0] sm:%s190] %v251
                %v253 = vld [vmem:[%s197 + $0x1b0] sm:%s190]
                %254 = vst [vmem:[%s198 + $0xd8] sm:%s190] %v253
                %v255 = vld [vmem:[%s197 + $0x1c0] sm:%s190]
                %256 = vst [vmem:[%s198 + $0xe0] sm:%s190] %v255
                %v257 = vld [vmem:[%s197 + $0x1d0] sm:%s190]
                %258 = vst [vmem:[%s198 + $0xe8] sm:%s190] %v257
                %v259 = vld [vmem:[%s197 + $0x1e0] sm:%s190]
                %260 = vst [vmem:[%s198 + $0xf0] sm:%s190] %v259
                %v261 = vld [vmem:[%s197 + $0x1f0] sm:%s190]
                %262 = vst [vmem:[%s198 + $0xf8] sm:%s190] %v261
                %v263 = vld [vmem:[%s197 + $0x200] sm:%s190]
                %264 = vst [vmem:[%s198 + $0x100] sm:%s190] %v263
                %v265 = vld [vmem:[%s197 + $0x210] sm:%s190]
                %266 = vst [vmem:[%s198 + $0x108] sm:%s190] %v265
                %v267 = vld [vmem:[%s197 + $0x220] sm:%s190]
                %268 = vst [vmem:[%s198 + $0x110] sm:%s190] %v267
                %v269 = vld [vmem:[%s197 + $0x230] sm:%s190]
                %270 = vst [vmem:[%s198 + $0x118] sm:%s190] %v269
                %v271 = vld [vmem:[%s197 + $0x240] sm:%s190]
                %272 = vst [vmem:[%s198 + $0x120] sm:%s190] %v271
                %v273 = vld [vmem:[%s197 + $0x250] sm:%s190]
                %274 = vst [vmem:[%s198 + $0x128] sm:%s190] %v273
                %v275 = vld [vmem:[%s197 + $0x260] sm:%s190]
                %276 = vst [vmem:[%s198 + $0x130] sm:%s190] %v275
                %v277 = vld [vmem:[%s197 + $0x270] sm:%s190]
                %278 = vst [vmem:[%s198 + $0x138] sm:%s190] %v277
                %v279 = vld [vmem:[%s197 + $0x280] sm:%s190]
                %280 = vst [vmem:[%s198 + $0x140] sm:%s190] %v279
                %v281 = vld [vmem:[%s197 + $0x290] sm:%s190]
                %282 = vst [vmem:[%s198 + $0x148] sm:%s190] %v281
                %v283 = vld [vmem:[%s197 + $0x2a0] sm:%s190]
                %284 = vst [vmem:[%s198 + $0x150] sm:%s190] %v283
                %v285 = vld [vmem:[%s197 + $0x2b0] sm:%s190]
                %286 = vst [vmem:[%s198 + $0x158] sm:%s190] %v285
                %v287 = vld [vmem:[%s197 + $0x2c0] sm:%s190]
                %288 = vst [vmem:[%s198 + $0x160] sm:%s190] %v287
                %v289 = vld [vmem:[%s197 + $0x2d0] sm:%s190]
                %290 = vst [vmem:[%s198 + $0x168] sm:%s190] %v289
                %v291 = vld [vmem:[%s197 + $0x2e0] sm:%s190]
                %292 = vst [vmem:[%s198 + $0x170] sm:%s190] %v291
                %v293 = vld [vmem:[%s197 + $0x2f0] sm:%s190]
                %294 = vst [vmem:[%s198 + $0x178] sm:%s190] %v293
                %v295 = vld [vmem:[%s197 + $0x300] sm:%s190]
                %296 = vst [vmem:[%s198 + $0x180] sm:%s190] %v295
                %v297 = vld [vmem:[%s197 + $0x310] sm:%s190]
                %298 = vst [vmem:[%s198 + $0x188] sm:%s190] %v297
                %v299 = vld [vmem:[%s197 + $0x320] sm:%s190]
                %300 = vst [vmem:[%s198 + $0x190] sm:%s190] %v299
                %v301 = vld [vmem:[%s197 + $0x330] sm:%s190]
                %302 = vst [vmem:[%s198 + $0x198] sm:%s190] %v301
                %v303 = vld [vmem:[%s197 + $0x340] sm:%s190]
                %304 = vst [vmem:[%s198 + $0x1a0] sm:%s190] %v303
                %v305 = vld [vmem:[%s197 + $0x350] sm:%s190]
                %306 = vst [vmem:[%s198 + $0x1a8] sm:%s190] %v305
                %v307 = vld [vmem:[%s197 + $0x360] sm:%s190]
                %308 = vst [vmem:[%s198 + $0x1b0] sm:%s190] %v307
                %v309 = vld [vmem:[%s197 + $0x370] sm:%s190]
                %310 = vst [vmem:[%s198 + $0x1b8] sm:%s190] %v309
                %v311 = vld [vmem:[%s197 + $0x380] sm:%s190]
                %312 = vst [vmem:[%s198 + $0x1c0] sm:%s190] %v311
                %v313 = vld [vmem:[%s197 + $0x390] sm:%s190]
                %314 = vst [vmem:[%s198 + $0x1c8] sm:%s190] %v313
                %v315 = vld [vmem:[%s197 + $0x3a0] sm:%s190]
                %316 = vst [vmem:[%s198 + $0x1d0] sm:%s190] %v315
                %v317 = vld [vmem:[%s197 + $0x3b0] sm:%s190]
                %318 = vst [vmem:[%s198 + $0x1d8] sm:%s190] %v317
                %v319 = vld [vmem:[%s197 + $0x3c0] sm:%s190]
                %320 = vst [vmem:[%s198 + $0x1e0] sm:%s190] %v319
                %v321 = vld [vmem:[%s197 + $0x3d0] sm:%s190]
                %322 = vst [vmem:[%s198 + $0x1e8] sm:%s190] %v321
                %v323 = vld [vmem:[%s197 + $0x3e0] sm:%s190]
                %324 = vst [vmem:[%s198 + $0x1f0] sm:%s190] %v323
                %v325 = vld [vmem:[%s197 + $0x3f0] sm:%s190]
                %326 = vst [vmem:[%s198 + $0x1f8] sm:%s190] %v325
              $region41: #{infogan_generator_forward.21} parent=35 // loop_footer
                %s196 = sadd.s32 1, %s192
              $region42: #{infogan_generator_forward.21} parent=35 // loop_footer_branch
                %191 = sbr.rel target = $region38
              $region43: #{infogan_generator_forward.21} parent=35 // loop_exit
                _
            $region36: #{infogan_generator_forward.21} parent=27 // pred_fallthru
              _
          $region28: #{infogan_generator_forward.21} parent=23 // pred_fallthru
            _
          %467 = vnop
        $region24: #{infogan_generator_forward.21} parent=15 // pred_fallthru
          _
        // Predicated region
        $region59: #{infogan_generator_forward.21} parent=15 // pred_check
          %p468 = pneg %p104
        $region60: #{infogan_generator_forward.21} parent=15 // pred_check_branch
          %470 = sbr.rel (%p468) target = $region62
        $region61: #{infogan_generator_forward.21} parent=15 // pred_region
          %s471 = smul.u32 2, %s17
          %p472 = scmp.lt.s32.totalorder %s471, 3
          %s473 = scalar_select %p472, %s471, 3
          %s474 = scalar_lea.vmem %s2, %s473
          %s475 = smul.u32 2, %s17
        $region62: #{infogan_generator_forward.21} parent=15 // pred_fallthru
          _
      $region16: #{infogan_generator_forward.21} parent=5 // pred_fallthru
        _
      %p476 = scmp.le.s32.totalorder 1, %s9
      %p477 = scmp.lt.s32.totalorder %s9, 17
      %p478 = pnand %p476, %p477
      %p479 = pneg %p478
      // Predicated region
      $region63: #{infogan_generator_forward.21} parent=5 // pred_check
        _
      $region64: #{infogan_generator_forward.21} parent=5 // pred_check_branch
        %481 = sbr.rel (%p478) target = $region66
      $region65: #{infogan_generator_forward.21} parent=5 // pred_region
        %s482 = ssub.s32 %s9, 1
        %s483 = sand.u32 %s71, 1
        %s484 = sand.u32 %s71, 1
        %s485 = smul.addr %s484, 512
        %s486 = scalar_lea.vmem [#allocation3], %s485
        // Predicated region
        $region67: #{infogan_generator_forward.21} parent=65 // pred_check
          %p487 = pneg %p84
        $region68: #{infogan_generator_forward.21} parent=65 // pred_check_branch
          %489 = sbr.rel (%p487) target = $region70
        $region69: #{infogan_generator_forward.21} parent=65 // pred_region
          _
        $region70: #{infogan_generator_forward.21} parent=65 // pred_fallthru
          _
        %s490 = smul.u32 4, %s21
        %p491 = scmp.lt.s32.totalorder %s19, 0
        %s492 = scalar_select %p491, %s19, 0
        %p493 = scmp.lt.s32.totalorder %s490, 31
        %s494 = scalar_select %p493, %s490, 31
        %s495 = smul.addr %s492, 32
        %s496 = sadd.s32 %s494, %s495
        %s497 = smul.addr %s496, 2
        %s498 = scalar_lea.vmem %s0, %s497
        %p499 = pneg %p56
        %p500 = pneg %p53
        %s501 = sand.u32 %s71, 1
        %s502 = sand.u32 %s71, 1
        %s503 = smul.addr %s502, 512
        %s504 = scalar_lea.vmem [#allocation3], %s503
        %p505 = pneg %p84
        %p506 = pneg %p81
        %s507 = smul.u32 2, %s20
        %p508 = scmp.lt.s32.totalorder %s507, 3
        %s509 = scalar_select %p508, %s507, 3
        %s510 = scalar_lea.vmem %s2, %s509
        %p511 = pneg %p110
        %p512 = pneg %p107
        %p513 = pneg %p138
        %p514 = pneg %p135
        %s515 = smul.u32 2, %s20
        %p516 = scmp.lt.s32.totalorder %s19, 0
        %s517 = scalar_select %p516, %s19, 0
        %p518 = scmp.lt.s32.totalorder %s515, 3
        %s519 = scalar_select %p518, %s515, 3
        %s520 = smul.addr %s517, 4
        %s521 = sadd.s32 %s519, %s520
        %s522 = smul.addr %s521, 2
        %s523 = scalar_lea.vmem %s3, %s522
        %s524 = smul.u32 4, %s21
        %p525 = scmp.lt.s32.totalorder %s19, 0
        %s526 = scalar_select %p525, %s19, 0
        %p527 = scmp.lt.s32.totalorder %s524, 31
        %s528 = scalar_select %p527, %s524, 31
        %s529 = smul.addr %s526, 32
        %s530 = sadd.s32 %s528, %s529
        %s531 = smul.addr %s530, 2
        %s532 = scalar_lea.vmem %s0, %s531
        %s533 = smul.u32 4, %s21
        %s534 = smul.u32 64, %s21
        %s535 = smul.u32 2, %s20
        %s536 = smul.u32 2, %s20
        %p537 = scmp.lt.s32.totalorder %s536, 3
        %s538 = scalar_select %p537, %s536, 3
        %s539 = scalar_lea.vmem %s2, %s538
        %s540 = smul.u32 2, %s20
        %s541 = smul.u32 2, %s20
        %p542 = scmp.lt.s32.totalorder %s19, 0
        %s543 = scalar_select %p542, %s19, 0
        %p544 = scmp.lt.s32.totalorder %s541, 3
        %s545 = scalar_select %p544, %s541, 3
        %s546 = smul.addr %s543, 4
        %s547 = sadd.s32 %s545, %s546
        %s548 = smul.addr %s547, 2
        %s549 = scalar_lea.vmem %s3, %s548
        %s550 = smul.u32 2, %s20
        %p551 = scmp.eq.s32.totalorder %s21, 0
        // Predicated region
        $region71: #{infogan_generator_forward.21} parent=65 // pred_check
          %p552 = pneg %p551
        $region72: #{infogan_generator_forward.21} parent=65 // pred_check_branch
          %554 = sbr.rel (%p552) target = $region74
        $region73: #{infogan_generator_forward.21} parent=65 // pred_region
          %555 = vst [vmem:[#allocation2] sm:$0xf] 0.0
        $region74: #{infogan_generator_forward.21} parent=65 // pred_fallthru
          _
        %v556 = vld [vmem:[#allocation2] sm:$0xf]
        %v557 = vld [vmem:[%s532] sm:$0xff]
        %v559 = vcombine.high %v557, %v557
        %v561 = vunpack.c.l.s4 1983009808
        %v562 = vunpack.c.0.s8 %v561
        %v563 = vlaneseq
        %v564 = vshrl.u32 %v563, 7
        %v565 = vsub.s32 %v562, %v564
        %v566 = vrot.slane %v557, %v565
        %v568 = vunpack.c.l.s4 1983009808
        %v569 = vunpack.c.0.s8 %v568
        %v570 = vlaneseq
        %v571 = vshrl.u32 %v570, 7
        %v572 = vsub.s32 %v569, %v571
        %v573 = vrot.slane %v559, %v572
        %v574 = vcombine.high %v566, %v566
        %v575 = vcombine.high %v573, %v573
        %v580 = vpack.c.bf16 %v566, %v566
        %v581 = vpack.c.bf16 %v574, %v574
        %v582 = vpack.c.bf16 %v573, %v573
        %v583 = vpack.c.bf16 %v575, %v575
        %v584 = vld [vmem:[%s486] sm:$0xff]
        %v585 = vld [vmem:[%s486 + $0x8] sm:$0xff]
        %v586 = vld [vmem:[%s486 + $0x10] sm:$0xff]
        %v587 = vld [vmem:[%s486 + $0x18] sm:$0xff]
        %v588 = vld [vmem:[%s486 + $0x20] sm:$0xff]
        %v589 = vld [vmem:[%s486 + $0x28] sm:$0xff]
        %v590 = vld [vmem:[%s486 + $0x30] sm:$0xff]
        %v591 = vld [vmem:[%s486 + $0x38] sm:$0xff]
        %v592 = vld [vmem:[%s486 + $0x40] sm:$0xff]
        %v593 = vld [vmem:[%s486 + $0x48] sm:$0xff]
        %v594 = vld [vmem:[%s486 + $0x50] sm:$0xff]
        %v595 = vld [vmem:[%s486 + $0x58] sm:$0xff]
        %v596 = vld [vmem:[%s486 + $0x60] sm:$0xff]
        %v597 = vld [vmem:[%s486 + $0x68] sm:$0xff]
        %v598 = vld [vmem:[%s486 + $0x70] sm:$0xff]
        %v599 = vld [vmem:[%s486 + $0x78] sm:$0xff]
        %v600 = vld [vmem:[%s486 + $0x80] sm:$0xff]
        %v601 = vld [vmem:[%s486 + $0x88] sm:$0xff]
        %v602 = vld [vmem:[%s486 + $0x90] sm:$0xff]
        %v603 = vld [vmem:[%s486 + $0x98] sm:$0xff]
        %v604 = vld [vmem:[%s486 + $0xa0] sm:$0xff]
        %v605 = vld [vmem:[%s486 + $0xa8] sm:$0xff]
        %v606 = vld [vmem:[%s486 + $0xb0] sm:$0xff]
        %v607 = vld [vmem:[%s486 + $0xb8] sm:$0xff]
        %v608 = vld [vmem:[%s486 + $0xc0] sm:$0xff]
        %v609 = vld [vmem:[%s486 + $0xc8] sm:$0xff]
        %v610 = vld [vmem:[%s486 + $0xd0] sm:$0xff]
        %v611 = vld [vmem:[%s486 + $0xd8] sm:$0xff]
        %v612 = vld [vmem:[%s486 + $0xe0] sm:$0xff]
        %v613 = vld [vmem:[%s486 + $0xe8] sm:$0xff]
        %v614 = vld [vmem:[%s486 + $0xf0] sm:$0xff]
        %v615 = vld [vmem:[%s486 + $0xf8] sm:$0xff]
        %v616 = vld [vmem:[%s486 + $0x100] sm:$0xff]
        %v617 = vld [vmem:[%s486 + $0x108] sm:$0xff]
        %v618 = vld [vmem:[%s486 + $0x110] sm:$0xff]
        %v619 = vld [vmem:[%s486 + $0x118] sm:$0xff]
        %v620 = vld [vmem:[%s486 + $0x120] sm:$0xff]
        %v621 = vld [vmem:[%s486 + $0x128] sm:$0xff]
        %v622 = vld [vmem:[%s486 + $0x130] sm:$0xff]
        %v623 = vld [vmem:[%s486 + $0x138] sm:$0xff]
        %v624 = vld [vmem:[%s486 + $0x140] sm:$0xff]
        %v625 = vld [vmem:[%s486 + $0x148] sm:$0xff]
        %v626 = vld [vmem:[%s486 + $0x150] sm:$0xff]
        %v627 = vld [vmem:[%s486 + $0x158] sm:$0xff]
        %v628 = vld [vmem:[%s486 + $0x160] sm:$0xff]
        %v629 = vld [vmem:[%s486 + $0x168] sm:$0xff]
        %v630 = vld [vmem:[%s486 + $0x170] sm:$0xff]
        %v631 = vld [vmem:[%s486 + $0x178] sm:$0xff]
        %v632 = vld [vmem:[%s486 + $0x180] sm:$0xff]
        %v633 = vld [vmem:[%s486 + $0x188] sm:$0xff]
        %v634 = vld [vmem:[%s486 + $0x190] sm:$0xff]
        %v635 = vld [vmem:[%s486 + $0x198] sm:$0xff]
        %v636 = vld [vmem:[%s486 + $0x1a0] sm:$0xff]
        %v637 = vld [vmem:[%s486 + $0x1a8] sm:$0xff]
        %v638 = vld [vmem:[%s486 + $0x1b0] sm:$0xff]
        %v639 = vld [vmem:[%s486 + $0x1b8] sm:$0xff]
        %v640 = vld [vmem:[%s486 + $0x1c0] sm:$0xff]
        %v641 = vld [vmem:[%s486 + $0x1c8] sm:$0xff]
        %v642 = vld [vmem:[%s486 + $0x1d0] sm:$0xff]
        %v643 = vld [vmem:[%s486 + $0x1d8] sm:$0xff]
        %v644 = vld [vmem:[%s486 + $0x1e0] sm:$0xff]
        %v645 = vld [vmem:[%s486 + $0x1e8] sm:$0xff]
        %v646 = vld [vmem:[%s486 + $0x1f0] sm:$0xff]
        %v647 = vld [vmem:[%s486 + $0x1f8] sm:$0xff]
        %v712 = vunpack.c.l.b16 %v584
        %v713 = vunpack.c.h.b16 %v584
        %v714 = vunpack.c.l.b16 %v585
        %v715 = vunpack.c.h.b16 %v585
        %v716 = vunpack.c.l.b16 %v586
        %v717 = vunpack.c.h.b16 %v586
        %v718 = vunpack.c.l.b16 %v587
        %v719 = vunpack.c.h.b16 %v587
        %v720 = vunpack.c.l.b16 %v588
        %v721 = vunpack.c.h.b16 %v588
        %v722 = vunpack.c.l.b16 %v589
        %v723 = vunpack.c.h.b16 %v589
        %v724 = vunpack.c.l.b16 %v590
        %v725 = vunpack.c.h.b16 %v590
        %v726 = vunpack.c.l.b16 %v591
        %v727 = vunpack.c.h.b16 %v591
        %v728 = vunpack.c.l.b16 %v592
        %v729 = vunpack.c.h.b16 %v592
        %v730 = vunpack.c.l.b16 %v593
        %v731 = vunpack.c.h.b16 %v593
        %v732 = vunpack.c.l.b16 %v594
        %v733 = vunpack.c.h.b16 %v594
        %v734 = vunpack.c.l.b16 %v595
        %v735 = vunpack.c.h.b16 %v595
        %v736 = vunpack.c.l.b16 %v596
        %v737 = vunpack.c.h.b16 %v596
        %v738 = vunpack.c.l.b16 %v597
        %v739 = vunpack.c.h.b16 %v597
        %v740 = vunpack.c.l.b16 %v598
        %v741 = vunpack.c.h.b16 %v598
        %v742 = vunpack.c.l.b16 %v599
        %v743 = vunpack.c.h.b16 %v599
        %v744 = vunpack.c.l.b16 %v600
        %v745 = vunpack.c.h.b16 %v600
        %v746 = vunpack.c.l.b16 %v601
        %v747 = vunpack.c.h.b16 %v601
        %v748 = vunpack.c.l.b16 %v602
        %v749 = vunpack.c.h.b16 %v602
        %v750 = vunpack.c.l.b16 %v603
        %v751 = vunpack.c.h.b16 %v603
        %v752 = vunpack.c.l.b16 %v604
        %v753 = vunpack.c.h.b16 %v604
        %v754 = vunpack.c.l.b16 %v605
        %v755 = vunpack.c.h.b16 %v605
        %v756 = vunpack.c.l.b16 %v606
        %v757 = vunpack.c.h.b16 %v606
        %v758 = vunpack.c.l.b16 %v607
        %v759 = vunpack.c.h.b16 %v607
        %v760 = vunpack.c.l.b16 %v608
        %v761 = vunpack.c.h.b16 %v608
        %v762 = vunpack.c.l.b16 %v609
        %v763 = vunpack.c.h.b16 %v609
        %v764 = vunpack.c.l.b16 %v610
        %v765 = vunpack.c.h.b16 %v610
        %v766 = vunpack.c.l.b16 %v611
        %v767 = vunpack.c.h.b16 %v611
        %v768 = vunpack.c.l.b16 %v612
        %v769 = vunpack.c.h.b16 %v612
        %v770 = vunpack.c.l.b16 %v613
        %v771 = vunpack.c.h.b16 %v613
        %v772 = vunpack.c.l.b16 %v614
        %v773 = vunpack.c.h.b16 %v614
        %v774 = vunpack.c.l.b16 %v615
        %v775 = vunpack.c.h.b16 %v615
        %v776 = vunpack.c.l.b16 %v616
        %v777 = vunpack.c.h.b16 %v616
        %v778 = vunpack.c.l.b16 %v617
        %v779 = vunpack.c.h.b16 %v617
        %v780 = vunpack.c.l.b16 %v618
        %v781 = vunpack.c.h.b16 %v618
        %v782 = vunpack.c.l.b16 %v619
        %v783 = vunpack.c.h.b16 %v619
        %v784 = vunpack.c.l.b16 %v620
        %v785 = vunpack.c.h.b16 %v620
        %v786 = vunpack.c.l.b16 %v621
        %v787 = vunpack.c.h.b16 %v621
        %v788 = vunpack.c.l.b16 %v622
        %v789 = vunpack.c.h.b16 %v622
        %v790 = vunpack.c.l.b16 %v623
        %v791 = vunpack.c.h.b16 %v623
        %v792 = vunpack.c.l.b16 %v624
        %v793 = vunpack.c.h.b16 %v624
        %v794 = vunpack.c.l.b16 %v625
        %v795 = vunpack.c.h.b16 %v625
        %v796 = vunpack.c.l.b16 %v626
        %v797 = vunpack.c.h.b16 %v626
        %v798 = vunpack.c.l.b16 %v627
        %v799 = vunpack.c.h.b16 %v627
        %v800 = vunpack.c.l.b16 %v628
        %v801 = vunpack.c.h.b16 %v628
        %v802 = vunpack.c.l.b16 %v629
        %v803 = vunpack.c.h.b16 %v629
        %v804 = vunpack.c.l.b16 %v630
        %v805 = vunpack.c.h.b16 %v630
        %v806 = vunpack.c.l.b16 %v631
        %v807 = vunpack.c.h.b16 %v631
        %v808 = vunpack.c.l.b16 %v632
        %v809 = vunpack.c.h.b16 %v632
        %v810 = vunpack.c.l.b16 %v633
        %v811 = vunpack.c.h.b16 %v633
        %v812 = vunpack.c.l.b16 %v634
        %v813 = vunpack.c.h.b16 %v634
        %v814 = vunpack.c.l.b16 %v635
        %v815 = vunpack.c.h.b16 %v635
        %v816 = vunpack.c.l.b16 %v636
        %v817 = vunpack.c.h.b16 %v636
        %v818 = vunpack.c.l.b16 %v637
        %v819 = vunpack.c.h.b16 %v637
        %v820 = vunpack.c.l.b16 %v638
        %v821 = vunpack.c.h.b16 %v638
        %v822 = vunpack.c.l.b16 %v639
        %v823 = vunpack.c.h.b16 %v639
        %v824 = vunpack.c.l.b16 %v640
        %v825 = vunpack.c.h.b16 %v640
        %v826 = vunpack.c.l.b16 %v641
        %v827 = vunpack.c.h.b16 %v641
        %v828 = vunpack.c.l.b16 %v642
        %v829 = vunpack.c.h.b16 %v642
        %v830 = vunpack.c.l.b16 %v643
        %v831 = vunpack.c.h.b16 %v643
        %v832 = vunpack.c.l.b16 %v644
        %v833 = vunpack.c.h.b16 %v644
        %v834 = vunpack.c.l.b16 %v645
        %v835 = vunpack.c.h.b16 %v645
        %v836 = vunpack.c.l.b16 %v646
        %v837 = vunpack.c.h.b16 %v646
        %v838 = vunpack.c.l.b16 %v647
        %v839 = vunpack.c.h.b16 %v647
        %v840 = vpack.c.b16 %v714, %v712
        %v841 = vpack.c.b16 %v715, %v713
        %v842 = vpack.c.b16 %v718, %v716
        %v843 = vpack.c.b16 %v719, %v717
        %v844 = vpack.c.b16 %v722, %v720
        %v845 = vpack.c.b16 %v723, %v721
        %v846 = vpack.c.b16 %v726, %v724
        %v847 = vpack.c.b16 %v727, %v725
        %v848 = vpack.c.b16 %v730, %v728
        %v849 = vpack.c.b16 %v731, %v729
        %v850 = vpack.c.b16 %v734, %v732
        %v851 = vpack.c.b16 %v735, %v733
        %v852 = vpack.c.b16 %v738, %v736
        %v853 = vpack.c.b16 %v739, %v737
        %v854 = vpack.c.b16 %v742, %v740
        %v855 = vpack.c.b16 %v743, %v741
        %v856 = vpack.c.b16 %v746, %v744
        %v857 = vpack.c.b16 %v747, %v745
        %v858 = vpack.c.b16 %v750, %v748
        %v859 = vpack.c.b16 %v751, %v749
        %v860 = vpack.c.b16 %v754, %v752
        %v861 = vpack.c.b16 %v755, %v753
        %v862 = vpack.c.b16 %v758, %v756
        %v863 = vpack.c.b16 %v759, %v757
        %v864 = vpack.c.b16 %v762, %v760
        %v865 = vpack.c.b16 %v763, %v761
        %v866 = vpack.c.b16 %v766, %v764
        %v867 = vpack.c.b16 %v767, %v765
        %v868 = vpack.c.b16 %v770, %v768
        %v869 = vpack.c.b16 %v771, %v769
        %v870 = vpack.c.b16 %v774, %v772
        %v871 = vpack.c.b16 %v775, %v773
        %v872 = vpack.c.b16 %v778, %v776
        %v873 = vpack.c.b16 %v779, %v777
        %v874 = vpack.c.b16 %v782, %v780
        %v875 = vpack.c.b16 %v783, %v781
        %v876 = vpack.c.b16 %v786, %v784
        %v877 = vpack.c.b16 %v787, %v785
        %v878 = vpack.c.b16 %v790, %v788
        %v879 = vpack.c.b16 %v791, %v789
        %v880 = vpack.c.b16 %v794, %v792
        %v881 = vpack.c.b16 %v795, %v793
        %v882 = vpack.c.b16 %v798, %v796
        %v883 = vpack.c.b16 %v799, %v797
        %v884 = vpack.c.b16 %v802, %v800
        %v885 = vpack.c.b16 %v803, %v801
        %v886 = vpack.c.b16 %v806, %v804
        %v887 = vpack.c.b16 %v807, %v805
        %v888 = vpack.c.b16 %v810, %v808
        %v889 = vpack.c.b16 %v811, %v809
        %v890 = vpack.c.b16 %v814, %v812
        %v891 = vpack.c.b16 %v815, %v813
        %v892 = vpack.c.b16 %v818, %v816
        %v893 = vpack.c.b16 %v819, %v817
        %v894 = vpack.c.b16 %v822, %v820
        %v895 = vpack.c.b16 %v823, %v821
        %v896 = vpack.c.b16 %v826, %v824
        %v897 = vpack.c.b16 %v827, %v825
        %v898 = vpack.c.b16 %v830, %v828
        %v899 = vpack.c.b16 %v831, %v829
        %v900 = vpack.c.b16 %v834, %v832
        %v901 = vpack.c.b16 %v835, %v833
        %v902 = vpack.c.b16 %v838, %v836
        %v903 = vpack.c.b16 %v839, %v837
        %968 = vmatprep.subr.bf16.mxu0 %v855
        %969 = vmatpush1.bf16.msra.mxu0 %v854
        %970 = vmatprep.subr.bf16.mxu0 %v853
        %971 = vmatpush1.bf16.msra.mxu0 %v852
        %972 = vmatprep.subr.bf16.mxu0 %v851
        %973 = vmatpush1.bf16.msra.mxu0 %v850
        %974 = vmatprep.subr.bf16.mxu0 %v849
        %975 = vmatpush1.bf16.msra.mxu0 %v848
        %976 = vmatprep.subr.bf16.mxu0 %v847
        %977 = vmatpush1.bf16.msra.mxu0 %v846
        %978 = vmatprep.subr.bf16.mxu0 %v845
        %979 = vmatpush1.bf16.msra.mxu0 %v844
        %980 = vmatprep.subr.bf16.mxu0 %v843
        %981 = vmatpush1.bf16.msra.mxu0 %v842
        %982 = vmatprep.subr.bf16.mxu0 %v841
        %983 = vmatpush1.bf16.msra.mxu0 %v840
        %984 = vmatprep.subr.bf16.mxu0 %v871
        %985 = vmatpush2.bf16.msra.mxu0 %v870
        %986 = vmatprep.subr.bf16.mxu0 %v869
        %987 = vmatpush2.bf16.msra.mxu0 %v868
        %988 = vmatprep.subr.bf16.mxu0 %v867
        %989 = vmatpush2.bf16.msra.mxu0 %v866
        %990 = vmatprep.subr.bf16.mxu0 %v865
        %991 = vmatpush2.bf16.msra.mxu0 %v864
        %992 = vmatprep.subr.bf16.mxu0 %v863
        %993 = vmatpush2.bf16.msra.mxu0 %v862
        %994 = vmatprep.subr.bf16.mxu0 %v861
        %995 = vmatpush2.bf16.msra.mxu0 %v860
        %996 = vmatprep.subr.bf16.mxu0 %v859
        %997 = vmatpush2.bf16.msra.mxu0 %v858
        %998 = vmatprep.subr.bf16.mxu0 %v857
        %999 = vmatpush2.bf16.msra.mxu0 %v856
        %1000 = vmatprep.mubr.bf16.mxu0 %v581
        %1001 = vmatmul.mubr.bf16.gmra.mxu0 %v580
        %v1002 = vpop.f32.mrf.mxu0
        %v1003 = vadd.f32 0.0, %v1002
        %v1004 = vpop.f32.mrf.mxu0
        %v1005 = vadd.f32 0.0, %v1004
        %v1006 = vpop.f32.mrf.mxu0
        %v1007 = vpop.f32.mrf.mxu0
        %1008 = vdwg.mxu0
        %1009 = vmatprep.subr.bf16.mxu0 %v887
        %1010 = vmatpush1.bf16.msra.mxu0 %v886
        %1011 = vmatprep.subr.bf16.mxu0 %v885
        %1012 = vmatpush1.bf16.msra.mxu0 %v884
        %1013 = vmatprep.subr.bf16.mxu0 %v883
        %1014 = vmatpush1.bf16.msra.mxu0 %v882
        %1015 = vmatprep.subr.bf16.mxu0 %v881
        %1016 = vmatpush1.bf16.msra.mxu0 %v880
        %1017 = vmatprep.subr.bf16.mxu0 %v879
        %1018 = vmatpush1.bf16.msra.mxu0 %v878
        %1019 = vmatprep.subr.bf16.mxu0 %v877
        %1020 = vmatpush1.bf16.msra.mxu0 %v876
        %1021 = vmatprep.subr.bf16.mxu0 %v875
        %1022 = vmatpush1.bf16.msra.mxu0 %v874
        %1023 = vmatprep.subr.bf16.mxu0 %v873
        %1024 = vmatpush1.bf16.msra.mxu0 %v872
        %1025 = vmatprep.subr.bf16.mxu0 %v903
        %1026 = vmatpush2.bf16.msra.mxu0 %v902
        %1027 = vmatprep.subr.bf16.mxu0 %v901
        %1028 = vmatpush2.bf16.msra.mxu0 %v900
        %1029 = vmatprep.subr.bf16.mxu0 %v899
        %1030 = vmatpush2.bf16.msra.mxu0 %v898
        %1031 = vmatprep.subr.bf16.mxu0 %v897
        %1032 = vmatpush2.bf16.msra.mxu0 %v896
        %1033 = vmatprep.subr.bf16.mxu0 %v895
        %1034 = vmatpush2.bf16.msra.mxu0 %v894
        %1035 = vmatprep.subr.bf16.mxu0 %v893
        %1036 = vmatpush2.bf16.msra.mxu0 %v892
        %1037 = vmatprep.subr.bf16.mxu0 %v891
        %1038 = vmatpush2.bf16.msra.mxu0 %v890
        %1039 = vmatprep.subr.bf16.mxu0 %v889
        %1040 = vmatpush2.bf16.msra.mxu0 %v888
        %1041 = vmatprep.mubr.bf16.mxu0 %v583
        %1042 = vmatmul.mubr.bf16.gmra.mxu0 %v582
        %v1043 = vpop.f32.mrf.mxu0
        %v1044 = vadd.f32 %v1003, %v1043
        %v1045 = vpop.f32.mrf.mxu0
        %v1046 = vadd.f32 %v1005, %v1045
        %v1047 = vpop.f32.mrf.mxu0
        %v1048 = vpop.f32.mrf.mxu0
        %1049 = vdwg.mxu0
        %v1052 = vcombine.low %v1044, %v1046
        %v1054 = vunpack.c.l.s4 1983009808
        %v1055 = vunpack.c.0.s8 %v1054
        %v1056 = vlaneseq
        %v1057 = vshrl.u32 %v1056, 7
        %v1058 = vsub.s32 %v1055, %v1057
        %v1059 = vrot.slane %v1052, %v1058
        %v1061 = vadd.f32 %v556, %v1059
        %1062 = vst [vmem:[#allocation2] sm:$0xf] %v1061
        %p1063 = scmp.eq.s32.totalorder %s21, 7
        // Predicated region
        $region75: #{infogan_generator_forward.21} parent=65 // pred_check
          %p1064 = pneg %p1063
        $region76: #{infogan_generator_forward.21} parent=65 // pred_check_branch
          %1066 = sbr.rel (%p1064) target = $region78
        $region77: #{infogan_generator_forward.21} parent=65 // pred_region
          %v1067 = vld [vmem:[#allocation2] sm:$0xf]
          %v1068 = vld [vmem:[%s539] sm:$0x3]
          %v1070 = vlaneseq
          %v1071 = vshrl.u32 %v1070, 7
          %v1072 = vsub.s32 0, %v1071
          %v1073 = vrot.slane %v1068, %v1072
          %v1074 = vlaneseq
          %v1075 = vshrl.u32 %v1074, 7
          %v1076 = vsub.s32 1, %v1075
          %v1077 = vrot.slane %v1068, %v1076
          %v1078 = vcombine.low %v1073, %v1077
          %v1080 = vunpack.c.l.s4 1983009808
          %v1081 = vunpack.c.0.s8 %v1080
          %v1082 = vlaneseq
          %v1083 = vshrl.u32 %v1082, 7
          %v1084 = vsub.s32 %v1081, %v1083
          %v1085 = vrot.slane %v1078, %v1084
          %v1087 = vadd.f32 %v1067, %v1085
          %1088 = vst [vmem:[%s549] sm:$0xf] %v1087
        $region78: #{infogan_generator_forward.21} parent=65 // pred_fallthru
          _
        %s1089 = smul.u32 2, %s20
        %p1090 = scmp.lt.s32.totalorder %s19, 0
        %s1091 = scalar_select %p1090, %s19, 0
        %p1092 = scmp.lt.s32.totalorder %s1089, 3
        %s1093 = scalar_select %p1092, %s1089, 3
        %s1094 = smul.addr %s1091, 4
        %s1095 = sadd.s32 %s1093, %s1094
        %s1096 = smul.addr %s1095, 2
        %s1097 = scalar_lea.vmem %s3, %s1096
        // Predicated region
        $region79: #{infogan_generator_forward.21} parent=65 // pred_check
          %p1098 = pneg %p135
        $region80: #{infogan_generator_forward.21} parent=65 // pred_check_branch
          %1100 = sbr.rel (%p1098) target = $region82
        $region81: #{infogan_generator_forward.21} parent=65 // pred_region
          %s1101 = smul.u32 2, %s20
        $region82: #{infogan_generator_forward.21} parent=65 // pred_fallthru
          _
      $region66: #{infogan_generator_forward.21} parent=5 // pred_fallthru
        _
      %p1102 = scmp.le.s32.totalorder 2, %s9
      // Predicated region
      $region83: #{infogan_generator_forward.21} parent=5 // pred_check
        %p1103 = pneg %p1102
      $region84: #{infogan_generator_forward.21} parent=5 // pred_check_branch
        %1105 = sbr.rel (%p1103) target = $region86
      $region85: #{infogan_generator_forward.21} parent=5 // pred_region
        %s1106 = ssub.s32 %s9, 2
        // Predicated region
        $region87: #{infogan_generator_forward.21} parent=85 // pred_check
          %p1107 = pneg %p141
        $region88: #{infogan_generator_forward.21} parent=85 // pred_check_branch
          %1109 = sbr.rel (%p1107) target = $region90
        $region89: #{infogan_generator_forward.21} parent=85 // pred_region
          %s1110 = smul.u32 2, %s23
          %p1111 = scmp.lt.s32.totalorder %s22, 0
          %s1112 = scalar_select %p1111, %s22, 0
          %p1113 = scmp.lt.s32.totalorder %s1110, 3
          %s1114 = scalar_select %p1113, %s1110, 3
          %s1115 = smul.addr %s1112, 4
          %s1116 = sadd.s32 %s1114, %s1115
          %s1117 = smul.addr %s1116, 2
          %s1118 = scalar_lea.vmem %s3, %s1117
        $region90: #{infogan_generator_forward.21} parent=85 // pred_fallthru
          _
      $region86: #{infogan_generator_forward.21} parent=5 // pred_fallthru
        _
    $region6: #{infogan_generator_forward.21} parent=1 // loop_footer
      %s13 = sadd.s32 1, %s9
    $region7: #{infogan_generator_forward.21} parent=1 // loop_footer_branch
      %8 = sbr.rel target = $region3
    $region8: #{infogan_generator_forward.21} parent=1 // loop_exit
      _

// kernel: infogan_generator_forward.24
$region0: #{infogan_generator_forward.24}
  #allocation0 [shape = 'u32[]', space=smem, size = 0x4, offset = 0x4, fixed_abs, tag = 'smem constant byte address 0x4 - core index']
  #allocation1 [shape = 'u32[144,128]{1,0:T(1,128)}', space=vmem, size = 0x12000, scoped, tag = 'internal scratch']
  %s0 = inlined_call_operand.vmem [shape: f32[2,512], index: 0, kind: input, shape index: {}]
  %s1 = inlined_call_operand.vmem [shape: bf16[512,512], index: 1, kind: input, shape index: {}]
  %s2 = inlined_call_operand.vmem [shape: f32[1,512], index: 2, kind: input, shape index: {}]
  %s3 = inlined_call_operand.vmem [shape: f32[2,512], index: 3, kind: output, shape index: {}]
  %s4 = sld [smem:[#allocation0]]
  $region83: #{infogan_generator_forward.24} parent=0
    _
  %s6 = ssub.s32 1, %s4
  %s7 = scalar_select 0, %s6, %s4
  $region1: #{infogan_generator_forward.24} parent=0
    #allocation2 [shape = 'u8[524288]{0}', space=vmem, size = 0x80000, scoped, tag = 'input window, operand 1']
    loop: start=0, step=1, limit=4
    $region2: #{infogan_generator_forward.24} parent=1 // loop_pre_header
      _
    $region3: #{infogan_generator_forward.24} parent=1 // loop_header
      %s9 = sphi 0, %s13
      %p10 = scmp.ge.s32.totalorder %s9, 4
      %s16 = sphi 0, %s35
      %s17 = sphi 0, %s31
      %s18 = sphi 0, %s27
      %s19 = sphi 0, %s16
      %s20 = sphi 0, %s17
      %s21 = sphi 0, %s18
      %s22 = sphi 0, %s19
      %s23 = sphi 0, %s20
      %s24 = sphi 0, %s21
      %s40 = sphi 0, %s42
      %s43 = sphi 0, %s40
      %s44 = sphi 0, %s43
      %s60 = sphi 0, %s44
      %s68 = sphi 0, %s70
      %s71 = sphi 0, %s68
      %s72 = sphi 0, %s71
      %s88 = sphi 0, %s72
      %s94 = sphi 0, %s96
      %s97 = sphi 0, %s94
      %s98 = sphi 0, %s97
      %s114 = sphi 0, %s98
      %s122 = sphi 0, %s124
      %s125 = sphi 0, %s122
      %s126 = sphi 0, %s125
      %s142 = sphi 0, %s126
    $region4: #{infogan_generator_forward.24} parent=1 // loop_header_branch
      %12 = sbr.rel (%p10) target = $region8
    $region5: #{infogan_generator_forward.24} parent=1 // loop_body
      %s14 = ssub.s32 %s9, 1
      %s15 = ssub.s32 %s9, 2
      %s25 = sadd.s32 1, %s18
      %p26 = scmp.ge.s32.totalorder %s25, 1
      %s27 = scalar_select %p26, 0, %s25
      %s28 = sadd.s32 1, %s17
      %s29 = scalar_select %p26, %s28, %s17
      %p30 = scmp.ge.s32.totalorder %s29, 2
      %s31 = scalar_select %p30, 0, %s29
      %s32 = sadd.s32 1, %s16
      %s33 = scalar_select %p30, %s32, %s16
      %p34 = scmp.ge.s32.totalorder %s33, 1
      %s35 = scalar_select %p34, 0, %s33
      %s36 = ssub.s32 %s16, %s35
      %s37 = ssub.s32 %s18, %s27
      %s38 = sor.u32 %s36, %s37
      %p39 = scmp.eq.s32.totalorder %s38, 0
      %s41 = sadd.s32 %s40, 1
      %s42 = scalar_select %p39, %s40, %s41
      %p45 = pneg %p39
      %p46 = scmp.eq.s32.totalorder %s9, 1
      %p47 = por %p45, %p46
      %p48 = scmp.ne.s32.totalorder %s40, %s43
      %p49 = scmp.eq.s32.totalorder %s9, 0
      %p50 = por %p48, %p49
      %p51 = scmp.ne.s32.totalorder %s40, %s43
      %p52 = scmp.eq.s32.totalorder %s14, 1
      %p53 = por %p51, %p52
      %p54 = scmp.ne.s32.totalorder %s43, %s44
      %p55 = scmp.eq.s32.totalorder %s14, 0
      %p56 = por %p54, %p55
      %p57 = scmp.ne.s32.totalorder %s43, %s44
      %p58 = scmp.eq.s32.totalorder %s15, 1
      %p59 = por %p57, %p58
      %p61 = scmp.ne.s32.totalorder %s44, %s60
      %p62 = scmp.eq.s32.totalorder %s15, 0
      %p63 = por %p61, %p62
      %s64 = ssub.s32 %s18, %s27
      %s65 = ssub.s32 %s17, %s31
      %s66 = sor.u32 %s64, %s65
      %p67 = scmp.eq.s32.totalorder %s66, 0
      %s69 = sadd.s32 %s68, 1
      %s70 = scalar_select %p67, %s68, %s69
      %p73 = pneg %p67
      %p74 = scmp.eq.s32.totalorder %s9, 1
      %p75 = por %p73, %p74
      %p76 = scmp.ne.s32.totalorder %s68, %s71
      %p77 = scmp.eq.s32.totalorder %s9, 0
      %p78 = por %p76, %p77
      %p79 = scmp.ne.s32.totalorder %s68, %s71
      %p80 = scmp.eq.s32.totalorder %s14, 1
      %p81 = por %p79, %p80
      %p82 = scmp.ne.s32.totalorder %s71, %s72
      %p83 = scmp.eq.s32.totalorder %s14, 0
      %p84 = por %p82, %p83
      %p85 = scmp.ne.s32.totalorder %s71, %s72
      %p86 = scmp.eq.s32.totalorder %s15, 1
      %p87 = por %p85, %p86
      %p89 = scmp.ne.s32.totalorder %s72, %s88
      %p90 = scmp.eq.s32.totalorder %s15, 0
      %p91 = por %p89, %p90
      %s92 = ssub.s32 %s17, %s31
      %p93 = scmp.eq.s32.totalorder %s92, 0
      %s95 = sadd.s32 %s94, 1
      %s96 = scalar_select %p93, %s94, %s95
      %p99 = pneg %p93
      %p100 = scmp.eq.s32.totalorder %s9, 1
      %p101 = por %p99, %p100
      %p102 = scmp.ne.s32.totalorder %s94, %s97
      %p103 = scmp.eq.s32.totalorder %s9, 0
      %p104 = por %p102, %p103
      %p105 = scmp.ne.s32.totalorder %s94, %s97
      %p106 = scmp.eq.s32.totalorder %s14, 1
      %p107 = por %p105, %p106
      %p108 = scmp.ne.s32.totalorder %s97, %s98
      %p109 = scmp.eq.s32.totalorder %s14, 0
      %p110 = por %p108, %p109
      %p111 = scmp.ne.s32.totalorder %s97, %s98
      %p112 = scmp.eq.s32.totalorder %s15, 1
      %p113 = por %p111, %p112
      %p115 = scmp.ne.s32.totalorder %s98, %s114
      %p116 = scmp.eq.s32.totalorder %s15, 0
      %p117 = por %p115, %p116
      %s118 = ssub.s32 %s16, %s35
      %s119 = ssub.s32 %s17, %s31
      %s120 = sor.u32 %s118, %s119
      %p121 = scmp.eq.s32.totalorder %s120, 0
      %s123 = sadd.s32 %s122, 1
      %s124 = scalar_select %p121, %s122, %s123
      %p127 = pneg %p121
      %p128 = scmp.eq.s32.totalorder %s9, 1
      %p129 = por %p127, %p128
      %p130 = scmp.ne.s32.totalorder %s122, %s125
      %p131 = scmp.eq.s32.totalorder %s9, 0
      %p132 = por %p130, %p131
      %p133 = scmp.ne.s32.totalorder %s122, %s125
      %p134 = scmp.eq.s32.totalorder %s14, 1
      %p135 = por %p133, %p134
      %p136 = scmp.ne.s32.totalorder %s125, %s126
      %p137 = scmp.eq.s32.totalorder %s14, 0
      %p138 = por %p136, %p137
      %p139 = scmp.ne.s32.totalorder %s125, %s126
      %p140 = scmp.eq.s32.totalorder %s15, 1
      %p141 = por %p139, %p140
      %p143 = scmp.ne.s32.totalorder %s126, %s142
      %p144 = scmp.eq.s32.totalorder %s15, 0
      %p145 = por %p143, %p144
      %p146 = scmp.le.s32.totalorder 1, %s9
      %p147 = scmp.lt.s32.totalorder %s9, 3
      %p148 = pnand %p146, %p147
      %p149 = pneg %p148
      // Predicated region
      $region9: #{infogan_generator_forward.24} parent=5 // pred_check
        _
      $region10: #{infogan_generator_forward.24} parent=5 // pred_check_branch
        %151 = sbr.rel (%p148) target = $region12
      $region11: #{infogan_generator_forward.24} parent=5 // pred_region
        %s152 = ssub.s32 %s9, 1
        // Predicated region
        $region13: #{infogan_generator_forward.24} parent=11 // pred_check
          %p153 = pneg %p56
        $region14: #{infogan_generator_forward.24} parent=11 // pred_check_branch
          %155 = sbr.rel (%p153) target = $region16
        $region15: #{infogan_generator_forward.24} parent=11 // pred_region
          %s156 = smul.u32 4, %s21
          %p157 = scmp.lt.s32.totalorder %s19, 0
          %s158 = scalar_select %p157, %s19, 0
          %p159 = scmp.lt.s32.totalorder %s156, 3
          %s160 = scalar_select %p159, %s156, 3
          %s161 = smul.addr %s158, 4
          %s162 = sadd.s32 %s160, %s161
          %s163 = smul.addr %s162, 2
          %s164 = scalar_lea.vmem %s0, %s163
          %s165 = smul.u32 4, %s21
        $region16: #{infogan_generator_forward.24} parent=11 // pred_fallthru
          _
      $region12: #{infogan_generator_forward.24} parent=5 // pred_fallthru
        _
      %p166 = scmp.lt.s32.totalorder %s9, 2
      // Predicated region
      $region17: #{infogan_generator_forward.24} parent=5 // pred_check
        %p167 = pneg %p166
      $region18: #{infogan_generator_forward.24} parent=5 // pred_check_branch
        %169 = sbr.rel (%p167) target = $region20
      $region19: #{infogan_generator_forward.24} parent=5 // pred_region
        // Predicated region
        $region21: #{infogan_generator_forward.24} parent=19 // pred_check
          %p170 = pneg %p78
        $region22: #{infogan_generator_forward.24} parent=19 // pred_check_branch
          %172 = sbr.rel (%p170) target = $region24
        $region23: #{infogan_generator_forward.24} parent=19 // pred_region
          %s173 = sand.u32 %s68, 1
          %s174 = sand.u32 %s68, 1
          %s175 = smul.addr %s174, 512
          %s176 = scalar_lea.vmem [#allocation2], %s175
          %s177 = smul.u32 64, %s18
          %s178 = smul.u32 2, %s17
          %s179 = smul.addr %s177, 4
          %s180 = sadd.s32 %s178, %s179
          %s181 = smul.addr %s180, 4
          %s182 = scalar_lea.vmem %s1, %s181
          // Predicated region
          $region25: #{infogan_generator_forward.24} parent=23 // pred_check
            _
          $region26: #{infogan_generator_forward.24} parent=23 // pred_check_branch
            %184 = sbr.rel (0) target = $region28
          $region27: #{infogan_generator_forward.24} parent=23 // pred_region
            // Predicated region
            $region29: #{infogan_generator_forward.24} parent=27 // pred_check
              _
            $region30: #{infogan_generator_forward.24} parent=27 // pred_check_branch
              %186 = sbr.rel (0) target = $region32
            $region31: #{infogan_generator_forward.24} parent=27 // pred_region
              // Predicated region
              $region44: #{infogan_generator_forward.24} parent=31 // pred_check
                _
              $region45: #{infogan_generator_forward.24} parent=31 // pred_check_branch
                %328 = sbr.rel (0) target = $region47
              $region46: #{infogan_generator_forward.24} parent=31 // pred_region
                loop: start=0, step=1, limit=1
                $region48: #{infogan_generator_forward.24} parent=46 // loop_pre_header
                  _
                $region49: #{infogan_generator_forward.24} parent=46 // loop_header
                  %s330 = sphi 0, %s334
                  %p331 = scmp.ge.s32.totalorder %s330, 1
                  %s335 = sphi %s182, %s182
                  %s336 = sphi %s176, %s176
                $region50: #{infogan_generator_forward.24} parent=46 // loop_header_branch
                  %333 = sbr.rel (%p331) target = $region54
                $region51: #{infogan_generator_forward.24} parent=46 // loop_body
                  %v337 = vld [vmem:[%s335] sm:$0xff]
                  %338 = vst [vmem:[%s336] sm:$0xff] %v337
                  %v339 = vld [vmem:[%s335 + $0x10] sm:$0xff]
                  %340 = vst [vmem:[%s336 + $0x8] sm:$0xff] %v339
                  %v341 = vld [vmem:[%s335 + $0x20] sm:$0xff]
                  %342 = vst [vmem:[%s336 + $0x10] sm:$0xff] %v341
                  %v343 = vld [vmem:[%s335 + $0x30] sm:$0xff]
                  %344 = vst [vmem:[%s336 + $0x18] sm:$0xff] %v343
                  %v345 = vld [vmem:[%s335 + $0x40] sm:$0xff]
                  %346 = vst [vmem:[%s336 + $0x20] sm:$0xff] %v345
                  %v347 = vld [vmem:[%s335 + $0x50] sm:$0xff]
                  %348 = vst [vmem:[%s336 + $0x28] sm:$0xff] %v347
                  %v349 = vld [vmem:[%s335 + $0x60] sm:$0xff]
                  %350 = vst [vmem:[%s336 + $0x30] sm:$0xff] %v349
                  %v351 = vld [vmem:[%s335 + $0x70] sm:$0xff]
                  %352 = vst [vmem:[%s336 + $0x38] sm:$0xff] %v351
                  %v353 = vld [vmem:[%s335 + $0x80] sm:$0xff]
                  %354 = vst [vmem:[%s336 + $0x40] sm:$0xff] %v353
                  %v355 = vld [vmem:[%s335 + $0x90] sm:$0xff]
                  %356 = vst [vmem:[%s336 + $0x48] sm:$0xff] %v355
                  %v357 = vld [vmem:[%s335 + $0xa0] sm:$0xff]
                  %358 = vst [vmem:[%s336 + $0x50] sm:$0xff] %v357
                  %v359 = vld [vmem:[%s335 + $0xb0] sm:$0xff]
                  %360 = vst [vmem:[%s336 + $0x58] sm:$0xff] %v359
                  %v361 = vld [vmem:[%s335 + $0xc0] sm:$0xff]
                  %362 = vst [vmem:[%s336 + $0x60] sm:$0xff] %v361
                  %v363 = vld [vmem:[%s335 + $0xd0] sm:$0xff]
                  %364 = vst [vmem:[%s336 + $0x68] sm:$0xff] %v363
                  %v365 = vld [vmem:[%s335 + $0xe0] sm:$0xff]
                  %366 = vst [vmem:[%s336 + $0x70] sm:$0xff] %v365
                  %v367 = vld [vmem:[%s335 + $0xf0] sm:$0xff]
                  %368 = vst [vmem:[%s336 + $0x78] sm:$0xff] %v367
                  %v369 = vld [vmem:[%s335 + $0x100] sm:$0xff]
                  %370 = vst [vmem:[%s336 + $0x80] sm:$0xff] %v369
                  %v371 = vld [vmem:[%s335 + $0x110] sm:$0xff]
                  %372 = vst [vmem:[%s336 + $0x88] sm:$0xff] %v371
                  %v373 = vld [vmem:[%s335 + $0x120] sm:$0xff]
                  %374 = vst [vmem:[%s336 + $0x90] sm:$0xff] %v373
                  %v375 = vld [vmem:[%s335 + $0x130] sm:$0xff]
                  %376 = vst [vmem:[%s336 + $0x98] sm:$0xff] %v375
                  %v377 = vld [vmem:[%s335 + $0x140] sm:$0xff]
                  %378 = vst [vmem:[%s336 + $0xa0] sm:$0xff] %v377
                  %v379 = vld [vmem:[%s335 + $0x150] sm:$0xff]
                  %380 = vst [vmem:[%s336 + $0xa8] sm:$0xff] %v379
                  %v381 = vld [vmem:[%s335 + $0x160] sm:$0xff]
                  %382 = vst [vmem:[%s336 + $0xb0] sm:$0xff] %v381
                  %v383 = vld [vmem:[%s335 + $0x170] sm:$0xff]
                  %384 = vst [vmem:[%s336 + $0xb8] sm:$0xff] %v383
                  %v385 = vld [vmem:[%s335 + $0x180] sm:$0xff]
                  %386 = vst [vmem:[%s336 + $0xc0] sm:$0xff] %v385
                  %v387 = vld [vmem:[%s335 + $0x190] sm:$0xff]
                  %388 = vst [vmem:[%s336 + $0xc8] sm:$0xff] %v387
                  %v389 = vld [vmem:[%s335 + $0x1a0] sm:$0xff]
                  %390 = vst [vmem:[%s336 + $0xd0] sm:$0xff] %v389
                  %v391 = vld [vmem:[%s335 + $0x1b0] sm:$0xff]
                  %392 = vst [vmem:[%s336 + $0xd8] sm:$0xff] %v391
                  %v393 = vld [vmem:[%s335 + $0x1c0] sm:$0xff]
                  %394 = vst [vmem:[%s336 + $0xe0] sm:$0xff] %v393
                  %v395 = vld [vmem:[%s335 + $0x1d0] sm:$0xff]
                  %396 = vst [vmem:[%s336 + $0xe8] sm:$0xff] %v395
                  %v397 = vld [vmem:[%s335 + $0x1e0] sm:$0xff]
                  %398 = vst [vmem:[%s336 + $0xf0] sm:$0xff] %v397
                  %v399 = vld [vmem:[%s335 + $0x1f0] sm:$0xff]
                  %400 = vst [vmem:[%s336 + $0xf8] sm:$0xff] %v399
                  %v401 = vld [vmem:[%s335 + $0x200] sm:$0xff]
                  %402 = vst [vmem:[%s336 + $0x100] sm:$0xff] %v401
                  %v403 = vld [vmem:[%s335 + $0x210] sm:$0xff]
                  %404 = vst [vmem:[%s336 + $0x108] sm:$0xff] %v403
                  %v405 = vld [vmem:[%s335 + $0x220] sm:$0xff]
                  %406 = vst [vmem:[%s336 + $0x110] sm:$0xff] %v405
                  %v407 = vld [vmem:[%s335 + $0x230] sm:$0xff]
                  %408 = vst [vmem:[%s336 + $0x118] sm:$0xff] %v407
                  %v409 = vld [vmem:[%s335 + $0x240] sm:$0xff]
                  %410 = vst [vmem:[%s336 + $0x120] sm:$0xff] %v409
                  %v411 = vld [vmem:[%s335 + $0x250] sm:$0xff]
                  %412 = vst [vmem:[%s336 + $0x128] sm:$0xff] %v411
                  %v413 = vld [vmem:[%s335 + $0x260] sm:$0xff]
                  %414 = vst [vmem:[%s336 + $0x130] sm:$0xff] %v413
                  %v415 = vld [vmem:[%s335 + $0x270] sm:$0xff]
                  %416 = vst [vmem:[%s336 + $0x138] sm:$0xff] %v415
                  %v417 = vld [vmem:[%s335 + $0x280] sm:$0xff]
                  %418 = vst [vmem:[%s336 + $0x140] sm:$0xff] %v417
                  %v419 = vld [vmem:[%s335 + $0x290] sm:$0xff]
                  %420 = vst [vmem:[%s336 + $0x148] sm:$0xff] %v419
                  %v421 = vld [vmem:[%s335 + $0x2a0] sm:$0xff]
                  %422 = vst [vmem:[%s336 + $0x150] sm:$0xff] %v421
                  %v423 = vld [vmem:[%s335 + $0x2b0] sm:$0xff]
                  %424 = vst [vmem:[%s336 + $0x158] sm:$0xff] %v423
                  %v425 = vld [vmem:[%s335 + $0x2c0] sm:$0xff]
                  %426 = vst [vmem:[%s336 + $0x160] sm:$0xff] %v425
                  %v427 = vld [vmem:[%s335 + $0x2d0] sm:$0xff]
                  %428 = vst [vmem:[%s336 + $0x168] sm:$0xff] %v427
                  %v429 = vld [vmem:[%s335 + $0x2e0] sm:$0xff]
                  %430 = vst [vmem:[%s336 + $0x170] sm:$0xff] %v429
                  %v431 = vld [vmem:[%s335 + $0x2f0] sm:$0xff]
                  %432 = vst [vmem:[%s336 + $0x178] sm:$0xff] %v431
                  %v433 = vld [vmem:[%s335 + $0x300] sm:$0xff]
                  %434 = vst [vmem:[%s336 + $0x180] sm:$0xff] %v433
                  %v435 = vld [vmem:[%s335 + $0x310] sm:$0xff]
                  %436 = vst [vmem:[%s336 + $0x188] sm:$0xff] %v435
                  %v437 = vld [vmem:[%s335 + $0x320] sm:$0xff]
                  %438 = vst [vmem:[%s336 + $0x190] sm:$0xff] %v437
                  %v439 = vld [vmem:[%s335 + $0x330] sm:$0xff]
                  %440 = vst [vmem:[%s336 + $0x198] sm:$0xff] %v439
                  %v441 = vld [vmem:[%s335 + $0x340] sm:$0xff]
                  %442 = vst [vmem:[%s336 + $0x1a0] sm:$0xff] %v441
                  %v443 = vld [vmem:[%s335 + $0x350] sm:$0xff]
                  %444 = vst [vmem:[%s336 + $0x1a8] sm:$0xff] %v443
                  %v445 = vld [vmem:[%s335 + $0x360] sm:$0xff]
                  %446 = vst [vmem:[%s336 + $0x1b0] sm:$0xff] %v445
                  %v447 = vld [vmem:[%s335 + $0x370] sm:$0xff]
                  %448 = vst [vmem:[%s336 + $0x1b8] sm:$0xff] %v447
                  %v449 = vld [vmem:[%s335 + $0x380] sm:$0xff]
                  %450 = vst [vmem:[%s336 + $0x1c0] sm:$0xff] %v449
                  %v451 = vld [vmem:[%s335 + $0x390] sm:$0xff]
                  %452 = vst [vmem:[%s336 + $0x1c8] sm:$0xff] %v451
                  %v453 = vld [vmem:[%s335 + $0x3a0] sm:$0xff]
                  %454 = vst [vmem:[%s336 + $0x1d0] sm:$0xff] %v453
                  %v455 = vld [vmem:[%s335 + $0x3b0] sm:$0xff]
                  %456 = vst [vmem:[%s336 + $0x1d8] sm:$0xff] %v455
                  %v457 = vld [vmem:[%s335 + $0x3c0] sm:$0xff]
                  %458 = vst [vmem:[%s336 + $0x1e0] sm:$0xff] %v457
                  %v459 = vld [vmem:[%s335 + $0x3d0] sm:$0xff]
                  %460 = vst [vmem:[%s336 + $0x1e8] sm:$0xff] %v459
                  %v461 = vld [vmem:[%s335 + $0x3e0] sm:$0xff]
                  %462 = vst [vmem:[%s336 + $0x1f0] sm:$0xff] %v461
                  %v463 = vld [vmem:[%s335 + $0x3f0] sm:$0xff]
                  %464 = vst [vmem:[%s336 + $0x1f8] sm:$0xff] %v463
                $region52: #{infogan_generator_forward.24} parent=46 // loop_footer
                  %s334 = sadd.s32 1, %s330
                $region53: #{infogan_generator_forward.24} parent=46 // loop_footer_branch
                  %329 = sbr.rel target = $region49
                $region54: #{infogan_generator_forward.24} parent=46 // loop_exit
                  _
              $region47: #{infogan_generator_forward.24} parent=31 // pred_fallthru
                _
              // Predicated region
              $region55: #{infogan_generator_forward.24} parent=31 // pred_check
                _
              $region56: #{infogan_generator_forward.24} parent=31 // pred_check_branch
                %466 = sbr.rel target = $region58
              $region57: #{infogan_generator_forward.24} parent=31 // pred_region
                _
              $region58: #{infogan_generator_forward.24} parent=31 // pred_fallthru
                _
            $region32: #{infogan_generator_forward.24} parent=27 // pred_fallthru
              _
            // Predicated region
            $region33: #{infogan_generator_forward.24} parent=27 // pred_check
              _
            $region34: #{infogan_generator_forward.24} parent=27 // pred_check_branch
              %188 = sbr.rel target = $region36
            $region35: #{infogan_generator_forward.24} parent=27 // pred_region
              %s190 = ssub.s32 256, 1
              loop: start=0, step=1, limit=1
              $region37: #{infogan_generator_forward.24} parent=35 // loop_pre_header
                _
              $region38: #{infogan_generator_forward.24} parent=35 // loop_header
                %s192 = sphi 0, %s196
                %p193 = scmp.ge.s32.totalorder %s192, 1
                %s197 = sphi %s182, %s182
                %s198 = sphi %s176, %s176
              $region39: #{infogan_generator_forward.24} parent=35 // loop_header_branch
                %195 = sbr.rel (%p193) target = $region43
              $region40: #{infogan_generator_forward.24} parent=35 // loop_body
                %v199 = vld [vmem:[%s197] sm:%s190]
                %200 = vst [vmem:[%s198] sm:%s190] %v199
                %v201 = vld [vmem:[%s197 + $0x10] sm:%s190]
                %202 = vst [vmem:[%s198 + $0x8] sm:%s190] %v201
                %v203 = vld [vmem:[%s197 + $0x20] sm:%s190]
                %204 = vst [vmem:[%s198 + $0x10] sm:%s190] %v203
                %v205 = vld [vmem:[%s197 + $0x30] sm:%s190]
                %206 = vst [vmem:[%s198 + $0x18] sm:%s190] %v205
                %v207 = vld [vmem:[%s197 + $0x40] sm:%s190]
                %208 = vst [vmem:[%s198 + $0x20] sm:%s190] %v207
                %v209 = vld [vmem:[%s197 + $0x50] sm:%s190]
                %210 = vst [vmem:[%s198 + $0x28] sm:%s190] %v209
                %v211 = vld [vmem:[%s197 + $0x60] sm:%s190]
                %212 = vst [vmem:[%s198 + $0x30] sm:%s190] %v211
                %v213 = vld [vmem:[%s197 + $0x70] sm:%s190]
                %214 = vst [vmem:[%s198 + $0x38] sm:%s190] %v213
                %v215 = vld [vmem:[%s197 + $0x80] sm:%s190]
                %216 = vst [vmem:[%s198 + $0x40] sm:%s190] %v215
                %v217 = vld [vmem:[%s197 + $0x90] sm:%s190]
                %218 = vst [vmem:[%s198 + $0x48] sm:%s190] %v217
                %v219 = vld [vmem:[%s197 + $0xa0] sm:%s190]
                %220 = vst [vmem:[%s198 + $0x50] sm:%s190] %v219
                %v221 = vld [vmem:[%s197 + $0xb0] sm:%s190]
                %222 = vst [vmem:[%s198 + $0x58] sm:%s190] %v221
                %v223 = vld [vmem:[%s197 + $0xc0] sm:%s190]
                %224 = vst [vmem:[%s198 + $0x60] sm:%s190] %v223
                %v225 = vld [vmem:[%s197 + $0xd0] sm:%s190]
                %226 = vst [vmem:[%s198 + $0x68] sm:%s190] %v225
                %v227 = vld [vmem:[%s197 + $0xe0] sm:%s190]
                %228 = vst [vmem:[%s198 + $0x70] sm:%s190] %v227
                %v229 = vld [vmem:[%s197 + $0xf0] sm:%s190]
                %230 = vst [vmem:[%s198 + $0x78] sm:%s190] %v229
                %v231 = vld [vmem:[%s197 + $0x100] sm:%s190]
                %232 = vst [vmem:[%s198 + $0x80] sm:%s190] %v231
                %v233 = vld [vmem:[%s197 + $0x110] sm:%s190]
                %234 = vst [vmem:[%s198 + $0x88] sm:%s190] %v233
                %v235 = vld [vmem:[%s197 + $0x120] sm:%s190]
                %236 = vst [vmem:[%s198 + $0x90] sm:%s190] %v235
                %v237 = vld [vmem:[%s197 + $0x130] sm:%s190]
                %238 = vst [vmem:[%s198 + $0x98] sm:%s190] %v237
                %v239 = vld [vmem:[%s197 + $0x140] sm:%s190]
                %240 = vst [vmem:[%s198 + $0xa0] sm:%s190] %v239
                %v241 = vld [vmem:[%s197 + $0x150] sm:%s190]
                %242 = vst [vmem:[%s198 + $0xa8] sm:%s190] %v241
                %v243 = vld [vmem:[%s197 + $0x160] sm:%s190]
                %244 = vst [vmem:[%s198 + $0xb0] sm:%s190] %v243
                %v245 = vld [vmem:[%s197 + $0x170] sm:%s190]
                %246 = vst [vmem:[%s198 + $0xb8] sm:%s190] %v245
                %v247 = vld [vmem:[%s197 + $0x180] sm:%s190]
                %248 = vst [vmem:[%s198 + $0xc0] sm:%s190] %v247
                %v249 = vld [vmem:[%s197 + $0x190] sm:%s190]
                %250 = vst [vmem:[%s198 + $0xc8] sm:%s190] %v249
                %v251 = vld [vmem:[%s197 + $0x1a0] sm:%s190]
                %252 = vst [vmem:[%s198 + $0xd0] sm:%s190] %v251
                %v253 = vld [vmem:[%s197 + $0x1b0] sm:%s190]
                %254 = vst [vmem:[%s198 + $0xd8] sm:%s190] %v253
                %v255 = vld [vmem:[%s197 + $0x1c0] sm:%s190]
                %256 = vst [vmem:[%s198 + $0xe0] sm:%s190] %v255
                %v257 = vld [vmem:[%s197 + $0x1d0] sm:%s190]
                %258 = vst [vmem:[%s198 + $0xe8] sm:%s190] %v257
                %v259 = vld [vmem:[%s197 + $0x1e0] sm:%s190]
                %260 = vst [vmem:[%s198 + $0xf0] sm:%s190] %v259
                %v261 = vld [vmem:[%s197 + $0x1f0] sm:%s190]
                %262 = vst [vmem:[%s198 + $0xf8] sm:%s190] %v261
                %v263 = vld [vmem:[%s197 + $0x200] sm:%s190]
                %264 = vst [vmem:[%s198 + $0x100] sm:%s190] %v263
                %v265 = vld [vmem:[%s197 + $0x210] sm:%s190]
                %266 = vst [vmem:[%s198 + $0x108] sm:%s190] %v265
                %v267 = vld [vmem:[%s197 + $0x220] sm:%s190]
                %268 = vst [vmem:[%s198 + $0x110] sm:%s190] %v267
                %v269 = vld [vmem:[%s197 + $0x230] sm:%s190]
                %270 = vst [vmem:[%s198 + $0x118] sm:%s190] %v269
                %v271 = vld [vmem:[%s197 + $0x240] sm:%s190]
                %272 = vst [vmem:[%s198 + $0x120] sm:%s190] %v271
                %v273 = vld [vmem:[%s197 + $0x250] sm:%s190]
                %274 = vst [vmem:[%s198 + $0x128] sm:%s190] %v273
                %v275 = vld [vmem:[%s197 + $0x260] sm:%s190]
                %276 = vst [vmem:[%s198 + $0x130] sm:%s190] %v275
                %v277 = vld [vmem:[%s197 + $0x270] sm:%s190]
                %278 = vst [vmem:[%s198 + $0x138] sm:%s190] %v277
                %v279 = vld [vmem:[%s197 + $0x280] sm:%s190]
                %280 = vst [vmem:[%s198 + $0x140] sm:%s190] %v279
                %v281 = vld [vmem:[%s197 + $0x290] sm:%s190]
                %282 = vst [vmem:[%s198 + $0x148] sm:%s190] %v281
                %v283 = vld [vmem:[%s197 + $0x2a0] sm:%s190]
                %284 = vst [vmem:[%s198 + $0x150] sm:%s190] %v283
                %v285 = vld [vmem:[%s197 + $0x2b0] sm:%s190]
                %286 = vst [vmem:[%s198 + $0x158] sm:%s190] %v285
                %v287 = vld [vmem:[%s197 + $0x2c0] sm:%s190]
                %288 = vst [vmem:[%s198 + $0x160] sm:%s190] %v287
                %v289 = vld [vmem:[%s197 + $0x2d0] sm:%s190]
                %290 = vst [vmem:[%s198 + $0x168] sm:%s190] %v289
                %v291 = vld [vmem:[%s197 + $0x2e0] sm:%s190]
                %292 = vst [vmem:[%s198 + $0x170] sm:%s190] %v291
                %v293 = vld [vmem:[%s197 + $0x2f0] sm:%s190]
                %294 = vst [vmem:[%s198 + $0x178] sm:%s190] %v293
                %v295 = vld [vmem:[%s197 + $0x300] sm:%s190]
                %296 = vst [vmem:[%s198 + $0x180] sm:%s190] %v295
                %v297 = vld [vmem:[%s197 + $0x310] sm:%s190]
                %298 = vst [vmem:[%s198 + $0x188] sm:%s190] %v297
                %v299 = vld [vmem:[%s197 + $0x320] sm:%s190]
                %300 = vst [vmem:[%s198 + $0x190] sm:%s190] %v299
                %v301 = vld [vmem:[%s197 + $0x330] sm:%s190]
                %302 = vst [vmem:[%s198 + $0x198] sm:%s190] %v301
                %v303 = vld [vmem:[%s197 + $0x340] sm:%s190]
                %304 = vst [vmem:[%s198 + $0x1a0] sm:%s190] %v303
                %v305 = vld [vmem:[%s197 + $0x350] sm:%s190]
                %306 = vst [vmem:[%s198 + $0x1a8] sm:%s190] %v305
                %v307 = vld [vmem:[%s197 + $0x360] sm:%s190]
                %308 = vst [vmem:[%s198 + $0x1b0] sm:%s190] %v307
                %v309 = vld [vmem:[%s197 + $0x370] sm:%s190]
                %310 = vst [vmem:[%s198 + $0x1b8] sm:%s190] %v309
                %v311 = vld [vmem:[%s197 + $0x380] sm:%s190]
                %312 = vst [vmem:[%s198 + $0x1c0] sm:%s190] %v311
                %v313 = vld [vmem:[%s197 + $0x390] sm:%s190]
                %314 = vst [vmem:[%s198 + $0x1c8] sm:%s190] %v313
                %v315 = vld [vmem:[%s197 + $0x3a0] sm:%s190]
                %316 = vst [vmem:[%s198 + $0x1d0] sm:%s190] %v315
                %v317 = vld [vmem:[%s197 + $0x3b0] sm:%s190]
                %318 = vst [vmem:[%s198 + $0x1d8] sm:%s190] %v317
                %v319 = vld [vmem:[%s197 + $0x3c0] sm:%s190]
                %320 = vst [vmem:[%s198 + $0x1e0] sm:%s190] %v319
                %v321 = vld [vmem:[%s197 + $0x3d0] sm:%s190]
                %322 = vst [vmem:[%s198 + $0x1e8] sm:%s190] %v321
                %v323 = vld [vmem:[%s197 + $0x3e0] sm:%s190]
                %324 = vst [vmem:[%s198 + $0x1f0] sm:%s190] %v323
                %v325 = vld [vmem:[%s197 + $0x3f0] sm:%s190]
                %326 = vst [vmem:[%s198 + $0x1f8] sm:%s190] %v325
              $region41: #{infogan_generator_forward.24} parent=35 // loop_footer
                %s196 = sadd.s32 1, %s192
              $region42: #{infogan_generator_forward.24} parent=35 // loop_footer_branch
                %191 = sbr.rel target = $region38
              $region43: #{infogan_generator_forward.24} parent=35 // loop_exit
                _
            $region36: #{infogan_generator_forward.24} parent=27 // pred_fallthru
              _
          $region28: #{infogan_generator_forward.24} parent=23 // pred_fallthru
            _
          %467 = vnop
        $region24: #{infogan_generator_forward.24} parent=19 // pred_fallthru
          _
        // Predicated region
        $region59: #{infogan_generator_forward.24} parent=19 // pred_check
          %p468 = pneg %p104
        $region60: #{infogan_generator_forward.24} parent=19 // pred_check_branch
          %470 = sbr.rel (%p468) target = $region62
        $region61: #{infogan_generator_forward.24} parent=19 // pred_region
          %s471 = smul.u32 2, %s17
          %p472 = scmp.lt.s32.totalorder %s471, 3
          %s473 = scalar_select %p472, %s471, 3
          %s474 = scalar_lea.vmem %s2, %s473
          %s475 = smul.u32 2, %s17
        $region62: #{infogan_generator_forward.24} parent=19 // pred_fallthru
          _
      $region20: #{infogan_generator_forward.24} parent=5 // pred_fallthru
        _
      %p476 = scmp.le.s32.totalorder 1, %s9
      %p477 = scmp.lt.s32.totalorder %s9, 3
      %p478 = pnand %p476, %p477
      %p479 = pneg %p478
      // Predicated region
      $region63: #{infogan_generator_forward.24} parent=5 // pred_check
        _
      $region64: #{infogan_generator_forward.24} parent=5 // pred_check_branch
        %481 = sbr.rel (%p478) target = $region66
      $region65: #{infogan_generator_forward.24} parent=5 // pred_region
        %s482 = ssub.s32 %s9, 1
        %s483 = sand.u32 %s71, 1
        %s484 = sand.u32 %s71, 1
        %s485 = smul.addr %s484, 512
        %s486 = scalar_lea.vmem [#allocation2], %s485
        // Predicated region
        $region67: #{infogan_generator_forward.24} parent=65 // pred_check
          %p487 = pneg %p84
        $region68: #{infogan_generator_forward.24} parent=65 // pred_check_branch
          %489 = sbr.rel (%p487) target = $region70
        $region69: #{infogan_generator_forward.24} parent=65 // pred_region
          _
        $region70: #{infogan_generator_forward.24} parent=65 // pred_fallthru
          _
        %s490 = smul.u32 4, %s21
        %p491 = scmp.lt.s32.totalorder %s19, 0
        %s492 = scalar_select %p491, %s19, 0
        %p493 = scmp.lt.s32.totalorder %s490, 3
        %s494 = scalar_select %p493, %s490, 3
        %s495 = smul.addr %s492, 4
        %s496 = sadd.s32 %s494, %s495
        %s497 = smul.addr %s496, 2
        %s498 = scalar_lea.vmem %s0, %s497
        %p499 = pneg %p56
        %p500 = pneg %p53
        %s501 = sand.u32 %s71, 1
        %s502 = sand.u32 %s71, 1
        %s503 = smul.addr %s502, 512
        %s504 = scalar_lea.vmem [#allocation2], %s503
        %p505 = pneg %p84
        %p506 = pneg %p81
        %s507 = smul.u32 2, %s20
        %p508 = scmp.lt.s32.totalorder %s507, 3
        %s509 = scalar_select %p508, %s507, 3
        %s510 = scalar_lea.vmem %s2, %s509
        %p511 = pneg %p110
        %p512 = pneg %p107
        %p513 = pneg %p138
        %p514 = pneg %p135
        %s515 = smul.u32 2, %s20
        %p516 = scmp.lt.s32.totalorder %s19, 0
        %s517 = scalar_select %p516, %s19, 0
        %p518 = scmp.lt.s32.totalorder %s515, 3
        %s519 = scalar_select %p518, %s515, 3
        %s520 = smul.addr %s517, 4
        %s521 = sadd.s32 %s519, %s520
        %s522 = smul.addr %s521, 2
        %s523 = scalar_lea.vmem %s3, %s522
        %s524 = smul.u32 4, %s21
        %p525 = scmp.lt.s32.totalorder %s19, 0
        %s526 = scalar_select %p525, %s19, 0
        %p527 = scmp.lt.s32.totalorder %s524, 3
        %s528 = scalar_select %p527, %s524, 3
        %s529 = smul.addr %s526, 4
        %s530 = sadd.s32 %s528, %s529
        %s531 = smul.addr %s530, 2
        %s532 = scalar_lea.vmem %s0, %s531
        %s533 = smul.u32 4, %s21
        %s534 = smul.u32 64, %s21
        %s535 = smul.u32 2, %s20
        %s536 = smul.u32 2, %s20
        %p537 = scmp.lt.s32.totalorder %s536, 3
        %s538 = scalar_select %p537, %s536, 3
        %s539 = scalar_lea.vmem %s2, %s538
        %s540 = smul.u32 2, %s20
        %s541 = smul.u32 2, %s20
        %p542 = scmp.lt.s32.totalorder %s19, 0
        %s543 = scalar_select %p542, %s19, 0
        %p544 = scmp.lt.s32.totalorder %s541, 3
        %s545 = scalar_select %p544, %s541, 3
        %s546 = smul.addr %s543, 4
        %s547 = sadd.s32 %s545, %s546
        %s548 = smul.addr %s547, 2
        %s549 = scalar_lea.vmem %s3, %s548
        %s550 = smul.u32 2, %s20
        %v551 = vld [vmem:[%s532] sm:$0xff]
        %v553 = vcombine.high %v551, %v551
        %v555 = vunpack.c.l.s4 1983009808
        %v556 = vunpack.c.0.s8 %v555
        %v557 = vlaneseq
        %v558 = vshrl.u32 %v557, 7
        %v559 = vsub.s32 %v556, %v558
        %v560 = vrot.slane %v551, %v559
        %v562 = vunpack.c.l.s4 1983009808
        %v563 = vunpack.c.0.s8 %v562
        %v564 = vlaneseq
        %v565 = vshrl.u32 %v564, 7
        %v566 = vsub.s32 %v563, %v565
        %v567 = vrot.slane %v553, %v566
        %v568 = vcombine.high %v560, %v560
        %v569 = vcombine.high %v567, %v567
        %v574 = vpack.c.bf16 %v560, %v560
        %v575 = vpack.c.bf16 %v568, %v568
        %v576 = vpack.c.bf16 %v567, %v567
        %v577 = vpack.c.bf16 %v569, %v569
        %v578 = vld [vmem:[%s486] sm:$0xff]
        %v579 = vld [vmem:[%s486 + $0x8] sm:$0xff]
        %v580 = vld [vmem:[%s486 + $0x10] sm:$0xff]
        %v581 = vld [vmem:[%s486 + $0x18] sm:$0xff]
        %v582 = vld [vmem:[%s486 + $0x20] sm:$0xff]
        %v583 = vld [vmem:[%s486 + $0x28] sm:$0xff]
        %v584 = vld [vmem:[%s486 + $0x30] sm:$0xff]
        %v585 = vld [vmem:[%s486 + $0x38] sm:$0xff]
        %v586 = vld [vmem:[%s486 + $0x40] sm:$0xff]
        %v587 = vld [vmem:[%s486 + $0x48] sm:$0xff]
        %v588 = vld [vmem:[%s486 + $0x50] sm:$0xff]
        %v589 = vld [vmem:[%s486 + $0x58] sm:$0xff]
        %v590 = vld [vmem:[%s486 + $0x60] sm:$0xff]
        %v591 = vld [vmem:[%s486 + $0x68] sm:$0xff]
        %v592 = vld [vmem:[%s486 + $0x70] sm:$0xff]
        %v593 = vld [vmem:[%s486 + $0x78] sm:$0xff]
        %v594 = vld [vmem:[%s486 + $0x80] sm:$0xff]
        %v595 = vld [vmem:[%s486 + $0x88] sm:$0xff]
        %v596 = vld [vmem:[%s486 + $0x90] sm:$0xff]
        %v597 = vld [vmem:[%s486 + $0x98] sm:$0xff]
        %v598 = vld [vmem:[%s486 + $0xa0] sm:$0xff]
        %v599 = vld [vmem:[%s486 + $0xa8] sm:$0xff]
        %v600 = vld [vmem:[%s486 + $0xb0] sm:$0xff]
        %v601 = vld [vmem:[%s486 + $0xb8] sm:$0xff]
        %v602 = vld [vmem:[%s486 + $0xc0] sm:$0xff]
        %v603 = vld [vmem:[%s486 + $0xc8] sm:$0xff]
        %v604 = vld [vmem:[%s486 + $0xd0] sm:$0xff]
        %v605 = vld [vmem:[%s486 + $0xd8] sm:$0xff]
        %v606 = vld [vmem:[%s486 + $0xe0] sm:$0xff]
        %v607 = vld [vmem:[%s486 + $0xe8] sm:$0xff]
        %v608 = vld [vmem:[%s486 + $0xf0] sm:$0xff]
        %v609 = vld [vmem:[%s486 + $0xf8] sm:$0xff]
        %v610 = vld [vmem:[%s486 + $0x100] sm:$0xff]
        %v611 = vld [vmem:[%s486 + $0x108] sm:$0xff]
        %v612 = vld [vmem:[%s486 + $0x110] sm:$0xff]
        %v613 = vld [vmem:[%s486 + $0x118] sm:$0xff]
        %v614 = vld [vmem:[%s486 + $0x120] sm:$0xff]
        %v615 = vld [vmem:[%s486 + $0x128] sm:$0xff]
        %v616 = vld [vmem:[%s486 + $0x130] sm:$0xff]
        %v617 = vld [vmem:[%s486 + $0x138] sm:$0xff]
        %v618 = vld [vmem:[%s486 + $0x140] sm:$0xff]
        %v619 = vld [vmem:[%s486 + $0x148] sm:$0xff]
        %v620 = vld [vmem:[%s486 + $0x150] sm:$0xff]
        %v621 = vld [vmem:[%s486 + $0x158] sm:$0xff]
        %v622 = vld [vmem:[%s486 + $0x160] sm:$0xff]
        %v623 = vld [vmem:[%s486 + $0x168] sm:$0xff]
        %v624 = vld [vmem:[%s486 + $0x170] sm:$0xff]
        %v625 = vld [vmem:[%s486 + $0x178] sm:$0xff]
        %v626 = vld [vmem:[%s486 + $0x180] sm:$0xff]
        %v627 = vld [vmem:[%s486 + $0x188] sm:$0xff]
        %v628 = vld [vmem:[%s486 + $0x190] sm:$0xff]
        %v629 = vld [vmem:[%s486 + $0x198] sm:$0xff]
        %v630 = vld [vmem:[%s486 + $0x1a0] sm:$0xff]
        %v631 = vld [vmem:[%s486 + $0x1a8] sm:$0xff]
        %v632 = vld [vmem:[%s486 + $0x1b0] sm:$0xff]
        %v633 = vld [vmem:[%s486 + $0x1b8] sm:$0xff]
        %v634 = vld [vmem:[%s486 + $0x1c0] sm:$0xff]
        %v635 = vld [vmem:[%s486 + $0x1c8] sm:$0xff]
        %v636 = vld [vmem:[%s486 + $0x1d0] sm:$0xff]
        %v637 = vld [vmem:[%s486 + $0x1d8] sm:$0xff]
        %v638 = vld [vmem:[%s486 + $0x1e0] sm:$0xff]
        %v639 = vld [vmem:[%s486 + $0x1e8] sm:$0xff]
        %v640 = vld [vmem:[%s486 + $0x1f0] sm:$0xff]
        %v641 = vld [vmem:[%s486 + $0x1f8] sm:$0xff]
        %v642 = vld [vmem:[%s539] sm:$0x3]
        %v644 = vlaneseq
        %v645 = vshrl.u32 %v644, 7
        %v646 = vsub.s32 0, %v645
        %v647 = vrot.slane %v642, %v646
        %v648 = vlaneseq
        %v649 = vshrl.u32 %v648, 7
        %v650 = vsub.s32 1, %v649
        %v651 = vrot.slane %v642, %v650
        %v718 = vunpack.c.l.b16 %v578
        %v719 = vunpack.c.h.b16 %v578
        %v720 = vunpack.c.l.b16 %v579
        %v721 = vunpack.c.h.b16 %v579
        %v722 = vunpack.c.l.b16 %v580
        %v723 = vunpack.c.h.b16 %v580
        %v724 = vunpack.c.l.b16 %v581
        %v725 = vunpack.c.h.b16 %v581
        %v726 = vunpack.c.l.b16 %v582
        %v727 = vunpack.c.h.b16 %v582
        %v728 = vunpack.c.l.b16 %v583
        %v729 = vunpack.c.h.b16 %v583
        %v730 = vunpack.c.l.b16 %v584
        %v731 = vunpack.c.h.b16 %v584
        %v732 = vunpack.c.l.b16 %v585
        %v733 = vunpack.c.h.b16 %v585
        %v734 = vunpack.c.l.b16 %v586
        %v735 = vunpack.c.h.b16 %v586
        %v736 = vunpack.c.l.b16 %v587
        %v737 = vunpack.c.h.b16 %v587
        %v738 = vunpack.c.l.b16 %v588
        %v739 = vunpack.c.h.b16 %v588
        %v740 = vunpack.c.l.b16 %v589
        %v741 = vunpack.c.h.b16 %v589
        %v742 = vunpack.c.l.b16 %v590
        %v743 = vunpack.c.h.b16 %v590
        %v744 = vunpack.c.l.b16 %v591
        %v745 = vunpack.c.h.b16 %v591
        %v746 = vunpack.c.l.b16 %v592
        %v747 = vunpack.c.h.b16 %v592
        %v748 = vunpack.c.l.b16 %v593
        %v749 = vunpack.c.h.b16 %v593
        %v750 = vunpack.c.l.b16 %v594
        %v751 = vunpack.c.h.b16 %v594
        %v752 = vunpack.c.l.b16 %v595
        %v753 = vunpack.c.h.b16 %v595
        %v754 = vunpack.c.l.b16 %v596
        %v755 = vunpack.c.h.b16 %v596
        %v756 = vunpack.c.l.b16 %v597
        %v757 = vunpack.c.h.b16 %v597
        %v758 = vunpack.c.l.b16 %v598
        %v759 = vunpack.c.h.b16 %v598
        %v760 = vunpack.c.l.b16 %v599
        %v761 = vunpack.c.h.b16 %v599
        %v762 = vunpack.c.l.b16 %v600
        %v763 = vunpack.c.h.b16 %v600
        %v764 = vunpack.c.l.b16 %v601
        %v765 = vunpack.c.h.b16 %v601
        %v766 = vunpack.c.l.b16 %v602
        %v767 = vunpack.c.h.b16 %v602
        %v768 = vunpack.c.l.b16 %v603
        %v769 = vunpack.c.h.b16 %v603
        %v770 = vunpack.c.l.b16 %v604
        %v771 = vunpack.c.h.b16 %v604
        %v772 = vunpack.c.l.b16 %v605
        %v773 = vunpack.c.h.b16 %v605
        %v774 = vunpack.c.l.b16 %v606
        %v775 = vunpack.c.h.b16 %v606
        %v776 = vunpack.c.l.b16 %v607
        %v777 = vunpack.c.h.b16 %v607
        %v778 = vunpack.c.l.b16 %v608
        %v779 = vunpack.c.h.b16 %v608
        %v780 = vunpack.c.l.b16 %v609
        %v781 = vunpack.c.h.b16 %v609
        %v782 = vunpack.c.l.b16 %v610
        %v783 = vunpack.c.h.b16 %v610
        %v784 = vunpack.c.l.b16 %v611
        %v785 = vunpack.c.h.b16 %v611
        %v786 = vunpack.c.l.b16 %v612
        %v787 = vunpack.c.h.b16 %v612
        %v788 = vunpack.c.l.b16 %v613
        %v789 = vunpack.c.h.b16 %v613
        %v790 = vunpack.c.l.b16 %v614
        %v791 = vunpack.c.h.b16 %v614
        %v792 = vunpack.c.l.b16 %v615
        %v793 = vunpack.c.h.b16 %v615
        %v794 = vunpack.c.l.b16 %v616
        %v795 = vunpack.c.h.b16 %v616
        %v796 = vunpack.c.l.b16 %v617
        %v797 = vunpack.c.h.b16 %v617
        %v798 = vunpack.c.l.b16 %v618
        %v799 = vunpack.c.h.b16 %v618
        %v800 = vunpack.c.l.b16 %v619
        %v801 = vunpack.c.h.b16 %v619
        %v802 = vunpack.c.l.b16 %v620
        %v803 = vunpack.c.h.b16 %v620
        %v804 = vunpack.c.l.b16 %v621
        %v805 = vunpack.c.h.b16 %v621
        %v806 = vunpack.c.l.b16 %v622
        %v807 = vunpack.c.h.b16 %v622
        %v808 = vunpack.c.l.b16 %v623
        %v809 = vunpack.c.h.b16 %v623
        %v810 = vunpack.c.l.b16 %v624
        %v811 = vunpack.c.h.b16 %v624
        %v812 = vunpack.c.l.b16 %v625
        %v813 = vunpack.c.h.b16 %v625
        %v814 = vunpack.c.l.b16 %v626
        %v815 = vunpack.c.h.b16 %v626
        %v816 = vunpack.c.l.b16 %v627
        %v817 = vunpack.c.h.b16 %v627
        %v818 = vunpack.c.l.b16 %v628
        %v819 = vunpack.c.h.b16 %v628
        %v820 = vunpack.c.l.b16 %v629
        %v821 = vunpack.c.h.b16 %v629
        %v822 = vunpack.c.l.b16 %v630
        %v823 = vunpack.c.h.b16 %v630
        %v824 = vunpack.c.l.b16 %v631
        %v825 = vunpack.c.h.b16 %v631
        %v826 = vunpack.c.l.b16 %v632
        %v827 = vunpack.c.h.b16 %v632
        %v828 = vunpack.c.l.b16 %v633
        %v829 = vunpack.c.h.b16 %v633
        %v830 = vunpack.c.l.b16 %v634
        %v831 = vunpack.c.h.b16 %v634
        %v832 = vunpack.c.l.b16 %v635
        %v833 = vunpack.c.h.b16 %v635
        %v834 = vunpack.c.l.b16 %v636
        %v835 = vunpack.c.h.b16 %v636
        %v836 = vunpack.c.l.b16 %v637
        %v837 = vunpack.c.h.b16 %v637
        %v838 = vunpack.c.l.b16 %v638
        %v839 = vunpack.c.h.b16 %v638
        %v840 = vunpack.c.l.b16 %v639
        %v841 = vunpack.c.h.b16 %v639
        %v842 = vunpack.c.l.b16 %v640
        %v843 = vunpack.c.h.b16 %v640
        %v844 = vunpack.c.l.b16 %v641
        %v845 = vunpack.c.h.b16 %v641
        %v846 = vpack.c.b16 %v720, %v718
        %v847 = vpack.c.b16 %v721, %v719
        %v848 = vpack.c.b16 %v724, %v722
        %v849 = vpack.c.b16 %v725, %v723
        %v850 = vpack.c.b16 %v728, %v726
        %v851 = vpack.c.b16 %v729, %v727
        %v852 = vpack.c.b16 %v732, %v730
        %v853 = vpack.c.b16 %v733, %v731
        %v854 = vpack.c.b16 %v736, %v734
        %v855 = vpack.c.b16 %v737, %v735
        %v856 = vpack.c.b16 %v740, %v738
        %v857 = vpack.c.b16 %v741, %v739
        %v858 = vpack.c.b16 %v744, %v742
        %v859 = vpack.c.b16 %v745, %v743
        %v860 = vpack.c.b16 %v748, %v746
        %v861 = vpack.c.b16 %v749, %v747
        %v862 = vpack.c.b16 %v752, %v750
        %v863 = vpack.c.b16 %v753, %v751
        %v864 = vpack.c.b16 %v756, %v754
        %v865 = vpack.c.b16 %v757, %v755
        %v866 = vpack.c.b16 %v760, %v758
        %v867 = vpack.c.b16 %v761, %v759
        %v868 = vpack.c.b16 %v764, %v762
        %v869 = vpack.c.b16 %v765, %v763
        %v870 = vpack.c.b16 %v768, %v766
        %v871 = vpack.c.b16 %v769, %v767
        %v872 = vpack.c.b16 %v772, %v770
        %v873 = vpack.c.b16 %v773, %v771
        %v874 = vpack.c.b16 %v776, %v774
        %v875 = vpack.c.b16 %v777, %v775
        %v876 = vpack.c.b16 %v780, %v778
        %v877 = vpack.c.b16 %v781, %v779
        %v878 = vpack.c.b16 %v784, %v782
        %v879 = vpack.c.b16 %v785, %v783
        %v880 = vpack.c.b16 %v788, %v786
        %v881 = vpack.c.b16 %v789, %v787
        %v882 = vpack.c.b16 %v792, %v790
        %v883 = vpack.c.b16 %v793, %v791
        %v884 = vpack.c.b16 %v796, %v794
        %v885 = vpack.c.b16 %v797, %v795
        %v886 = vpack.c.b16 %v800, %v798
        %v887 = vpack.c.b16 %v801, %v799
        %v888 = vpack.c.b16 %v804, %v802
        %v889 = vpack.c.b16 %v805, %v803
        %v890 = vpack.c.b16 %v808, %v806
        %v891 = vpack.c.b16 %v809, %v807
        %v892 = vpack.c.b16 %v812, %v810
        %v893 = vpack.c.b16 %v813, %v811
        %v894 = vpack.c.b16 %v816, %v814
        %v895 = vpack.c.b16 %v817, %v815
        %v896 = vpack.c.b16 %v820, %v818
        %v897 = vpack.c.b16 %v821, %v819
        %v898 = vpack.c.b16 %v824, %v822
        %v899 = vpack.c.b16 %v825, %v823
        %v900 = vpack.c.b16 %v828, %v826
        %v901 = vpack.c.b16 %v829, %v827
        %v902 = vpack.c.b16 %v832, %v830
        %v903 = vpack.c.b16 %v833, %v831
        %v904 = vpack.c.b16 %v836, %v834
        %v905 = vpack.c.b16 %v837, %v835
        %v906 = vpack.c.b16 %v840, %v838
        %v907 = vpack.c.b16 %v841, %v839
        %v908 = vpack.c.b16 %v844, %v842
        %v909 = vpack.c.b16 %v845, %v843
        %974 = vmatprep.subr.bf16.mxu0 %v861
        %975 = vmatpush1.bf16.msra.mxu0 %v860
        %976 = vmatprep.subr.bf16.mxu0 %v859
        %977 = vmatpush1.bf16.msra.mxu0 %v858
        %978 = vmatprep.subr.bf16.mxu0 %v857
        %979 = vmatpush1.bf16.msra.mxu0 %v856
        %980 = vmatprep.subr.bf16.mxu0 %v855
        %981 = vmatpush1.bf16.msra.mxu0 %v854
        %982 = vmatprep.subr.bf16.mxu0 %v853
        %983 = vmatpush1.bf16.msra.mxu0 %v852
        %984 = vmatprep.subr.bf16.mxu0 %v851
        %985 = vmatpush1.bf16.msra.mxu0 %v850
        %986 = vmatprep.subr.bf16.mxu0 %v849
        %987 = vmatpush1.bf16.msra.mxu0 %v848
        %988 = vmatprep.subr.bf16.mxu0 %v847
        %989 = vmatpush1.bf16.msra.mxu0 %v846
        %990 = vmatprep.subr.bf16.mxu0 %v877
        %991 = vmatpush2.bf16.msra.mxu0 %v876
        %992 = vmatprep.subr.bf16.mxu0 %v875
        %993 = vmatpush2.bf16.msra.mxu0 %v874
        %994 = vmatprep.subr.bf16.mxu0 %v873
        %995 = vmatpush2.bf16.msra.mxu0 %v872
        %996 = vmatprep.subr.bf16.mxu0 %v871
        %997 = vmatpush2.bf16.msra.mxu0 %v870
        %998 = vmatprep.subr.bf16.mxu0 %v869
        %999 = vmatpush2.bf16.msra.mxu0 %v868
        %1000 = vmatprep.subr.bf16.mxu0 %v867
        %1001 = vmatpush2.bf16.msra.mxu0 %v866
        %1002 = vmatprep.subr.bf16.mxu0 %v865
        %1003 = vmatpush2.bf16.msra.mxu0 %v864
        %1004 = vmatprep.subr.bf16.mxu0 %v863
        %1005 = vmatpush2.bf16.msra.mxu0 %v862
        %1006 = vmatprep.mubr.bf16.mxu0 %v575
        %1007 = vmatmul.mubr.bf16.gmra.mxu0 %v574
        %v1008 = vpop.f32.mrf.mxu0
        %v1009 = vadd.f32 %v647, %v1008
        %v1010 = vpop.f32.mrf.mxu0
        %v1011 = vadd.f32 %v651, %v1010
        %v1012 = vpop.f32.mrf.mxu0
        %v1013 = vpop.f32.mrf.mxu0
        %1014 = vdwg.mxu0
        %1015 = vmatprep.subr.bf16.mxu0 %v893
        %1016 = vmatpush1.bf16.msra.mxu0 %v892
        %1017 = vmatprep.subr.bf16.mxu0 %v891
        %1018 = vmatpush1.bf16.msra.mxu0 %v890
        %1019 = vmatprep.subr.bf16.mxu0 %v889
        %1020 = vmatpush1.bf16.msra.mxu0 %v888
        %1021 = vmatprep.subr.bf16.mxu0 %v887
        %1022 = vmatpush1.bf16.msra.mxu0 %v886
        %1023 = vmatprep.subr.bf16.mxu0 %v885
        %1024 = vmatpush1.bf16.msra.mxu0 %v884
        %1025 = vmatprep.subr.bf16.mxu0 %v883
        %1026 = vmatpush1.bf16.msra.mxu0 %v882
        %1027 = vmatprep.subr.bf16.mxu0 %v881
        %1028 = vmatpush1.bf16.msra.mxu0 %v880
        %1029 = vmatprep.subr.bf16.mxu0 %v879
        %1030 = vmatpush1.bf16.msra.mxu0 %v878
        %1031 = vmatprep.subr.bf16.mxu0 %v909
        %1032 = vmatpush2.bf16.msra.mxu0 %v908
        %1033 = vmatprep.subr.bf16.mxu0 %v907
        %1034 = vmatpush2.bf16.msra.mxu0 %v906
        %1035 = vmatprep.subr.bf16.mxu0 %v905
        %1036 = vmatpush2.bf16.msra.mxu0 %v904
        %1037 = vmatprep.subr.bf16.mxu0 %v903
        %1038 = vmatpush2.bf16.msra.mxu0 %v902
        %1039 = vmatprep.subr.bf16.mxu0 %v901
        %1040 = vmatpush2.bf16.msra.mxu0 %v900
        %1041 = vmatprep.subr.bf16.mxu0 %v899
        %1042 = vmatpush2.bf16.msra.mxu0 %v898
        %1043 = vmatprep.subr.bf16.mxu0 %v897
        %1044 = vmatpush2.bf16.msra.mxu0 %v896
        %1045 = vmatprep.subr.bf16.mxu0 %v895
        %1046 = vmatpush2.bf16.msra.mxu0 %v894
        %1047 = vmatprep.mubr.bf16.mxu0 %v577
        %1048 = vmatmul.mubr.bf16.gmra.mxu0 %v576
        %v1049 = vpop.f32.mrf.mxu0
        %v1050 = vadd.f32 %v1009, %v1049
        %v1051 = vpop.f32.mrf.mxu0
        %v1052 = vadd.f32 %v1011, %v1051
        %v1053 = vpop.f32.mrf.mxu0
        %v1054 = vpop.f32.mrf.mxu0
        %1055 = vdwg.mxu0
        %v1056 = vmax.f32 %v1050, 0.0
        %v1057 = vmax.f32 %v1052, 0.0
        %v1060 = vcombine.low %v1056, %v1057
        %v1062 = vunpack.c.l.s4 1983009808
        %v1063 = vunpack.c.0.s8 %v1062
        %v1064 = vlaneseq
        %v1065 = vshrl.u32 %v1064, 7
        %v1066 = vsub.s32 %v1063, %v1065
        %v1067 = vrot.slane %v1060, %v1066
        %1069 = vst [vmem:[%s549] sm:$0xf] %v1067
        %s1070 = smul.u32 2, %s20
        %p1071 = scmp.lt.s32.totalorder %s19, 0
        %s1072 = scalar_select %p1071, %s19, 0
        %p1073 = scmp.lt.s32.totalorder %s1070, 3
        %s1074 = scalar_select %p1073, %s1070, 3
        %s1075 = smul.addr %s1072, 4
        %s1076 = sadd.s32 %s1074, %s1075
        %s1077 = smul.addr %s1076, 2
        %s1078 = scalar_lea.vmem %s3, %s1077
        // Predicated region
        $region71: #{infogan_generator_forward.24} parent=65 // pred_check
          %p1079 = pneg %p135
        $region72: #{infogan_generator_forward.24} parent=65 // pred_check_branch
          %1081 = sbr.rel (%p1079) target = $region74
        $region73: #{infogan_generator_forward.24} parent=65 // pred_region
          %s1082 = smul.u32 2, %s20
        $region74: #{infogan_generator_forward.24} parent=65 // pred_fallthru
          _
      $region66: #{infogan_generator_forward.24} parent=5 // pred_fallthru
        _
      %p1083 = scmp.le.s32.totalorder 2, %s9
      // Predicated region
      $region75: #{infogan_generator_forward.24} parent=5 // pred_check
        %p1084 = pneg %p1083
      $region76: #{infogan_generator_forward.24} parent=5 // pred_check_branch
        %1086 = sbr.rel (%p1084) target = $region78
      $region77: #{infogan_generator_forward.24} parent=5 // pred_region
        %s1087 = ssub.s32 %s9, 2
        // Predicated region
        $region79: #{infogan_generator_forward.24} parent=77 // pred_check
          %p1088 = pneg %p141
        $region80: #{infogan_generator_forward.24} parent=77 // pred_check_branch
          %1090 = sbr.rel (%p1088) target = $region82
        $region81: #{infogan_generator_forward.24} parent=77 // pred_region
          %s1091 = smul.u32 2, %s23
          %p1092 = scmp.lt.s32.totalorder %s22, 0
          %s1093 = scalar_select %p1092, %s22, 0
          %p1094 = scmp.lt.s32.totalorder %s1091, 3
          %s1095 = scalar_select %p1094, %s1091, 3
          %s1096 = smul.addr %s1093, 4
          %s1097 = sadd.s32 %s1095, %s1096
          %s1098 = smul.addr %s1097, 2
          %s1099 = scalar_lea.vmem %s3, %s1098
        $region82: #{infogan_generator_forward.24} parent=77 // pred_fallthru
          _
      $region78: #{infogan_generator_forward.24} parent=5 // pred_fallthru
        _
    $region6: #{infogan_generator_forward.24} parent=1 // loop_footer
      %s13 = sadd.s32 1, %s9
    $region7: #{infogan_generator_forward.24} parent=1 // loop_footer_branch
      %8 = sbr.rel target = $region3
    $region8: #{infogan_generator_forward.24} parent=1 // loop_exit
      _

// kernel: infogan_generator_forward.13
$region0: #{infogan_generator_forward.13}
  #allocation0 [shape = 'u32[]', space=smem, size = 0x4, offset = 0x4, fixed_abs, tag = 'smem constant byte address 0x4 - core index']
  #allocation1 [shape = 'u32[144,128]{1,0:T(1,128)}', space=vmem, size = 0x12000, scoped, tag = 'internal scratch']
  %s0 = inlined_call_operand.vmem [shape: f32[2,25], index: 0, kind: input, shape index: {}]
  %s1 = inlined_call_operand.vmem [shape: bf16[25,512], index: 1, kind: input, shape index: {}]
  %s2 = inlined_call_operand.vmem [shape: f32[1,512], index: 2, kind: input, shape index: {}]
  %s3 = inlined_call_operand.vmem [shape: f32[2,512], index: 3, kind: output, shape index: {}]
  %s4 = sld [smem:[#allocation0]]
  $region83: #{infogan_generator_forward.13} parent=0
    _
  %s6 = ssub.s32 1, %s4
  %s7 = scalar_select 0, %s6, %s4
  $region1: #{infogan_generator_forward.13} parent=0
    #allocation2 [shape = 'u8[32768]{0}', space=vmem, size = 0x8000, scoped, tag = 'input window, operand 1']
    loop: start=0, step=1, limit=4
    $region2: #{infogan_generator_forward.13} parent=1 // loop_pre_header
      _
    $region3: #{infogan_generator_forward.13} parent=1 // loop_header
      %s9 = sphi 0, %s13
      %p10 = scmp.ge.s32.totalorder %s9, 4
      %s16 = sphi 0, %s35
      %s17 = sphi 0, %s31
      %s18 = sphi 0, %s27
      %s19 = sphi 0, %s16
      %s20 = sphi 0, %s17
      %s21 = sphi 0, %s18
      %s22 = sphi 0, %s19
      %s23 = sphi 0, %s20
      %s24 = sphi 0, %s21
      %s40 = sphi 0, %s42
      %s43 = sphi 0, %s40
      %s44 = sphi 0, %s43
      %s60 = sphi 0, %s44
      %s68 = sphi 0, %s70
      %s71 = sphi 0, %s68
      %s72 = sphi 0, %s71
      %s88 = sphi 0, %s72
      %s94 = sphi 0, %s96
      %s97 = sphi 0, %s94
      %s98 = sphi 0, %s97
      %s114 = sphi 0, %s98
      %s122 = sphi 0, %s124
      %s125 = sphi 0, %s122
      %s126 = sphi 0, %s125
      %s142 = sphi 0, %s126
    $region4: #{infogan_generator_forward.13} parent=1 // loop_header_branch
      %12 = sbr.rel (%p10) target = $region8
    $region5: #{infogan_generator_forward.13} parent=1 // loop_body
      %s14 = ssub.s32 %s9, 1
      %s15 = ssub.s32 %s9, 2
      %s25 = sadd.s32 1, %s18
      %p26 = scmp.ge.s32.totalorder %s25, 1
      %s27 = scalar_select %p26, 0, %s25
      %s28 = sadd.s32 1, %s17
      %s29 = scalar_select %p26, %s28, %s17
      %p30 = scmp.ge.s32.totalorder %s29, 2
      %s31 = scalar_select %p30, 0, %s29
      %s32 = sadd.s32 1, %s16
      %s33 = scalar_select %p30, %s32, %s16
      %p34 = scmp.ge.s32.totalorder %s33, 1
      %s35 = scalar_select %p34, 0, %s33
      %s36 = ssub.s32 %s16, %s35
      %s37 = ssub.s32 %s18, %s27
      %s38 = sor.u32 %s36, %s37
      %p39 = scmp.eq.s32.totalorder %s38, 0
      %s41 = sadd.s32 %s40, 1
      %s42 = scalar_select %p39, %s40, %s41
      %p45 = pneg %p39
      %p46 = scmp.eq.s32.totalorder %s9, 1
      %p47 = por %p45, %p46
      %p48 = scmp.ne.s32.totalorder %s40, %s43
      %p49 = scmp.eq.s32.totalorder %s9, 0
      %p50 = por %p48, %p49
      %p51 = scmp.ne.s32.totalorder %s40, %s43
      %p52 = scmp.eq.s32.totalorder %s14, 1
      %p53 = por %p51, %p52
      %p54 = scmp.ne.s32.totalorder %s43, %s44
      %p55 = scmp.eq.s32.totalorder %s14, 0
      %p56 = por %p54, %p55
      %p57 = scmp.ne.s32.totalorder %s43, %s44
      %p58 = scmp.eq.s32.totalorder %s15, 1
      %p59 = por %p57, %p58
      %p61 = scmp.ne.s32.totalorder %s44, %s60
      %p62 = scmp.eq.s32.totalorder %s15, 0
      %p63 = por %p61, %p62
      %s64 = ssub.s32 %s18, %s27
      %s65 = ssub.s32 %s17, %s31
      %s66 = sor.u32 %s64, %s65
      %p67 = scmp.eq.s32.totalorder %s66, 0
      %s69 = sadd.s32 %s68, 1
      %s70 = scalar_select %p67, %s68, %s69
      %p73 = pneg %p67
      %p74 = scmp.eq.s32.totalorder %s9, 1
      %p75 = por %p73, %p74
      %p76 = scmp.ne.s32.totalorder %s68, %s71
      %p77 = scmp.eq.s32.totalorder %s9, 0
      %p78 = por %p76, %p77
      %p79 = scmp.ne.s32.totalorder %s68, %s71
      %p80 = scmp.eq.s32.totalorder %s14, 1
      %p81 = por %p79, %p80
      %p82 = scmp.ne.s32.totalorder %s71, %s72
      %p83 = scmp.eq.s32.totalorder %s14, 0
      %p84 = por %p82, %p83
      %p85 = scmp.ne.s32.totalorder %s71, %s72
      %p86 = scmp.eq.s32.totalorder %s15, 1
      %p87 = por %p85, %p86
      %p89 = scmp.ne.s32.totalorder %s72, %s88
      %p90 = scmp.eq.s32.totalorder %s15, 0
      %p91 = por %p89, %p90
      %s92 = ssub.s32 %s17, %s31
      %p93 = scmp.eq.s32.totalorder %s92, 0
      %s95 = sadd.s32 %s94, 1
      %s96 = scalar_select %p93, %s94, %s95
      %p99 = pneg %p93
      %p100 = scmp.eq.s32.totalorder %s9, 1
      %p101 = por %p99, %p100
      %p102 = scmp.ne.s32.totalorder %s94, %s97
      %p103 = scmp.eq.s32.totalorder %s9, 0
      %p104 = por %p102, %p103
      %p105 = scmp.ne.s32.totalorder %s94, %s97
      %p106 = scmp.eq.s32.totalorder %s14, 1
      %p107 = por %p105, %p106
      %p108 = scmp.ne.s32.totalorder %s97, %s98
      %p109 = scmp.eq.s32.totalorder %s14, 0
      %p110 = por %p108, %p109
      %p111 = scmp.ne.s32.totalorder %s97, %s98
      %p112 = scmp.eq.s32.totalorder %s15, 1
      %p113 = por %p111, %p112
      %p115 = scmp.ne.s32.totalorder %s98, %s114
      %p116 = scmp.eq.s32.totalorder %s15, 0
      %p117 = por %p115, %p116
      %s118 = ssub.s32 %s16, %s35
      %s119 = ssub.s32 %s17, %s31
      %s120 = sor.u32 %s118, %s119
      %p121 = scmp.eq.s32.totalorder %s120, 0
      %s123 = sadd.s32 %s122, 1
      %s124 = scalar_select %p121, %s122, %s123
      %p127 = pneg %p121
      %p128 = scmp.eq.s32.totalorder %s9, 1
      %p129 = por %p127, %p128
      %p130 = scmp.ne.s32.totalorder %s122, %s125
      %p131 = scmp.eq.s32.totalorder %s9, 0
      %p132 = por %p130, %p131
      %p133 = scmp.ne.s32.totalorder %s122, %s125
      %p134 = scmp.eq.s32.totalorder %s14, 1
      %p135 = por %p133, %p134
      %p136 = scmp.ne.s32.totalorder %s125, %s126
      %p137 = scmp.eq.s32.totalorder %s14, 0
      %p138 = por %p136, %p137
      %p139 = scmp.ne.s32.totalorder %s125, %s126
      %p140 = scmp.eq.s32.totalorder %s15, 1
      %p141 = por %p139, %p140
      %p143 = scmp.ne.s32.totalorder %s126, %s142
      %p144 = scmp.eq.s32.totalorder %s15, 0
      %p145 = por %p143, %p144
      %p146 = scmp.le.s32.totalorder 1, %s9
      %p147 = scmp.lt.s32.totalorder %s9, 3
      %p148 = pnand %p146, %p147
      %p149 = pneg %p148
      // Predicated region
      $region9: #{infogan_generator_forward.13} parent=5 // pred_check
        _
      $region10: #{infogan_generator_forward.13} parent=5 // pred_check_branch
        %151 = sbr.rel (%p148) target = $region12
      $region11: #{infogan_generator_forward.13} parent=5 // pred_region
        %s152 = ssub.s32 %s9, 1
        // Predicated region
        $region13: #{infogan_generator_forward.13} parent=11 // pred_check
          %p153 = pneg %p56
        $region14: #{infogan_generator_forward.13} parent=11 // pred_check_branch
          %155 = sbr.rel (%p153) target = $region16
        $region15: #{infogan_generator_forward.13} parent=11 // pred_region
          %p156 = scmp.lt.s32.totalorder %s19, 0
          %s157 = scalar_select %p156, %s19, 0
          %p158 = scmp.lt.s32.totalorder %s21, 0
          %s159 = scalar_select %p158, %s21, 0
          %s160 = sadd.s32 %s159, %s157
          %s161 = smul.addr %s160, 2
          %s162 = scalar_lea.vmem %s0, %s161
        $region16: #{infogan_generator_forward.13} parent=11 // pred_fallthru
          _
      $region12: #{infogan_generator_forward.13} parent=5 // pred_fallthru
        _
      %p163 = scmp.lt.s32.totalorder %s9, 2
      // Predicated region
      $region17: #{infogan_generator_forward.13} parent=5 // pred_check
        %p164 = pneg %p163
      $region18: #{infogan_generator_forward.13} parent=5 // pred_check_branch
        %166 = sbr.rel (%p164) target = $region20
      $region19: #{infogan_generator_forward.13} parent=5 // pred_region
        // Predicated region
        $region21: #{infogan_generator_forward.13} parent=19 // pred_check
          %p167 = pneg %p78
        $region22: #{infogan_generator_forward.13} parent=19 // pred_check_branch
          %169 = sbr.rel (%p167) target = $region24
        $region23: #{infogan_generator_forward.13} parent=19 // pred_region
          %s170 = sand.u32 %s68, 1
          %s171 = sand.u32 %s68, 1
          %s172 = smul.addr %s171, 32
          %s173 = scalar_lea.vmem [#allocation2], %s172
          %s174 = smul.u32 4, %s18
          %s175 = smul.u32 2, %s17
          %s176 = smul.addr %s174, 4
          %s177 = sadd.s32 %s175, %s176
          %s178 = smul.addr %s177, 4
          %s179 = scalar_lea.vmem %s1, %s178
          // Predicated region
          $region25: #{infogan_generator_forward.13} parent=23 // pred_check
            _
          $region26: #{infogan_generator_forward.13} parent=23 // pred_check_branch
            %181 = sbr.rel (0) target = $region28
          $region27: #{infogan_generator_forward.13} parent=23 // pred_region
            // Predicated region
            $region29: #{infogan_generator_forward.13} parent=27 // pred_check
              _
            $region30: #{infogan_generator_forward.13} parent=27 // pred_check_branch
              %183 = sbr.rel (0) target = $region32
            $region31: #{infogan_generator_forward.13} parent=27 // pred_region
              // Predicated region
              $region44: #{infogan_generator_forward.13} parent=31 // pred_check
                _
              $region45: #{infogan_generator_forward.13} parent=31 // pred_check_branch
                %205 = sbr.rel (0) target = $region47
              $region46: #{infogan_generator_forward.13} parent=31 // pred_region
                loop: start=0, step=1, limit=1
                $region48: #{infogan_generator_forward.13} parent=46 // loop_pre_header
                  _
                $region49: #{infogan_generator_forward.13} parent=46 // loop_header
                  %s207 = sphi 0, %s211
                  %p208 = scmp.ge.s32.totalorder %s207, 1
                  %s212 = sphi %s179, %s179
                  %s213 = sphi %s173, %s173
                $region50: #{infogan_generator_forward.13} parent=46 // loop_header_branch
                  %210 = sbr.rel (%p208) target = $region54
                $region51: #{infogan_generator_forward.13} parent=46 // loop_body
                  %v214 = vld [vmem:[%s212] sm:$0xff]
                  %215 = vst [vmem:[%s213] sm:$0xff] %v214
                  %v216 = vld [vmem:[%s212 + $0x10] sm:$0xff]
                  %217 = vst [vmem:[%s213 + $0x8] sm:$0xff] %v216
                  %v218 = vld [vmem:[%s212 + $0x20] sm:$0xff]
                  %219 = vst [vmem:[%s213 + $0x10] sm:$0xff] %v218
                  %v220 = vld [vmem:[%s212 + $0x30] sm:$0xff]
                  %221 = vst [vmem:[%s213 + $0x18] sm:$0xff] %v220
                $region52: #{infogan_generator_forward.13} parent=46 // loop_footer
                  %s211 = sadd.s32 1, %s207
                $region53: #{infogan_generator_forward.13} parent=46 // loop_footer_branch
                  %206 = sbr.rel target = $region49
                $region54: #{infogan_generator_forward.13} parent=46 // loop_exit
                  _
              $region47: #{infogan_generator_forward.13} parent=31 // pred_fallthru
                _
              // Predicated region
              $region55: #{infogan_generator_forward.13} parent=31 // pred_check
                _
              $region56: #{infogan_generator_forward.13} parent=31 // pred_check_branch
                %223 = sbr.rel target = $region58
              $region57: #{infogan_generator_forward.13} parent=31 // pred_region
                _
              $region58: #{infogan_generator_forward.13} parent=31 // pred_fallthru
                _
            $region32: #{infogan_generator_forward.13} parent=27 // pred_fallthru
              _
            // Predicated region
            $region33: #{infogan_generator_forward.13} parent=27 // pred_check
              _
            $region34: #{infogan_generator_forward.13} parent=27 // pred_check_branch
              %185 = sbr.rel target = $region36
            $region35: #{infogan_generator_forward.13} parent=27 // pred_region
              %s187 = ssub.s32 256, 1
              loop: start=0, step=1, limit=1
              $region37: #{infogan_generator_forward.13} parent=35 // loop_pre_header
                _
              $region38: #{infogan_generator_forward.13} parent=35 // loop_header
                %s189 = sphi 0, %s193
                %p190 = scmp.ge.s32.totalorder %s189, 1
                %s194 = sphi %s179, %s179
                %s195 = sphi %s173, %s173
              $region39: #{infogan_generator_forward.13} parent=35 // loop_header_branch
                %192 = sbr.rel (%p190) target = $region43
              $region40: #{infogan_generator_forward.13} parent=35 // loop_body
                %v196 = vld [vmem:[%s194] sm:%s187]
                %197 = vst [vmem:[%s195] sm:%s187] %v196
                %v198 = vld [vmem:[%s194 + $0x10] sm:%s187]
                %199 = vst [vmem:[%s195 + $0x8] sm:%s187] %v198
                %v200 = vld [vmem:[%s194 + $0x20] sm:%s187]
                %201 = vst [vmem:[%s195 + $0x10] sm:%s187] %v200
                %v202 = vld [vmem:[%s194 + $0x30] sm:%s187]
                %203 = vst [vmem:[%s195 + $0x18] sm:%s187] %v202
              $region41: #{infogan_generator_forward.13} parent=35 // loop_footer
                %s193 = sadd.s32 1, %s189
              $region42: #{infogan_generator_forward.13} parent=35 // loop_footer_branch
                %188 = sbr.rel target = $region38
              $region43: #{infogan_generator_forward.13} parent=35 // loop_exit
                _
            $region36: #{infogan_generator_forward.13} parent=27 // pred_fallthru
              _
          $region28: #{infogan_generator_forward.13} parent=23 // pred_fallthru
            _
          %224 = vnop
        $region24: #{infogan_generator_forward.13} parent=19 // pred_fallthru
          _
        // Predicated region
        $region59: #{infogan_generator_forward.13} parent=19 // pred_check
          %p225 = pneg %p104
        $region60: #{infogan_generator_forward.13} parent=19 // pred_check_branch
          %227 = sbr.rel (%p225) target = $region62
        $region61: #{infogan_generator_forward.13} parent=19 // pred_region
          %s228 = smul.u32 2, %s17
          %p229 = scmp.lt.s32.totalorder %s228, 3
          %s230 = scalar_select %p229, %s228, 3
          %s231 = scalar_lea.vmem %s2, %s230
          %s232 = smul.u32 2, %s17
        $region62: #{infogan_generator_forward.13} parent=19 // pred_fallthru
          _
      $region20: #{infogan_generator_forward.13} parent=5 // pred_fallthru
        _
      %p233 = scmp.le.s32.totalorder 1, %s9
      %p234 = scmp.lt.s32.totalorder %s9, 3
      %p235 = pnand %p233, %p234
      %p236 = pneg %p235
      // Predicated region
      $region63: #{infogan_generator_forward.13} parent=5 // pred_check
        _
      $region64: #{infogan_generator_forward.13} parent=5 // pred_check_branch
        %238 = sbr.rel (%p235) target = $region66
      $region65: #{infogan_generator_forward.13} parent=5 // pred_region
        %s239 = ssub.s32 %s9, 1
        %s240 = sand.u32 %s71, 1
        %s241 = sand.u32 %s71, 1
        %s242 = smul.addr %s241, 32
        %s243 = scalar_lea.vmem [#allocation2], %s242
        // Predicated region
        $region67: #{infogan_generator_forward.13} parent=65 // pred_check
          %p244 = pneg %p84
        $region68: #{infogan_generator_forward.13} parent=65 // pred_check_branch
          %246 = sbr.rel (%p244) target = $region70
        $region69: #{infogan_generator_forward.13} parent=65 // pred_region
          _
        $region70: #{infogan_generator_forward.13} parent=65 // pred_fallthru
          _
        %p247 = scmp.lt.s32.totalorder %s19, 0
        %s248 = scalar_select %p247, %s19, 0
        %p249 = scmp.lt.s32.totalorder %s21, 0
        %s250 = scalar_select %p249, %s21, 0
        %s251 = sadd.s32 %s250, %s248
        %s252 = smul.addr %s251, 2
        %s253 = scalar_lea.vmem %s0, %s252
        %p254 = pneg %p56
        %p255 = pneg %p53
        %s256 = sand.u32 %s71, 1
        %s257 = sand.u32 %s71, 1
        %s258 = smul.addr %s257, 32
        %s259 = scalar_lea.vmem [#allocation2], %s258
        %p260 = pneg %p84
        %p261 = pneg %p81
        %s262 = smul.u32 2, %s20
        %p263 = scmp.lt.s32.totalorder %s262, 3
        %s264 = scalar_select %p263, %s262, 3
        %s265 = scalar_lea.vmem %s2, %s264
        %p266 = pneg %p110
        %p267 = pneg %p107
        %p268 = pneg %p138
        %p269 = pneg %p135
        %s270 = smul.u32 2, %s20
        %p271 = scmp.lt.s32.totalorder %s19, 0
        %s272 = scalar_select %p271, %s19, 0
        %p273 = scmp.lt.s32.totalorder %s270, 3
        %s274 = scalar_select %p273, %s270, 3
        %s275 = smul.addr %s272, 4
        %s276 = sadd.s32 %s274, %s275
        %s277 = smul.addr %s276, 2
        %s278 = scalar_lea.vmem %s3, %s277
        %p279 = scmp.lt.s32.totalorder %s19, 0
        %s280 = scalar_select %p279, %s19, 0
        %p281 = scmp.lt.s32.totalorder %s21, 0
        %s282 = scalar_select %p281, %s21, 0
        %s283 = sadd.s32 %s282, %s280
        %s284 = smul.addr %s283, 2
        %s285 = scalar_lea.vmem %s0, %s284
        %s286 = smul.u32 4, %s21
        %s287 = smul.u32 2, %s20
        %s288 = smul.u32 2, %s20
        %p289 = scmp.lt.s32.totalorder %s288, 3
        %s290 = scalar_select %p289, %s288, 3
        %s291 = scalar_lea.vmem %s2, %s290
        %s292 = smul.u32 2, %s20
        %s293 = smul.u32 2, %s20
        %p294 = scmp.lt.s32.totalorder %s19, 0
        %s295 = scalar_select %p294, %s19, 0
        %p296 = scmp.lt.s32.totalorder %s293, 3
        %s297 = scalar_select %p296, %s293, 3
        %s298 = smul.addr %s295, 4
        %s299 = sadd.s32 %s297, %s298
        %s300 = smul.addr %s299, 2
        %s301 = scalar_lea.vmem %s3, %s300
        %s302 = smul.u32 2, %s20
        %v304 = vld [vmem:[%s285] sm:$0x3]
        %v305 = vpack.c.bf16 %v304, %v304
        %v306 = vld [vmem:[%s243] sm:$0xff]
        %v307 = vld [vmem:[%s243 + $0x8] sm:$0xff]
        %v308 = vld [vmem:[%s243 + $0x10] sm:$0xff]
        %v309 = vld [vmem:[%s243 + $0x18] sm:$0x11]
        %v310 = vld [vmem:[%s291] sm:$0x3]
        %v312 = vlaneseq
        %v313 = vshrl.u32 %v312, 7
        %v314 = vsub.s32 0, %v313
        %v315 = vrot.slane %v310, %v314
        %v316 = vlaneseq
        %v317 = vshrl.u32 %v316, 7
        %v318 = vsub.s32 1, %v317
        %v319 = vrot.slane %v310, %v318
        %v326 = vunpack.c.l.b16 %v306
        %v327 = vunpack.c.h.b16 %v306
        %v328 = vunpack.c.l.b16 %v307
        %v329 = vunpack.c.h.b16 %v307
        %v330 = vunpack.c.l.b16 %v308
        %v331 = vunpack.c.h.b16 %v308
        %v332 = vunpack.c.l.b16 %v309
        %v333 = vunpack.c.h.b16 %v309
        %v334 = vpack.c.b16 %v328, %v326
        %v335 = vpack.c.b16 %v329, %v327
        %v336 = vpack.c.b16 %v332, %v330
        %v337 = vpack.c.b16 %v333, %v331
        %vm340 = vcmask 203776
        %v342 = vsel %vm340, %v305, 0
        %vm344 = vcmask 1043456
        %vm345 = vcmask 1044480
        %v346 = vsel %vm344, 4294967295, 65535
        %v347 = vsel %vm345, %v346, 0
        %v349 = vand.u32 %v336, %v347
        %v352 = vand.u32 %v337, %v347
        %354 = vmatprep.subr.bf16.mxu0 0
        %355 = vmatpush1.bf16.msra.mxu0 0
        %356 = vmatprep.subr.bf16.mxu0 0
        %357 = vmatpush1.bf16.msra.mxu0 0
        %358 = vmatprep.subr.bf16.mxu0 0
        %359 = vmatpush1.bf16.msra.mxu0 0
        %360 = vmatprep.subr.bf16.mxu0 0
        %361 = vmatpush1.bf16.msra.mxu0 0
        %362 = vmatprep.subr.bf16.mxu0 0
        %363 = vmatpush1.bf16.msra.mxu0 0
        %364 = vmatprep.subr.bf16.mxu0 0
        %365 = vmatpush1.bf16.msra.mxu0 0
        %366 = vmatprep.subr.bf16.mxu0 %v352
        %367 = vmatpush1.bf16.msra.mxu0 %v349
        %368 = vmatprep.subr.bf16.mxu0 %v335
        %369 = vmatpush1.bf16.msra.mxu0 %v334
        %370 = vmatprep.subr.bf16.mxu0 0
        %371 = vmatpush2.bf16.msra.mxu0 0
        %372 = vmatprep.subr.bf16.mxu0 0
        %373 = vmatpush2.bf16.msra.mxu0 0
        %374 = vmatprep.subr.bf16.mxu0 0
        %375 = vmatpush2.bf16.msra.mxu0 0
        %376 = vmatprep.subr.bf16.mxu0 0
        %377 = vmatpush2.bf16.msra.mxu0 0
        %378 = vmatprep.subr.bf16.mxu0 0
        %379 = vmatpush2.bf16.msra.mxu0 0
        %380 = vmatprep.subr.bf16.mxu0 0
        %381 = vmatpush2.bf16.msra.mxu0 0
        %382 = vmatprep.subr.bf16.mxu0 0
        %383 = vmatpush2.bf16.msra.mxu0 0
        %384 = vmatprep.subr.bf16.mxu0 0
        %385 = vmatpush2.bf16.msra.mxu0 0
        %386 = vmatprep.mubr.bf16.mxu0 0
        %387 = vmatmul.mubr.bf16.gmra.mxu0 %v342
        %v388 = vpop.f32.mrf.mxu0
        %v389 = vadd.f32 %v315, %v388
        %v390 = vpop.f32.mrf.mxu0
        %v391 = vadd.f32 %v319, %v390
        %v392 = vpop.f32.mrf.mxu0
        %v393 = vpop.f32.mrf.mxu0
        %394 = vdwg.mxu0
        %v397 = vcombine.low %v389, %v391
        %v399 = vunpack.c.l.s4 1983009808
        %v400 = vunpack.c.0.s8 %v399
        %v401 = vlaneseq
        %v402 = vshrl.u32 %v401, 7
        %v403 = vsub.s32 %v400, %v402
        %v404 = vrot.slane %v397, %v403
        %406 = vst [vmem:[%s301] sm:$0xf] %v404
        %s407 = smul.u32 2, %s20
        %p408 = scmp.lt.s32.totalorder %s19, 0
        %s409 = scalar_select %p408, %s19, 0
        %p410 = scmp.lt.s32.totalorder %s407, 3
        %s411 = scalar_select %p410, %s407, 3
        %s412 = smul.addr %s409, 4
        %s413 = sadd.s32 %s411, %s412
        %s414 = smul.addr %s413, 2
        %s415 = scalar_lea.vmem %s3, %s414
        // Predicated region
        $region71: #{infogan_generator_forward.13} parent=65 // pred_check
          %p416 = pneg %p135
        $region72: #{infogan_generator_forward.13} parent=65 // pred_check_branch
          %418 = sbr.rel (%p416) target = $region74
        $region73: #{infogan_generator_forward.13} parent=65 // pred_region
          %s419 = smul.u32 2, %s20
        $region74: #{infogan_generator_forward.13} parent=65 // pred_fallthru
          _
      $region66: #{infogan_generator_forward.13} parent=5 // pred_fallthru
        _
      %p420 = scmp.le.s32.totalorder 2, %s9
      // Predicated region
      $region75: #{infogan_generator_forward.13} parent=5 // pred_check
        %p421 = pneg %p420
      $region76: #{infogan_generator_forward.13} parent=5 // pred_check_branch
        %423 = sbr.rel (%p421) target = $region78
      $region77: #{infogan_generator_forward.13} parent=5 // pred_region
        %s424 = ssub.s32 %s9, 2
        // Predicated region
        $region79: #{infogan_generator_forward.13} parent=77 // pred_check
          %p425 = pneg %p141
        $region80: #{infogan_generator_forward.13} parent=77 // pred_check_branch
          %427 = sbr.rel (%p425) target = $region82
        $region81: #{infogan_generator_forward.13} parent=77 // pred_region
          %s428 = smul.u32 2, %s23
          %p429 = scmp.lt.s32.totalorder %s22, 0
          %s430 = scalar_select %p429, %s22, 0
          %p431 = scmp.lt.s32.totalorder %s428, 3
          %s432 = scalar_select %p431, %s428, 3
          %s433 = smul.addr %s430, 4
          %s434 = sadd.s32 %s432, %s433
          %s435 = smul.addr %s434, 2
          %s436 = scalar_lea.vmem %s3, %s435
        $region82: #{infogan_generator_forward.13} parent=77 // pred_fallthru
          _
      $region78: #{infogan_generator_forward.13} parent=5 // pred_fallthru
        _
    $region6: #{infogan_generator_forward.13} parent=1 // loop_footer
      %s13 = sadd.s32 1, %s9
    $region7: #{infogan_generator_forward.13} parent=1 // loop_footer_branch
      %8 = sbr.rel target = $region3
    $region8: #{infogan_generator_forward.13} parent=1 // loop_exit
      _

// kernel: infogan_generator_forward.25
$region0: #{infogan_generator_forward.25}
  #allocation0 [shape = 'u32[]', space=smem, size = 0x4, offset = 0x4, fixed_abs, tag = 'smem constant byte address 0x4 - core index']
  #allocation1 [shape = 'u32[144,128]{1,0:T(1,128)}', space=vmem, size = 0x12000, scoped, tag = 'internal scratch']
  %s0 = inlined_call_operand.vmem [shape: f32[2,1024], index: 0, kind: input, shape index: {}]
  %s1 = inlined_call_operand.vmem [shape: bf16[1024,384], index: 1, kind: input, shape index: {}]
  %s2 = inlined_call_operand.vmem [shape: f32[1,384], index: 2, kind: input, shape index: {}]
  %s3 = inlined_call_operand.vmem [shape: f32[2,384], index: 3, kind: output, shape index: {}]
  %s4 = sld [smem:[#allocation0]]
  $region86: #{infogan_generator_forward.25} parent=0
    _
  %s6 = ssub.s32 1, %s4
  %s7 = scalar_select 0, %s6, %s4
  $region1: #{infogan_generator_forward.25} parent=0
    #allocation2 [shape = 'u8[524288]{0}', space=vmem, size = 0x80000, scoped, tag = 'input window, operand 1']
    loop: start=0, step=1, limit=5
    $region2: #{infogan_generator_forward.25} parent=1 // loop_pre_header
      _
    $region3: #{infogan_generator_forward.25} parent=1 // loop_header
      %s9 = sphi 0, %s13
      %p10 = scmp.ge.s32.totalorder %s9, 5
      %s16 = sphi 0, %s35
      %s17 = sphi 0, %s31
      %s18 = sphi 0, %s27
      %s19 = sphi 0, %s16
      %s20 = sphi 0, %s17
      %s21 = sphi 0, %s18
      %s22 = sphi 0, %s19
      %s23 = sphi 0, %s20
      %s24 = sphi 0, %s21
      %s40 = sphi 0, %s42
      %s43 = sphi 0, %s40
      %s44 = sphi 0, %s43
      %s60 = sphi 0, %s44
      %s68 = sphi 0, %s70
      %s71 = sphi 0, %s68
      %s72 = sphi 0, %s71
      %s88 = sphi 0, %s72
      %s94 = sphi 0, %s96
      %s97 = sphi 0, %s94
      %s98 = sphi 0, %s97
      %s114 = sphi 0, %s98
      %s122 = sphi 0, %s124
      %s125 = sphi 0, %s122
      %s126 = sphi 0, %s125
      %s142 = sphi 0, %s126
    $region4: #{infogan_generator_forward.25} parent=1 // loop_header_branch
      %12 = sbr.rel (%p10) target = $region8
    $region5: #{infogan_generator_forward.25} parent=1 // loop_body
      %s14 = ssub.s32 %s9, 1
      %s15 = ssub.s32 %s9, 2
      %s25 = sadd.s32 1, %s18
      %p26 = scmp.ge.s32.totalorder %s25, 1
      %s27 = scalar_select %p26, 0, %s25
      %s28 = sadd.s32 1, %s17
      %s29 = scalar_select %p26, %s28, %s17
      %p30 = scmp.ge.s32.totalorder %s29, 3
      %s31 = scalar_select %p30, 0, %s29
      %s32 = sadd.s32 1, %s16
      %s33 = scalar_select %p30, %s32, %s16
      %p34 = scmp.ge.s32.totalorder %s33, 1
      %s35 = scalar_select %p34, 0, %s33
      %s36 = ssub.s32 %s16, %s35
      %s37 = ssub.s32 %s18, %s27
      %s38 = sor.u32 %s36, %s37
      %p39 = scmp.eq.s32.totalorder %s38, 0
      %s41 = sadd.s32 %s40, 1
      %s42 = scalar_select %p39, %s40, %s41
      %p45 = pneg %p39
      %p46 = scmp.eq.s32.totalorder %s9, 2
      %p47 = por %p45, %p46
      %p48 = scmp.ne.s32.totalorder %s40, %s43
      %p49 = scmp.eq.s32.totalorder %s9, 0
      %p50 = por %p48, %p49
      %p51 = scmp.ne.s32.totalorder %s40, %s43
      %p52 = scmp.eq.s32.totalorder %s14, 2
      %p53 = por %p51, %p52
      %p54 = scmp.ne.s32.totalorder %s43, %s44
      %p55 = scmp.eq.s32.totalorder %s14, 0
      %p56 = por %p54, %p55
      %p57 = scmp.ne.s32.totalorder %s43, %s44
      %p58 = scmp.eq.s32.totalorder %s15, 2
      %p59 = por %p57, %p58
      %p61 = scmp.ne.s32.totalorder %s44, %s60
      %p62 = scmp.eq.s32.totalorder %s15, 0
      %p63 = por %p61, %p62
      %s64 = ssub.s32 %s18, %s27
      %s65 = ssub.s32 %s17, %s31
      %s66 = sor.u32 %s64, %s65
      %p67 = scmp.eq.s32.totalorder %s66, 0
      %s69 = sadd.s32 %s68, 1
      %s70 = scalar_select %p67, %s68, %s69
      %p73 = pneg %p67
      %p74 = scmp.eq.s32.totalorder %s9, 2
      %p75 = por %p73, %p74
      %p76 = scmp.ne.s32.totalorder %s68, %s71
      %p77 = scmp.eq.s32.totalorder %s9, 0
      %p78 = por %p76, %p77
      %p79 = scmp.ne.s32.totalorder %s68, %s71
      %p80 = scmp.eq.s32.totalorder %s14, 2
      %p81 = por %p79, %p80
      %p82 = scmp.ne.s32.totalorder %s71, %s72
      %p83 = scmp.eq.s32.totalorder %s14, 0
      %p84 = por %p82, %p83
      %p85 = scmp.ne.s32.totalorder %s71, %s72
      %p86 = scmp.eq.s32.totalorder %s15, 2
      %p87 = por %p85, %p86
      %p89 = scmp.ne.s32.totalorder %s72, %s88
      %p90 = scmp.eq.s32.totalorder %s15, 0
      %p91 = por %p89, %p90
      %s92 = ssub.s32 %s17, %s31
      %p93 = scmp.eq.s32.totalorder %s92, 0
      %s95 = sadd.s32 %s94, 1
      %s96 = scalar_select %p93, %s94, %s95
      %p99 = pneg %p93
      %p100 = scmp.eq.s32.totalorder %s9, 2
      %p101 = por %p99, %p100
      %p102 = scmp.ne.s32.totalorder %s94, %s97
      %p103 = scmp.eq.s32.totalorder %s9, 0
      %p104 = por %p102, %p103
      %p105 = scmp.ne.s32.totalorder %s94, %s97
      %p106 = scmp.eq.s32.totalorder %s14, 2
      %p107 = por %p105, %p106
      %p108 = scmp.ne.s32.totalorder %s97, %s98
      %p109 = scmp.eq.s32.totalorder %s14, 0
      %p110 = por %p108, %p109
      %p111 = scmp.ne.s32.totalorder %s97, %s98
      %p112 = scmp.eq.s32.totalorder %s15, 2
      %p113 = por %p111, %p112
      %p115 = scmp.ne.s32.totalorder %s98, %s114
      %p116 = scmp.eq.s32.totalorder %s15, 0
      %p117 = por %p115, %p116
      %s118 = ssub.s32 %s16, %s35
      %s119 = ssub.s32 %s17, %s31
      %s120 = sor.u32 %s118, %s119
      %p121 = scmp.eq.s32.totalorder %s120, 0
      %s123 = sadd.s32 %s122, 1
      %s124 = scalar_select %p121, %s122, %s123
      %p127 = pneg %p121
      %p128 = scmp.eq.s32.totalorder %s9, 2
      %p129 = por %p127, %p128
      %p130 = scmp.ne.s32.totalorder %s122, %s125
      %p131 = scmp.eq.s32.totalorder %s9, 0
      %p132 = por %p130, %p131
      %p133 = scmp.ne.s32.totalorder %s122, %s125
      %p134 = scmp.eq.s32.totalorder %s14, 2
      %p135 = por %p133, %p134
      %p136 = scmp.ne.s32.totalorder %s125, %s126
      %p137 = scmp.eq.s32.totalorder %s14, 0
      %p138 = por %p136, %p137
      %p139 = scmp.ne.s32.totalorder %s125, %s126
      %p140 = scmp.eq.s32.totalorder %s15, 2
      %p141 = por %p139, %p140
      %p143 = scmp.ne.s32.totalorder %s126, %s142
      %p144 = scmp.eq.s32.totalorder %s15, 0
      %p145 = por %p143, %p144
      %p146 = scmp.le.s32.totalorder 1, %s9
      %p147 = scmp.lt.s32.totalorder %s9, 4
      %p148 = pnand %p146, %p147
      %p149 = pneg %p148
      // Predicated region
      $region9: #{infogan_generator_forward.25} parent=5 // pred_check
        _
      $region10: #{infogan_generator_forward.25} parent=5 // pred_check_branch
        %151 = sbr.rel (%p148) target = $region12
      $region11: #{infogan_generator_forward.25} parent=5 // pred_region
        %s152 = ssub.s32 %s9, 1
        // Predicated region
        $region13: #{infogan_generator_forward.25} parent=11 // pred_check
          %p153 = pneg %p56
        $region14: #{infogan_generator_forward.25} parent=11 // pred_check_branch
          %155 = sbr.rel (%p153) target = $region16
        $region15: #{infogan_generator_forward.25} parent=11 // pred_region
          %s156 = smul.u32 8, %s21
          %p157 = scmp.lt.s32.totalorder %s19, 0
          %s158 = scalar_select %p157, %s19, 0
          %p159 = scmp.lt.s32.totalorder %s156, 7
          %s160 = scalar_select %p159, %s156, 7
          %s161 = smul.addr %s158, 8
          %s162 = sadd.s32 %s160, %s161
          %s163 = smul.addr %s162, 2
          %s164 = scalar_lea.vmem %s0, %s163
          %s165 = smul.u32 8, %s21
        $region16: #{infogan_generator_forward.25} parent=11 // pred_fallthru
          _
      $region12: #{infogan_generator_forward.25} parent=5 // pred_fallthru
        _
      %p166 = scmp.lt.s32.totalorder %s9, 3
      // Predicated region
      $region17: #{infogan_generator_forward.25} parent=5 // pred_check
        %p167 = pneg %p166
      $region18: #{infogan_generator_forward.25} parent=5 // pred_check_branch
        %169 = sbr.rel (%p167) target = $region20
      $region19: #{infogan_generator_forward.25} parent=5 // pred_region
        // Predicated region
        $region21: #{infogan_generator_forward.25} parent=19 // pred_check
          %p170 = pneg %p78
        $region22: #{infogan_generator_forward.25} parent=19 // pred_check_branch
          %172 = sbr.rel (%p170) target = $region24
        $region23: #{infogan_generator_forward.25} parent=19 // pred_region
          %s173 = sand.u32 %s68, 1
          %s174 = sand.u32 %s68, 1
          %s175 = smul.addr %s174, 512
          %s176 = scalar_lea.vmem [#allocation2], %s175
          %s177 = smul.u32 128, %s18
          %s178 = smul.addr %s177, 3
          %s179 = sadd.s32 %s17, %s178
          %s180 = smul.addr %s179, 4
          %s181 = scalar_lea.vmem %s1, %s180
          // Predicated region
          $region25: #{infogan_generator_forward.25} parent=23 // pred_check
            _
          $region26: #{infogan_generator_forward.25} parent=23 // pred_check_branch
            %183 = sbr.rel (0) target = $region28
          $region27: #{infogan_generator_forward.25} parent=23 // pred_region
            // Predicated region
            $region29: #{infogan_generator_forward.25} parent=27 // pred_check
              _
            $region30: #{infogan_generator_forward.25} parent=27 // pred_check_branch
              %185 = sbr.rel target = $region32
            $region31: #{infogan_generator_forward.25} parent=27 // pred_region
              // Predicated region
              $region44: #{infogan_generator_forward.25} parent=31 // pred_check
                _
              $region45: #{infogan_generator_forward.25} parent=31 // pred_check_branch
                %455 = sbr.rel (0) target = $region47
              $region46: #{infogan_generator_forward.25} parent=31 // pred_region
                loop: start=0, step=1, limit=1
                $region48: #{infogan_generator_forward.25} parent=46 // loop_pre_header
                  _
                $region49: #{infogan_generator_forward.25} parent=46 // loop_header
                  %s457 = sphi 0, %s461
                  %p458 = scmp.ge.s32.totalorder %s457, 1
                  %s462 = sphi %s181, %s181
                  %s463 = sphi %s176, %s176
                $region50: #{infogan_generator_forward.25} parent=46 // loop_header_branch
                  %460 = sbr.rel (%p458) target = $region54
                $region51: #{infogan_generator_forward.25} parent=46 // loop_body
                  _
                $region52: #{infogan_generator_forward.25} parent=46 // loop_footer
                  %s461 = sadd.s32 1, %s457
                $region53: #{infogan_generator_forward.25} parent=46 // loop_footer_branch
                  %456 = sbr.rel target = $region49
                $region54: #{infogan_generator_forward.25} parent=46 // loop_exit
                  _
                %s465 = ssub.s32 16, 1
                loop: start=0, step=1, limit=1
                $region55: #{infogan_generator_forward.25} parent=46 // loop_pre_header
                  _
                $region56: #{infogan_generator_forward.25} parent=46 // loop_header
                  %s467 = sphi 0, %s471
                  %p468 = scmp.ge.s32.totalorder %s467, 1
                  %s472 = sphi %s181, %s181
                  %s473 = sphi %s176, %s176
                $region57: #{infogan_generator_forward.25} parent=46 // loop_header_branch
                  %470 = sbr.rel (%p468) target = $region61
                $region58: #{infogan_generator_forward.25} parent=46 // loop_body
                  %v474 = vld [vmem:[%s472] sm:%s465]
                  %475 = vst [vmem:[%s473] sm:%s465] %v474
                  %v476 = vld [vmem:[%s472 + $0xc] sm:%s465]
                  %477 = vst [vmem:[%s473 + $0x4] sm:%s465] %v476
                  %v478 = vld [vmem:[%s472 + $0x18] sm:%s465]
                  %479 = vst [vmem:[%s473 + $0x8] sm:%s465] %v478
                  %v480 = vld [vmem:[%s472 + $0x24] sm:%s465]
                  %481 = vst [vmem:[%s473 + $0xc] sm:%s465] %v480
                  %v482 = vld [vmem:[%s472 + $0x30] sm:%s465]
                  %483 = vst [vmem:[%s473 + $0x10] sm:%s465] %v482
                  %v484 = vld [vmem:[%s472 + $0x3c] sm:%s465]
                  %485 = vst [vmem:[%s473 + $0x14] sm:%s465] %v484
                  %v486 = vld [vmem:[%s472 + $0x48] sm:%s465]
                  %487 = vst [vmem:[%s473 + $0x18] sm:%s465] %v486
                  %v488 = vld [vmem:[%s472 + $0x54] sm:%s465]
                  %489 = vst [vmem:[%s473 + $0x1c] sm:%s465] %v488
                  %v490 = vld [vmem:[%s472 + $0x60] sm:%s465]
                  %491 = vst [vmem:[%s473 + $0x20] sm:%s465] %v490
                  %v492 = vld [vmem:[%s472 + $0x6c] sm:%s465]
                  %493 = vst [vmem:[%s473 + $0x24] sm:%s465] %v492
                  %v494 = vld [vmem:[%s472 + $0x78] sm:%s465]
                  %495 = vst [vmem:[%s473 + $0x28] sm:%s465] %v494
                  %v496 = vld [vmem:[%s472 + $0x84] sm:%s465]
                  %497 = vst [vmem:[%s473 + $0x2c] sm:%s465] %v496
                  %v498 = vld [vmem:[%s472 + $0x90] sm:%s465]
                  %499 = vst [vmem:[%s473 + $0x30] sm:%s465] %v498
                  %v500 = vld [vmem:[%s472 + $0x9c] sm:%s465]
                  %501 = vst [vmem:[%s473 + $0x34] sm:%s465] %v500
                  %v502 = vld [vmem:[%s472 + $0xa8] sm:%s465]
                  %503 = vst [vmem:[%s473 + $0x38] sm:%s465] %v502
                  %v504 = vld [vmem:[%s472 + $0xb4] sm:%s465]
                  %505 = vst [vmem:[%s473 + $0x3c] sm:%s465] %v504
                  %v506 = vld [vmem:[%s472 + $0xc0] sm:%s465]
                  %507 = vst [vmem:[%s473 + $0x40] sm:%s465] %v506
                  %v508 = vld [vmem:[%s472 + $0xcc] sm:%s465]
                  %509 = vst [vmem:[%s473 + $0x44] sm:%s465] %v508
                  %v510 = vld [vmem:[%s472 + $0xd8] sm:%s465]
                  %511 = vst [vmem:[%s473 + $0x48] sm:%s465] %v510
                  %v512 = vld [vmem:[%s472 + $0xe4] sm:%s465]
                  %513 = vst [vmem:[%s473 + $0x4c] sm:%s465] %v512
                  %v514 = vld [vmem:[%s472 + $0xf0] sm:%s465]
                  %515 = vst [vmem:[%s473 + $0x50] sm:%s465] %v514
                  %v516 = vld [vmem:[%s472 + $0xfc] sm:%s465]
                  %517 = vst [vmem:[%s473 + $0x54] sm:%s465] %v516
                  %v518 = vld [vmem:[%s472 + $0x108] sm:%s465]
                  %519 = vst [vmem:[%s473 + $0x58] sm:%s465] %v518
                  %v520 = vld [vmem:[%s472 + $0x114] sm:%s465]
                  %521 = vst [vmem:[%s473 + $0x5c] sm:%s465] %v520
                  %v522 = vld [vmem:[%s472 + $0x120] sm:%s465]
                  %523 = vst [vmem:[%s473 + $0x60] sm:%s465] %v522
                  %v524 = vld [vmem:[%s472 + $0x12c] sm:%s465]
                  %525 = vst [vmem:[%s473 + $0x64] sm:%s465] %v524
                  %v526 = vld [vmem:[%s472 + $0x138] sm:%s465]
                  %527 = vst [vmem:[%s473 + $0x68] sm:%s465] %v526
                  %v528 = vld [vmem:[%s472 + $0x144] sm:%s465]
                  %529 = vst [vmem:[%s473 + $0x6c] sm:%s465] %v528
                  %v530 = vld [vmem:[%s472 + $0x150] sm:%s465]
                  %531 = vst [vmem:[%s473 + $0x70] sm:%s465] %v530
                  %v532 = vld [vmem:[%s472 + $0x15c] sm:%s465]
                  %533 = vst [vmem:[%s473 + $0x74] sm:%s465] %v532
                  %v534 = vld [vmem:[%s472 + $0x168] sm:%s465]
                  %535 = vst [vmem:[%s473 + $0x78] sm:%s465] %v534
                  %v536 = vld [vmem:[%s472 + $0x174] sm:%s465]
                  %537 = vst [vmem:[%s473 + $0x7c] sm:%s465] %v536
                  %v538 = vld [vmem:[%s472 + $0x180] sm:%s465]
                  %539 = vst [vmem:[%s473 + $0x80] sm:%s465] %v538
                  %v540 = vld [vmem:[%s472 + $0x18c] sm:%s465]
                  %541 = vst [vmem:[%s473 + $0x84] sm:%s465] %v540
                  %v542 = vld [vmem:[%s472 + $0x198] sm:%s465]
                  %543 = vst [vmem:[%s473 + $0x88] sm:%s465] %v542
                  %v544 = vld [vmem:[%s472 + $0x1a4] sm:%s465]
                  %545 = vst [vmem:[%s473 + $0x8c] sm:%s465] %v544
                  %v546 = vld [vmem:[%s472 + $0x1b0] sm:%s465]
                  %547 = vst [vmem:[%s473 + $0x90] sm:%s465] %v546
                  %v548 = vld [vmem:[%s472 + $0x1bc] sm:%s465]
                  %549 = vst [vmem:[%s473 + $0x94] sm:%s465] %v548
                  %v550 = vld [vmem:[%s472 + $0x1c8] sm:%s465]
                  %551 = vst [vmem:[%s473 + $0x98] sm:%s465] %v550
                  %v552 = vld [vmem:[%s472 + $0x1d4] sm:%s465]
                  %553 = vst [vmem:[%s473 + $0x9c] sm:%s465] %v552
                  %v554 = vld [vmem:[%s472 + $0x1e0] sm:%s465]
                  %555 = vst [vmem:[%s473 + $0xa0] sm:%s465] %v554
                  %v556 = vld [vmem:[%s472 + $0x1ec] sm:%s465]
                  %557 = vst [vmem:[%s473 + $0xa4] sm:%s465] %v556
                  %v558 = vld [vmem:[%s472 + $0x1f8] sm:%s465]
                  %559 = vst [vmem:[%s473 + $0xa8] sm:%s465] %v558
                  %v560 = vld [vmem:[%s472 + $0x204] sm:%s465]
                  %561 = vst [vmem:[%s473 + $0xac] sm:%s465] %v560
                  %v562 = vld [vmem:[%s472 + $0x210] sm:%s465]
                  %563 = vst [vmem:[%s473 + $0xb0] sm:%s465] %v562
                  %v564 = vld [vmem:[%s472 + $0x21c] sm:%s465]
                  %565 = vst [vmem:[%s473 + $0xb4] sm:%s465] %v564
                  %v566 = vld [vmem:[%s472 + $0x228] sm:%s465]
                  %567 = vst [vmem:[%s473 + $0xb8] sm:%s465] %v566
                  %v568 = vld [vmem:[%s472 + $0x234] sm:%s465]
                  %569 = vst [vmem:[%s473 + $0xbc] sm:%s465] %v568
                  %v570 = vld [vmem:[%s472 + $0x240] sm:%s465]
                  %571 = vst [vmem:[%s473 + $0xc0] sm:%s465] %v570
                  %v572 = vld [vmem:[%s472 + $0x24c] sm:%s465]
                  %573 = vst [vmem:[%s473 + $0xc4] sm:%s465] %v572
                  %v574 = vld [vmem:[%s472 + $0x258] sm:%s465]
                  %575 = vst [vmem:[%s473 + $0xc8] sm:%s465] %v574
                  %v576 = vld [vmem:[%s472 + $0x264] sm:%s465]
                  %577 = vst [vmem:[%s473 + $0xcc] sm:%s465] %v576
                  %v578 = vld [vmem:[%s472 + $0x270] sm:%s465]
                  %579 = vst [vmem:[%s473 + $0xd0] sm:%s465] %v578
                  %v580 = vld [vmem:[%s472 + $0x27c] sm:%s465]
                  %581 = vst [vmem:[%s473 + $0xd4] sm:%s465] %v580
                  %v582 = vld [vmem:[%s472 + $0x288] sm:%s465]
                  %583 = vst [vmem:[%s473 + $0xd8] sm:%s465] %v582
                  %v584 = vld [vmem:[%s472 + $0x294] sm:%s465]
                  %585 = vst [vmem:[%s473 + $0xdc] sm:%s465] %v584
                  %v586 = vld [vmem:[%s472 + $0x2a0] sm:%s465]
                  %587 = vst [vmem:[%s473 + $0xe0] sm:%s465] %v586
                  %v588 = vld [vmem:[%s472 + $0x2ac] sm:%s465]
                  %589 = vst [vmem:[%s473 + $0xe4] sm:%s465] %v588
                  %v590 = vld [vmem:[%s472 + $0x2b8] sm:%s465]
                  %591 = vst [vmem:[%s473 + $0xe8] sm:%s465] %v590
                  %v592 = vld [vmem:[%s472 + $0x2c4] sm:%s465]
                  %593 = vst [vmem:[%s473 + $0xec] sm:%s465] %v592
                  %v594 = vld [vmem:[%s472 + $0x2d0] sm:%s465]
                  %595 = vst [vmem:[%s473 + $0xf0] sm:%s465] %v594
                  %v596 = vld [vmem:[%s472 + $0x2dc] sm:%s465]
                  %597 = vst [vmem:[%s473 + $0xf4] sm:%s465] %v596
                  %v598 = vld [vmem:[%s472 + $0x2e8] sm:%s465]
                  %599 = vst [vmem:[%s473 + $0xf8] sm:%s465] %v598
                  %v600 = vld [vmem:[%s472 + $0x2f4] sm:%s465]
                  %601 = vst [vmem:[%s473 + $0xfc] sm:%s465] %v600
                  %v602 = vld [vmem:[%s472 + $0x300] sm:%s465]
                  %603 = vst [vmem:[%s473 + $0x100] sm:%s465] %v602
                  %v604 = vld [vmem:[%s472 + $0x30c] sm:%s465]
                  %605 = vst [vmem:[%s473 + $0x104] sm:%s465] %v604
                  %v606 = vld [vmem:[%s472 + $0x318] sm:%s465]
                  %607 = vst [vmem:[%s473 + $0x108] sm:%s465] %v606
                  %v608 = vld [vmem:[%s472 + $0x324] sm:%s465]
                  %609 = vst [vmem:[%s473 + $0x10c] sm:%s465] %v608
                  %v610 = vld [vmem:[%s472 + $0x330] sm:%s465]
                  %611 = vst [vmem:[%s473 + $0x110] sm:%s465] %v610
                  %v612 = vld [vmem:[%s472 + $0x33c] sm:%s465]
                  %613 = vst [vmem:[%s473 + $0x114] sm:%s465] %v612
                  %v614 = vld [vmem:[%s472 + $0x348] sm:%s465]
                  %615 = vst [vmem:[%s473 + $0x118] sm:%s465] %v614
                  %v616 = vld [vmem:[%s472 + $0x354] sm:%s465]
                  %617 = vst [vmem:[%s473 + $0x11c] sm:%s465] %v616
                  %v618 = vld [vmem:[%s472 + $0x360] sm:%s465]
                  %619 = vst [vmem:[%s473 + $0x120] sm:%s465] %v618
                  %v620 = vld [vmem:[%s472 + $0x36c] sm:%s465]
                  %621 = vst [vmem:[%s473 + $0x124] sm:%s465] %v620
                  %v622 = vld [vmem:[%s472 + $0x378] sm:%s465]
                  %623 = vst [vmem:[%s473 + $0x128] sm:%s465] %v622
                  %v624 = vld [vmem:[%s472 + $0x384] sm:%s465]
                  %625 = vst [vmem:[%s473 + $0x12c] sm:%s465] %v624
                  %v626 = vld [vmem:[%s472 + $0x390] sm:%s465]
                  %627 = vst [vmem:[%s473 + $0x130] sm:%s465] %v626
                  %v628 = vld [vmem:[%s472 + $0x39c] sm:%s465]
                  %629 = vst [vmem:[%s473 + $0x134] sm:%s465] %v628
                  %v630 = vld [vmem:[%s472 + $0x3a8] sm:%s465]
                  %631 = vst [vmem:[%s473 + $0x138] sm:%s465] %v630
                  %v632 = vld [vmem:[%s472 + $0x3b4] sm:%s465]
                  %633 = vst [vmem:[%s473 + $0x13c] sm:%s465] %v632
                  %v634 = vld [vmem:[%s472 + $0x3c0] sm:%s465]
                  %635 = vst [vmem:[%s473 + $0x140] sm:%s465] %v634
                  %v636 = vld [vmem:[%s472 + $0x3cc] sm:%s465]
                  %637 = vst [vmem:[%s473 + $0x144] sm:%s465] %v636
                  %v638 = vld [vmem:[%s472 + $0x3d8] sm:%s465]
                  %639 = vst [vmem:[%s473 + $0x148] sm:%s465] %v638
                  %v640 = vld [vmem:[%s472 + $0x3e4] sm:%s465]
                  %641 = vst [vmem:[%s473 + $0x14c] sm:%s465] %v640
                  %v642 = vld [vmem:[%s472 + $0x3f0] sm:%s465]
                  %643 = vst [vmem:[%s473 + $0x150] sm:%s465] %v642
                  %v644 = vld [vmem:[%s472 + $0x3fc] sm:%s465]
                  %645 = vst [vmem:[%s473 + $0x154] sm:%s465] %v644
                  %v646 = vld [vmem:[%s472 + $0x408] sm:%s465]
                  %647 = vst [vmem:[%s473 + $0x158] sm:%s465] %v646
                  %v648 = vld [vmem:[%s472 + $0x414] sm:%s465]
                  %649 = vst [vmem:[%s473 + $0x15c] sm:%s465] %v648
                  %v650 = vld [vmem:[%s472 + $0x420] sm:%s465]
                  %651 = vst [vmem:[%s473 + $0x160] sm:%s465] %v650
                  %v652 = vld [vmem:[%s472 + $0x42c] sm:%s465]
                  %653 = vst [vmem:[%s473 + $0x164] sm:%s465] %v652
                  %v654 = vld [vmem:[%s472 + $0x438] sm:%s465]
                  %655 = vst [vmem:[%s473 + $0x168] sm:%s465] %v654
                  %v656 = vld [vmem:[%s472 + $0x444] sm:%s465]
                  %657 = vst [vmem:[%s473 + $0x16c] sm:%s465] %v656
                  %v658 = vld [vmem:[%s472 + $0x450] sm:%s465]
                  %659 = vst [vmem:[%s473 + $0x170] sm:%s465] %v658
                  %v660 = vld [vmem:[%s472 + $0x45c] sm:%s465]
                  %661 = vst [vmem:[%s473 + $0x174] sm:%s465] %v660
                  %v662 = vld [vmem:[%s472 + $0x468] sm:%s465]
                  %663 = vst [vmem:[%s473 + $0x178] sm:%s465] %v662
                  %v664 = vld [vmem:[%s472 + $0x474] sm:%s465]
                  %665 = vst [vmem:[%s473 + $0x17c] sm:%s465] %v664
                  %v666 = vld [vmem:[%s472 + $0x480] sm:%s465]
                  %667 = vst [vmem:[%s473 + $0x180] sm:%s465] %v666
                  %v668 = vld [vmem:[%s472 + $0x48c] sm:%s465]
                  %669 = vst [vmem:[%s473 + $0x184] sm:%s465] %v668
                  %v670 = vld [vmem:[%s472 + $0x498] sm:%s465]
                  %671 = vst [vmem:[%s473 + $0x188] sm:%s465] %v670
                  %v672 = vld [vmem:[%s472 + $0x4a4] sm:%s465]
                  %673 = vst [vmem:[%s473 + $0x18c] sm:%s465] %v672
                  %v674 = vld [vmem:[%s472 + $0x4b0] sm:%s465]
                  %675 = vst [vmem:[%s473 + $0x190] sm:%s465] %v674
                  %v676 = vld [vmem:[%s472 + $0x4bc] sm:%s465]
                  %677 = vst [vmem:[%s473 + $0x194] sm:%s465] %v676
                  %v678 = vld [vmem:[%s472 + $0x4c8] sm:%s465]
                  %679 = vst [vmem:[%s473 + $0x198] sm:%s465] %v678
                  %v680 = vld [vmem:[%s472 + $0x4d4] sm:%s465]
                  %681 = vst [vmem:[%s473 + $0x19c] sm:%s465] %v680
                  %v682 = vld [vmem:[%s472 + $0x4e0] sm:%s465]
                  %683 = vst [vmem:[%s473 + $0x1a0] sm:%s465] %v682
                  %v684 = vld [vmem:[%s472 + $0x4ec] sm:%s465]
                  %685 = vst [vmem:[%s473 + $0x1a4] sm:%s465] %v684
                  %v686 = vld [vmem:[%s472 + $0x4f8] sm:%s465]
                  %687 = vst [vmem:[%s473 + $0x1a8] sm:%s465] %v686
                  %v688 = vld [vmem:[%s472 + $0x504] sm:%s465]
                  %689 = vst [vmem:[%s473 + $0x1ac] sm:%s465] %v688
                  %v690 = vld [vmem:[%s472 + $0x510] sm:%s465]
                  %691 = vst [vmem:[%s473 + $0x1b0] sm:%s465] %v690
                  %v692 = vld [vmem:[%s472 + $0x51c] sm:%s465]
                  %693 = vst [vmem:[%s473 + $0x1b4] sm:%s465] %v692
                  %v694 = vld [vmem:[%s472 + $0x528] sm:%s465]
                  %695 = vst [vmem:[%s473 + $0x1b8] sm:%s465] %v694
                  %v696 = vld [vmem:[%s472 + $0x534] sm:%s465]
                  %697 = vst [vmem:[%s473 + $0x1bc] sm:%s465] %v696
                  %v698 = vld [vmem:[%s472 + $0x540] sm:%s465]
                  %699 = vst [vmem:[%s473 + $0x1c0] sm:%s465] %v698
                  %v700 = vld [vmem:[%s472 + $0x54c] sm:%s465]
                  %701 = vst [vmem:[%s473 + $0x1c4] sm:%s465] %v700
                  %v702 = vld [vmem:[%s472 + $0x558] sm:%s465]
                  %703 = vst [vmem:[%s473 + $0x1c8] sm:%s465] %v702
                  %v704 = vld [vmem:[%s472 + $0x564] sm:%s465]
                  %705 = vst [vmem:[%s473 + $0x1cc] sm:%s465] %v704
                  %v706 = vld [vmem:[%s472 + $0x570] sm:%s465]
                  %707 = vst [vmem:[%s473 + $0x1d0] sm:%s465] %v706
                  %v708 = vld [vmem:[%s472 + $0x57c] sm:%s465]
                  %709 = vst [vmem:[%s473 + $0x1d4] sm:%s465] %v708
                  %v710 = vld [vmem:[%s472 + $0x588] sm:%s465]
                  %711 = vst [vmem:[%s473 + $0x1d8] sm:%s465] %v710
                  %v712 = vld [vmem:[%s472 + $0x594] sm:%s465]
                  %713 = vst [vmem:[%s473 + $0x1dc] sm:%s465] %v712
                  %v714 = vld [vmem:[%s472 + $0x5a0] sm:%s465]
                  %715 = vst [vmem:[%s473 + $0x1e0] sm:%s465] %v714
                  %v716 = vld [vmem:[%s472 + $0x5ac] sm:%s465]
                  %717 = vst [vmem:[%s473 + $0x1e4] sm:%s465] %v716
                  %v718 = vld [vmem:[%s472 + $0x5b8] sm:%s465]
                  %719 = vst [vmem:[%s473 + $0x1e8] sm:%s465] %v718
                  %v720 = vld [vmem:[%s472 + $0x5c4] sm:%s465]
                  %721 = vst [vmem:[%s473 + $0x1ec] sm:%s465] %v720
                  %v722 = vld [vmem:[%s472 + $0x5d0] sm:%s465]
                  %723 = vst [vmem:[%s473 + $0x1f0] sm:%s465] %v722
                  %v724 = vld [vmem:[%s472 + $0x5dc] sm:%s465]
                  %725 = vst [vmem:[%s473 + $0x1f4] sm:%s465] %v724
                  %v726 = vld [vmem:[%s472 + $0x5e8] sm:%s465]
                  %727 = vst [vmem:[%s473 + $0x1f8] sm:%s465] %v726
                  %v728 = vld [vmem:[%s472 + $0x5f4] sm:%s465]
                  %729 = vst [vmem:[%s473 + $0x1fc] sm:%s465] %v728
                $region59: #{infogan_generator_forward.25} parent=46 // loop_footer
                  %s471 = sadd.s32 1, %s467
                $region60: #{infogan_generator_forward.25} parent=46 // loop_footer_branch
                  %466 = sbr.rel target = $region56
                $region61: #{infogan_generator_forward.25} parent=46 // loop_exit
                  _
              $region47: #{infogan_generator_forward.25} parent=31 // pred_fallthru
                _
            $region32: #{infogan_generator_forward.25} parent=27 // pred_fallthru
              _
            // Predicated region
            $region33: #{infogan_generator_forward.25} parent=27 // pred_check
              _
            $region34: #{infogan_generator_forward.25} parent=27 // pred_check_branch
              %187 = sbr.rel (0) target = $region36
            $region35: #{infogan_generator_forward.25} parent=27 // pred_region
              %s189 = ssub.s32 16, 1
              loop: start=0, step=1, limit=1
              $region37: #{infogan_generator_forward.25} parent=35 // loop_pre_header
                _
              $region38: #{infogan_generator_forward.25} parent=35 // loop_header
                %s191 = sphi 0, %s195
                %p192 = scmp.ge.s32.totalorder %s191, 1
                %s196 = sphi %s181, %s181
                %s197 = sphi %s176, %s176
              $region39: #{infogan_generator_forward.25} parent=35 // loop_header_branch
                %194 = sbr.rel (%p192) target = $region43
              $region40: #{infogan_generator_forward.25} parent=35 // loop_body
                %v198 = vld [vmem:[%s196] sm:%s189]
                %199 = vst [vmem:[%s197] sm:%s189] %v198
                %v200 = vld [vmem:[%s196 + $0xc] sm:%s189]
                %201 = vst [vmem:[%s197 + $0x4] sm:%s189] %v200
                %v202 = vld [vmem:[%s196 + $0x18] sm:%s189]
                %203 = vst [vmem:[%s197 + $0x8] sm:%s189] %v202
                %v204 = vld [vmem:[%s196 + $0x24] sm:%s189]
                %205 = vst [vmem:[%s197 + $0xc] sm:%s189] %v204
                %v206 = vld [vmem:[%s196 + $0x30] sm:%s189]
                %207 = vst [vmem:[%s197 + $0x10] sm:%s189] %v206
                %v208 = vld [vmem:[%s196 + $0x3c] sm:%s189]
                %209 = vst [vmem:[%s197 + $0x14] sm:%s189] %v208
                %v210 = vld [vmem:[%s196 + $0x48] sm:%s189]
                %211 = vst [vmem:[%s197 + $0x18] sm:%s189] %v210
                %v212 = vld [vmem:[%s196 + $0x54] sm:%s189]
                %213 = vst [vmem:[%s197 + $0x1c] sm:%s189] %v212
                %v214 = vld [vmem:[%s196 + $0x60] sm:%s189]
                %215 = vst [vmem:[%s197 + $0x20] sm:%s189] %v214
                %v216 = vld [vmem:[%s196 + $0x6c] sm:%s189]
                %217 = vst [vmem:[%s197 + $0x24] sm:%s189] %v216
                %v218 = vld [vmem:[%s196 + $0x78] sm:%s189]
                %219 = vst [vmem:[%s197 + $0x28] sm:%s189] %v218
                %v220 = vld [vmem:[%s196 + $0x84] sm:%s189]
                %221 = vst [vmem:[%s197 + $0x2c] sm:%s189] %v220
                %v222 = vld [vmem:[%s196 + $0x90] sm:%s189]
                %223 = vst [vmem:[%s197 + $0x30] sm:%s189] %v222
                %v224 = vld [vmem:[%s196 + $0x9c] sm:%s189]
                %225 = vst [vmem:[%s197 + $0x34] sm:%s189] %v224
                %v226 = vld [vmem:[%s196 + $0xa8] sm:%s189]
                %227 = vst [vmem:[%s197 + $0x38] sm:%s189] %v226
                %v228 = vld [vmem:[%s196 + $0xb4] sm:%s189]
                %229 = vst [vmem:[%s197 + $0x3c] sm:%s189] %v228
                %v230 = vld [vmem:[%s196 + $0xc0] sm:%s189]
                %231 = vst [vmem:[%s197 + $0x40] sm:%s189] %v230
                %v232 = vld [vmem:[%s196 + $0xcc] sm:%s189]
                %233 = vst [vmem:[%s197 + $0x44] sm:%s189] %v232
                %v234 = vld [vmem:[%s196 + $0xd8] sm:%s189]
                %235 = vst [vmem:[%s197 + $0x48] sm:%s189] %v234
                %v236 = vld [vmem:[%s196 + $0xe4] sm:%s189]
                %237 = vst [vmem:[%s197 + $0x4c] sm:%s189] %v236
                %v238 = vld [vmem:[%s196 + $0xf0] sm:%s189]
                %239 = vst [vmem:[%s197 + $0x50] sm:%s189] %v238
                %v240 = vld [vmem:[%s196 + $0xfc] sm:%s189]
                %241 = vst [vmem:[%s197 + $0x54] sm:%s189] %v240
                %v242 = vld [vmem:[%s196 + $0x108] sm:%s189]
                %243 = vst [vmem:[%s197 + $0x58] sm:%s189] %v242
                %v244 = vld [vmem:[%s196 + $0x114] sm:%s189]
                %245 = vst [vmem:[%s197 + $0x5c] sm:%s189] %v244
                %v246 = vld [vmem:[%s196 + $0x120] sm:%s189]
                %247 = vst [vmem:[%s197 + $0x60] sm:%s189] %v246
                %v248 = vld [vmem:[%s196 + $0x12c] sm:%s189]
                %249 = vst [vmem:[%s197 + $0x64] sm:%s189] %v248
                %v250 = vld [vmem:[%s196 + $0x138] sm:%s189]
                %251 = vst [vmem:[%s197 + $0x68] sm:%s189] %v250
                %v252 = vld [vmem:[%s196 + $0x144] sm:%s189]
                %253 = vst [vmem:[%s197 + $0x6c] sm:%s189] %v252
                %v254 = vld [vmem:[%s196 + $0x150] sm:%s189]
                %255 = vst [vmem:[%s197 + $0x70] sm:%s189] %v254
                %v256 = vld [vmem:[%s196 + $0x15c] sm:%s189]
                %257 = vst [vmem:[%s197 + $0x74] sm:%s189] %v256
                %v258 = vld [vmem:[%s196 + $0x168] sm:%s189]
                %259 = vst [vmem:[%s197 + $0x78] sm:%s189] %v258
                %v260 = vld [vmem:[%s196 + $0x174] sm:%s189]
                %261 = vst [vmem:[%s197 + $0x7c] sm:%s189] %v260
                %v262 = vld [vmem:[%s196 + $0x180] sm:%s189]
                %263 = vst [vmem:[%s197 + $0x80] sm:%s189] %v262
                %v264 = vld [vmem:[%s196 + $0x18c] sm:%s189]
                %265 = vst [vmem:[%s197 + $0x84] sm:%s189] %v264
                %v266 = vld [vmem:[%s196 + $0x198] sm:%s189]
                %267 = vst [vmem:[%s197 + $0x88] sm:%s189] %v266
                %v268 = vld [vmem:[%s196 + $0x1a4] sm:%s189]
                %269 = vst [vmem:[%s197 + $0x8c] sm:%s189] %v268
                %v270 = vld [vmem:[%s196 + $0x1b0] sm:%s189]
                %271 = vst [vmem:[%s197 + $0x90] sm:%s189] %v270
                %v272 = vld [vmem:[%s196 + $0x1bc] sm:%s189]
                %273 = vst [vmem:[%s197 + $0x94] sm:%s189] %v272
                %v274 = vld [vmem:[%s196 + $0x1c8] sm:%s189]
                %275 = vst [vmem:[%s197 + $0x98] sm:%s189] %v274
                %v276 = vld [vmem:[%s196 + $0x1d4] sm:%s189]
                %277 = vst [vmem:[%s197 + $0x9c] sm:%s189] %v276
                %v278 = vld [vmem:[%s196 + $0x1e0] sm:%s189]
                %279 = vst [vmem:[%s197 + $0xa0] sm:%s189] %v278
                %v280 = vld [vmem:[%s196 + $0x1ec] sm:%s189]
                %281 = vst [vmem:[%s197 + $0xa4] sm:%s189] %v280
                %v282 = vld [vmem:[%s196 + $0x1f8] sm:%s189]
                %283 = vst [vmem:[%s197 + $0xa8] sm:%s189] %v282
                %v284 = vld [vmem:[%s196 + $0x204] sm:%s189]
                %285 = vst [vmem:[%s197 + $0xac] sm:%s189] %v284
                %v286 = vld [vmem:[%s196 + $0x210] sm:%s189]
                %287 = vst [vmem:[%s197 + $0xb0] sm:%s189] %v286
                %v288 = vld [vmem:[%s196 + $0x21c] sm:%s189]
                %289 = vst [vmem:[%s197 + $0xb4] sm:%s189] %v288
                %v290 = vld [vmem:[%s196 + $0x228] sm:%s189]
                %291 = vst [vmem:[%s197 + $0xb8] sm:%s189] %v290
                %v292 = vld [vmem:[%s196 + $0x234] sm:%s189]
                %293 = vst [vmem:[%s197 + $0xbc] sm:%s189] %v292
                %v294 = vld [vmem:[%s196 + $0x240] sm:%s189]
                %295 = vst [vmem:[%s197 + $0xc0] sm:%s189] %v294
                %v296 = vld [vmem:[%s196 + $0x24c] sm:%s189]
                %297 = vst [vmem:[%s197 + $0xc4] sm:%s189] %v296
                %v298 = vld [vmem:[%s196 + $0x258] sm:%s189]
                %299 = vst [vmem:[%s197 + $0xc8] sm:%s189] %v298
                %v300 = vld [vmem:[%s196 + $0x264] sm:%s189]
                %301 = vst [vmem:[%s197 + $0xcc] sm:%s189] %v300
                %v302 = vld [vmem:[%s196 + $0x270] sm:%s189]
                %303 = vst [vmem:[%s197 + $0xd0] sm:%s189] %v302
                %v304 = vld [vmem:[%s196 + $0x27c] sm:%s189]
                %305 = vst [vmem:[%s197 + $0xd4] sm:%s189] %v304
                %v306 = vld [vmem:[%s196 + $0x288] sm:%s189]
                %307 = vst [vmem:[%s197 + $0xd8] sm:%s189] %v306
                %v308 = vld [vmem:[%s196 + $0x294] sm:%s189]
                %309 = vst [vmem:[%s197 + $0xdc] sm:%s189] %v308
                %v310 = vld [vmem:[%s196 + $0x2a0] sm:%s189]
                %311 = vst [vmem:[%s197 + $0xe0] sm:%s189] %v310
                %v312 = vld [vmem:[%s196 + $0x2ac] sm:%s189]
                %313 = vst [vmem:[%s197 + $0xe4] sm:%s189] %v312
                %v314 = vld [vmem:[%s196 + $0x2b8] sm:%s189]
                %315 = vst [vmem:[%s197 + $0xe8] sm:%s189] %v314
                %v316 = vld [vmem:[%s196 + $0x2c4] sm:%s189]
                %317 = vst [vmem:[%s197 + $0xec] sm:%s189] %v316
                %v318 = vld [vmem:[%s196 + $0x2d0] sm:%s189]
                %319 = vst [vmem:[%s197 + $0xf0] sm:%s189] %v318
                %v320 = vld [vmem:[%s196 + $0x2dc] sm:%s189]
                %321 = vst [vmem:[%s197 + $0xf4] sm:%s189] %v320
                %v322 = vld [vmem:[%s196 + $0x2e8] sm:%s189]
                %323 = vst [vmem:[%s197 + $0xf8] sm:%s189] %v322
                %v324 = vld [vmem:[%s196 + $0x2f4] sm:%s189]
                %325 = vst [vmem:[%s197 + $0xfc] sm:%s189] %v324
                %v326 = vld [vmem:[%s196 + $0x300] sm:%s189]
                %327 = vst [vmem:[%s197 + $0x100] sm:%s189] %v326
                %v328 = vld [vmem:[%s196 + $0x30c] sm:%s189]
                %329 = vst [vmem:[%s197 + $0x104] sm:%s189] %v328
                %v330 = vld [vmem:[%s196 + $0x318] sm:%s189]
                %331 = vst [vmem:[%s197 + $0x108] sm:%s189] %v330
                %v332 = vld [vmem:[%s196 + $0x324] sm:%s189]
                %333 = vst [vmem:[%s197 + $0x10c] sm:%s189] %v332
                %v334 = vld [vmem:[%s196 + $0x330] sm:%s189]
                %335 = vst [vmem:[%s197 + $0x110] sm:%s189] %v334
                %v336 = vld [vmem:[%s196 + $0x33c] sm:%s189]
                %337 = vst [vmem:[%s197 + $0x114] sm:%s189] %v336
                %v338 = vld [vmem:[%s196 + $0x348] sm:%s189]
                %339 = vst [vmem:[%s197 + $0x118] sm:%s189] %v338
                %v340 = vld [vmem:[%s196 + $0x354] sm:%s189]
                %341 = vst [vmem:[%s197 + $0x11c] sm:%s189] %v340
                %v342 = vld [vmem:[%s196 + $0x360] sm:%s189]
                %343 = vst [vmem:[%s197 + $0x120] sm:%s189] %v342
                %v344 = vld [vmem:[%s196 + $0x36c] sm:%s189]
                %345 = vst [vmem:[%s197 + $0x124] sm:%s189] %v344
                %v346 = vld [vmem:[%s196 + $0x378] sm:%s189]
                %347 = vst [vmem:[%s197 + $0x128] sm:%s189] %v346
                %v348 = vld [vmem:[%s196 + $0x384] sm:%s189]
                %349 = vst [vmem:[%s197 + $0x12c] sm:%s189] %v348
                %v350 = vld [vmem:[%s196 + $0x390] sm:%s189]
                %351 = vst [vmem:[%s197 + $0x130] sm:%s189] %v350
                %v352 = vld [vmem:[%s196 + $0x39c] sm:%s189]
                %353 = vst [vmem:[%s197 + $0x134] sm:%s189] %v352
                %v354 = vld [vmem:[%s196 + $0x3a8] sm:%s189]
                %355 = vst [vmem:[%s197 + $0x138] sm:%s189] %v354
                %v356 = vld [vmem:[%s196 + $0x3b4] sm:%s189]
                %357 = vst [vmem:[%s197 + $0x13c] sm:%s189] %v356
                %v358 = vld [vmem:[%s196 + $0x3c0] sm:%s189]
                %359 = vst [vmem:[%s197 + $0x140] sm:%s189] %v358
                %v360 = vld [vmem:[%s196 + $0x3cc] sm:%s189]
                %361 = vst [vmem:[%s197 + $0x144] sm:%s189] %v360
                %v362 = vld [vmem:[%s196 + $0x3d8] sm:%s189]
                %363 = vst [vmem:[%s197 + $0x148] sm:%s189] %v362
                %v364 = vld [vmem:[%s196 + $0x3e4] sm:%s189]
                %365 = vst [vmem:[%s197 + $0x14c] sm:%s189] %v364
                %v366 = vld [vmem:[%s196 + $0x3f0] sm:%s189]
                %367 = vst [vmem:[%s197 + $0x150] sm:%s189] %v366
                %v368 = vld [vmem:[%s196 + $0x3fc] sm:%s189]
                %369 = vst [vmem:[%s197 + $0x154] sm:%s189] %v368
                %v370 = vld [vmem:[%s196 + $0x408] sm:%s189]
                %371 = vst [vmem:[%s197 + $0x158] sm:%s189] %v370
                %v372 = vld [vmem:[%s196 + $0x414] sm:%s189]
                %373 = vst [vmem:[%s197 + $0x15c] sm:%s189] %v372
                %v374 = vld [vmem:[%s196 + $0x420] sm:%s189]
                %375 = vst [vmem:[%s197 + $0x160] sm:%s189] %v374
                %v376 = vld [vmem:[%s196 + $0x42c] sm:%s189]
                %377 = vst [vmem:[%s197 + $0x164] sm:%s189] %v376
                %v378 = vld [vmem:[%s196 + $0x438] sm:%s189]
                %379 = vst [vmem:[%s197 + $0x168] sm:%s189] %v378
                %v380 = vld [vmem:[%s196 + $0x444] sm:%s189]
                %381 = vst [vmem:[%s197 + $0x16c] sm:%s189] %v380
                %v382 = vld [vmem:[%s196 + $0x450] sm:%s189]
                %383 = vst [vmem:[%s197 + $0x170] sm:%s189] %v382
                %v384 = vld [vmem:[%s196 + $0x45c] sm:%s189]
                %385 = vst [vmem:[%s197 + $0x174] sm:%s189] %v384
                %v386 = vld [vmem:[%s196 + $0x468] sm:%s189]
                %387 = vst [vmem:[%s197 + $0x178] sm:%s189] %v386
                %v388 = vld [vmem:[%s196 + $0x474] sm:%s189]
                %389 = vst [vmem:[%s197 + $0x17c] sm:%s189] %v388
                %v390 = vld [vmem:[%s196 + $0x480] sm:%s189]
                %391 = vst [vmem:[%s197 + $0x180] sm:%s189] %v390
                %v392 = vld [vmem:[%s196 + $0x48c] sm:%s189]
                %393 = vst [vmem:[%s197 + $0x184] sm:%s189] %v392
                %v394 = vld [vmem:[%s196 + $0x498] sm:%s189]
                %395 = vst [vmem:[%s197 + $0x188] sm:%s189] %v394
                %v396 = vld [vmem:[%s196 + $0x4a4] sm:%s189]
                %397 = vst [vmem:[%s197 + $0x18c] sm:%s189] %v396
                %v398 = vld [vmem:[%s196 + $0x4b0] sm:%s189]
                %399 = vst [vmem:[%s197 + $0x190] sm:%s189] %v398
                %v400 = vld [vmem:[%s196 + $0x4bc] sm:%s189]
                %401 = vst [vmem:[%s197 + $0x194] sm:%s189] %v400
                %v402 = vld [vmem:[%s196 + $0x4c8] sm:%s189]
                %403 = vst [vmem:[%s197 + $0x198] sm:%s189] %v402
                %v404 = vld [vmem:[%s196 + $0x4d4] sm:%s189]
                %405 = vst [vmem:[%s197 + $0x19c] sm:%s189] %v404
                %v406 = vld [vmem:[%s196 + $0x4e0] sm:%s189]
                %407 = vst [vmem:[%s197 + $0x1a0] sm:%s189] %v406
                %v408 = vld [vmem:[%s196 + $0x4ec] sm:%s189]
                %409 = vst [vmem:[%s197 + $0x1a4] sm:%s189] %v408
                %v410 = vld [vmem:[%s196 + $0x4f8] sm:%s189]
                %411 = vst [vmem:[%s197 + $0x1a8] sm:%s189] %v410
                %v412 = vld [vmem:[%s196 + $0x504] sm:%s189]
                %413 = vst [vmem:[%s197 + $0x1ac] sm:%s189] %v412
                %v414 = vld [vmem:[%s196 + $0x510] sm:%s189]
                %415 = vst [vmem:[%s197 + $0x1b0] sm:%s189] %v414
                %v416 = vld [vmem:[%s196 + $0x51c] sm:%s189]
                %417 = vst [vmem:[%s197 + $0x1b4] sm:%s189] %v416
                %v418 = vld [vmem:[%s196 + $0x528] sm:%s189]
                %419 = vst [vmem:[%s197 + $0x1b8] sm:%s189] %v418
                %v420 = vld [vmem:[%s196 + $0x534] sm:%s189]
                %421 = vst [vmem:[%s197 + $0x1bc] sm:%s189] %v420
                %v422 = vld [vmem:[%s196 + $0x540] sm:%s189]
                %423 = vst [vmem:[%s197 + $0x1c0] sm:%s189] %v422
                %v424 = vld [vmem:[%s196 + $0x54c] sm:%s189]
                %425 = vst [vmem:[%s197 + $0x1c4] sm:%s189] %v424
                %v426 = vld [vmem:[%s196 + $0x558] sm:%s189]
                %427 = vst [vmem:[%s197 + $0x1c8] sm:%s189] %v426
                %v428 = vld [vmem:[%s196 + $0x564] sm:%s189]
                %429 = vst [vmem:[%s197 + $0x1cc] sm:%s189] %v428
                %v430 = vld [vmem:[%s196 + $0x570] sm:%s189]
                %431 = vst [vmem:[%s197 + $0x1d0] sm:%s189] %v430
                %v432 = vld [vmem:[%s196 + $0x57c] sm:%s189]
                %433 = vst [vmem:[%s197 + $0x1d4] sm:%s189] %v432
                %v434 = vld [vmem:[%s196 + $0x588] sm:%s189]
                %435 = vst [vmem:[%s197 + $0x1d8] sm:%s189] %v434
                %v436 = vld [vmem:[%s196 + $0x594] sm:%s189]
                %437 = vst [vmem:[%s197 + $0x1dc] sm:%s189] %v436
                %v438 = vld [vmem:[%s196 + $0x5a0] sm:%s189]
                %439 = vst [vmem:[%s197 + $0x1e0] sm:%s189] %v438
                %v440 = vld [vmem:[%s196 + $0x5ac] sm:%s189]
                %441 = vst [vmem:[%s197 + $0x1e4] sm:%s189] %v440
                %v442 = vld [vmem:[%s196 + $0x5b8] sm:%s189]
                %443 = vst [vmem:[%s197 + $0x1e8] sm:%s189] %v442
                %v444 = vld [vmem:[%s196 + $0x5c4] sm:%s189]
                %445 = vst [vmem:[%s197 + $0x1ec] sm:%s189] %v444
                %v446 = vld [vmem:[%s196 + $0x5d0] sm:%s189]
                %447 = vst [vmem:[%s197 + $0x1f0] sm:%s189] %v446
                %v448 = vld [vmem:[%s196 + $0x5dc] sm:%s189]
                %449 = vst [vmem:[%s197 + $0x1f4] sm:%s189] %v448
                %v450 = vld [vmem:[%s196 + $0x5e8] sm:%s189]
                %451 = vst [vmem:[%s197 + $0x1f8] sm:%s189] %v450
                %v452 = vld [vmem:[%s196 + $0x5f4] sm:%s189]
                %453 = vst [vmem:[%s197 + $0x1fc] sm:%s189] %v452
              $region41: #{infogan_generator_forward.25} parent=35 // loop_footer
                %s195 = sadd.s32 1, %s191
              $region42: #{infogan_generator_forward.25} parent=35 // loop_footer_branch
                %190 = sbr.rel target = $region38
              $region43: #{infogan_generator_forward.25} parent=35 // loop_exit
                _
            $region36: #{infogan_generator_forward.25} parent=27 // pred_fallthru
              _
          $region28: #{infogan_generator_forward.25} parent=23 // pred_fallthru
            _
          %730 = vnop
        $region24: #{infogan_generator_forward.25} parent=19 // pred_fallthru
          _
        // Predicated region
        $region62: #{infogan_generator_forward.25} parent=19 // pred_check
          %p731 = pneg %p104
        $region63: #{infogan_generator_forward.25} parent=19 // pred_check_branch
          %733 = sbr.rel (%p731) target = $region65
        $region64: #{infogan_generator_forward.25} parent=19 // pred_region
          %p734 = scmp.lt.s32.totalorder %s17, 2
          %s735 = scalar_select %p734, %s17, 2
          %s736 = scalar_lea.vmem %s2, %s735
        $region65: #{infogan_generator_forward.25} parent=19 // pred_fallthru
          _
      $region20: #{infogan_generator_forward.25} parent=5 // pred_fallthru
        _
      %p737 = scmp.le.s32.totalorder 1, %s9
      %p738 = scmp.lt.s32.totalorder %s9, 4
      %p739 = pnand %p737, %p738
      %p740 = pneg %p739
      // Predicated region
      $region66: #{infogan_generator_forward.25} parent=5 // pred_check
        _
      $region67: #{infogan_generator_forward.25} parent=5 // pred_check_branch
        %742 = sbr.rel (%p739) target = $region69
      $region68: #{infogan_generator_forward.25} parent=5 // pred_region
        %s743 = ssub.s32 %s9, 1
        %s744 = sand.u32 %s71, 1
        %s745 = sand.u32 %s71, 1
        %s746 = smul.addr %s745, 512
        %s747 = scalar_lea.vmem [#allocation2], %s746
        // Predicated region
        $region70: #{infogan_generator_forward.25} parent=68 // pred_check
          %p748 = pneg %p84
        $region71: #{infogan_generator_forward.25} parent=68 // pred_check_branch
          %750 = sbr.rel (%p748) target = $region73
        $region72: #{infogan_generator_forward.25} parent=68 // pred_region
          _
        $region73: #{infogan_generator_forward.25} parent=68 // pred_fallthru
          _
        %s751 = smul.u32 8, %s21
        %p752 = scmp.lt.s32.totalorder %s19, 0
        %s753 = scalar_select %p752, %s19, 0
        %p754 = scmp.lt.s32.totalorder %s751, 7
        %s755 = scalar_select %p754, %s751, 7
        %s756 = smul.addr %s753, 8
        %s757 = sadd.s32 %s755, %s756
        %s758 = smul.addr %s757, 2
        %s759 = scalar_lea.vmem %s0, %s758
        %p760 = pneg %p56
        %p761 = pneg %p53
        %s762 = sand.u32 %s71, 1
        %s763 = sand.u32 %s71, 1
        %s764 = smul.addr %s763, 512
        %s765 = scalar_lea.vmem [#allocation2], %s764
        %p766 = pneg %p84
        %p767 = pneg %p81
        %p768 = scmp.lt.s32.totalorder %s20, 2
        %s769 = scalar_select %p768, %s20, 2
        %s770 = scalar_lea.vmem %s2, %s769
        %p771 = pneg %p110
        %p772 = pneg %p107
        %p773 = pneg %p138
        %p774 = pneg %p135
        %p775 = scmp.lt.s32.totalorder %s19, 0
        %s776 = scalar_select %p775, %s19, 0
        %p777 = scmp.lt.s32.totalorder %s20, 2
        %s778 = scalar_select %p777, %s20, 2
        %s779 = smul.addr %s776, 3
        %s780 = sadd.s32 %s778, %s779
        %s781 = smul.addr %s780, 2
        %s782 = scalar_lea.vmem %s3, %s781
        %s783 = smul.u32 8, %s21
        %p784 = scmp.lt.s32.totalorder %s19, 0
        %s785 = scalar_select %p784, %s19, 0
        %p786 = scmp.lt.s32.totalorder %s783, 7
        %s787 = scalar_select %p786, %s783, 7
        %s788 = smul.addr %s785, 8
        %s789 = sadd.s32 %s787, %s788
        %s790 = smul.addr %s789, 2
        %s791 = scalar_lea.vmem %s0, %s790
        %s792 = smul.u32 8, %s21
        %s793 = smul.u32 128, %s21
        %p794 = scmp.lt.s32.totalorder %s20, 2
        %s795 = scalar_select %p794, %s20, 2
        %s796 = scalar_lea.vmem %s2, %s795
        %p797 = scmp.lt.s32.totalorder %s19, 0
        %s798 = scalar_select %p797, %s19, 0
        %p799 = scmp.lt.s32.totalorder %s20, 2
        %s800 = scalar_select %p799, %s20, 2
        %s801 = smul.addr %s798, 3
        %s802 = sadd.s32 %s800, %s801
        %s803 = smul.addr %s802, 2
        %s804 = scalar_lea.vmem %s3, %s803
        %v806 = vld [vmem:[%s791] sm:$0xff]
        %v807 = vld [vmem:[%s791 + $0x8] sm:$0xff]
        %v810 = vcombine.high %v806, %v806
        %v812 = vunpack.c.l.s4 1983009808
        %v813 = vunpack.c.0.s8 %v812
        %v814 = vlaneseq
        %v815 = vshrl.u32 %v814, 7
        %v816 = vsub.s32 %v813, %v815
        %v817 = vrot.slane %v806, %v816
        %v819 = vunpack.c.l.s4 1983009808
        %v820 = vunpack.c.0.s8 %v819
        %v821 = vlaneseq
        %v822 = vshrl.u32 %v821, 7
        %v823 = vsub.s32 %v820, %v822
        %v824 = vrot.slane %v810, %v823
        %v825 = vcombine.high %v817, %v817
        %v826 = vcombine.high %v824, %v824
        %v827 = vcombine.high %v807, %v807
        %v829 = vunpack.c.l.s4 1983009808
        %v830 = vunpack.c.0.s8 %v829
        %v831 = vlaneseq
        %v832 = vshrl.u32 %v831, 7
        %v833 = vsub.s32 %v830, %v832
        %v834 = vrot.slane %v807, %v833
        %v836 = vunpack.c.l.s4 1983009808
        %v837 = vunpack.c.0.s8 %v836
        %v838 = vlaneseq
        %v839 = vshrl.u32 %v838, 7
        %v840 = vsub.s32 %v837, %v839
        %v841 = vrot.slane %v827, %v840
        %v842 = vcombine.high %v834, %v834
        %v843 = vcombine.high %v841, %v841
        %v852 = vpack.c.bf16 %v817, %v817
        %v853 = vpack.c.bf16 %v825, %v825
        %v854 = vpack.c.bf16 %v824, %v824
        %v855 = vpack.c.bf16 %v826, %v826
        %v856 = vpack.c.bf16 %v834, %v834
        %v857 = vpack.c.bf16 %v842, %v842
        %v858 = vpack.c.bf16 %v841, %v841
        %v859 = vpack.c.bf16 %v843, %v843
        %v860 = vld [vmem:[%s747] sm:$0xf]
        %v861 = vld [vmem:[%s747 + $0x4] sm:$0xf]
        %v862 = vld [vmem:[%s747 + $0x8] sm:$0xf]
        %v863 = vld [vmem:[%s747 + $0xc] sm:$0xf]
        %v864 = vld [vmem:[%s747 + $0x10] sm:$0xf]
        %v865 = vld [vmem:[%s747 + $0x14] sm:$0xf]
        %v866 = vld [vmem:[%s747 + $0x18] sm:$0xf]
        %v867 = vld [vmem:[%s747 + $0x1c] sm:$0xf]
        %v868 = vld [vmem:[%s747 + $0x20] sm:$0xf]
        %v869 = vld [vmem:[%s747 + $0x24] sm:$0xf]
        %v870 = vld [vmem:[%s747 + $0x28] sm:$0xf]
        %v871 = vld [vmem:[%s747 + $0x2c] sm:$0xf]
        %v872 = vld [vmem:[%s747 + $0x30] sm:$0xf]
        %v873 = vld [vmem:[%s747 + $0x34] sm:$0xf]
        %v874 = vld [vmem:[%s747 + $0x38] sm:$0xf]
        %v875 = vld [vmem:[%s747 + $0x3c] sm:$0xf]
        %v876 = vld [vmem:[%s747 + $0x40] sm:$0xf]
        %v877 = vld [vmem:[%s747 + $0x44] sm:$0xf]
        %v878 = vld [vmem:[%s747 + $0x48] sm:$0xf]
        %v879 = vld [vmem:[%s747 + $0x4c] sm:$0xf]
        %v880 = vld [vmem:[%s747 + $0x50] sm:$0xf]
        %v881 = vld [vmem:[%s747 + $0x54] sm:$0xf]
        %v882 = vld [vmem:[%s747 + $0x58] sm:$0xf]
        %v883 = vld [vmem:[%s747 + $0x5c] sm:$0xf]
        %v884 = vld [vmem:[%s747 + $0x60] sm:$0xf]
        %v885 = vld [vmem:[%s747 + $0x64] sm:$0xf]
        %v886 = vld [vmem:[%s747 + $0x68] sm:$0xf]
        %v887 = vld [vmem:[%s747 + $0x6c] sm:$0xf]
        %v888 = vld [vmem:[%s747 + $0x70] sm:$0xf]
        %v889 = vld [vmem:[%s747 + $0x74] sm:$0xf]
        %v890 = vld [vmem:[%s747 + $0x78] sm:$0xf]
        %v891 = vld [vmem:[%s747 + $0x7c] sm:$0xf]
        %v892 = vld [vmem:[%s747 + $0x80] sm:$0xf]
        %v893 = vld [vmem:[%s747 + $0x84] sm:$0xf]
        %v894 = vld [vmem:[%s747 + $0x88] sm:$0xf]
        %v895 = vld [vmem:[%s747 + $0x8c] sm:$0xf]
        %v896 = vld [vmem:[%s747 + $0x90] sm:$0xf]
        %v897 = vld [vmem:[%s747 + $0x94] sm:$0xf]
        %v898 = vld [vmem:[%s747 + $0x98] sm:$0xf]
        %v899 = vld [vmem:[%s747 + $0x9c] sm:$0xf]
        %v900 = vld [vmem:[%s747 + $0xa0] sm:$0xf]
        %v901 = vld [vmem:[%s747 + $0xa4] sm:$0xf]
        %v902 = vld [vmem:[%s747 + $0xa8] sm:$0xf]
        %v903 = vld [vmem:[%s747 + $0xac] sm:$0xf]
        %v904 = vld [vmem:[%s747 + $0xb0] sm:$0xf]
        %v905 = vld [vmem:[%s747 + $0xb4] sm:$0xf]
        %v906 = vld [vmem:[%s747 + $0xb8] sm:$0xf]
        %v907 = vld [vmem:[%s747 + $0xbc] sm:$0xf]
        %v908 = vld [vmem:[%s747 + $0xc0] sm:$0xf]
        %v909 = vld [vmem:[%s747 + $0xc4] sm:$0xf]
        %v910 = vld [vmem:[%s747 + $0xc8] sm:$0xf]
        %v911 = vld [vmem:[%s747 + $0xcc] sm:$0xf]
        %v912 = vld [vmem:[%s747 + $0xd0] sm:$0xf]
        %v913 = vld [vmem:[%s747 + $0xd4] sm:$0xf]
        %v914 = vld [vmem:[%s747 + $0xd8] sm:$0xf]
        %v915 = vld [vmem:[%s747 + $0xdc] sm:$0xf]
        %v916 = vld [vmem:[%s747 + $0xe0] sm:$0xf]
        %v917 = vld [vmem:[%s747 + $0xe4] sm:$0xf]
        %v918 = vld [vmem:[%s747 + $0xe8] sm:$0xf]
        %v919 = vld [vmem:[%s747 + $0xec] sm:$0xf]
        %v920 = vld [vmem:[%s747 + $0xf0] sm:$0xf]
        %v921 = vld [vmem:[%s747 + $0xf4] sm:$0xf]
        %v922 = vld [vmem:[%s747 + $0xf8] sm:$0xf]
        %v923 = vld [vmem:[%s747 + $0xfc] sm:$0xf]
        %v924 = vld [vmem:[%s747 + $0x100] sm:$0xf]
        %v925 = vld [vmem:[%s747 + $0x104] sm:$0xf]
        %v926 = vld [vmem:[%s747 + $0x108] sm:$0xf]
        %v927 = vld [vmem:[%s747 + $0x10c] sm:$0xf]
        %v928 = vld [vmem:[%s747 + $0x110] sm:$0xf]
        %v929 = vld [vmem:[%s747 + $0x114] sm:$0xf]
        %v930 = vld [vmem:[%s747 + $0x118] sm:$0xf]
        %v931 = vld [vmem:[%s747 + $0x11c] sm:$0xf]
        %v932 = vld [vmem:[%s747 + $0x120] sm:$0xf]
        %v933 = vld [vmem:[%s747 + $0x124] sm:$0xf]
        %v934 = vld [vmem:[%s747 + $0x128] sm:$0xf]
        %v935 = vld [vmem:[%s747 + $0x12c] sm:$0xf]
        %v936 = vld [vmem:[%s747 + $0x130] sm:$0xf]
        %v937 = vld [vmem:[%s747 + $0x134] sm:$0xf]
        %v938 = vld [vmem:[%s747 + $0x138] sm:$0xf]
        %v939 = vld [vmem:[%s747 + $0x13c] sm:$0xf]
        %v940 = vld [vmem:[%s747 + $0x140] sm:$0xf]
        %v941 = vld [vmem:[%s747 + $0x144] sm:$0xf]
        %v942 = vld [vmem:[%s747 + $0x148] sm:$0xf]
        %v943 = vld [vmem:[%s747 + $0x14c] sm:$0xf]
        %v944 = vld [vmem:[%s747 + $0x150] sm:$0xf]
        %v945 = vld [vmem:[%s747 + $0x154] sm:$0xf]
        %v946 = vld [vmem:[%s747 + $0x158] sm:$0xf]
        %v947 = vld [vmem:[%s747 + $0x15c] sm:$0xf]
        %v948 = vld [vmem:[%s747 + $0x160] sm:$0xf]
        %v949 = vld [vmem:[%s747 + $0x164] sm:$0xf]
        %v950 = vld [vmem:[%s747 + $0x168] sm:$0xf]
        %v951 = vld [vmem:[%s747 + $0x16c] sm:$0xf]
        %v952 = vld [vmem:[%s747 + $0x170] sm:$0xf]
        %v953 = vld [vmem:[%s747 + $0x174] sm:$0xf]
        %v954 = vld [vmem:[%s747 + $0x178] sm:$0xf]
        %v955 = vld [vmem:[%s747 + $0x17c] sm:$0xf]
        %v956 = vld [vmem:[%s747 + $0x180] sm:$0xf]
        %v957 = vld [vmem:[%s747 + $0x184] sm:$0xf]
        %v958 = vld [vmem:[%s747 + $0x188] sm:$0xf]
        %v959 = vld [vmem:[%s747 + $0x18c] sm:$0xf]
        %v960 = vld [vmem:[%s747 + $0x190] sm:$0xf]
        %v961 = vld [vmem:[%s747 + $0x194] sm:$0xf]
        %v962 = vld [vmem:[%s747 + $0x198] sm:$0xf]
        %v963 = vld [vmem:[%s747 + $0x19c] sm:$0xf]
        %v964 = vld [vmem:[%s747 + $0x1a0] sm:$0xf]
        %v965 = vld [vmem:[%s747 + $0x1a4] sm:$0xf]
        %v966 = vld [vmem:[%s747 + $0x1a8] sm:$0xf]
        %v967 = vld [vmem:[%s747 + $0x1ac] sm:$0xf]
        %v968 = vld [vmem:[%s747 + $0x1b0] sm:$0xf]
        %v969 = vld [vmem:[%s747 + $0x1b4] sm:$0xf]
        %v970 = vld [vmem:[%s747 + $0x1b8] sm:$0xf]
        %v971 = vld [vmem:[%s747 + $0x1bc] sm:$0xf]
        %v972 = vld [vmem:[%s747 + $0x1c0] sm:$0xf]
        %v973 = vld [vmem:[%s747 + $0x1c4] sm:$0xf]
        %v974 = vld [vmem:[%s747 + $0x1c8] sm:$0xf]
        %v975 = vld [vmem:[%s747 + $0x1cc] sm:$0xf]
        %v976 = vld [vmem:[%s747 + $0x1d0] sm:$0xf]
        %v977 = vld [vmem:[%s747 + $0x1d4] sm:$0xf]
        %v978 = vld [vmem:[%s747 + $0x1d8] sm:$0xf]
        %v979 = vld [vmem:[%s747 + $0x1dc] sm:$0xf]
        %v980 = vld [vmem:[%s747 + $0x1e0] sm:$0xf]
        %v981 = vld [vmem:[%s747 + $0x1e4] sm:$0xf]
        %v982 = vld [vmem:[%s747 + $0x1e8] sm:$0xf]
        %v983 = vld [vmem:[%s747 + $0x1ec] sm:$0xf]
        %v984 = vld [vmem:[%s747 + $0x1f0] sm:$0xf]
        %v985 = vld [vmem:[%s747 + $0x1f4] sm:$0xf]
        %v986 = vld [vmem:[%s747 + $0x1f8] sm:$0xf]
        %v987 = vld [vmem:[%s747 + $0x1fc] sm:$0xf]
        %v988 = vld [vmem:[%s796] sm:$0x1]
        %v990 = vlaneseq
        %v991 = vshrl.u32 %v990, 7
        %v992 = vsub.s32 0, %v991
        %v993 = vrot.slane %v988, %v992
        %v1123 = vunpack.c.l.b16 %v860
        %v1124 = vunpack.c.l.b16 %v861
        %v1125 = vunpack.c.l.b16 %v862
        %v1126 = vunpack.c.l.b16 %v863
        %v1127 = vunpack.c.l.b16 %v864
        %v1128 = vunpack.c.l.b16 %v865
        %v1129 = vunpack.c.l.b16 %v866
        %v1130 = vunpack.c.l.b16 %v867
        %v1131 = vunpack.c.l.b16 %v868
        %v1132 = vunpack.c.l.b16 %v869
        %v1133 = vunpack.c.l.b16 %v870
        %v1134 = vunpack.c.l.b16 %v871
        %v1135 = vunpack.c.l.b16 %v872
        %v1136 = vunpack.c.l.b16 %v873
        %v1137 = vunpack.c.l.b16 %v874
        %v1138 = vunpack.c.l.b16 %v875
        %v1139 = vunpack.c.l.b16 %v876
        %v1140 = vunpack.c.l.b16 %v877
        %v1141 = vunpack.c.l.b16 %v878
        %v1142 = vunpack.c.l.b16 %v879
        %v1143 = vunpack.c.l.b16 %v880
        %v1144 = vunpack.c.l.b16 %v881
        %v1145 = vunpack.c.l.b16 %v882
        %v1146 = vunpack.c.l.b16 %v883
        %v1147 = vunpack.c.l.b16 %v884
        %v1148 = vunpack.c.l.b16 %v885
        %v1149 = vunpack.c.l.b16 %v886
        %v1150 = vunpack.c.l.b16 %v887
        %v1151 = vunpack.c.l.b16 %v888
        %v1152 = vunpack.c.l.b16 %v889
        %v1153 = vunpack.c.l.b16 %v890
        %v1154 = vunpack.c.l.b16 %v891
        %v1155 = vunpack.c.l.b16 %v892
        %v1156 = vunpack.c.l.b16 %v893
        %v1157 = vunpack.c.l.b16 %v894
        %v1158 = vunpack.c.l.b16 %v895
        %v1159 = vunpack.c.l.b16 %v896
        %v1160 = vunpack.c.l.b16 %v897
        %v1161 = vunpack.c.l.b16 %v898
        %v1162 = vunpack.c.l.b16 %v899
        %v1163 = vunpack.c.l.b16 %v900
        %v1164 = vunpack.c.l.b16 %v901
        %v1165 = vunpack.c.l.b16 %v902
        %v1166 = vunpack.c.l.b16 %v903
        %v1167 = vunpack.c.l.b16 %v904
        %v1168 = vunpack.c.l.b16 %v905
        %v1169 = vunpack.c.l.b16 %v906
        %v1170 = vunpack.c.l.b16 %v907
        %v1171 = vunpack.c.l.b16 %v908
        %v1172 = vunpack.c.l.b16 %v909
        %v1173 = vunpack.c.l.b16 %v910
        %v1174 = vunpack.c.l.b16 %v911
        %v1175 = vunpack.c.l.b16 %v912
        %v1176 = vunpack.c.l.b16 %v913
        %v1177 = vunpack.c.l.b16 %v914
        %v1178 = vunpack.c.l.b16 %v915
        %v1179 = vunpack.c.l.b16 %v916
        %v1180 = vunpack.c.l.b16 %v917
        %v1181 = vunpack.c.l.b16 %v918
        %v1182 = vunpack.c.l.b16 %v919
        %v1183 = vunpack.c.l.b16 %v920
        %v1184 = vunpack.c.l.b16 %v921
        %v1185 = vunpack.c.l.b16 %v922
        %v1186 = vunpack.c.l.b16 %v923
        %v1187 = vunpack.c.l.b16 %v924
        %v1188 = vunpack.c.l.b16 %v925
        %v1189 = vunpack.c.l.b16 %v926
        %v1190 = vunpack.c.l.b16 %v927
        %v1191 = vunpack.c.l.b16 %v928
        %v1192 = vunpack.c.l.b16 %v929
        %v1193 = vunpack.c.l.b16 %v930
        %v1194 = vunpack.c.l.b16 %v931
        %v1195 = vunpack.c.l.b16 %v932
        %v1196 = vunpack.c.l.b16 %v933
        %v1197 = vunpack.c.l.b16 %v934
        %v1198 = vunpack.c.l.b16 %v935
        %v1199 = vunpack.c.l.b16 %v936
        %v1200 = vunpack.c.l.b16 %v937
        %v1201 = vunpack.c.l.b16 %v938
        %v1202 = vunpack.c.l.b16 %v939
        %v1203 = vunpack.c.l.b16 %v940
        %v1204 = vunpack.c.l.b16 %v941
        %v1205 = vunpack.c.l.b16 %v942
        %v1206 = vunpack.c.l.b16 %v943
        %v1207 = vunpack.c.l.b16 %v944
        %v1208 = vunpack.c.l.b16 %v945
        %v1209 = vunpack.c.l.b16 %v946
        %v1210 = vunpack.c.l.b16 %v947
        %v1211 = vunpack.c.l.b16 %v948
        %v1212 = vunpack.c.l.b16 %v949
        %v1213 = vunpack.c.l.b16 %v950
        %v1214 = vunpack.c.l.b16 %v951
        %v1215 = vunpack.c.l.b16 %v952
        %v1216 = vunpack.c.l.b16 %v953
        %v1217 = vunpack.c.l.b16 %v954
        %v1218 = vunpack.c.l.b16 %v955
        %v1219 = vunpack.c.l.b16 %v956
        %v1220 = vunpack.c.l.b16 %v957
        %v1221 = vunpack.c.l.b16 %v958
        %v1222 = vunpack.c.l.b16 %v959
        %v1223 = vunpack.c.l.b16 %v960
        %v1224 = vunpack.c.l.b16 %v961
        %v1225 = vunpack.c.l.b16 %v962
        %v1226 = vunpack.c.l.b16 %v963
        %v1227 = vunpack.c.l.b16 %v964
        %v1228 = vunpack.c.l.b16 %v965
        %v1229 = vunpack.c.l.b16 %v966
        %v1230 = vunpack.c.l.b16 %v967
        %v1231 = vunpack.c.l.b16 %v968
        %v1232 = vunpack.c.l.b16 %v969
        %v1233 = vunpack.c.l.b16 %v970
        %v1234 = vunpack.c.l.b16 %v971
        %v1235 = vunpack.c.l.b16 %v972
        %v1236 = vunpack.c.l.b16 %v973
        %v1237 = vunpack.c.l.b16 %v974
        %v1238 = vunpack.c.l.b16 %v975
        %v1239 = vunpack.c.l.b16 %v976
        %v1240 = vunpack.c.l.b16 %v977
        %v1241 = vunpack.c.l.b16 %v978
        %v1242 = vunpack.c.l.b16 %v979
        %v1243 = vunpack.c.l.b16 %v980
        %v1244 = vunpack.c.l.b16 %v981
        %v1245 = vunpack.c.l.b16 %v982
        %v1246 = vunpack.c.l.b16 %v983
        %v1247 = vunpack.c.l.b16 %v984
        %v1248 = vunpack.c.l.b16 %v985
        %v1249 = vunpack.c.l.b16 %v986
        %v1250 = vunpack.c.l.b16 %v987
        %v1251 = vpack.c.b16 %v1124, %v1123
        %v1252 = vpack.c.b16 %v1126, %v1125
        %v1253 = vpack.c.b16 %v1128, %v1127
        %v1254 = vpack.c.b16 %v1130, %v1129
        %v1255 = vpack.c.b16 %v1132, %v1131
        %v1256 = vpack.c.b16 %v1134, %v1133
        %v1257 = vpack.c.b16 %v1136, %v1135
        %v1258 = vpack.c.b16 %v1138, %v1137
        %v1259 = vpack.c.b16 %v1140, %v1139
        %v1260 = vpack.c.b16 %v1142, %v1141
        %v1261 = vpack.c.b16 %v1144, %v1143
        %v1262 = vpack.c.b16 %v1146, %v1145
        %v1263 = vpack.c.b16 %v1148, %v1147
        %v1264 = vpack.c.b16 %v1150, %v1149
        %v1265 = vpack.c.b16 %v1152, %v1151
        %v1266 = vpack.c.b16 %v1154, %v1153
        %v1267 = vpack.c.b16 %v1156, %v1155
        %v1268 = vpack.c.b16 %v1158, %v1157
        %v1269 = vpack.c.b16 %v1160, %v1159
        %v1270 = vpack.c.b16 %v1162, %v1161
        %v1271 = vpack.c.b16 %v1164, %v1163
        %v1272 = vpack.c.b16 %v1166, %v1165
        %v1273 = vpack.c.b16 %v1168, %v1167
        %v1274 = vpack.c.b16 %v1170, %v1169
        %v1275 = vpack.c.b16 %v1172, %v1171
        %v1276 = vpack.c.b16 %v1174, %v1173
        %v1277 = vpack.c.b16 %v1176, %v1175
        %v1278 = vpack.c.b16 %v1178, %v1177
        %v1279 = vpack.c.b16 %v1180, %v1179
        %v1280 = vpack.c.b16 %v1182, %v1181
        %v1281 = vpack.c.b16 %v1184, %v1183
        %v1282 = vpack.c.b16 %v1186, %v1185
        %v1283 = vpack.c.b16 %v1188, %v1187
        %v1284 = vpack.c.b16 %v1190, %v1189
        %v1285 = vpack.c.b16 %v1192, %v1191
        %v1286 = vpack.c.b16 %v1194, %v1193
        %v1287 = vpack.c.b16 %v1196, %v1195
        %v1288 = vpack.c.b16 %v1198, %v1197
        %v1289 = vpack.c.b16 %v1200, %v1199
        %v1290 = vpack.c.b16 %v1202, %v1201
        %v1291 = vpack.c.b16 %v1204, %v1203
        %v1292 = vpack.c.b16 %v1206, %v1205
        %v1293 = vpack.c.b16 %v1208, %v1207
        %v1294 = vpack.c.b16 %v1210, %v1209
        %v1295 = vpack.c.b16 %v1212, %v1211
        %v1296 = vpack.c.b16 %v1214, %v1213
        %v1297 = vpack.c.b16 %v1216, %v1215
        %v1298 = vpack.c.b16 %v1218, %v1217
        %v1299 = vpack.c.b16 %v1220, %v1219
        %v1300 = vpack.c.b16 %v1222, %v1221
        %v1301 = vpack.c.b16 %v1224, %v1223
        %v1302 = vpack.c.b16 %v1226, %v1225
        %v1303 = vpack.c.b16 %v1228, %v1227
        %v1304 = vpack.c.b16 %v1230, %v1229
        %v1305 = vpack.c.b16 %v1232, %v1231
        %v1306 = vpack.c.b16 %v1234, %v1233
        %v1307 = vpack.c.b16 %v1236, %v1235
        %v1308 = vpack.c.b16 %v1238, %v1237
        %v1309 = vpack.c.b16 %v1240, %v1239
        %v1310 = vpack.c.b16 %v1242, %v1241
        %v1311 = vpack.c.b16 %v1244, %v1243
        %v1312 = vpack.c.b16 %v1246, %v1245
        %v1313 = vpack.c.b16 %v1248, %v1247
        %v1314 = vpack.c.b16 %v1250, %v1249
        %1379 = vmatprep.subr.bf16.mxu0 0
        %1380 = vmatpush1.bf16.msra.mxu0 %v1258
        %1381 = vmatprep.subr.bf16.mxu0 0
        %1382 = vmatpush1.bf16.msra.mxu0 %v1257
        %1383 = vmatprep.subr.bf16.mxu0 0
        %1384 = vmatpush1.bf16.msra.mxu0 %v1256
        %1385 = vmatprep.subr.bf16.mxu0 0
        %1386 = vmatpush1.bf16.msra.mxu0 %v1255
        %1387 = vmatprep.subr.bf16.mxu0 0
        %1388 = vmatpush1.bf16.msra.mxu0 %v1254
        %1389 = vmatprep.subr.bf16.mxu0 0
        %1390 = vmatpush1.bf16.msra.mxu0 %v1253
        %1391 = vmatprep.subr.bf16.mxu0 0
        %1392 = vmatpush1.bf16.msra.mxu0 %v1252
        %1393 = vmatprep.subr.bf16.mxu0 0
        %1394 = vmatpush1.bf16.msra.mxu0 %v1251
        %1395 = vmatprep.subr.bf16.mxu0 0
        %1396 = vmatpush2.bf16.msra.mxu0 %v1266
        %1397 = vmatprep.subr.bf16.mxu0 0
        %1398 = vmatpush2.bf16.msra.mxu0 %v1265
        %1399 = vmatprep.subr.bf16.mxu0 0
        %1400 = vmatpush2.bf16.msra.mxu0 %v1264
        %1401 = vmatprep.subr.bf16.mxu0 0
        %1402 = vmatpush2.bf16.msra.mxu0 %v1263
        %1403 = vmatprep.subr.bf16.mxu0 0
        %1404 = vmatpush2.bf16.msra.mxu0 %v1262
        %1405 = vmatprep.subr.bf16.mxu0 0
        %1406 = vmatpush2.bf16.msra.mxu0 %v1261
        %1407 = vmatprep.subr.bf16.mxu0 0
        %1408 = vmatpush2.bf16.msra.mxu0 %v1260
        %1409 = vmatprep.subr.bf16.mxu0 0
        %1410 = vmatpush2.bf16.msra.mxu0 %v1259
        %1411 = vmatprep.mubr.bf16.mxu0 %v853
        %1412 = vmatmul.mubr.bf16.gmra.mxu0 %v852
        %v1413 = vpop.f32.mrf.mxu0
        %v1414 = vadd.f32 %v993, %v1413
        %v1415 = vpop.f32.mrf.mxu0
        %v1416 = vpop.f32.mrf.mxu0
        %v1417 = vpop.f32.mrf.mxu0
        %1418 = vdwg.mxu0
        %1419 = vmatprep.subr.bf16.mxu0 0
        %1420 = vmatpush1.bf16.msra.mxu0 %v1274
        %1421 = vmatprep.subr.bf16.mxu0 0
        %1422 = vmatpush1.bf16.msra.mxu0 %v1273
        %1423 = vmatprep.subr.bf16.mxu0 0
        %1424 = vmatpush1.bf16.msra.mxu0 %v1272
        %1425 = vmatprep.subr.bf16.mxu0 0
        %1426 = vmatpush1.bf16.msra.mxu0 %v1271
        %1427 = vmatprep.subr.bf16.mxu0 0
        %1428 = vmatpush1.bf16.msra.mxu0 %v1270
        %1429 = vmatprep.subr.bf16.mxu0 0
        %1430 = vmatpush1.bf16.msra.mxu0 %v1269
        %1431 = vmatprep.subr.bf16.mxu0 0
        %1432 = vmatpush1.bf16.msra.mxu0 %v1268
        %1433 = vmatprep.subr.bf16.mxu0 0
        %1434 = vmatpush1.bf16.msra.mxu0 %v1267
        %1435 = vmatprep.subr.bf16.mxu0 0
        %1436 = vmatpush2.bf16.msra.mxu0 %v1282
        %1437 = vmatprep.subr.bf16.mxu0 0
        %1438 = vmatpush2.bf16.msra.mxu0 %v1281
        %1439 = vmatprep.subr.bf16.mxu0 0
        %1440 = vmatpush2.bf16.msra.mxu0 %v1280
        %1441 = vmatprep.subr.bf16.mxu0 0
        %1442 = vmatpush2.bf16.msra.mxu0 %v1279
        %1443 = vmatprep.subr.bf16.mxu0 0
        %1444 = vmatpush2.bf16.msra.mxu0 %v1278
        %1445 = vmatprep.subr.bf16.mxu0 0
        %1446 = vmatpush2.bf16.msra.mxu0 %v1277
        %1447 = vmatprep.subr.bf16.mxu0 0
        %1448 = vmatpush2.bf16.msra.mxu0 %v1276
        %1449 = vmatprep.subr.bf16.mxu0 0
        %1450 = vmatpush2.bf16.msra.mxu0 %v1275
        %1451 = vmatprep.mubr.bf16.mxu0 %v855
        %1452 = vmatmul.mubr.bf16.gmra.mxu0 %v854
        %v1453 = vpop.f32.mrf.mxu0
        %v1454 = vadd.f32 %v1414, %v1453
        %v1455 = vpop.f32.mrf.mxu0
        %v1456 = vpop.f32.mrf.mxu0
        %v1457 = vpop.f32.mrf.mxu0
        %1458 = vdwg.mxu0
        %1459 = vmatprep.subr.bf16.mxu0 0
        %1460 = vmatpush1.bf16.msra.mxu0 %v1290
        %1461 = vmatprep.subr.bf16.mxu0 0
        %1462 = vmatpush1.bf16.msra.mxu0 %v1289
        %1463 = vmatprep.subr.bf16.mxu0 0
        %1464 = vmatpush1.bf16.msra.mxu0 %v1288
        %1465 = vmatprep.subr.bf16.mxu0 0
        %1466 = vmatpush1.bf16.msra.mxu0 %v1287
        %1467 = vmatprep.subr.bf16.mxu0 0
        %1468 = vmatpush1.bf16.msra.mxu0 %v1286
        %1469 = vmatprep.subr.bf16.mxu0 0
        %1470 = vmatpush1.bf16.msra.mxu0 %v1285
        %1471 = vmatprep.subr.bf16.mxu0 0
        %1472 = vmatpush1.bf16.msra.mxu0 %v1284
        %1473 = vmatprep.subr.bf16.mxu0 0
        %1474 = vmatpush1.bf16.msra.mxu0 %v1283
        %1475 = vmatprep.subr.bf16.mxu0 0
        %1476 = vmatpush2.bf16.msra.mxu0 %v1298
        %1477 = vmatprep.subr.bf16.mxu0 0
        %1478 = vmatpush2.bf16.msra.mxu0 %v1297
        %1479 = vmatprep.subr.bf16.mxu0 0
        %1480 = vmatpush2.bf16.msra.mxu0 %v1296
        %1481 = vmatprep.subr.bf16.mxu0 0
        %1482 = vmatpush2.bf16.msra.mxu0 %v1295
        %1483 = vmatprep.subr.bf16.mxu0 0
        %1484 = vmatpush2.bf16.msra.mxu0 %v1294
        %1485 = vmatprep.subr.bf16.mxu0 0
        %1486 = vmatpush2.bf16.msra.mxu0 %v1293
        %1487 = vmatprep.subr.bf16.mxu0 0
        %1488 = vmatpush2.bf16.msra.mxu0 %v1292
        %1489 = vmatprep.subr.bf16.mxu0 0
        %1490 = vmatpush2.bf16.msra.mxu0 %v1291
        %1491 = vmatprep.mubr.bf16.mxu0 %v857
        %1492 = vmatmul.mubr.bf16.gmra.mxu0 %v856
        %v1493 = vpop.f32.mrf.mxu0
        %v1494 = vadd.f32 %v1454, %v1493
        %v1495 = vpop.f32.mrf.mxu0
        %v1496 = vpop.f32.mrf.mxu0
        %v1497 = vpop.f32.mrf.mxu0
        %1498 = vdwg.mxu0
        %1499 = vmatprep.subr.bf16.mxu0 0
        %1500 = vmatpush1.bf16.msra.mxu0 %v1306
        %1501 = vmatprep.subr.bf16.mxu0 0
        %1502 = vmatpush1.bf16.msra.mxu0 %v1305
        %1503 = vmatprep.subr.bf16.mxu0 0
        %1504 = vmatpush1.bf16.msra.mxu0 %v1304
        %1505 = vmatprep.subr.bf16.mxu0 0
        %1506 = vmatpush1.bf16.msra.mxu0 %v1303
        %1507 = vmatprep.subr.bf16.mxu0 0
        %1508 = vmatpush1.bf16.msra.mxu0 %v1302
        %1509 = vmatprep.subr.bf16.mxu0 0
        %1510 = vmatpush1.bf16.msra.mxu0 %v1301
        %1511 = vmatprep.subr.bf16.mxu0 0
        %1512 = vmatpush1.bf16.msra.mxu0 %v1300
        %1513 = vmatprep.subr.bf16.mxu0 0
        %1514 = vmatpush1.bf16.msra.mxu0 %v1299
        %1515 = vmatprep.subr.bf16.mxu0 0
        %1516 = vmatpush2.bf16.msra.mxu0 %v1314
        %1517 = vmatprep.subr.bf16.mxu0 0
        %1518 = vmatpush2.bf16.msra.mxu0 %v1313
        %1519 = vmatprep.subr.bf16.mxu0 0
        %1520 = vmatpush2.bf16.msra.mxu0 %v1312
        %1521 = vmatprep.subr.bf16.mxu0 0
        %1522 = vmatpush2.bf16.msra.mxu0 %v1311
        %1523 = vmatprep.subr.bf16.mxu0 0
        %1524 = vmatpush2.bf16.msra.mxu0 %v1310
        %1525 = vmatprep.subr.bf16.mxu0 0
        %1526 = vmatpush2.bf16.msra.mxu0 %v1309
        %1527 = vmatprep.subr.bf16.mxu0 0
        %1528 = vmatpush2.bf16.msra.mxu0 %v1308
        %1529 = vmatprep.subr.bf16.mxu0 0
        %1530 = vmatpush2.bf16.msra.mxu0 %v1307
        %1531 = vmatprep.mubr.bf16.mxu0 %v859
        %1532 = vmatmul.mubr.bf16.gmra.mxu0 %v858
        %v1533 = vpop.f32.mrf.mxu0
        %v1534 = vadd.f32 %v1494, %v1533
        %v1535 = vpop.f32.mrf.mxu0
        %v1536 = vpop.f32.mrf.mxu0
        %v1537 = vpop.f32.mrf.mxu0
        %1538 = vdwg.mxu0
        %1539 = vst [vmem:[%s804] sm:$0x3] %v1534
        %p1540 = scmp.lt.s32.totalorder %s19, 0
        %s1541 = scalar_select %p1540, %s19, 0
        %p1542 = scmp.lt.s32.totalorder %s20, 2
        %s1543 = scalar_select %p1542, %s20, 2
        %s1544 = smul.addr %s1541, 3
        %s1545 = sadd.s32 %s1543, %s1544
        %s1546 = smul.addr %s1545, 2
        %s1547 = scalar_lea.vmem %s3, %s1546
        // Predicated region
        $region74: #{infogan_generator_forward.25} parent=68 // pred_check
          %p1548 = pneg %p135
        $region75: #{infogan_generator_forward.25} parent=68 // pred_check_branch
          %1550 = sbr.rel (%p1548) target = $region77
        $region76: #{infogan_generator_forward.25} parent=68 // pred_region
          _
        $region77: #{infogan_generator_forward.25} parent=68 // pred_fallthru
          _
      $region69: #{infogan_generator_forward.25} parent=5 // pred_fallthru
        _
      %p1551 = scmp.le.s32.totalorder 2, %s9
      // Predicated region
      $region78: #{infogan_generator_forward.25} parent=5 // pred_check
        %p1552 = pneg %p1551
      $region79: #{infogan_generator_forward.25} parent=5 // pred_check_branch
        %1554 = sbr.rel (%p1552) target = $region81
      $region80: #{infogan_generator_forward.25} parent=5 // pred_region
        %s1555 = ssub.s32 %s9, 2
        // Predicated region
        $region82: #{infogan_generator_forward.25} parent=80 // pred_check
          %p1556 = pneg %p141
        $region83: #{infogan_generator_forward.25} parent=80 // pred_check_branch
          %1558 = sbr.rel (%p1556) target = $region85
        $region84: #{infogan_generator_forward.25} parent=80 // pred_region
          %p1559 = scmp.lt.s32.totalorder %s22, 0
          %s1560 = scalar_select %p1559, %s22, 0
          %p1561 = scmp.lt.s32.totalorder %s23, 2
          %s1562 = scalar_select %p1561, %s23, 2
          %s1563 = smul.addr %s1560, 3
          %s1564 = sadd.s32 %s1562, %s1563
          %s1565 = smul.addr %s1564, 2
          %s1566 = scalar_lea.vmem %s3, %s1565
        $region85: #{infogan_generator_forward.25} parent=80 // pred_fallthru
          _
      $region81: #{infogan_generator_forward.25} parent=5 // pred_fallthru
        _
    $region6: #{infogan_generator_forward.25} parent=1 // loop_footer
      %s13 = sadd.s32 1, %s9
    $region7: #{infogan_generator_forward.25} parent=1 // loop_footer_branch
      %8 = sbr.rel target = $region3
    $region8: #{infogan_generator_forward.25} parent=1 // loop_exit
      _

</llo_original>
